<compile_context>
chip_gen: v7x
topology: tpu7x:2x2x1
jax: 0.10.0
libtpu: 0.0.40
codegen_flags: <defaults>
</compile_context>

<pallas_src>
import math
import numpy as np
import jax
import jax.numpy as jnp
from jax import lax
from jax.experimental import pallas as pl
from jax.experimental.pallas import tpu as pltpu

# ----------------------- small configuration (consistent with the module) ----
BATCH = 2
NUM_BINS = 8
BIN_SIZE = 10
CONV_DIMS = (16, 32, 64)
EMB_DIM = 128
NHEAD = 4
HEAD_DIM = EMB_DIM // NHEAD
NUM_LAYERS = 2
FFN_DIM = 128
NUM_EXPERTS = 4
TOP_K = 2
SEQ = NUM_BINS + 1          # CLS + bins
ROWS = BATCH * SEQ          # token rows processed at once
LN_EPS = 1e-5
BN_EPS = 1e-5


# ------------------------------- helpers -------------------------------------
def _layer_norm(x, g, b):
    mu = jnp.mean(x, axis=-1, keepdims=True)
    xc = x - mu
    var = jnp.mean(xc * xc, axis=-1, keepdims=True)
    return xc * lax.rsqrt(var + LN_EPS) * g + b


# --------------------------- fully fused forward kernel ----------------------
def _fused_forward_kernel(
        x_ref,                                                     # (ROWS, L)
        m1_ref, s1_ref, b1_ref, m2_ref, s2_ref, b2_ref,            # conv chain
        m3_ref, s3_ref, b3_ref, pool_ref, wp_ref, bp_ref,
        cls_ref, msk_ref, pos_ref, clssel_ref, abias_ref, clspick_ref,
        ln1g_ref, ln1b_ref, wqkv_ref, bqkv_ref, wo_ref, bo_ref,    # stacked layers
        ln2g_ref, ln2b_ref, wg_ref, bg_ref,
        w1_ref, b1c_ref, w2_ref, b2s_ref,
        out_ref):                                                  # (B, E)
    f32 = jnp.float32
    bf16 = jnp.bfloat16

    # ---- ConvEmbedder: dilated conv chain folded to band-matrix matmuls -----
    x = x_ref[...]                                                 # (ROWS, L) f32
    h = jnp.dot(x.astype(bf16), m1_ref[...], preferred_element_type=f32)
    h = jax.nn.gelu(h * s1_ref[...] + b1_ref[...])                 # BN(eval) + GELU
    h = jnp.dot(h.astype(bf16), m2_ref[...], preferred_element_type=f32)
    h = jax.nn.gelu(h * s2_ref[...] + b2_ref[...])
    h = jnp.dot(h.astype(bf16), m3_ref[...], preferred_element_type=f32)
    h = jax.nn.gelu(h * s3_ref[...] + b3_ref[...])
    pooled = jnp.dot(h.astype(bf16), pool_ref[...], preferred_element_type=f32)
    emb = (jnp.dot(pooled.astype(bf16), wp_ref[...], preferred_element_type=f32)
           + bp_ref[...])                                          # (ROWS, E)

    # ---- mask-token / CLS-token substitution + positional encoding ----------
    n_hit = jnp.sum((x == -100.0).astype(f32), axis=-1, keepdims=True)
    tok = jnp.where(n_hit == float(BIN_SIZE), msk_ref[...], emb)   # mask token
    tok = jnp.where(clssel_ref[...] > 0.5, cls_ref[...], tok)      # CLS rows
    seq = tok + pos_ref[...]                                       # (ROWS, E)

    scale = 1.0 / math.sqrt(HEAD_DIM)
    abias = abias_ref[...]                                         # (ROWS, ROWS)

    for l in range(NUM_LAYERS):
        # ----- pre-LN multi-head self-attention (block-diagonal over batch) --
        hln = _layer_norm(seq, ln1g_ref[l], ln1b_ref[l])
        qkv = (jnp.dot(hln.astype(bf16), wqkv_ref[l], preferred_element_type=f32)
               + bqkv_ref[l])                                      # (ROWS, 3E)
        q = qkv[:, :EMB_DIM]
        k = qkv[:, EMB_DIM:2 * EMB_DIM]
        v = qkv[:, 2 * EMB_DIM:]
        wo_l = wo_ref[l]                                           # (E, E) bf16
        attn = jnp.zeros_like(seq)
        for hd in range(NHEAD):                                    # static head slices
            cs = slice(hd * HEAD_DIM, (hd + 1) * HEAD_DIM)
            s = jnp.einsum('qd,kd->qk', q[:, cs], k[:, cs],
                           preferred_element_type=f32) * scale + abias
            s = s - jnp.max(s, axis=-1, keepdims=True)
            p = jnp.exp(s)
            p = p * pl.reciprocal(jnp.sum(p, axis=-1, keepdims=True), approx=True)
            oh = jnp.dot(p, v[:, cs], preferred_element_type=f32)  # (ROWS, HD)
            attn = attn + jnp.dot(oh.astype(bf16), wo_l[cs, :],
                                  preferred_element_type=f32)
        x1 = seq + attn + bo_ref[l]

        # ----- pre-LN MoE FFN: dense top-k routing over stacked experts ------
        h2 = _layer_norm(x1, ln2g_ref[l], ln2b_ref[l])
        logits = (jnp.dot(h2, wg_ref[l], preferred_element_type=f32)
                  + bg_ref[l])                                     # (ROWS, NE) f32

        # top-k selection via rank computation (index tie-break), all in f32
        iota_e = lax.broadcasted_iota(jnp.int32, (1, NUM_EXPERTS), 1)
        sel = jnp.zeros_like(logits)
        for e in range(NUM_EXPERTS):
            col = logits[:, e:e + 1]
            better = jnp.sum((logits > col).astype(f32), axis=-1, keepdims=True)
            ties = jnp.sum(((logits == col) & (iota_e < e)).astype(f32),
                           axis=-1, keepdims=True)
            sel_e = ((better + ties) < TOP_K).astype(f32)
            sel = sel + sel_e * (iota_e == e).astype(f32)
        masked = jnp.where(sel > 0.5, logits, -1e30)
        masked = masked - jnp.max(masked, axis=-1, keepdims=True)
        ew = jnp.exp(masked)
        gates = ew * pl.reciprocal(jnp.sum(ew, axis=-1, keepdims=True),
                                   approx=True)                    # (ROWS, NE)

        # dense expert compute with concatenated expert weights (2 wide matmuls)
        hid = jax.nn.gelu(jnp.dot(h2.astype(bf16), w1_ref[l],
                                  preferred_element_type=f32)
                          + b1c_ref[l])                            # (ROWS, NE*FFN)
        scaled = jnp.concatenate(
            [hid[:, e * FFN_DIM:(e + 1) * FFN_DIM] * gates[:, e:e + 1]
             for e in range(NUM_EXPERTS)], axis=-1)                # gate the blocks
        moe = (jnp.dot(scaled.astype(bf16), w2_ref[l], preferred_element_type=f32)
               + jnp.dot(gates, b2s_ref[l], preferred_element_type=f32))
        seq = x1 + moe

    # ---- CLS readout: constant 0/1 selection matrix (one tiny matmul) -------
    out_ref[...] = jnp.dot(clspick_ref[...], seq, preferred_element_type=f32)


def transformer_encoder_forward(x, params):
    B = x.shape[0]
    assert B == BATCH, (B, BATCH)
    # Pad each batch's bin rows with one dummy "CLS" row so conv + transformer
    # share the same (B*S, .) row layout (dummy rows are overwritten in-kernel).
    xb = x.reshape(B, NUM_BINS, BIN_SIZE)
    x_pad = jnp.concatenate(
        [jnp.zeros((B, 1, BIN_SIZE), x.dtype), xb], axis=1
    ).reshape(B * SEQ, BIN_SIZE)

    cp = params['conv']
    lp = params['layers']
    args = [
        x_pad,
        cp['m1'], cp['s1'], cp['b1'], cp['m2'], cp['s2'], cp['b2'],
        cp['m3'], cp['s3'], cp['b3'], cp['pool'], cp['wp'], cp['bp'],
        params['cls_token'], params['mask_token'],
        params['pos_tiled'], params['cls_sel'], params['attn_bias'],
        params['cls_pick'],
        lp['ln1g'], lp['ln1b'], lp['wqkv'], lp['bqkv'], lp['wo'], lp['bo'],
        lp['ln2g'], lp['ln2b'], lp['wg'], lp['bg'],
        lp['w1cat'], lp['b1cat'], lp['w2cat'], lp['b2stack'],
    ]
    vmem = pl.BlockSpec(memory_space=pltpu.MemorySpace.VMEM)
    return pl.pallas_call(
        _fused_forward_kernel,
        out_shape=jax.ShapeDtypeStruct((B, EMB_DIM), jnp.float32),
        in_specs=[vmem] * len(args),
        out_specs=vmem,
    )(*args)


# ------------------------------ parameter setup ------------------------------
def conv_to_matrix(w, L, dil):
    """Fold Conv1d(kernel=3, padding=dil, dilation=dil) into a (C_in*L, C_out*L) matrix."""
    c_out, c_in, K = w.shape
    m = np.zeros((c_in, L, c_out, L), dtype=np.float32)
    for k in range(K):
        off = (k - 1) * dil
        for l in range(L):
            i = l + off
            if 0 <= i < L:
                m[:, i, :, l] += np.asarray(w)[:, :, k].T
    return jnp.asarray(m.reshape(c_in * L, c_out * L))


def sinusoidal_pe(max_len, d):
    pos = np.arange(max_len)[:, None].astype(np.float64)
    div = np.exp(np.arange(0, d, 2).astype(np.float64) * (-math.log(10000.0) / d))
    pe = np.zeros((max_len, d), dtype=np.float32)
    pe[:, 0::2] = np.sin(pos * div)
    pe[:, 1::2] = np.cos(pos * div)
    return pe


def init_params(key):
    ks = iter(jax.random.split(key, 256))

    def nrm(shape, std=0.02):
        return std * jax.random.normal(next(ks), shape, dtype=jnp.float32)

    bf16 = jnp.bfloat16
    L = BIN_SIZE
    c1, c2, c3 = CONV_DIMS
    w1 = nrm((c1, 1, 3), 0.4)
    w2 = nrm((c2, c1, 3), 0.2)
    w3 = nrm((c3, c2, 3), 0.15)

    def bn(c):
        gamma = 1.0 + np.asarray(nrm((c,), 0.02))
        beta = np.asarray(nrm((c,), 0.02))
        scale = gamma / np.sqrt(1.0 + BN_EPS)   # eval mode: running_mean=0, running_var=1
        return (jnp.asarray(np.repeat(scale, L).astype(np.float32)[None, :]),
                jnp.asarray(np.repeat(beta, L).astype(np.float32)[None, :]))

    s1, b1 = bn(c1)
    s2, b2 = bn(c2)
    s3, b3 = bn(c3)
    conv = dict(
        m1=conv_to_matrix(w1, L, 1).astype(bf16), s1=s1, b1=b1,
        m2=conv_to_matrix(w2, L, 2).astype(bf16), s2=s2, b2=b2,
        m3=conv_to_matrix(w3, L, 4).astype(bf16), s3=s3, b3=b3,
        pool=jnp.asarray((np.kron(np.eye(c3), np.ones((L, 1))) / L)
                         .astype(np.float32)).astype(bf16),
        wp=nrm((c3, EMB_DIM), 0.1).astype(bf16),
        bp=nrm((1, EMB_DIM), 0.02),
    )

    per_layer = []
    for _ in range(NUM_LAYERS):
        wq = nrm((EMB_DIM, EMB_DIM), 0.05)
        wk = nrm((EMB_DIM, EMB_DIM), 0.05)
        wv = nrm((EMB_DIM, EMB_DIM), 0.05)
        bq, bk, bv = nrm((1, EMB_DIM), 0.02), nrm((1, EMB_DIM), 0.02), nrm((1, EMB_DIM), 0.02)
        w1e = [nrm((EMB_DIM, FFN_DIM), 0.05) for _ in range(NUM_EXPERTS)]
        b1e = [nrm((1, FFN_DIM), 0.02) for _ in range(NUM_EXPERTS)]
        w2e = [nrm((FFN_DIM, EMB_DIM), 0.05) for _ in range(NUM_EXPERTS)]
        b2e = [nrm((1, EMB_DIM), 0.02) for _ in range(NUM_EXPERTS)]
        per_layer.append(dict(
            ln1g=jnp.ones((1, EMB_DIM), jnp.float32),
            ln1b=jnp.zeros((1, EMB_DIM), jnp.float32),
            wqkv=jnp.concatenate([wq, wk, wv], axis=1).astype(bf16),   # (E, 3E)
            bqkv=jnp.concatenate([bq, bk, bv], axis=1),                # (1, 3E)
            wo=nrm((EMB_DIM, EMB_DIM), 0.05).astype(bf16),
            bo=nrm((1, EMB_DIM), 0.02),
            ln2g=jnp.ones((1, EMB_DIM), jnp.float32),
            ln2b=jnp.zeros((1, EMB_DIM), jnp.float32),
            wg=nrm((EMB_DIM, NUM_EXPERTS), 0.05),                      # routing in f32
            bg=nrm((1, NUM_EXPERTS), 0.02),
            w1cat=jnp.concatenate(w1e, axis=1).astype(bf16),           # (E, NE*FFN)
            b1cat=jnp.concatenate(b1e, axis=1),                        # (1, NE*FFN)
            w2cat=jnp.concatenate(w2e, axis=0).astype(bf16),           # (NE*FFN, E)
            b2stack=jnp.concatenate(b2e, axis=0),                      # (NE, E)
        ))
    layers = {name: jnp.stack([lay[name] for lay in per_layer], axis=0)
              for name in per_layer[0]}

    # constant index/mask helpers (built host-side, no in-kernel int div/mod)
    pe = sinusoidal_pe(SEQ, EMB_DIM)
    pos_tiled = np.tile(pe, (BATCH, 1)).astype(np.float32)             # (ROWS, E)
    cls_sel = np.zeros((ROWS, 1), np.float32)
    cls_pick = np.zeros((BATCH, ROWS), np.float32)
    attn_bias = np.full((ROWS, ROWS), -1e30, np.float32)
    for b in range(BATCH):
        cls_sel[b * SEQ, 0] = 1.0
        cls_pick[b, b * SEQ] = 1.0
        attn_bias[b * SEQ:(b + 1) * SEQ, b * SEQ:(b + 1) * SEQ] = 0.0

    return dict(conv=conv,
                cls_token=nrm((1, EMB_DIM), 0.02),
                mask_token=nrm((1, EMB_DIM), 0.02),
                pos_tiled=jnp.asarray(pos_tiled),
                cls_sel=jnp.asarray(cls_sel),
                attn_bias=jnp.asarray(attn_bias),
                cls_pick=jnp.asarray(cls_pick),
                layers=layers)


if __name__ == "__main__":
    key = jax.random.PRNGKey(0)
    pkey, xkey = jax.random.split(key)
    params = init_params(pkey)
    x = jax.random.normal(xkey, (BATCH, NUM_BINS * BIN_SIZE), dtype=jnp.float32)
    # make one bin fully == -100 to exercise the mask-token path
    x = x.at[1, 2 * BIN_SIZE:3 * BIN_SIZE].set(-100.0)

    out = jax.jit(lambda a: transformer_encoder_forward(a, params))(x)
    jax.block_until_ready(out)
    assert out.shape == (BATCH, EMB_DIM), out.shape
    assert bool(jnp.all(jnp.isfinite(out)))
    print("KERNEL_OK")
</pallas_src>

<mosaic_0001>
module attributes {stable_mosaic.version = 11 : i64} {
  func.func @_fused_forward_kernel(%arg0: memref<18x10xf32, #tpu.memory_space<vmem>>, %arg1: memref<10x160xbf16, #tpu.memory_space<vmem>>, %arg2: memref<1x160xf32, #tpu.memory_space<vmem>>, %arg3: memref<1x160xf32, #tpu.memory_space<vmem>>, %arg4: memref<160x320xbf16, #tpu.memory_space<vmem>>, %arg5: memref<1x320xf32, #tpu.memory_space<vmem>>, %arg6: memref<1x320xf32, #tpu.memory_space<vmem>>, %arg7: memref<320x640xbf16, #tpu.memory_space<vmem>>, %arg8: memref<1x640xf32, #tpu.memory_space<vmem>>, %arg9: memref<1x640xf32, #tpu.memory_space<vmem>>, %arg10: memref<640x64xbf16, #tpu.memory_space<vmem>>, %arg11: memref<64x128xbf16, #tpu.memory_space<vmem>>, %arg12: memref<1x128xf32, #tpu.memory_space<vmem>>, %arg13: memref<1x128xf32, #tpu.memory_space<vmem>>, %arg14: memref<1x128xf32, #tpu.memory_space<vmem>>, %arg15: memref<18x128xf32, #tpu.memory_space<vmem>>, %arg16: memref<18x1xf32, #tpu.memory_space<vmem>>, %arg17: memref<18x18xf32, #tpu.memory_space<vmem>>, %arg18: memref<2x18xf32, #tpu.memory_space<vmem>>, %arg19: memref<2x1x128xf32, #tpu.memory_space<vmem>>, %arg20: memref<2x1x128xf32, #tpu.memory_space<vmem>>, %arg21: memref<2x128x384xbf16, #tpu.memory_space<vmem>>, %arg22: memref<2x1x384xf32, #tpu.memory_space<vmem>>, %arg23: memref<2x128x128xbf16, #tpu.memory_space<vmem>>, %arg24: memref<2x1x128xf32, #tpu.memory_space<vmem>>, %arg25: memref<2x1x128xf32, #tpu.memory_space<vmem>>, %arg26: memref<2x1x128xf32, #tpu.memory_space<vmem>>, %arg27: memref<2x128x4xf32, #tpu.memory_space<vmem>>, %arg28: memref<2x1x4xf32, #tpu.memory_space<vmem>>, %arg29: memref<2x128x512xbf16, #tpu.memory_space<vmem>>, %arg30: memref<2x1x512xf32, #tpu.memory_space<vmem>>, %arg31: memref<2x512x128xbf16, #tpu.memory_space<vmem>>, %arg32: memref<2x4x128xf32, #tpu.memory_space<vmem>>, %arg33: memref<2x128xf32, #tpu.memory_space<vmem>>) attributes {dimension_semantics = [], scalar_prefetch = 0 : i64, scratch_operands = 0 : i64, tpu.core_type = #tpu.core_type<tc>} {
    %c0 = arith.constant 0 : index
    %c0_0 = arith.constant 0 : index
    %0 = vector.load %arg0[%c0, %c0_0] : memref<18x10xf32, #tpu.memory_space<vmem>>, vector<18x10xf32>
    %1 = arith.truncf %0 : vector<18x10xf32> to vector<18x10xbf16>
    %c0_1 = arith.constant 0 : index
    %c0_2 = arith.constant 0 : index
    %2 = vector.load %arg1[%c0_1, %c0_2] : memref<10x160xbf16, #tpu.memory_space<vmem>>, vector<10x160xbf16>
    %cst = arith.constant dense<0.000000e+00> : vector<18x160xf32>
    %3 = tpu.matmul %1, %2, %cst {dimension_numbers = #tpu.dot_dimension_numbers<[1], [0], [0], [1], [0, 0, 1, 1], [], []>} : vector<18x10xbf16>, vector<10x160xbf16>, vector<18x160xf32> -> vector<18x160xf32>
    %c0_3 = arith.constant 0 : index
    %c0_4 = arith.constant 0 : index
    %4 = vector.load %arg2[%c0_3, %c0_4] : memref<1x160xf32, #tpu.memory_space<vmem>>, vector<1x160xf32>
    %5 = vector.broadcast %4 : vector<1x160xf32> to vector<18x160xf32>
    %6 = arith.mulf %3, %5 : vector<18x160xf32>
    %c0_5 = arith.constant 0 : index
    %c0_6 = arith.constant 0 : index
    %7 = vector.load %arg3[%c0_5, %c0_6] : memref<1x160xf32, #tpu.memory_space<vmem>>, vector<1x160xf32>
    %8 = vector.broadcast %7 : vector<1x160xf32> to vector<18x160xf32>
    %9 = arith.addf %6, %8 : vector<18x160xf32>
    %10 = arith.mulf %9, %9 : vector<18x160xf32>
    %11 = arith.mulf %9, %10 : vector<18x160xf32>
    %cst_7 = arith.constant 4.471500e-02 : f32
    %12 = vector.broadcast %cst_7 : f32 to vector<18x160xf32>
    %13 = arith.mulf %12, %11 : vector<18x160xf32>
    %14 = arith.addf %9, %13 : vector<18x160xf32>
    %cst_8 = arith.constant 0.797884583 : f32
    %15 = vector.broadcast %cst_8 : f32 to vector<18x160xf32>
    %16 = arith.mulf %15, %14 : vector<18x160xf32>
    %17 = math.tanh %16 : vector<18x160xf32>
    %cst_9 = arith.constant 1.000000e+00 : f32
    %18 = vector.broadcast %cst_9 : f32 to vector<18x160xf32>
    %19 = arith.addf %18, %17 : vector<18x160xf32>
    %cst_10 = arith.constant 5.000000e-01 : f32
    %20 = vector.broadcast %cst_10 : f32 to vector<18x160xf32>
    %21 = arith.mulf %20, %19 : vector<18x160xf32>
    %22 = arith.mulf %9, %21 : vector<18x160xf32>
    %23 = arith.truncf %22 : vector<18x160xf32> to vector<18x160xbf16>
    %c0_11 = arith.constant 0 : index
    %c0_12 = arith.constant 0 : index
    %24 = vector.load %arg4[%c0_11, %c0_12] : memref<160x320xbf16, #tpu.memory_space<vmem>>, vector<160x320xbf16>
    %cst_13 = arith.constant dense<0.000000e+00> : vector<18x320xf32>
    %25 = tpu.matmul %23, %24, %cst_13 {dimension_numbers = #tpu.dot_dimension_numbers<[1], [0], [0], [1], [0, 0, 1, 1], [], []>} : vector<18x160xbf16>, vector<160x320xbf16>, vector<18x320xf32> -> vector<18x320xf32>
    %c0_14 = arith.constant 0 : index
    %c0_15 = arith.constant 0 : index
    %26 = vector.load %arg5[%c0_14, %c0_15] : memref<1x320xf32, #tpu.memory_space<vmem>>, vector<1x320xf32>
    %27 = vector.broadcast %26 : vector<1x320xf32> to vector<18x320xf32>
    %28 = arith.mulf %25, %27 : vector<18x320xf32>
    %c0_16 = arith.constant 0 : index
    %c0_17 = arith.constant 0 : index
    %29 = vector.load %arg6[%c0_16, %c0_17] : memref<1x320xf32, #tpu.memory_space<vmem>>, vector<1x320xf32>
    %30 = vector.broadcast %29 : vector<1x320xf32> to vector<18x320xf32>
    %31 = arith.addf %28, %30 : vector<18x320xf32>
    %32 = arith.mulf %31, %31 : vector<18x320xf32>
    %33 = arith.mulf %31, %32 : vector<18x320xf32>
    %cst_18 = arith.constant 4.471500e-02 : f32
    %34 = vector.broadcast %cst_18 : f32 to vector<18x320xf32>
    %35 = arith.mulf %34, %33 : vector<18x320xf32>
    %36 = arith.addf %31, %35 : vector<18x320xf32>
    %cst_19 = arith.constant 0.797884583 : f32
    %37 = vector.broadcast %cst_19 : f32 to vector<18x320xf32>
    %38 = arith.mulf %37, %36 : vector<18x320xf32>
    %39 = math.tanh %38 : vector<18x320xf32>
    %cst_20 = arith.constant 1.000000e+00 : f32
    %40 = vector.broadcast %cst_20 : f32 to vector<18x320xf32>
    %41 = arith.addf %40, %39 : vector<18x320xf32>
    %cst_21 = arith.constant 5.000000e-01 : f32
    %42 = vector.broadcast %cst_21 : f32 to vector<18x320xf32>
    %43 = arith.mulf %42, %41 : vector<18x320xf32>
    %44 = arith.mulf %31, %43 : vector<18x320xf32>
    %45 = arith.truncf %44 : vector<18x320xf32> to vector<18x320xbf16>
    %c0_22 = arith.constant 0 : index
    %c0_23 = arith.constant 0 : index
    %46 = vector.load %arg7[%c0_22, %c0_23] : memref<320x640xbf16, #tpu.memory_space<vmem>>, vector<320x640xbf16>
    %cst_24 = arith.constant dense<0.000000e+00> : vector<18x640xf32>
    %47 = tpu.matmul %45, %46, %cst_24 {dimension_numbers = #tpu.dot_dimension_numbers<[1], [0], [0], [1], [0, 0, 1, 1], [], []>} : vector<18x320xbf16>, vector<320x640xbf16>, vector<18x640xf32> -> vector<18x640xf32>
    %c0_25 = arith.constant 0 : index
    %c0_26 = arith.constant 0 : index
    %48 = vector.load %arg8[%c0_25, %c0_26] : memref<1x640xf32, #tpu.memory_space<vmem>>, vector<1x640xf32>
    %49 = vector.broadcast %48 : vector<1x640xf32> to vector<18x640xf32>
    %50 = arith.mulf %47, %49 : vector<18x640xf32>
    %c0_27 = arith.constant 0 : index
    %c0_28 = arith.constant 0 : index
    %51 = vector.load %arg9[%c0_27, %c0_28] : memref<1x640xf32, #tpu.memory_space<vmem>>, vector<1x640xf32>
    %52 = vector.broadcast %51 : vector<1x640xf32> to vector<18x640xf32>
    %53 = arith.addf %50, %52 : vector<18x640xf32>
    %54 = arith.mulf %53, %53 : vector<18x640xf32>
    %55 = arith.mulf %53, %54 : vector<18x640xf32>
    %cst_29 = arith.constant 4.471500e-02 : f32
    %56 = vector.broadcast %cst_29 : f32 to vector<18x640xf32>
    %57 = arith.mulf %56, %55 : vector<18x640xf32>
    %58 = arith.addf %53, %57 : vector<18x640xf32>
    %cst_30 = arith.constant 0.797884583 : f32
    %59 = vector.broadcast %cst_30 : f32 to vector<18x640xf32>
    %60 = arith.mulf %59, %58 : vector<18x640xf32>
    %61 = math.tanh %60 : vector<18x640xf32>
    %cst_31 = arith.constant 1.000000e+00 : f32
    %62 = vector.broadcast %cst_31 : f32 to vector<18x640xf32>
    %63 = arith.addf %62, %61 : vector<18x640xf32>
    %cst_32 = arith.constant 5.000000e-01 : f32
    %64 = vector.broadcast %cst_32 : f32 to vector<18x640xf32>
    %65 = arith.mulf %64, %63 : vector<18x640xf32>
    %66 = arith.mulf %53, %65 : vector<18x640xf32>
    %67 = arith.truncf %66 : vector<18x640xf32> to vector<18x640xbf16>
    %c0_33 = arith.constant 0 : index
    %c0_34 = arith.constant 0 : index
    %68 = vector.load %arg10[%c0_33, %c0_34] : memref<640x64xbf16, #tpu.memory_space<vmem>>, vector<640x64xbf16>
    %cst_35 = arith.constant dense<0.000000e+00> : vector<18x64xf32>
    %69 = tpu.matmul %67, %68, %cst_35 {dimension_numbers = #tpu.dot_dimension_numbers<[1], [0], [0], [1], [0, 0, 1, 1], [], []>} : vector<18x640xbf16>, vector<640x64xbf16>, vector<18x64xf32> -> vector<18x64xf32>
    %70 = arith.truncf %69 : vector<18x64xf32> to vector<18x64xbf16>
    %c0_36 = arith.constant 0 : index
    %c0_37 = arith.constant 0 : index
    %71 = vector.load %arg11[%c0_36, %c0_37] : memref<64x128xbf16, #tpu.memory_space<vmem>>, vector<64x128xbf16>
    %cst_38 = arith.constant dense<0.000000e+00> : vector<18x128xf32>
    %72 = tpu.matmul %70, %71, %cst_38 {dimension_numbers = #tpu.dot_dimension_numbers<[1], [0], [0], [1], [0, 0, 1, 1], [], []>} : vector<18x64xbf16>, vector<64x128xbf16>, vector<18x128xf32> -> vector<18x128xf32>
    %c0_39 = arith.constant 0 : index
    %c0_40 = arith.constant 0 : index
    %73 = vector.load %arg12[%c0_39, %c0_40] : memref<1x128xf32, #tpu.memory_space<vmem>>, vector<1x128xf32>
    %74 = vector.broadcast %73 : vector<1x128xf32> to vector<18x128xf32>
    %75 = arith.addf %72, %74 : vector<18x128xf32>
    %cst_41 = arith.constant -1.000000e+02 : f32
    %76 = vector.broadcast %cst_41 : f32 to vector<18x10xf32>
    %77 = arith.cmpf oeq, %0, %76 : vector<18x10xf32>
    %78 = arith.extui %77 : vector<18x10xi1> to vector<18x10xi32>
    %79 = arith.sitofp %78 : vector<18x10xi32> to vector<18x10xf32>
    %cst_42 = arith.constant dense<0.000000e+00> : vector<18xf32>
    %80 = vector.multi_reduction <add>, %79, %cst_42 [1] : vector<18x10xf32> to vector<18xf32>
    %81 = vector.shape_cast %80 : vector<18xf32> to vector<18x1xf32>
    %cst_43 = arith.constant 1.000000e+01 : f32
    %82 = vector.broadcast %cst_43 : f32 to vector<18x1xf32>
    %83 = arith.cmpf oeq, %81, %82 : vector<18x1xf32>
    %c0_44 = arith.constant 0 : index
    %c0_45 = arith.constant 0 : index
    %84 = vector.load %arg14[%c0_44, %c0_45] : memref<1x128xf32, #tpu.memory_space<vmem>>, vector<1x128xf32>
    %85 = vector.shape_cast %83 : vector<18x1xi1> to vector<18x1xi1>
    %86 = vector.broadcast %85 : vector<18x1xi1> to vector<18x128xi1>
    %87 = vector.shape_cast %84 : vector<1x128xf32> to vector<1x128xf32>
    %88 = vector.broadcast %87 : vector<1x128xf32> to vector<18x128xf32>
    %89 = arith.select %86, %88, %75 : vector<18x128xi1>, vector<18x128xf32>
    %c0_46 = arith.constant 0 : index
    %c0_47 = arith.constant 0 : index
    %90 = vector.load %arg16[%c0_46, %c0_47] : memref<18x1xf32, #tpu.memory_space<vmem>>, vector<18x1xf32>
    %cst_48 = arith.constant 5.000000e-01 : f32
    %91 = vector.broadcast %cst_48 : f32 to vector<18x1xf32>
    %92 = arith.cmpf ogt, %90, %91 : vector<18x1xf32>
    %c0_49 = arith.constant 0 : index
    %c0_50 = arith.constant 0 : index
    %93 = vector.load %arg13[%c0_49, %c0_50] : memref<1x128xf32, #tpu.memory_space<vmem>>, vector<1x128xf32>
    %94 = vector.shape_cast %92 : vector<18x1xi1> to vector<18x1xi1>
    %95 = vector.broadcast %94 : vector<18x1xi1> to vector<18x128xi1>
    %96 = vector.shape_cast %93 : vector<1x128xf32> to vector<1x128xf32>
    %97 = vector.broadcast %96 : vector<1x128xf32> to vector<18x128xf32>
    %98 = arith.select %95, %97, %89 : vector<18x128xi1>, vector<18x128xf32>
    %c0_51 = arith.constant 0 : index
    %c0_52 = arith.constant 0 : index
    %99 = vector.load %arg15[%c0_51, %c0_52] : memref<18x128xf32, #tpu.memory_space<vmem>>, vector<18x128xf32>
    %100 = arith.addf %98, %99 : vector<18x128xf32>
    %c0_53 = arith.constant 0 : index
    %c0_54 = arith.constant 0 : index
    %101 = vector.load %arg17[%c0_53, %c0_54] : memref<18x18xf32, #tpu.memory_space<vmem>>, vector<18x18xf32>
    %c0_55 = arith.constant 0 : index
    %c0_56 = arith.constant 0 : index
    %c0_57 = arith.constant 0 : index
    %102 = vector.load %arg19[%c0_55, %c0_56, %c0_57] : memref<2x1x128xf32, #tpu.memory_space<vmem>>, vector<1x1x128xf32>
    %103 = vector.shape_cast %102 : vector<1x1x128xf32> to vector<1x128xf32>
    %c0_58 = arith.constant 0 : index
    %c0_59 = arith.constant 0 : index
    %c0_60 = arith.constant 0 : index
    %104 = vector.load %arg20[%c0_58, %c0_59, %c0_60] : memref<2x1x128xf32, #tpu.memory_space<vmem>>, vector<1x1x128xf32>
    %105 = vector.shape_cast %104 : vector<1x1x128xf32> to vector<1x128xf32>
    %cst_61 = arith.constant dense<0.000000e+00> : vector<18xf32>
    %106 = vector.multi_reduction <add>, %100, %cst_61 [1] : vector<18x128xf32> to vector<18xf32>
    %107 = vector.shape_cast %106 : vector<18xf32> to vector<18x1xf32>
    %cst_62 = arith.constant 1.280000e+02 : f32
    %108 = vector.broadcast %cst_62 : f32 to vector<18x1xf32>
    %109 = arith.divf %107, %108 : vector<18x1xf32>
    %110 = vector.broadcast %109 : vector<18x1xf32> to vector<18x128xf32>
    %111 = arith.subf %100, %110 : vector<18x128xf32>
    %112 = arith.mulf %111, %111 : vector<18x128xf32>
    %cst_63 = arith.constant dense<0.000000e+00> : vector<18xf32>
    %113 = vector.multi_reduction <add>, %112, %cst_63 [1] : vector<18x128xf32> to vector<18xf32>
    %114 = vector.shape_cast %113 : vector<18xf32> to vector<18x1xf32>
    %cst_64 = arith.constant 1.280000e+02 : f32
    %115 = vector.broadcast %cst_64 : f32 to vector<18x1xf32>
    %116 = arith.divf %114, %115 : vector<18x1xf32>
    %cst_65 = arith.constant 9.99999974E-6 : f32
    %117 = vector.broadcast %cst_65 : f32 to vector<18x1xf32>
    %118 = arith.addf %116, %117 : vector<18x1xf32>
    %119 = math.rsqrt %118 : vector<18x1xf32>
    %120 = vector.broadcast %119 : vector<18x1xf32> to vector<18x128xf32>
    %121 = arith.mulf %111, %120 : vector<18x128xf32>
    %122 = vector.broadcast %103 : vector<1x128xf32> to vector<18x128xf32>
    %123 = arith.mulf %121, %122 : vector<18x128xf32>
    %124 = vector.broadcast %105 : vector<1x128xf32> to vector<18x128xf32>
    %125 = arith.addf %123, %124 : vector<18x128xf32>
    %126 = arith.truncf %125 : vector<18x128xf32> to vector<18x128xbf16>
    %c0_66 = arith.constant 0 : index
    %c0_67 = arith.constant 0 : index
    %c0_68 = arith.constant 0 : index
    %127 = vector.load %arg21[%c0_66, %c0_67, %c0_68] : memref<2x128x384xbf16, #tpu.memory_space<vmem>>, vector<1x128x384xbf16>
    %128 = vector.shape_cast %127 : vector<1x128x384xbf16> to vector<128x384xbf16>
    %cst_69 = arith.constant dense<0.000000e+00> : vector<18x384xf32>
    %129 = tpu.matmul %126, %128, %cst_69 {dimension_numbers = #tpu.dot_dimension_numbers<[1], [0], [0], [1], [0, 0, 1, 1], [], []>} : vector<18x128xbf16>, vector<128x384xbf16>, vector<18x384xf32> -> vector<18x384xf32>
    %c0_70 = arith.constant 0 : index
    %c0_71 = arith.constant 0 : index
    %c0_72 = arith.constant 0 : index
    %130 = vector.load %arg22[%c0_70, %c0_71, %c0_72] : memref<2x1x384xf32, #tpu.memory_space<vmem>>, vector<1x1x384xf32>
    %131 = vector.shape_cast %130 : vector<1x1x384xf32> to vector<1x384xf32>
    %132 = vector.broadcast %131 : vector<1x384xf32> to vector<18x384xf32>
    %133 = arith.addf %129, %132 : vector<18x384xf32>
    %134 = vector.extract_strided_slice %133 {offsets = [0, 0], sizes = [18, 128], strides = [1, 1]} : vector<18x384xf32> to vector<18x128xf32>
    %135 = vector.extract_strided_slice %133 {offsets = [0, 128], sizes = [18, 128], strides = [1, 1]} : vector<18x384xf32> to vector<18x128xf32>
    %136 = vector.extract_strided_slice %133 {offsets = [0, 256], sizes = [18, 128], strides = [1, 1]} : vector<18x384xf32> to vector<18x128xf32>
    %c0_73 = arith.constant 0 : index
    %c0_74 = arith.constant 0 : index
    %c0_75 = arith.constant 0 : index
    %137 = vector.load %arg23[%c0_73, %c0_74, %c0_75] : memref<2x128x128xbf16, #tpu.memory_space<vmem>>, vector<1x128x128xbf16>
    %138 = vector.shape_cast %137 : vector<1x128x128xbf16> to vector<128x128xbf16>
    %cst_76 = arith.constant 0.000000e+00 : f32
    %139 = vector.broadcast %cst_76 : f32 to vector<18x128xf32>
    %140 = vector.extract_strided_slice %134 {offsets = [0, 0], sizes = [18, 32], strides = [1, 1]} : vector<18x128xf32> to vector<18x32xf32>
    %141 = vector.extract_strided_slice %135 {offsets = [0, 0], sizes = [18, 32], strides = [1, 1]} : vector<18x128xf32> to vector<18x32xf32>
    "tpu.trace_start"() <{level = 10 : i32, message = "qd,kd->qk"}> : () -> ()
    %cst_77 = arith.constant dense<0.000000e+00> : vector<18x18xf32>
    %142 = tpu.matmul %140, %141, %cst_77 {dimension_numbers = #tpu.dot_dimension_numbers<[1], [1], [0], [0], [0, 0, 1, 0], [], []>} : vector<18x32xf32>, vector<18x32xf32>, vector<18x18xf32> -> vector<18x18xf32>
    "tpu.trace_stop"() : () -> ()
    %cst_78 = arith.constant 0.176776692 : f32
    %143 = vector.broadcast %cst_78 : f32 to vector<18x18xf32>
    %144 = arith.mulf %142, %143 : vector<18x18xf32>
    %145 = arith.addf %144, %101 : vector<18x18xf32>
    %cst_79 = arith.constant dense<0xFF800000> : vector<18xf32>
    %146 = vector.multi_reduction <maximumf>, %145, %cst_79 [1] : vector<18x18xf32> to vector<18xf32>
    %147 = vector.shape_cast %146 : vector<18xf32> to vector<18x1xf32>
    %148 = vector.broadcast %147 : vector<18x1xf32> to vector<18x18xf32>
    %149 = arith.subf %145, %148 : vector<18x18xf32>
    %150 = math.exp %149 : vector<18x18xf32>
    %cst_80 = arith.constant dense<0.000000e+00> : vector<18xf32>
    %151 = vector.multi_reduction <add>, %150, %cst_80 [1] : vector<18x18xf32> to vector<18xf32>
    %152 = vector.shape_cast %151 : vector<18xf32> to vector<18x1xf32>
    %153 = tpu.reciprocal %152 {approx = true} : vector<18x1xf32> -> vector<18x1xf32>
    %154 = vector.broadcast %153 : vector<18x1xf32> to vector<18x18xf32>
    %155 = arith.mulf %150, %154 : vector<18x18xf32>
    %156 = vector.extract_strided_slice %136 {offsets = [0, 0], sizes = [18, 32], strides = [1, 1]} : vector<18x128xf32> to vector<18x32xf32>
    %cst_81 = arith.constant dense<0.000000e+00> : vector<18x32xf32>
    %157 = tpu.matmul %155, %156, %cst_81 {dimension_numbers = #tpu.dot_dimension_numbers<[1], [0], [0], [1], [0, 0, 1, 1], [], []>} : vector<18x18xf32>, vector<18x32xf32>, vector<18x32xf32> -> vector<18x32xf32>
    %158 = arith.truncf %157 : vector<18x32xf32> to vector<18x32xbf16>
    %159 = vector.extract_strided_slice %138 {offsets = [0, 0], sizes = [32, 128], strides = [1, 1]} : vector<128x128xbf16> to vector<32x128xbf16>
    %cst_82 = arith.constant dense<0.000000e+00> : vector<18x128xf32>
    %160 = tpu.matmul %158, %159, %cst_82 {dimension_numbers = #tpu.dot_dimension_numbers<[1], [0], [0], [1], [0, 0, 1, 1], [], []>} : vector<18x32xbf16>, vector<32x128xbf16>, vector<18x128xf32> -> vector<18x128xf32>
    %161 = arith.addf %139, %160 : vector<18x128xf32>
    %162 = vector.extract_strided_slice %134 {offsets = [0, 32], sizes = [18, 32], strides = [1, 1]} : vector<18x128xf32> to vector<18x32xf32>
    %163 = vector.extract_strided_slice %135 {offsets = [0, 32], sizes = [18, 32], strides = [1, 1]} : vector<18x128xf32> to vector<18x32xf32>
    "tpu.trace_start"() <{level = 10 : i32, message = "qd,kd->qk"}> : () -> ()
    %cst_83 = arith.constant dense<0.000000e+00> : vector<18x18xf32>
    %164 = tpu.matmul %162, %163, %cst_83 {dimension_numbers = #tpu.dot_dimension_numbers<[1], [1], [0], [0], [0, 0, 1, 0], [], []>} : vector<18x32xf32>, vector<18x32xf32>, vector<18x18xf32> -> vector<18x18xf32>
    "tpu.trace_stop"() : () -> ()
    %cst_84 = arith.constant 0.176776692 : f32
    %165 = vector.broadcast %cst_84 : f32 to vector<18x18xf32>
    %166 = arith.mulf %164, %165 : vector<18x18xf32>
    %167 = arith.addf %166, %101 : vector<18x18xf32>
    %cst_85 = arith.constant dense<0xFF800000> : vector<18xf32>
    %168 = vector.multi_reduction <maximumf>, %167, %cst_85 [1] : vector<18x18xf32> to vector<18xf32>
    %169 = vector.shape_cast %168 : vector<18xf32> to vector<18x1xf32>
    %170 = vector.broadcast %169 : vector<18x1xf32> to vector<18x18xf32>
    %171 = arith.subf %167, %170 : vector<18x18xf32>
    %172 = math.exp %171 : vector<18x18xf32>
    %cst_86 = arith.constant dense<0.000000e+00> : vector<18xf32>
    %173 = vector.multi_reduction <add>, %172, %cst_86 [1] : vector<18x18xf32> to vector<18xf32>
    %174 = vector.shape_cast %173 : vector<18xf32> to vector<18x1xf32>
    %175 = tpu.reciprocal %174 {approx = true} : vector<18x1xf32> -> vector<18x1xf32>
    %176 = vector.broadcast %175 : vector<18x1xf32> to vector<18x18xf32>
    %177 = arith.mulf %172, %176 : vector<18x18xf32>
    %178 = vector.extract_strided_slice %136 {offsets = [0, 32], sizes = [18, 32], strides = [1, 1]} : vector<18x128xf32> to vector<18x32xf32>
    %cst_87 = arith.constant dense<0.000000e+00> : vector<18x32xf32>
    %179 = tpu.matmul %177, %178, %cst_87 {dimension_numbers = #tpu.dot_dimension_numbers<[1], [0], [0], [1], [0, 0, 1, 1], [], []>} : vector<18x18xf32>, vector<18x32xf32>, vector<18x32xf32> -> vector<18x32xf32>
    %180 = arith.truncf %179 : vector<18x32xf32> to vector<18x32xbf16>
    %181 = vector.extract_strided_slice %138 {offsets = [32, 0], sizes = [32, 128], strides = [1, 1]} : vector<128x128xbf16> to vector<32x128xbf16>
    %cst_88 = arith.constant dense<0.000000e+00> : vector<18x128xf32>
    %182 = tpu.matmul %180, %181, %cst_88 {dimension_numbers = #tpu.dot_dimension_numbers<[1], [0], [0], [1], [0, 0, 1, 1], [], []>} : vector<18x32xbf16>, vector<32x128xbf16>, vector<18x128xf32> -> vector<18x128xf32>
    %183 = arith.addf %161, %182 : vector<18x128xf32>
    %184 = vector.extract_strided_slice %134 {offsets = [0, 64], sizes = [18, 32], strides = [1, 1]} : vector<18x128xf32> to vector<18x32xf32>
    %185 = vector.extract_strided_slice %135 {offsets = [0, 64], sizes = [18, 32], strides = [1, 1]} : vector<18x128xf32> to vector<18x32xf32>
    "tpu.trace_start"() <{level = 10 : i32, message = "qd,kd->qk"}> : () -> ()
    %cst_89 = arith.constant dense<0.000000e+00> : vector<18x18xf32>
    %186 = tpu.matmul %184, %185, %cst_89 {dimension_numbers = #tpu.dot_dimension_numbers<[1], [1], [0], [0], [0, 0, 1, 0], [], []>} : vector<18x32xf32>, vector<18x32xf32>, vector<18x18xf32> -> vector<18x18xf32>
    "tpu.trace_stop"() : () -> ()
    %cst_90 = arith.constant 0.176776692 : f32
    %187 = vector.broadcast %cst_90 : f32 to vector<18x18xf32>
    %188 = arith.mulf %186, %187 : vector<18x18xf32>
    %189 = arith.addf %188, %101 : vector<18x18xf32>
    %cst_91 = arith.constant dense<0xFF800000> : vector<18xf32>
    %190 = vector.multi_reduction <maximumf>, %189, %cst_91 [1] : vector<18x18xf32> to vector<18xf32>
    %191 = vector.shape_cast %190 : vector<18xf32> to vector<18x1xf32>
    %192 = vector.broadcast %191 : vector<18x1xf32> to vector<18x18xf32>
    %193 = arith.subf %189, %192 : vector<18x18xf32>
    %194 = math.exp %193 : vector<18x18xf32>
    %cst_92 = arith.constant dense<0.000000e+00> : vector<18xf32>
    %195 = vector.multi_reduction <add>, %194, %cst_92 [1] : vector<18x18xf32> to vector<18xf32>
    %196 = vector.shape_cast %195 : vector<18xf32> to vector<18x1xf32>
    %197 = tpu.reciprocal %196 {approx = true} : vector<18x1xf32> -> vector<18x1xf32>
    %198 = vector.broadcast %197 : vector<18x1xf32> to vector<18x18xf32>
    %199 = arith.mulf %194, %198 : vector<18x18xf32>
    %200 = vector.extract_strided_slice %136 {offsets = [0, 64], sizes = [18, 32], strides = [1, 1]} : vector<18x128xf32> to vector<18x32xf32>
    %cst_93 = arith.constant dense<0.000000e+00> : vector<18x32xf32>
    %201 = tpu.matmul %199, %200, %cst_93 {dimension_numbers = #tpu.dot_dimension_numbers<[1], [0], [0], [1], [0, 0, 1, 1], [], []>} : vector<18x18xf32>, vector<18x32xf32>, vector<18x32xf32> -> vector<18x32xf32>
    %202 = arith.truncf %201 : vector<18x32xf32> to vector<18x32xbf16>
    %203 = vector.extract_strided_slice %138 {offsets = [64, 0], sizes = [32, 128], strides = [1, 1]} : vector<128x128xbf16> to vector<32x128xbf16>
    %cst_94 = arith.constant dense<0.000000e+00> : vector<18x128xf32>
    %204 = tpu.matmul %202, %203, %cst_94 {dimension_numbers = #tpu.dot_dimension_numbers<[1], [0], [0], [1], [0, 0, 1, 1], [], []>} : vector<18x32xbf16>, vector<32x128xbf16>, vector<18x128xf32> -> vector<18x128xf32>
    %205 = arith.addf %183, %204 : vector<18x128xf32>
    %206 = vector.extract_strided_slice %134 {offsets = [0, 96], sizes = [18, 32], strides = [1, 1]} : vector<18x128xf32> to vector<18x32xf32>
    %207 = vector.extract_strided_slice %135 {offsets = [0, 96], sizes = [18, 32], strides = [1, 1]} : vector<18x128xf32> to vector<18x32xf32>
    "tpu.trace_start"() <{level = 10 : i32, message = "qd,kd->qk"}> : () -> ()
    %cst_95 = arith.constant dense<0.000000e+00> : vector<18x18xf32>
    %208 = tpu.matmul %206, %207, %cst_95 {dimension_numbers = #tpu.dot_dimension_numbers<[1], [1], [0], [0], [0, 0, 1, 0], [], []>} : vector<18x32xf32>, vector<18x32xf32>, vector<18x18xf32> -> vector<18x18xf32>
    "tpu.trace_stop"() : () -> ()
    %cst_96 = arith.constant 0.176776692 : f32
    %209 = vector.broadcast %cst_96 : f32 to vector<18x18xf32>
    %210 = arith.mulf %208, %209 : vector<18x18xf32>
    %211 = arith.addf %210, %101 : vector<18x18xf32>
    %cst_97 = arith.constant dense<0xFF800000> : vector<18xf32>
    %212 = vector.multi_reduction <maximumf>, %211, %cst_97 [1] : vector<18x18xf32> to vector<18xf32>
    %213 = vector.shape_cast %212 : vector<18xf32> to vector<18x1xf32>
    %214 = vector.broadcast %213 : vector<18x1xf32> to vector<18x18xf32>
    %215 = arith.subf %211, %214 : vector<18x18xf32>
    %216 = math.exp %215 : vector<18x18xf32>
    %cst_98 = arith.constant dense<0.000000e+00> : vector<18xf32>
    %217 = vector.multi_reduction <add>, %216, %cst_98 [1] : vector<18x18xf32> to vector<18xf32>
    %218 = vector.shape_cast %217 : vector<18xf32> to vector<18x1xf32>
    %219 = tpu.reciprocal %218 {approx = true} : vector<18x1xf32> -> vector<18x1xf32>
    %220 = vector.broadcast %219 : vector<18x1xf32> to vector<18x18xf32>
    %221 = arith.mulf %216, %220 : vector<18x18xf32>
    %222 = vector.extract_strided_slice %136 {offsets = [0, 96], sizes = [18, 32], strides = [1, 1]} : vector<18x128xf32> to vector<18x32xf32>
    %cst_99 = arith.constant dense<0.000000e+00> : vector<18x32xf32>
    %223 = tpu.matmul %221, %222, %cst_99 {dimension_numbers = #tpu.dot_dimension_numbers<[1], [0], [0], [1], [0, 0, 1, 1], [], []>} : vector<18x18xf32>, vector<18x32xf32>, vector<18x32xf32> -> vector<18x32xf32>
    %224 = arith.truncf %223 : vector<18x32xf32> to vector<18x32xbf16>
    %225 = vector.extract_strided_slice %138 {offsets = [96, 0], sizes = [32, 128], strides = [1, 1]} : vector<128x128xbf16> to vector<32x128xbf16>
    %cst_100 = arith.constant dense<0.000000e+00> : vector<18x128xf32>
    %226 = tpu.matmul %224, %225, %cst_100 {dimension_numbers = #tpu.dot_dimension_numbers<[1], [0], [0], [1], [0, 0, 1, 1], [], []>} : vector<18x32xbf16>, vector<32x128xbf16>, vector<18x128xf32> -> vector<18x128xf32>
    %227 = arith.addf %205, %226 : vector<18x128xf32>
    %228 = arith.addf %100, %227 : vector<18x128xf32>
    %c0_101 = arith.constant 0 : index
    %c0_102 = arith.constant 0 : index
    %c0_103 = arith.constant 0 : index
    %229 = vector.load %arg24[%c0_101, %c0_102, %c0_103] : memref<2x1x128xf32, #tpu.memory_space<vmem>>, vector<1x1x128xf32>
    %230 = vector.shape_cast %229 : vector<1x1x128xf32> to vector<1x128xf32>
    %231 = vector.broadcast %230 : vector<1x128xf32> to vector<18x128xf32>
    %232 = arith.addf %228, %231 : vector<18x128xf32>
    %c0_104 = arith.constant 0 : index
    %c0_105 = arith.constant 0 : index
    %c0_106 = arith.constant 0 : index
    %233 = vector.load %arg25[%c0_104, %c0_105, %c0_106] : memref<2x1x128xf32, #tpu.memory_space<vmem>>, vector<1x1x128xf32>
    %234 = vector.shape_cast %233 : vector<1x1x128xf32> to vector<1x128xf32>
    %c0_107 = arith.constant 0 : index
    %c0_108 = arith.constant 0 : index
    %c0_109 = arith.constant 0 : index
    %235 = vector.load %arg26[%c0_107, %c0_108, %c0_109] : memref<2x1x128xf32, #tpu.memory_space<vmem>>, vector<1x1x128xf32>
    %236 = vector.shape_cast %235 : vector<1x1x128xf32> to vector<1x128xf32>
    %cst_110 = arith.constant dense<0.000000e+00> : vector<18xf32>
    %237 = vector.multi_reduction <add>, %232, %cst_110 [1] : vector<18x128xf32> to vector<18xf32>
    %238 = vector.shape_cast %237 : vector<18xf32> to vector<18x1xf32>
    %cst_111 = arith.constant 1.280000e+02 : f32
    %239 = vector.broadcast %cst_111 : f32 to vector<18x1xf32>
    %240 = arith.divf %238, %239 : vector<18x1xf32>
    %241 = vector.broadcast %240 : vector<18x1xf32> to vector<18x128xf32>
    %242 = arith.subf %232, %241 : vector<18x128xf32>
    %243 = arith.mulf %242, %242 : vector<18x128xf32>
    %cst_112 = arith.constant dense<0.000000e+00> : vector<18xf32>
    %244 = vector.multi_reduction <add>, %243, %cst_112 [1] : vector<18x128xf32> to vector<18xf32>
    %245 = vector.shape_cast %244 : vector<18xf32> to vector<18x1xf32>
    %cst_113 = arith.constant 1.280000e+02 : f32
    %246 = vector.broadcast %cst_113 : f32 to vector<18x1xf32>
    %247 = arith.divf %245, %246 : vector<18x1xf32>
    %cst_114 = arith.constant 9.99999974E-6 : f32
    %248 = vector.broadcast %cst_114 : f32 to vector<18x1xf32>
    %249 = arith.addf %247, %248 : vector<18x1xf32>
    %250 = math.rsqrt %249 : vector<18x1xf32>
    %251 = vector.broadcast %250 : vector<18x1xf32> to vector<18x128xf32>
    %252 = arith.mulf %242, %251 : vector<18x128xf32>
    %253 = vector.broadcast %234 : vector<1x128xf32> to vector<18x128xf32>
    %254 = arith.mulf %252, %253 : vector<18x128xf32>
    %255 = vector.broadcast %236 : vector<1x128xf32> to vector<18x128xf32>
    %256 = arith.addf %254, %255 : vector<18x128xf32>
    %c0_115 = arith.constant 0 : index
    %c0_116 = arith.constant 0 : index
    %c0_117 = arith.constant 0 : index
    %257 = vector.load %arg27[%c0_115, %c0_116, %c0_117] : memref<2x128x4xf32, #tpu.memory_space<vmem>>, vector<1x128x4xf32>
    %258 = vector.shape_cast %257 : vector<1x128x4xf32> to vector<128x4xf32>
    %cst_118 = arith.constant dense<0.000000e+00> : vector<18x4xf32>
    %259 = tpu.matmul %256, %258, %cst_118 {dimension_numbers = #tpu.dot_dimension_numbers<[1], [0], [0], [1], [0, 0, 1, 1], [], []>} : vector<18x128xf32>, vector<128x4xf32>, vector<18x4xf32> -> vector<18x4xf32>
    %c0_119 = arith.constant 0 : index
    %c0_120 = arith.constant 0 : index
    %c0_121 = arith.constant 0 : index
    %260 = vector.load %arg28[%c0_119, %c0_120, %c0_121] : memref<2x1x4xf32, #tpu.memory_space<vmem>>, vector<1x1x4xf32>
    %261 = vector.shape_cast %260 : vector<1x1x4xf32> to vector<1x4xf32>
    %262 = vector.broadcast %261 : vector<1x4xf32> to vector<18x4xf32>
    %263 = arith.addf %259, %262 : vector<18x4xf32>
    %264 = tpu.iota {dimensions = array<i32: 1>} : vector<1x4xi32>
    %cst_122 = arith.constant 0.000000e+00 : f32
    %265 = vector.broadcast %cst_122 : f32 to vector<18x4xf32>
    %266 = vector.extract_strided_slice %263 {offsets = [0, 0], sizes = [18, 1], strides = [1, 1]} : vector<18x4xf32> to vector<18x1xf32>
    %267 = vector.broadcast %266 : vector<18x1xf32> to vector<18x4xf32>
    %268 = arith.cmpf ogt, %263, %267 : vector<18x4xf32>
    %269 = arith.extui %268 : vector<18x4xi1> to vector<18x4xi32>
    %270 = arith.sitofp %269 : vector<18x4xi32> to vector<18x4xf32>
    %cst_123 = arith.constant dense<0.000000e+00> : vector<18xf32>
    %271 = vector.multi_reduction <add>, %270, %cst_123 [1] : vector<18x4xf32> to vector<18xf32>
    %272 = vector.shape_cast %271 : vector<18xf32> to vector<18x1xf32>
    %273 = vector.broadcast %266 : vector<18x1xf32> to vector<18x4xf32>
    %274 = arith.cmpf oeq, %263, %273 : vector<18x4xf32>
    %c0_i32 = arith.constant 0 : i32
    %275 = vector.broadcast %c0_i32 : i32 to vector<1x4xi32>
    %276 = arith.cmpi slt, %264, %275 : vector<1x4xi32>
    %277 = vector.broadcast %276 : vector<1x4xi1> to vector<18x4xi1>
    %278 = arith.andi %274, %277 : vector<18x4xi1>
    %279 = arith.extui %278 : vector<18x4xi1> to vector<18x4xi32>
    %280 = arith.sitofp %279 : vector<18x4xi32> to vector<18x4xf32>
    %cst_124 = arith.constant dense<0.000000e+00> : vector<18xf32>
    %281 = vector.multi_reduction <add>, %280, %cst_124 [1] : vector<18x4xf32> to vector<18xf32>
    %282 = vector.shape_cast %281 : vector<18xf32> to vector<18x1xf32>
    %283 = arith.addf %272, %282 : vector<18x1xf32>
    %cst_125 = arith.constant 2.000000e+00 : f32
    %284 = vector.broadcast %cst_125 : f32 to vector<18x1xf32>
    %285 = arith.cmpf olt, %283, %284 : vector<18x1xf32>
    %286 = arith.extui %285 : vector<18x1xi1> to vector<18x1xi32>
    %287 = arith.sitofp %286 : vector<18x1xi32> to vector<18x1xf32>
    %c0_i32_126 = arith.constant 0 : i32
    %288 = vector.broadcast %c0_i32_126 : i32 to vector<1x4xi32>
    %289 = arith.cmpi eq, %264, %288 : vector<1x4xi32>
    %290 = arith.extui %289 : vector<1x4xi1> to vector<1x4xi32>
    %291 = arith.sitofp %290 : vector<1x4xi32> to vector<1x4xf32>
    %292 = vector.broadcast %287 : vector<18x1xf32> to vector<18x4xf32>
    %293 = vector.broadcast %291 : vector<1x4xf32> to vector<18x4xf32>
    %294 = arith.mulf %292, %293 : vector<18x4xf32>
    %295 = arith.addf %265, %294 : vector<18x4xf32>
    %296 = vector.extract_strided_slice %263 {offsets = [0, 1], sizes = [18, 1], strides = [1, 1]} : vector<18x4xf32> to vector<18x1xf32>
    %297 = vector.broadcast %296 : vector<18x1xf32> to vector<18x4xf32>
    %298 = arith.cmpf ogt, %263, %297 : vector<18x4xf32>
    %299 = arith.extui %298 : vector<18x4xi1> to vector<18x4xi32>
    %300 = arith.sitofp %299 : vector<18x4xi32> to vector<18x4xf32>
    %cst_127 = arith.constant dense<0.000000e+00> : vector<18xf32>
    %301 = vector.multi_reduction <add>, %300, %cst_127 [1] : vector<18x4xf32> to vector<18xf32>
    %302 = vector.shape_cast %301 : vector<18xf32> to vector<18x1xf32>
    %303 = vector.broadcast %296 : vector<18x1xf32> to vector<18x4xf32>
    %304 = arith.cmpf oeq, %263, %303 : vector<18x4xf32>
    %c1_i32 = arith.constant 1 : i32
    %305 = vector.broadcast %c1_i32 : i32 to vector<1x4xi32>
    %306 = arith.cmpi slt, %264, %305 : vector<1x4xi32>
    %307 = vector.broadcast %306 : vector<1x4xi1> to vector<18x4xi1>
    %308 = arith.andi %304, %307 : vector<18x4xi1>
    %309 = arith.extui %308 : vector<18x4xi1> to vector<18x4xi32>
    %310 = arith.sitofp %309 : vector<18x4xi32> to vector<18x4xf32>
    %cst_128 = arith.constant dense<0.000000e+00> : vector<18xf32>
    %311 = vector.multi_reduction <add>, %310, %cst_128 [1] : vector<18x4xf32> to vector<18xf32>
    %312 = vector.shape_cast %311 : vector<18xf32> to vector<18x1xf32>
    %313 = arith.addf %302, %312 : vector<18x1xf32>
    %cst_129 = arith.constant 2.000000e+00 : f32
    %314 = vector.broadcast %cst_129 : f32 to vector<18x1xf32>
    %315 = arith.cmpf olt, %313, %314 : vector<18x1xf32>
    %316 = arith.extui %315 : vector<18x1xi1> to vector<18x1xi32>
    %317 = arith.sitofp %316 : vector<18x1xi32> to vector<18x1xf32>
    %c1_i32_130 = arith.constant 1 : i32
    %318 = vector.broadcast %c1_i32_130 : i32 to vector<1x4xi32>
    %319 = arith.cmpi eq, %264, %318 : vector<1x4xi32>
    %320 = arith.extui %319 : vector<1x4xi1> to vector<1x4xi32>
    %321 = arith.sitofp %320 : vector<1x4xi32> to vector<1x4xf32>
    %322 = vector.broadcast %317 : vector<18x1xf32> to vector<18x4xf32>
    %323 = vector.broadcast %321 : vector<1x4xf32> to vector<18x4xf32>
    %324 = arith.mulf %322, %323 : vector<18x4xf32>
    %325 = arith.addf %295, %324 : vector<18x4xf32>
    %326 = vector.extract_strided_slice %263 {offsets = [0, 2], sizes = [18, 1], strides = [1, 1]} : vector<18x4xf32> to vector<18x1xf32>
    %327 = vector.broadcast %326 : vector<18x1xf32> to vector<18x4xf32>
    %328 = arith.cmpf ogt, %263, %327 : vector<18x4xf32>
    %329 = arith.extui %328 : vector<18x4xi1> to vector<18x4xi32>
    %330 = arith.sitofp %329 : vector<18x4xi32> to vector<18x4xf32>
    %cst_131 = arith.constant dense<0.000000e+00> : vector<18xf32>
    %331 = vector.multi_reduction <add>, %330, %cst_131 [1] : vector<18x4xf32> to vector<18xf32>
    %332 = vector.shape_cast %331 : vector<18xf32> to vector<18x1xf32>
    %333 = vector.broadcast %326 : vector<18x1xf32> to vector<18x4xf32>
    %334 = arith.cmpf oeq, %263, %333 : vector<18x4xf32>
    %c2_i32 = arith.constant 2 : i32
    %335 = vector.broadcast %c2_i32 : i32 to vector<1x4xi32>
    %336 = arith.cmpi slt, %264, %335 : vector<1x4xi32>
    %337 = vector.broadcast %336 : vector<1x4xi1> to vector<18x4xi1>
    %338 = arith.andi %334, %337 : vector<18x4xi1>
    %339 = arith.extui %338 : vector<18x4xi1> to vector<18x4xi32>
    %340 = arith.sitofp %339 : vector<18x4xi32> to vector<18x4xf32>
    %cst_132 = arith.constant dense<0.000000e+00> : vector<18xf32>
    %341 = vector.multi_reduction <add>, %340, %cst_132 [1] : vector<18x4xf32> to vector<18xf32>
    %342 = vector.shape_cast %341 : vector<18xf32> to vector<18x1xf32>
    %343 = arith.addf %332, %342 : vector<18x1xf32>
    %cst_133 = arith.constant 2.000000e+00 : f32
    %344 = vector.broadcast %cst_133 : f32 to vector<18x1xf32>
    %345 = arith.cmpf olt, %343, %344 : vector<18x1xf32>
    %346 = arith.extui %345 : vector<18x1xi1> to vector<18x1xi32>
    %347 = arith.sitofp %346 : vector<18x1xi32> to vector<18x1xf32>
    %c2_i32_134 = arith.constant 2 : i32
    %348 = vector.broadcast %c2_i32_134 : i32 to vector<1x4xi32>
    %349 = arith.cmpi eq, %264, %348 : vector<1x4xi32>
    %350 = arith.extui %349 : vector<1x4xi1> to vector<1x4xi32>
    %351 = arith.sitofp %350 : vector<1x4xi32> to vector<1x4xf32>
    %352 = vector.broadcast %347 : vector<18x1xf32> to vector<18x4xf32>
    %353 = vector.broadcast %351 : vector<1x4xf32> to vector<18x4xf32>
    %354 = arith.mulf %352, %353 : vector<18x4xf32>
    %355 = arith.addf %325, %354 : vector<18x4xf32>
    %356 = vector.extract_strided_slice %263 {offsets = [0, 3], sizes = [18, 1], strides = [1, 1]} : vector<18x4xf32> to vector<18x1xf32>
    %357 = vector.broadcast %356 : vector<18x1xf32> to vector<18x4xf32>
    %358 = arith.cmpf ogt, %263, %357 : vector<18x4xf32>
    %359 = arith.extui %358 : vector<18x4xi1> to vector<18x4xi32>
    %360 = arith.sitofp %359 : vector<18x4xi32> to vector<18x4xf32>
    %cst_135 = arith.constant dense<0.000000e+00> : vector<18xf32>
    %361 = vector.multi_reduction <add>, %360, %cst_135 [1] : vector<18x4xf32> to vector<18xf32>
    %362 = vector.shape_cast %361 : vector<18xf32> to vector<18x1xf32>
    %363 = vector.broadcast %356 : vector<18x1xf32> to vector<18x4xf32>
    %364 = arith.cmpf oeq, %263, %363 : vector<18x4xf32>
    %c3_i32 = arith.constant 3 : i32
    %365 = vector.broadcast %c3_i32 : i32 to vector<1x4xi32>
    %366 = arith.cmpi slt, %264, %365 : vector<1x4xi32>
    %367 = vector.broadcast %366 : vector<1x4xi1> to vector<18x4xi1>
    %368 = arith.andi %364, %367 : vector<18x4xi1>
    %369 = arith.extui %368 : vector<18x4xi1> to vector<18x4xi32>
    %370 = arith.sitofp %369 : vector<18x4xi32> to vector<18x4xf32>
    %cst_136 = arith.constant dense<0.000000e+00> : vector<18xf32>
    %371 = vector.multi_reduction <add>, %370, %cst_136 [1] : vector<18x4xf32> to vector<18xf32>
    %372 = vector.shape_cast %371 : vector<18xf32> to vector<18x1xf32>
    %373 = arith.addf %362, %372 : vector<18x1xf32>
    %cst_137 = arith.constant 2.000000e+00 : f32
    %374 = vector.broadcast %cst_137 : f32 to vector<18x1xf32>
    %375 = arith.cmpf olt, %373, %374 : vector<18x1xf32>
    %376 = arith.extui %375 : vector<18x1xi1> to vector<18x1xi32>
    %377 = arith.sitofp %376 : vector<18x1xi32> to vector<18x1xf32>
    %c3_i32_138 = arith.constant 3 : i32
    %378 = vector.broadcast %c3_i32_138 : i32 to vector<1x4xi32>
    %379 = arith.cmpi eq, %264, %378 : vector<1x4xi32>
    %380 = arith.extui %379 : vector<1x4xi1> to vector<1x4xi32>
    %381 = arith.sitofp %380 : vector<1x4xi32> to vector<1x4xf32>
    %382 = vector.broadcast %377 : vector<18x1xf32> to vector<18x4xf32>
    %383 = vector.broadcast %381 : vector<1x4xf32> to vector<18x4xf32>
    %384 = arith.mulf %382, %383 : vector<18x4xf32>
    %385 = arith.addf %355, %384 : vector<18x4xf32>
    %cst_139 = arith.constant 5.000000e-01 : f32
    %386 = vector.broadcast %cst_139 : f32 to vector<18x4xf32>
    %387 = arith.cmpf ogt, %385, %386 : vector<18x4xf32>
    %cst_140 = arith.constant -1.000000e+30 : f32
    %388 = vector.broadcast %cst_140 : f32 to vector<18x4xf32>
    %389 = arith.select %387, %263, %388 : vector<18x4xi1>, vector<18x4xf32>
    %cst_141 = arith.constant dense<0xFF800000> : vector<18xf32>
    %390 = vector.multi_reduction <maximumf>, %389, %cst_141 [1] : vector<18x4xf32> to vector<18xf32>
    %391 = vector.shape_cast %390 : vector<18xf32> to vector<18x1xf32>
    %392 = vector.broadcast %391 : vector<18x1xf32> to vector<18x4xf32>
    %393 = arith.subf %389, %392 : vector<18x4xf32>
    %394 = math.exp %393 : vector<18x4xf32>
    %cst_142 = arith.constant dense<0.000000e+00> : vector<18xf32>
    %395 = vector.multi_reduction <add>, %394, %cst_142 [1] : vector<18x4xf32> to vector<18xf32>
    %396 = vector.shape_cast %395 : vector<18xf32> to vector<18x1xf32>
    %397 = tpu.reciprocal %396 {approx = true} : vector<18x1xf32> -> vector<18x1xf32>
    %398 = vector.broadcast %397 : vector<18x1xf32> to vector<18x4xf32>
    %399 = arith.mulf %394, %398 : vector<18x4xf32>
    %400 = arith.truncf %256 : vector<18x128xf32> to vector<18x128xbf16>
    %c0_143 = arith.constant 0 : index
    %c0_144 = arith.constant 0 : index
    %c0_145 = arith.constant 0 : index
    %401 = vector.load %arg29[%c0_143, %c0_144, %c0_145] : memref<2x128x512xbf16, #tpu.memory_space<vmem>>, vector<1x128x512xbf16>
    %402 = vector.shape_cast %401 : vector<1x128x512xbf16> to vector<128x512xbf16>
    %cst_146 = arith.constant dense<0.000000e+00> : vector<18x512xf32>
    %403 = tpu.matmul %400, %402, %cst_146 {dimension_numbers = #tpu.dot_dimension_numbers<[1], [0], [0], [1], [0, 0, 1, 1], [], []>} : vector<18x128xbf16>, vector<128x512xbf16>, vector<18x512xf32> -> vector<18x512xf32>
    %c0_147 = arith.constant 0 : index
    %c0_148 = arith.constant 0 : index
    %c0_149 = arith.constant 0 : index
    %404 = vector.load %arg30[%c0_147, %c0_148, %c0_149] : memref<2x1x512xf32, #tpu.memory_space<vmem>>, vector<1x1x512xf32>
    %405 = vector.shape_cast %404 : vector<1x1x512xf32> to vector<1x512xf32>
    %406 = vector.broadcast %405 : vector<1x512xf32> to vector<18x512xf32>
    %407 = arith.addf %403, %406 : vector<18x512xf32>
    %408 = arith.mulf %407, %407 : vector<18x512xf32>
    %409 = arith.mulf %407, %408 : vector<18x512xf32>
    %cst_150 = arith.constant 4.471500e-02 : f32
    %410 = vector.broadcast %cst_150 : f32 to vector<18x512xf32>
    %411 = arith.mulf %410, %409 : vector<18x512xf32>
    %412 = arith.addf %407, %411 : vector<18x512xf32>
    %cst_151 = arith.constant 0.797884583 : f32
    %413 = vector.broadcast %cst_151 : f32 to vector<18x512xf32>
    %414 = arith.mulf %413, %412 : vector<18x512xf32>
    %415 = math.tanh %414 : vector<18x512xf32>
    %cst_152 = arith.constant 1.000000e+00 : f32
    %416 = vector.broadcast %cst_152 : f32 to vector<18x512xf32>
    %417 = arith.addf %416, %415 : vector<18x512xf32>
    %cst_153 = arith.constant 5.000000e-01 : f32
    %418 = vector.broadcast %cst_153 : f32 to vector<18x512xf32>
    %419 = arith.mulf %418, %417 : vector<18x512xf32>
    %420 = arith.mulf %407, %419 : vector<18x512xf32>
    %421 = vector.extract_strided_slice %420 {offsets = [0, 0], sizes = [18, 128], strides = [1, 1]} : vector<18x512xf32> to vector<18x128xf32>
    %422 = vector.extract_strided_slice %399 {offsets = [0, 0], sizes = [18, 1], strides = [1, 1]} : vector<18x4xf32> to vector<18x1xf32>
    %423 = vector.broadcast %422 : vector<18x1xf32> to vector<18x128xf32>
    %424 = arith.mulf %421, %423 : vector<18x128xf32>
    %425 = vector.extract_strided_slice %420 {offsets = [0, 128], sizes = [18, 128], strides = [1, 1]} : vector<18x512xf32> to vector<18x128xf32>
    %426 = vector.extract_strided_slice %399 {offsets = [0, 1], sizes = [18, 1], strides = [1, 1]} : vector<18x4xf32> to vector<18x1xf32>
    %427 = vector.broadcast %426 : vector<18x1xf32> to vector<18x128xf32>
    %428 = arith.mulf %425, %427 : vector<18x128xf32>
    %429 = vector.extract_strided_slice %420 {offsets = [0, 256], sizes = [18, 128], strides = [1, 1]} : vector<18x512xf32> to vector<18x128xf32>
    %430 = vector.extract_strided_slice %399 {offsets = [0, 2], sizes = [18, 1], strides = [1, 1]} : vector<18x4xf32> to vector<18x1xf32>
    %431 = vector.broadcast %430 : vector<18x1xf32> to vector<18x128xf32>
    %432 = arith.mulf %429, %431 : vector<18x128xf32>
    %433 = vector.extract_strided_slice %420 {offsets = [0, 384], sizes = [18, 128], strides = [1, 1]} : vector<18x512xf32> to vector<18x128xf32>
    %434 = vector.extract_strided_slice %399 {offsets = [0, 3], sizes = [18, 1], strides = [1, 1]} : vector<18x4xf32> to vector<18x1xf32>
    %435 = vector.broadcast %434 : vector<18x1xf32> to vector<18x128xf32>
    %436 = arith.mulf %433, %435 : vector<18x128xf32>
    %437 = tpu.concatenate %424, %428, %432, %436 in 1 : vector<18x128xf32>, vector<18x128xf32>, vector<18x128xf32>, vector<18x128xf32> -> vector<18x512xf32>
    %438 = arith.truncf %437 : vector<18x512xf32> to vector<18x512xbf16>
    %c0_154 = arith.constant 0 : index
    %c0_155 = arith.constant 0 : index
    %c0_156 = arith.constant 0 : index
    %439 = vector.load %arg31[%c0_154, %c0_155, %c0_156] : memref<2x512x128xbf16, #tpu.memory_space<vmem>>, vector<1x512x128xbf16>
    %440 = vector.shape_cast %439 : vector<1x512x128xbf16> to vector<512x128xbf16>
    %cst_157 = arith.constant dense<0.000000e+00> : vector<18x128xf32>
    %441 = tpu.matmul %438, %440, %cst_157 {dimension_numbers = #tpu.dot_dimension_numbers<[1], [0], [0], [1], [0, 0, 1, 1], [], []>} : vector<18x512xbf16>, vector<512x128xbf16>, vector<18x128xf32> -> vector<18x128xf32>
    %c0_158 = arith.constant 0 : index
    %c0_159 = arith.constant 0 : index
    %c0_160 = arith.constant 0 : index
    %442 = vector.load %arg32[%c0_158, %c0_159, %c0_160] : memref<2x4x128xf32, #tpu.memory_space<vmem>>, vector<1x4x128xf32>
    %443 = vector.shape_cast %442 : vector<1x4x128xf32> to vector<4x128xf32>
    %cst_161 = arith.constant dense<0.000000e+00> : vector<18x128xf32>
    %444 = tpu.matmul %399, %443, %cst_161 {dimension_numbers = #tpu.dot_dimension_numbers<[1], [0], [0], [1], [0, 0, 1, 1], [], []>} : vector<18x4xf32>, vector<4x128xf32>, vector<18x128xf32> -> vector<18x128xf32>
    %445 = arith.addf %441, %444 : vector<18x128xf32>
    %446 = arith.addf %232, %445 : vector<18x128xf32>
    %c1 = arith.constant 1 : index
    %c0_162 = arith.constant 0 : index
    %c0_163 = arith.constant 0 : index
    %447 = vector.load %arg19[%c1, %c0_162, %c0_163] : memref<2x1x128xf32, #tpu.memory_space<vmem>>, vector<1x1x128xf32>
    %448 = vector.shape_cast %447 : vector<1x1x128xf32> to vector<1x128xf32>
    %c1_164 = arith.constant 1 : index
    %c0_165 = arith.constant 0 : index
    %c0_166 = arith.constant 0 : index
    %449 = vector.load %arg20[%c1_164, %c0_165, %c0_166] : memref<2x1x128xf32, #tpu.memory_space<vmem>>, vector<1x1x128xf32>
    %450 = vector.shape_cast %449 : vector<1x1x128xf32> to vector<1x128xf32>
    %cst_167 = arith.constant dense<0.000000e+00> : vector<18xf32>
    %451 = vector.multi_reduction <add>, %446, %cst_167 [1] : vector<18x128xf32> to vector<18xf32>
    %452 = vector.shape_cast %451 : vector<18xf32> to vector<18x1xf32>
    %cst_168 = arith.constant 1.280000e+02 : f32
    %453 = vector.broadcast %cst_168 : f32 to vector<18x1xf32>
    %454 = arith.divf %452, %453 : vector<18x1xf32>
    %455 = vector.broadcast %454 : vector<18x1xf32> to vector<18x128xf32>
    %456 = arith.subf %446, %455 : vector<18x128xf32>
    %457 = arith.mulf %456, %456 : vector<18x128xf32>
    %cst_169 = arith.constant dense<0.000000e+00> : vector<18xf32>
    %458 = vector.multi_reduction <add>, %457, %cst_169 [1] : vector<18x128xf32> to vector<18xf32>
    %459 = vector.shape_cast %458 : vector<18xf32> to vector<18x1xf32>
    %cst_170 = arith.constant 1.280000e+02 : f32
    %460 = vector.broadcast %cst_170 : f32 to vector<18x1xf32>
    %461 = arith.divf %459, %460 : vector<18x1xf32>
    %cst_171 = arith.constant 9.99999974E-6 : f32
    %462 = vector.broadcast %cst_171 : f32 to vector<18x1xf32>
    %463 = arith.addf %461, %462 : vector<18x1xf32>
    %464 = math.rsqrt %463 : vector<18x1xf32>
    %465 = vector.broadcast %464 : vector<18x1xf32> to vector<18x128xf32>
    %466 = arith.mulf %456, %465 : vector<18x128xf32>
    %467 = vector.broadcast %448 : vector<1x128xf32> to vector<18x128xf32>
    %468 = arith.mulf %466, %467 : vector<18x128xf32>
    %469 = vector.broadcast %450 : vector<1x128xf32> to vector<18x128xf32>
    %470 = arith.addf %468, %469 : vector<18x128xf32>
    %471 = arith.truncf %470 : vector<18x128xf32> to vector<18x128xbf16>
    %c1_172 = arith.constant 1 : index
    %c0_173 = arith.constant 0 : index
    %c0_174 = arith.constant 0 : index
    %472 = vector.load %arg21[%c1_172, %c0_173, %c0_174] : memref<2x128x384xbf16, #tpu.memory_space<vmem>>, vector<1x128x384xbf16>
    %473 = vector.shape_cast %472 : vector<1x128x384xbf16> to vector<128x384xbf16>
    %cst_175 = arith.constant dense<0.000000e+00> : vector<18x384xf32>
    %474 = tpu.matmul %471, %473, %cst_175 {dimension_numbers = #tpu.dot_dimension_numbers<[1], [0], [0], [1], [0, 0, 1, 1], [], []>} : vector<18x128xbf16>, vector<128x384xbf16>, vector<18x384xf32> -> vector<18x384xf32>
    %c1_176 = arith.constant 1 : index
    %c0_177 = arith.constant 0 : index
    %c0_178 = arith.constant 0 : index
    %475 = vector.load %arg22[%c1_176, %c0_177, %c0_178] : memref<2x1x384xf32, #tpu.memory_space<vmem>>, vector<1x1x384xf32>
    %476 = vector.shape_cast %475 : vector<1x1x384xf32> to vector<1x384xf32>
    %477 = vector.broadcast %476 : vector<1x384xf32> to vector<18x384xf32>
    %478 = arith.addf %474, %477 : vector<18x384xf32>
    %479 = vector.extract_strided_slice %478 {offsets = [0, 0], sizes = [18, 128], strides = [1, 1]} : vector<18x384xf32> to vector<18x128xf32>
    %480 = vector.extract_strided_slice %478 {offsets = [0, 128], sizes = [18, 128], strides = [1, 1]} : vector<18x384xf32> to vector<18x128xf32>
    %481 = vector.extract_strided_slice %478 {offsets = [0, 256], sizes = [18, 128], strides = [1, 1]} : vector<18x384xf32> to vector<18x128xf32>
    %c1_179 = arith.constant 1 : index
    %c0_180 = arith.constant 0 : index
    %c0_181 = arith.constant 0 : index
    %482 = vector.load %arg23[%c1_179, %c0_180, %c0_181] : memref<2x128x128xbf16, #tpu.memory_space<vmem>>, vector<1x128x128xbf16>
    %483 = vector.shape_cast %482 : vector<1x128x128xbf16> to vector<128x128xbf16>
    %cst_182 = arith.constant 0.000000e+00 : f32
    %484 = vector.broadcast %cst_182 : f32 to vector<18x128xf32>
    %485 = vector.extract_strided_slice %479 {offsets = [0, 0], sizes = [18, 32], strides = [1, 1]} : vector<18x128xf32> to vector<18x32xf32>
    %486 = vector.extract_strided_slice %480 {offsets = [0, 0], sizes = [18, 32], strides = [1, 1]} : vector<18x128xf32> to vector<18x32xf32>
    "tpu.trace_start"() <{level = 10 : i32, message = "qd,kd->qk"}> : () -> ()
    %cst_183 = arith.constant dense<0.000000e+00> : vector<18x18xf32>
    %487 = tpu.matmul %485, %486, %cst_183 {dimension_numbers = #tpu.dot_dimension_numbers<[1], [1], [0], [0], [0, 0, 1, 0], [], []>} : vector<18x32xf32>, vector<18x32xf32>, vector<18x18xf32> -> vector<18x18xf32>
    "tpu.trace_stop"() : () -> ()
    %cst_184 = arith.constant 0.176776692 : f32
    %488 = vector.broadcast %cst_184 : f32 to vector<18x18xf32>
    %489 = arith.mulf %487, %488 : vector<18x18xf32>
    %490 = arith.addf %489, %101 : vector<18x18xf32>
    %cst_185 = arith.constant dense<0xFF800000> : vector<18xf32>
    %491 = vector.multi_reduction <maximumf>, %490, %cst_185 [1] : vector<18x18xf32> to vector<18xf32>
    %492 = vector.shape_cast %491 : vector<18xf32> to vector<18x1xf32>
    %493 = vector.broadcast %492 : vector<18x1xf32> to vector<18x18xf32>
    %494 = arith.subf %490, %493 : vector<18x18xf32>
    %495 = math.exp %494 : vector<18x18xf32>
    %cst_186 = arith.constant dense<0.000000e+00> : vector<18xf32>
    %496 = vector.multi_reduction <add>, %495, %cst_186 [1] : vector<18x18xf32> to vector<18xf32>
    %497 = vector.shape_cast %496 : vector<18xf32> to vector<18x1xf32>
    %498 = tpu.reciprocal %497 {approx = true} : vector<18x1xf32> -> vector<18x1xf32>
    %499 = vector.broadcast %498 : vector<18x1xf32> to vector<18x18xf32>
    %500 = arith.mulf %495, %499 : vector<18x18xf32>
    %501 = vector.extract_strided_slice %481 {offsets = [0, 0], sizes = [18, 32], strides = [1, 1]} : vector<18x128xf32> to vector<18x32xf32>
    %cst_187 = arith.constant dense<0.000000e+00> : vector<18x32xf32>
    %502 = tpu.matmul %500, %501, %cst_187 {dimension_numbers = #tpu.dot_dimension_numbers<[1], [0], [0], [1], [0, 0, 1, 1], [], []>} : vector<18x18xf32>, vector<18x32xf32>, vector<18x32xf32> -> vector<18x32xf32>
    %503 = arith.truncf %502 : vector<18x32xf32> to vector<18x32xbf16>
    %504 = vector.extract_strided_slice %483 {offsets = [0, 0], sizes = [32, 128], strides = [1, 1]} : vector<128x128xbf16> to vector<32x128xbf16>
    %cst_188 = arith.constant dense<0.000000e+00> : vector<18x128xf32>
    %505 = tpu.matmul %503, %504, %cst_188 {dimension_numbers = #tpu.dot_dimension_numbers<[1], [0], [0], [1], [0, 0, 1, 1], [], []>} : vector<18x32xbf16>, vector<32x128xbf16>, vector<18x128xf32> -> vector<18x128xf32>
    %506 = arith.addf %484, %505 : vector<18x128xf32>
    %507 = vector.extract_strided_slice %479 {offsets = [0, 32], sizes = [18, 32], strides = [1, 1]} : vector<18x128xf32> to vector<18x32xf32>
    %508 = vector.extract_strided_slice %480 {offsets = [0, 32], sizes = [18, 32], strides = [1, 1]} : vector<18x128xf32> to vector<18x32xf32>
    "tpu.trace_start"() <{level = 10 : i32, message = "qd,kd->qk"}> : () -> ()
    %cst_189 = arith.constant dense<0.000000e+00> : vector<18x18xf32>
    %509 = tpu.matmul %507, %508, %cst_189 {dimension_numbers = #tpu.dot_dimension_numbers<[1], [1], [0], [0], [0, 0, 1, 0], [], []>} : vector<18x32xf32>, vector<18x32xf32>, vector<18x18xf32> -> vector<18x18xf32>
    "tpu.trace_stop"() : () -> ()
    %cst_190 = arith.constant 0.176776692 : f32
    %510 = vector.broadcast %cst_190 : f32 to vector<18x18xf32>
    %511 = arith.mulf %509, %510 : vector<18x18xf32>
    %512 = arith.addf %511, %101 : vector<18x18xf32>
    %cst_191 = arith.constant dense<0xFF800000> : vector<18xf32>
    %513 = vector.multi_reduction <maximumf>, %512, %cst_191 [1] : vector<18x18xf32> to vector<18xf32>
    %514 = vector.shape_cast %513 : vector<18xf32> to vector<18x1xf32>
    %515 = vector.broadcast %514 : vector<18x1xf32> to vector<18x18xf32>
    %516 = arith.subf %512, %515 : vector<18x18xf32>
    %517 = math.exp %516 : vector<18x18xf32>
    %cst_192 = arith.constant dense<0.000000e+00> : vector<18xf32>
    %518 = vector.multi_reduction <add>, %517, %cst_192 [1] : vector<18x18xf32> to vector<18xf32>
    %519 = vector.shape_cast %518 : vector<18xf32> to vector<18x1xf32>
    %520 = tpu.reciprocal %519 {approx = true} : vector<18x1xf32> -> vector<18x1xf32>
    %521 = vector.broadcast %520 : vector<18x1xf32> to vector<18x18xf32>
    %522 = arith.mulf %517, %521 : vector<18x18xf32>
    %523 = vector.extract_strided_slice %481 {offsets = [0, 32], sizes = [18, 32], strides = [1, 1]} : vector<18x128xf32> to vector<18x32xf32>
    %cst_193 = arith.constant dense<0.000000e+00> : vector<18x32xf32>
    %524 = tpu.matmul %522, %523, %cst_193 {dimension_numbers = #tpu.dot_dimension_numbers<[1], [0], [0], [1], [0, 0, 1, 1], [], []>} : vector<18x18xf32>, vector<18x32xf32>, vector<18x32xf32> -> vector<18x32xf32>
    %525 = arith.truncf %524 : vector<18x32xf32> to vector<18x32xbf16>
    %526 = vector.extract_strided_slice %483 {offsets = [32, 0], sizes = [32, 128], strides = [1, 1]} : vector<128x128xbf16> to vector<32x128xbf16>
    %cst_194 = arith.constant dense<0.000000e+00> : vector<18x128xf32>
    %527 = tpu.matmul %525, %526, %cst_194 {dimension_numbers = #tpu.dot_dimension_numbers<[1], [0], [0], [1], [0, 0, 1, 1], [], []>} : vector<18x32xbf16>, vector<32x128xbf16>, vector<18x128xf32> -> vector<18x128xf32>
    %528 = arith.addf %506, %527 : vector<18x128xf32>
    %529 = vector.extract_strided_slice %479 {offsets = [0, 64], sizes = [18, 32], strides = [1, 1]} : vector<18x128xf32> to vector<18x32xf32>
    %530 = vector.extract_strided_slice %480 {offsets = [0, 64], sizes = [18, 32], strides = [1, 1]} : vector<18x128xf32> to vector<18x32xf32>
    "tpu.trace_start"() <{level = 10 : i32, message = "qd,kd->qk"}> : () -> ()
    %cst_195 = arith.constant dense<0.000000e+00> : vector<18x18xf32>
    %531 = tpu.matmul %529, %530, %cst_195 {dimension_numbers = #tpu.dot_dimension_numbers<[1], [1], [0], [0], [0, 0, 1, 0], [], []>} : vector<18x32xf32>, vector<18x32xf32>, vector<18x18xf32> -> vector<18x18xf32>
    "tpu.trace_stop"() : () -> ()
    %cst_196 = arith.constant 0.176776692 : f32
    %532 = vector.broadcast %cst_196 : f32 to vector<18x18xf32>
    %533 = arith.mulf %531, %532 : vector<18x18xf32>
    %534 = arith.addf %533, %101 : vector<18x18xf32>
    %cst_197 = arith.constant dense<0xFF800000> : vector<18xf32>
    %535 = vector.multi_reduction <maximumf>, %534, %cst_197 [1] : vector<18x18xf32> to vector<18xf32>
    %536 = vector.shape_cast %535 : vector<18xf32> to vector<18x1xf32>
    %537 = vector.broadcast %536 : vector<18x1xf32> to vector<18x18xf32>
    %538 = arith.subf %534, %537 : vector<18x18xf32>
    %539 = math.exp %538 : vector<18x18xf32>
    %cst_198 = arith.constant dense<0.000000e+00> : vector<18xf32>
    %540 = vector.multi_reduction <add>, %539, %cst_198 [1] : vector<18x18xf32> to vector<18xf32>
    %541 = vector.shape_cast %540 : vector<18xf32> to vector<18x1xf32>
    %542 = tpu.reciprocal %541 {approx = true} : vector<18x1xf32> -> vector<18x1xf32>
    %543 = vector.broadcast %542 : vector<18x1xf32> to vector<18x18xf32>
    %544 = arith.mulf %539, %543 : vector<18x18xf32>
    %545 = vector.extract_strided_slice %481 {offsets = [0, 64], sizes = [18, 32], strides = [1, 1]} : vector<18x128xf32> to vector<18x32xf32>
    %cst_199 = arith.constant dense<0.000000e+00> : vector<18x32xf32>
    %546 = tpu.matmul %544, %545, %cst_199 {dimension_numbers = #tpu.dot_dimension_numbers<[1], [0], [0], [1], [0, 0, 1, 1], [], []>} : vector<18x18xf32>, vector<18x32xf32>, vector<18x32xf32> -> vector<18x32xf32>
    %547 = arith.truncf %546 : vector<18x32xf32> to vector<18x32xbf16>
    %548 = vector.extract_strided_slice %483 {offsets = [64, 0], sizes = [32, 128], strides = [1, 1]} : vector<128x128xbf16> to vector<32x128xbf16>
    %cst_200 = arith.constant dense<0.000000e+00> : vector<18x128xf32>
    %549 = tpu.matmul %547, %548, %cst_200 {dimension_numbers = #tpu.dot_dimension_numbers<[1], [0], [0], [1], [0, 0, 1, 1], [], []>} : vector<18x32xbf16>, vector<32x128xbf16>, vector<18x128xf32> -> vector<18x128xf32>
    %550 = arith.addf %528, %549 : vector<18x128xf32>
    %551 = vector.extract_strided_slice %479 {offsets = [0, 96], sizes = [18, 32], strides = [1, 1]} : vector<18x128xf32> to vector<18x32xf32>
    %552 = vector.extract_strided_slice %480 {offsets = [0, 96], sizes = [18, 32], strides = [1, 1]} : vector<18x128xf32> to vector<18x32xf32>
    "tpu.trace_start"() <{level = 10 : i32, message = "qd,kd->qk"}> : () -> ()
    %cst_201 = arith.constant dense<0.000000e+00> : vector<18x18xf32>
    %553 = tpu.matmul %551, %552, %cst_201 {dimension_numbers = #tpu.dot_dimension_numbers<[1], [1], [0], [0], [0, 0, 1, 0], [], []>} : vector<18x32xf32>, vector<18x32xf32>, vector<18x18xf32> -> vector<18x18xf32>
    "tpu.trace_stop"() : () -> ()
    %cst_202 = arith.constant 0.176776692 : f32
    %554 = vector.broadcast %cst_202 : f32 to vector<18x18xf32>
    %555 = arith.mulf %553, %554 : vector<18x18xf32>
    %556 = arith.addf %555, %101 : vector<18x18xf32>
    %cst_203 = arith.constant dense<0xFF800000> : vector<18xf32>
    %557 = vector.multi_reduction <maximumf>, %556, %cst_203 [1] : vector<18x18xf32> to vector<18xf32>
    %558 = vector.shape_cast %557 : vector<18xf32> to vector<18x1xf32>
    %559 = vector.broadcast %558 : vector<18x1xf32> to vector<18x18xf32>
    %560 = arith.subf %556, %559 : vector<18x18xf32>
    %561 = math.exp %560 : vector<18x18xf32>
    %cst_204 = arith.constant dense<0.000000e+00> : vector<18xf32>
    %562 = vector.multi_reduction <add>, %561, %cst_204 [1] : vector<18x18xf32> to vector<18xf32>
    %563 = vector.shape_cast %562 : vector<18xf32> to vector<18x1xf32>
    %564 = tpu.reciprocal %563 {approx = true} : vector<18x1xf32> -> vector<18x1xf32>
    %565 = vector.broadcast %564 : vector<18x1xf32> to vector<18x18xf32>
    %566 = arith.mulf %561, %565 : vector<18x18xf32>
    %567 = vector.extract_strided_slice %481 {offsets = [0, 96], sizes = [18, 32], strides = [1, 1]} : vector<18x128xf32> to vector<18x32xf32>
    %cst_205 = arith.constant dense<0.000000e+00> : vector<18x32xf32>
    %568 = tpu.matmul %566, %567, %cst_205 {dimension_numbers = #tpu.dot_dimension_numbers<[1], [0], [0], [1], [0, 0, 1, 1], [], []>} : vector<18x18xf32>, vector<18x32xf32>, vector<18x32xf32> -> vector<18x32xf32>
    %569 = arith.truncf %568 : vector<18x32xf32> to vector<18x32xbf16>
    %570 = vector.extract_strided_slice %483 {offsets = [96, 0], sizes = [32, 128], strides = [1, 1]} : vector<128x128xbf16> to vector<32x128xbf16>
    %cst_206 = arith.constant dense<0.000000e+00> : vector<18x128xf32>
    %571 = tpu.matmul %569, %570, %cst_206 {dimension_numbers = #tpu.dot_dimension_numbers<[1], [0], [0], [1], [0, 0, 1, 1], [], []>} : vector<18x32xbf16>, vector<32x128xbf16>, vector<18x128xf32> -> vector<18x128xf32>
    %572 = arith.addf %550, %571 : vector<18x128xf32>
    %573 = arith.addf %446, %572 : vector<18x128xf32>
    %c1_207 = arith.constant 1 : index
    %c0_208 = arith.constant 0 : index
    %c0_209 = arith.constant 0 : index
    %574 = vector.load %arg24[%c1_207, %c0_208, %c0_209] : memref<2x1x128xf32, #tpu.memory_space<vmem>>, vector<1x1x128xf32>
    %575 = vector.shape_cast %574 : vector<1x1x128xf32> to vector<1x128xf32>
    %576 = vector.broadcast %575 : vector<1x128xf32> to vector<18x128xf32>
    %577 = arith.addf %573, %576 : vector<18x128xf32>
    %c1_210 = arith.constant 1 : index
    %c0_211 = arith.constant 0 : index
    %c0_212 = arith.constant 0 : index
    %578 = vector.load %arg25[%c1_210, %c0_211, %c0_212] : memref<2x1x128xf32, #tpu.memory_space<vmem>>, vector<1x1x128xf32>
    %579 = vector.shape_cast %578 : vector<1x1x128xf32> to vector<1x128xf32>
    %c1_213 = arith.constant 1 : index
    %c0_214 = arith.constant 0 : index
    %c0_215 = arith.constant 0 : index
    %580 = vector.load %arg26[%c1_213, %c0_214, %c0_215] : memref<2x1x128xf32, #tpu.memory_space<vmem>>, vector<1x1x128xf32>
    %581 = vector.shape_cast %580 : vector<1x1x128xf32> to vector<1x128xf32>
    %cst_216 = arith.constant dense<0.000000e+00> : vector<18xf32>
    %582 = vector.multi_reduction <add>, %577, %cst_216 [1] : vector<18x128xf32> to vector<18xf32>
    %583 = vector.shape_cast %582 : vector<18xf32> to vector<18x1xf32>
    %cst_217 = arith.constant 1.280000e+02 : f32
    %584 = vector.broadcast %cst_217 : f32 to vector<18x1xf32>
    %585 = arith.divf %583, %584 : vector<18x1xf32>
    %586 = vector.broadcast %585 : vector<18x1xf32> to vector<18x128xf32>
    %587 = arith.subf %577, %586 : vector<18x128xf32>
    %588 = arith.mulf %587, %587 : vector<18x128xf32>
    %cst_218 = arith.constant dense<0.000000e+00> : vector<18xf32>
    %589 = vector.multi_reduction <add>, %588, %cst_218 [1] : vector<18x128xf32> to vector<18xf32>
    %590 = vector.shape_cast %589 : vector<18xf32> to vector<18x1xf32>
    %cst_219 = arith.constant 1.280000e+02 : f32
    %591 = vector.broadcast %cst_219 : f32 to vector<18x1xf32>
    %592 = arith.divf %590, %591 : vector<18x1xf32>
    %cst_220 = arith.constant 9.99999974E-6 : f32
    %593 = vector.broadcast %cst_220 : f32 to vector<18x1xf32>
    %594 = arith.addf %592, %593 : vector<18x1xf32>
    %595 = math.rsqrt %594 : vector<18x1xf32>
    %596 = vector.broadcast %595 : vector<18x1xf32> to vector<18x128xf32>
    %597 = arith.mulf %587, %596 : vector<18x128xf32>
    %598 = vector.broadcast %579 : vector<1x128xf32> to vector<18x128xf32>
    %599 = arith.mulf %597, %598 : vector<18x128xf32>
    %600 = vector.broadcast %581 : vector<1x128xf32> to vector<18x128xf32>
    %601 = arith.addf %599, %600 : vector<18x128xf32>
    %c1_221 = arith.constant 1 : index
    %c0_222 = arith.constant 0 : index
    %c0_223 = arith.constant 0 : index
    %602 = vector.load %arg27[%c1_221, %c0_222, %c0_223] : memref<2x128x4xf32, #tpu.memory_space<vmem>>, vector<1x128x4xf32>
    %603 = vector.shape_cast %602 : vector<1x128x4xf32> to vector<128x4xf32>
    %cst_224 = arith.constant dense<0.000000e+00> : vector<18x4xf32>
    %604 = tpu.matmul %601, %603, %cst_224 {dimension_numbers = #tpu.dot_dimension_numbers<[1], [0], [0], [1], [0, 0, 1, 1], [], []>} : vector<18x128xf32>, vector<128x4xf32>, vector<18x4xf32> -> vector<18x4xf32>
    %c1_225 = arith.constant 1 : index
    %c0_226 = arith.constant 0 : index
    %c0_227 = arith.constant 0 : index
    %605 = vector.load %arg28[%c1_225, %c0_226, %c0_227] : memref<2x1x4xf32, #tpu.memory_space<vmem>>, vector<1x1x4xf32>
    %606 = vector.shape_cast %605 : vector<1x1x4xf32> to vector<1x4xf32>
    %607 = vector.broadcast %606 : vector<1x4xf32> to vector<18x4xf32>
    %608 = arith.addf %604, %607 : vector<18x4xf32>
    %609 = tpu.iota {dimensions = array<i32: 1>} : vector<1x4xi32>
    %cst_228 = arith.constant 0.000000e+00 : f32
    %610 = vector.broadcast %cst_228 : f32 to vector<18x4xf32>
    %611 = vector.extract_strided_slice %608 {offsets = [0, 0], sizes = [18, 1], strides = [1, 1]} : vector<18x4xf32> to vector<18x1xf32>
    %612 = vector.broadcast %611 : vector<18x1xf32> to vector<18x4xf32>
    %613 = arith.cmpf ogt, %608, %612 : vector<18x4xf32>
    %614 = arith.extui %613 : vector<18x4xi1> to vector<18x4xi32>
    %615 = arith.sitofp %614 : vector<18x4xi32> to vector<18x4xf32>
    %cst_229 = arith.constant dense<0.000000e+00> : vector<18xf32>
    %616 = vector.multi_reduction <add>, %615, %cst_229 [1] : vector<18x4xf32> to vector<18xf32>
    %617 = vector.shape_cast %616 : vector<18xf32> to vector<18x1xf32>
    %618 = vector.broadcast %611 : vector<18x1xf32> to vector<18x4xf32>
    %619 = arith.cmpf oeq, %608, %618 : vector<18x4xf32>
    %c0_i32_230 = arith.constant 0 : i32
    %620 = vector.broadcast %c0_i32_230 : i32 to vector<1x4xi32>
    %621 = arith.cmpi slt, %609, %620 : vector<1x4xi32>
    %622 = vector.broadcast %621 : vector<1x4xi1> to vector<18x4xi1>
    %623 = arith.andi %619, %622 : vector<18x4xi1>
    %624 = arith.extui %623 : vector<18x4xi1> to vector<18x4xi32>
    %625 = arith.sitofp %624 : vector<18x4xi32> to vector<18x4xf32>
    %cst_231 = arith.constant dense<0.000000e+00> : vector<18xf32>
    %626 = vector.multi_reduction <add>, %625, %cst_231 [1] : vector<18x4xf32> to vector<18xf32>
    %627 = vector.shape_cast %626 : vector<18xf32> to vector<18x1xf32>
    %628 = arith.addf %617, %627 : vector<18x1xf32>
    %cst_232 = arith.constant 2.000000e+00 : f32
    %629 = vector.broadcast %cst_232 : f32 to vector<18x1xf32>
    %630 = arith.cmpf olt, %628, %629 : vector<18x1xf32>
    %631 = arith.extui %630 : vector<18x1xi1> to vector<18x1xi32>
    %632 = arith.sitofp %631 : vector<18x1xi32> to vector<18x1xf32>
    %c0_i32_233 = arith.constant 0 : i32
    %633 = vector.broadcast %c0_i32_233 : i32 to vector<1x4xi32>
    %634 = arith.cmpi eq, %609, %633 : vector<1x4xi32>
    %635 = arith.extui %634 : vector<1x4xi1> to vector<1x4xi32>
    %636 = arith.sitofp %635 : vector<1x4xi32> to vector<1x4xf32>
    %637 = vector.broadcast %632 : vector<18x1xf32> to vector<18x4xf32>
    %638 = vector.broadcast %636 : vector<1x4xf32> to vector<18x4xf32>
    %639 = arith.mulf %637, %638 : vector<18x4xf32>
    %640 = arith.addf %610, %639 : vector<18x4xf32>
    %641 = vector.extract_strided_slice %608 {offsets = [0, 1], sizes = [18, 1], strides = [1, 1]} : vector<18x4xf32> to vector<18x1xf32>
    %642 = vector.broadcast %641 : vector<18x1xf32> to vector<18x4xf32>
    %643 = arith.cmpf ogt, %608, %642 : vector<18x4xf32>
    %644 = arith.extui %643 : vector<18x4xi1> to vector<18x4xi32>
    %645 = arith.sitofp %644 : vector<18x4xi32> to vector<18x4xf32>
    %cst_234 = arith.constant dense<0.000000e+00> : vector<18xf32>
    %646 = vector.multi_reduction <add>, %645, %cst_234 [1] : vector<18x4xf32> to vector<18xf32>
    %647 = vector.shape_cast %646 : vector<18xf32> to vector<18x1xf32>
    %648 = vector.broadcast %641 : vector<18x1xf32> to vector<18x4xf32>
    %649 = arith.cmpf oeq, %608, %648 : vector<18x4xf32>
    %c1_i32_235 = arith.constant 1 : i32
    %650 = vector.broadcast %c1_i32_235 : i32 to vector<1x4xi32>
    %651 = arith.cmpi slt, %609, %650 : vector<1x4xi32>
    %652 = vector.broadcast %651 : vector<1x4xi1> to vector<18x4xi1>
    %653 = arith.andi %649, %652 : vector<18x4xi1>
    %654 = arith.extui %653 : vector<18x4xi1> to vector<18x4xi32>
    %655 = arith.sitofp %654 : vector<18x4xi32> to vector<18x4xf32>
    %cst_236 = arith.constant dense<0.000000e+00> : vector<18xf32>
    %656 = vector.multi_reduction <add>, %655, %cst_236 [1] : vector<18x4xf32> to vector<18xf32>
    %657 = vector.shape_cast %656 : vector<18xf32> to vector<18x1xf32>
    %658 = arith.addf %647, %657 : vector<18x1xf32>
    %cst_237 = arith.constant 2.000000e+00 : f32
    %659 = vector.broadcast %cst_237 : f32 to vector<18x1xf32>
    %660 = arith.cmpf olt, %658, %659 : vector<18x1xf32>
    %661 = arith.extui %660 : vector<18x1xi1> to vector<18x1xi32>
    %662 = arith.sitofp %661 : vector<18x1xi32> to vector<18x1xf32>
    %c1_i32_238 = arith.constant 1 : i32
    %663 = vector.broadcast %c1_i32_238 : i32 to vector<1x4xi32>
    %664 = arith.cmpi eq, %609, %663 : vector<1x4xi32>
    %665 = arith.extui %664 : vector<1x4xi1> to vector<1x4xi32>
    %666 = arith.sitofp %665 : vector<1x4xi32> to vector<1x4xf32>
    %667 = vector.broadcast %662 : vector<18x1xf32> to vector<18x4xf32>
    %668 = vector.broadcast %666 : vector<1x4xf32> to vector<18x4xf32>
    %669 = arith.mulf %667, %668 : vector<18x4xf32>
    %670 = arith.addf %640, %669 : vector<18x4xf32>
    %671 = vector.extract_strided_slice %608 {offsets = [0, 2], sizes = [18, 1], strides = [1, 1]} : vector<18x4xf32> to vector<18x1xf32>
    %672 = vector.broadcast %671 : vector<18x1xf32> to vector<18x4xf32>
    %673 = arith.cmpf ogt, %608, %672 : vector<18x4xf32>
    %674 = arith.extui %673 : vector<18x4xi1> to vector<18x4xi32>
    %675 = arith.sitofp %674 : vector<18x4xi32> to vector<18x4xf32>
    %cst_239 = arith.constant dense<0.000000e+00> : vector<18xf32>
    %676 = vector.multi_reduction <add>, %675, %cst_239 [1] : vector<18x4xf32> to vector<18xf32>
    %677 = vector.shape_cast %676 : vector<18xf32> to vector<18x1xf32>
    %678 = vector.broadcast %671 : vector<18x1xf32> to vector<18x4xf32>
    %679 = arith.cmpf oeq, %608, %678 : vector<18x4xf32>
    %c2_i32_240 = arith.constant 2 : i32
    %680 = vector.broadcast %c2_i32_240 : i32 to vector<1x4xi32>
    %681 = arith.cmpi slt, %609, %680 : vector<1x4xi32>
    %682 = vector.broadcast %681 : vector<1x4xi1> to vector<18x4xi1>
    %683 = arith.andi %679, %682 : vector<18x4xi1>
    %684 = arith.extui %683 : vector<18x4xi1> to vector<18x4xi32>
    %685 = arith.sitofp %684 : vector<18x4xi32> to vector<18x4xf32>
    %cst_241 = arith.constant dense<0.000000e+00> : vector<18xf32>
    %686 = vector.multi_reduction <add>, %685, %cst_241 [1] : vector<18x4xf32> to vector<18xf32>
    %687 = vector.shape_cast %686 : vector<18xf32> to vector<18x1xf32>
    %688 = arith.addf %677, %687 : vector<18x1xf32>
    %cst_242 = arith.constant 2.000000e+00 : f32
    %689 = vector.broadcast %cst_242 : f32 to vector<18x1xf32>
    %690 = arith.cmpf olt, %688, %689 : vector<18x1xf32>
    %691 = arith.extui %690 : vector<18x1xi1> to vector<18x1xi32>
    %692 = arith.sitofp %691 : vector<18x1xi32> to vector<18x1xf32>
    %c2_i32_243 = arith.constant 2 : i32
    %693 = vector.broadcast %c2_i32_243 : i32 to vector<1x4xi32>
    %694 = arith.cmpi eq, %609, %693 : vector<1x4xi32>
    %695 = arith.extui %694 : vector<1x4xi1> to vector<1x4xi32>
    %696 = arith.sitofp %695 : vector<1x4xi32> to vector<1x4xf32>
    %697 = vector.broadcast %692 : vector<18x1xf32> to vector<18x4xf32>
    %698 = vector.broadcast %696 : vector<1x4xf32> to vector<18x4xf32>
    %699 = arith.mulf %697, %698 : vector<18x4xf32>
    %700 = arith.addf %670, %699 : vector<18x4xf32>
    %701 = vector.extract_strided_slice %608 {offsets = [0, 3], sizes = [18, 1], strides = [1, 1]} : vector<18x4xf32> to vector<18x1xf32>
    %702 = vector.broadcast %701 : vector<18x1xf32> to vector<18x4xf32>
    %703 = arith.cmpf ogt, %608, %702 : vector<18x4xf32>
    %704 = arith.extui %703 : vector<18x4xi1> to vector<18x4xi32>
    %705 = arith.sitofp %704 : vector<18x4xi32> to vector<18x4xf32>
    %cst_244 = arith.constant dense<0.000000e+00> : vector<18xf32>
    %706 = vector.multi_reduction <add>, %705, %cst_244 [1] : vector<18x4xf32> to vector<18xf32>
    %707 = vector.shape_cast %706 : vector<18xf32> to vector<18x1xf32>
    %708 = vector.broadcast %701 : vector<18x1xf32> to vector<18x4xf32>
    %709 = arith.cmpf oeq, %608, %708 : vector<18x4xf32>
    %c3_i32_245 = arith.constant 3 : i32
    %710 = vector.broadcast %c3_i32_245 : i32 to vector<1x4xi32>
    %711 = arith.cmpi slt, %609, %710 : vector<1x4xi32>
    %712 = vector.broadcast %711 : vector<1x4xi1> to vector<18x4xi1>
    %713 = arith.andi %709, %712 : vector<18x4xi1>
    %714 = arith.extui %713 : vector<18x4xi1> to vector<18x4xi32>
    %715 = arith.sitofp %714 : vector<18x4xi32> to vector<18x4xf32>
    %cst_246 = arith.constant dense<0.000000e+00> : vector<18xf32>
    %716 = vector.multi_reduction <add>, %715, %cst_246 [1] : vector<18x4xf32> to vector<18xf32>
    %717 = vector.shape_cast %716 : vector<18xf32> to vector<18x1xf32>
    %718 = arith.addf %707, %717 : vector<18x1xf32>
    %cst_247 = arith.constant 2.000000e+00 : f32
    %719 = vector.broadcast %cst_247 : f32 to vector<18x1xf32>
    %720 = arith.cmpf olt, %718, %719 : vector<18x1xf32>
    %721 = arith.extui %720 : vector<18x1xi1> to vector<18x1xi32>
    %722 = arith.sitofp %721 : vector<18x1xi32> to vector<18x1xf32>
    %c3_i32_248 = arith.constant 3 : i32
    %723 = vector.broadcast %c3_i32_248 : i32 to vector<1x4xi32>
    %724 = arith.cmpi eq, %609, %723 : vector<1x4xi32>
    %725 = arith.extui %724 : vector<1x4xi1> to vector<1x4xi32>
    %726 = arith.sitofp %725 : vector<1x4xi32> to vector<1x4xf32>
    %727 = vector.broadcast %722 : vector<18x1xf32> to vector<18x4xf32>
    %728 = vector.broadcast %726 : vector<1x4xf32> to vector<18x4xf32>
    %729 = arith.mulf %727, %728 : vector<18x4xf32>
    %730 = arith.addf %700, %729 : vector<18x4xf32>
    %cst_249 = arith.constant 5.000000e-01 : f32
    %731 = vector.broadcast %cst_249 : f32 to vector<18x4xf32>
    %732 = arith.cmpf ogt, %730, %731 : vector<18x4xf32>
    %cst_250 = arith.constant -1.000000e+30 : f32
    %733 = vector.broadcast %cst_250 : f32 to vector<18x4xf32>
    %734 = arith.select %732, %608, %733 : vector<18x4xi1>, vector<18x4xf32>
    %cst_251 = arith.constant dense<0xFF800000> : vector<18xf32>
    %735 = vector.multi_reduction <maximumf>, %734, %cst_251 [1] : vector<18x4xf32> to vector<18xf32>
    %736 = vector.shape_cast %735 : vector<18xf32> to vector<18x1xf32>
    %737 = vector.broadcast %736 : vector<18x1xf32> to vector<18x4xf32>
    %738 = arith.subf %734, %737 : vector<18x4xf32>
    %739 = math.exp %738 : vector<18x4xf32>
    %cst_252 = arith.constant dense<0.000000e+00> : vector<18xf32>
    %740 = vector.multi_reduction <add>, %739, %cst_252 [1] : vector<18x4xf32> to vector<18xf32>
    %741 = vector.shape_cast %740 : vector<18xf32> to vector<18x1xf32>
    %742 = tpu.reciprocal %741 {approx = true} : vector<18x1xf32> -> vector<18x1xf32>
    %743 = vector.broadcast %742 : vector<18x1xf32> to vector<18x4xf32>
    %744 = arith.mulf %739, %743 : vector<18x4xf32>
    %745 = arith.truncf %601 : vector<18x128xf32> to vector<18x128xbf16>
    %c1_253 = arith.constant 1 : index
    %c0_254 = arith.constant 0 : index
    %c0_255 = arith.constant 0 : index
    %746 = vector.load %arg29[%c1_253, %c0_254, %c0_255] : memref<2x128x512xbf16, #tpu.memory_space<vmem>>, vector<1x128x512xbf16>
    %747 = vector.shape_cast %746 : vector<1x128x512xbf16> to vector<128x512xbf16>
    %cst_256 = arith.constant dense<0.000000e+00> : vector<18x512xf32>
    %748 = tpu.matmul %745, %747, %cst_256 {dimension_numbers = #tpu.dot_dimension_numbers<[1], [0], [0], [1], [0, 0, 1, 1], [], []>} : vector<18x128xbf16>, vector<128x512xbf16>, vector<18x512xf32> -> vector<18x512xf32>
    %c1_257 = arith.constant 1 : index
    %c0_258 = arith.constant 0 : index
    %c0_259 = arith.constant 0 : index
    %749 = vector.load %arg30[%c1_257, %c0_258, %c0_259] : memref<2x1x512xf32, #tpu.memory_space<vmem>>, vector<1x1x512xf32>
    %750 = vector.shape_cast %749 : vector<1x1x512xf32> to vector<1x512xf32>
    %751 = vector.broadcast %750 : vector<1x512xf32> to vector<18x512xf32>
    %752 = arith.addf %748, %751 : vector<18x512xf32>
    %753 = arith.mulf %752, %752 : vector<18x512xf32>
    %754 = arith.mulf %752, %753 : vector<18x512xf32>
    %cst_260 = arith.constant 4.471500e-02 : f32
    %755 = vector.broadcast %cst_260 : f32 to vector<18x512xf32>
    %756 = arith.mulf %755, %754 : vector<18x512xf32>
    %757 = arith.addf %752, %756 : vector<18x512xf32>
    %cst_261 = arith.constant 0.797884583 : f32
    %758 = vector.broadcast %cst_261 : f32 to vector<18x512xf32>
    %759 = arith.mulf %758, %757 : vector<18x512xf32>
    %760 = math.tanh %759 : vector<18x512xf32>
    %cst_262 = arith.constant 1.000000e+00 : f32
    %761 = vector.broadcast %cst_262 : f32 to vector<18x512xf32>
    %762 = arith.addf %761, %760 : vector<18x512xf32>
    %cst_263 = arith.constant 5.000000e-01 : f32
    %763 = vector.broadcast %cst_263 : f32 to vector<18x512xf32>
    %764 = arith.mulf %763, %762 : vector<18x512xf32>
    %765 = arith.mulf %752, %764 : vector<18x512xf32>
    %766 = vector.extract_strided_slice %765 {offsets = [0, 0], sizes = [18, 128], strides = [1, 1]} : vector<18x512xf32> to vector<18x128xf32>
    %767 = vector.extract_strided_slice %744 {offsets = [0, 0], sizes = [18, 1], strides = [1, 1]} : vector<18x4xf32> to vector<18x1xf32>
    %768 = vector.broadcast %767 : vector<18x1xf32> to vector<18x128xf32>
    %769 = arith.mulf %766, %768 : vector<18x128xf32>
    %770 = vector.extract_strided_slice %765 {offsets = [0, 128], sizes = [18, 128], strides = [1, 1]} : vector<18x512xf32> to vector<18x128xf32>
    %771 = vector.extract_strided_slice %744 {offsets = [0, 1], sizes = [18, 1], strides = [1, 1]} : vector<18x4xf32> to vector<18x1xf32>
    %772 = vector.broadcast %771 : vector<18x1xf32> to vector<18x128xf32>
    %773 = arith.mulf %770, %772 : vector<18x128xf32>
    %774 = vector.extract_strided_slice %765 {offsets = [0, 256], sizes = [18, 128], strides = [1, 1]} : vector<18x512xf32> to vector<18x128xf32>
    %775 = vector.extract_strided_slice %744 {offsets = [0, 2], sizes = [18, 1], strides = [1, 1]} : vector<18x4xf32> to vector<18x1xf32>
    %776 = vector.broadcast %775 : vector<18x1xf32> to vector<18x128xf32>
    %777 = arith.mulf %774, %776 : vector<18x128xf32>
    %778 = vector.extract_strided_slice %765 {offsets = [0, 384], sizes = [18, 128], strides = [1, 1]} : vector<18x512xf32> to vector<18x128xf32>
    %779 = vector.extract_strided_slice %744 {offsets = [0, 3], sizes = [18, 1], strides = [1, 1]} : vector<18x4xf32> to vector<18x1xf32>
    %780 = vector.broadcast %779 : vector<18x1xf32> to vector<18x128xf32>
    %781 = arith.mulf %778, %780 : vector<18x128xf32>
    %782 = tpu.concatenate %769, %773, %777, %781 in 1 : vector<18x128xf32>, vector<18x128xf32>, vector<18x128xf32>, vector<18x128xf32> -> vector<18x512xf32>
    %783 = arith.truncf %782 : vector<18x512xf32> to vector<18x512xbf16>
    %c1_264 = arith.constant 1 : index
    %c0_265 = arith.constant 0 : index
    %c0_266 = arith.constant 0 : index
    %784 = vector.load %arg31[%c1_264, %c0_265, %c0_266] : memref<2x512x128xbf16, #tpu.memory_space<vmem>>, vector<1x512x128xbf16>
    %785 = vector.shape_cast %784 : vector<1x512x128xbf16> to vector<512x128xbf16>
    %cst_267 = arith.constant dense<0.000000e+00> : vector<18x128xf32>
    %786 = tpu.matmul %783, %785, %cst_267 {dimension_numbers = #tpu.dot_dimension_numbers<[1], [0], [0], [1], [0, 0, 1, 1], [], []>} : vector<18x512xbf16>, vector<512x128xbf16>, vector<18x128xf32> -> vector<18x128xf32>
    %c1_268 = arith.constant 1 : index
    %c0_269 = arith.constant 0 : index
    %c0_270 = arith.constant 0 : index
    %787 = vector.load %arg32[%c1_268, %c0_269, %c0_270] : memref<2x4x128xf32, #tpu.memory_space<vmem>>, vector<1x4x128xf32>
    %788 = vector.shape_cast %787 : vector<1x4x128xf32> to vector<4x128xf32>
    %cst_271 = arith.constant dense<0.000000e+00> : vector<18x128xf32>
    %789 = tpu.matmul %744, %788, %cst_271 {dimension_numbers = #tpu.dot_dimension_numbers<[1], [0], [0], [1], [0, 0, 1, 1], [], []>} : vector<18x4xf32>, vector<4x128xf32>, vector<18x128xf32> -> vector<18x128xf32>
    %790 = arith.addf %786, %789 : vector<18x128xf32>
    %791 = arith.addf %577, %790 : vector<18x128xf32>
    %c0_272 = arith.constant 0 : index
    %c0_273 = arith.constant 0 : index
    %792 = vector.load %arg18[%c0_272, %c0_273] : memref<2x18xf32, #tpu.memory_space<vmem>>, vector<2x18xf32>
    %cst_274 = arith.constant dense<0.000000e+00> : vector<2x128xf32>
    %793 = tpu.matmul %792, %791, %cst_274 {dimension_numbers = #tpu.dot_dimension_numbers<[1], [0], [0], [1], [0, 0, 1, 1], [], []>} : vector<2x18xf32>, vector<18x128xf32>, vector<2x128xf32> -> vector<2x128xf32>
    %c0_275 = arith.constant 0 : index
    %c0_276 = arith.constant 0 : index
    %794 = vector.load %arg33[%c0_275, %c0_276] : memref<2x128xf32, #tpu.memory_space<vmem>>, vector<2x128xf32>
    tpu.vector_store %arg33[%c0_275, %c0_276], %793 {strides = array<i32>} : memref<2x128xf32, #tpu.memory_space<vmem>>, vector<2x128xf32>,
    return
  }
}

</mosaic_0001>

<llo_original>
// kernel: _lambda_.1
$region0: #{_lambda_.1}
  #allocation0 [shape = 'u32[]', space=smem, size = 0x4, offset = 0x4, fixed_abs, tag = 'smem constant byte address 0x4 - core index']
  #allocation1 [shape = 'u32[144,128]{1,0:T(1,128)}', space=vmem, size = 0x12000, scoped, tag = 'internal scratch']
  %s0 = inlined_call_operand.smem [shape: u32[34], index: -1, kind: input, shape index: {}]
  %s1 = sld [smem:[%s0]]
  %s2 = scalar_lea.smem %s0, 1
  %s3 = sld [smem:[%s2]]
  %s4 = scalar_lea.smem %s0, 2
  %s5 = sld [smem:[%s4]]
  %s6 = scalar_lea.smem %s0, 3
  %s7 = sld [smem:[%s6]]
  %s8 = scalar_lea.smem %s0, 4
  %s9 = sld [smem:[%s8]]
  %s10 = scalar_lea.smem %s0, 5
  %s11 = sld [smem:[%s10]]
  %s12 = scalar_lea.smem %s0, 6
  %s13 = sld [smem:[%s12]]
  %s14 = scalar_lea.smem %s0, 7
  %s15 = sld [smem:[%s14]]
  %s16 = scalar_lea.smem %s0, 8
  %s17 = sld [smem:[%s16]]
  %s18 = scalar_lea.smem %s0, 9
  %s19 = sld [smem:[%s18]]
  %s20 = scalar_lea.smem %s0, 10
  %s21 = sld [smem:[%s20]]
  %s22 = scalar_lea.smem %s0, 11
  %s23 = sld [smem:[%s22]]
  %s24 = scalar_lea.smem %s0, 12
  %s25 = sld [smem:[%s24]]
  %s26 = scalar_lea.smem %s0, 13
  %s27 = sld [smem:[%s26]]
  %s28 = scalar_lea.smem %s0, 14
  %s29 = sld [smem:[%s28]]
  %s30 = scalar_lea.smem %s0, 15
  %s31 = sld [smem:[%s30]]
  %s32 = scalar_lea.smem %s0, 16
  %s33 = sld [smem:[%s32]]
  %s34 = scalar_lea.smem %s0, 17
  %s35 = sld [smem:[%s34]]
  %s36 = scalar_lea.smem %s0, 18
  %s37 = sld [smem:[%s36]]
  %s38 = scalar_lea.smem %s0, 19
  %s39 = sld [smem:[%s38]]
  %s40 = scalar_lea.smem %s0, 20
  %s41 = sld [smem:[%s40]]
  %s42 = scalar_lea.smem %s0, 21
  %s43 = sld [smem:[%s42]]
  %s44 = scalar_lea.smem %s0, 22
  %s45 = sld [smem:[%s44]]
  %s46 = scalar_lea.smem %s0, 23
  %s47 = sld [smem:[%s46]]
  %s48 = scalar_lea.smem %s0, 24
  %s49 = sld [smem:[%s48]]
  %s50 = scalar_lea.smem %s0, 25
  %s51 = sld [smem:[%s50]]
  %s52 = scalar_lea.smem %s0, 26
  %s53 = sld [smem:[%s52]]
  %s54 = scalar_lea.smem %s0, 27
  %s55 = sld [smem:[%s54]]
  %s56 = scalar_lea.smem %s0, 28
  %s57 = sld [smem:[%s56]]
  %s58 = scalar_lea.smem %s0, 29
  %s59 = sld [smem:[%s58]]
  %s60 = scalar_lea.smem %s0, 30
  %s61 = sld [smem:[%s60]]
  %s62 = scalar_lea.smem %s0, 31
  %s63 = sld [smem:[%s62]]
  %s64 = scalar_lea.smem %s0, 32
  %s65 = sld [smem:[%s64]]
  %s66 = scalar_lea.smem %s0, 33
  %s67 = sld [smem:[%s66]]
  %s68 = sld [smem:[#allocation0]]
  $region142: #{_lambda_.1} parent=0
    _
  %s70 = ssub.s32 1, %s68
  %s71 = scalar_select 0, %s70, %s68
  $region1: #{_lambda_.1} parent=0
    #allocation2 [shape = 'u8[1024]{0}', space=vmem, size = 0x400, scoped, tag = 'output window, operand 0, single buffered']
    #allocation3 [shape = 's32[1]{0}', space=sflag, size = 0x4, scoped, tag = 'scoped memory for _lambda_.1']
    %72 = vsyncpa [#allocation3], 0
    // Predicated region
    $region2: #{_lambda_.1} parent=1 // pred_check
      _
    $region3: #{_lambda_.1} parent=1 // pred_check_branch
      %74 = sbr.rel (0) target = $region5
    $region4: #{_lambda_.1} parent=1 // pred_region
      _
    $region5: #{_lambda_.1} parent=1 // pred_fallthru
      _
    // Predicated region
    $region6: #{_lambda_.1} parent=1 // pred_check
      _
    $region7: #{_lambda_.1} parent=1 // pred_check_branch
      %76 = sbr.rel (0) target = $region9
    $region8: #{_lambda_.1} parent=1 // pred_region
      _
    $region9: #{_lambda_.1} parent=1 // pred_fallthru
      _
    // Predicated region
    $region10: #{_lambda_.1} parent=1 // pred_check
      _
    $region11: #{_lambda_.1} parent=1 // pred_check_branch
      %78 = sbr.rel (0) target = $region13
    $region12: #{_lambda_.1} parent=1 // pred_region
      _
    $region13: #{_lambda_.1} parent=1 // pred_fallthru
      _
    // Predicated region
    $region14: #{_lambda_.1} parent=1 // pred_check
      _
    $region15: #{_lambda_.1} parent=1 // pred_check_branch
      %80 = sbr.rel (0) target = $region17
    $region16: #{_lambda_.1} parent=1 // pred_region
      _
    $region17: #{_lambda_.1} parent=1 // pred_fallthru
      _
    // Predicated region
    $region18: #{_lambda_.1} parent=1 // pred_check
      _
    $region19: #{_lambda_.1} parent=1 // pred_check_branch
      %82 = sbr.rel (0) target = $region21
    $region20: #{_lambda_.1} parent=1 // pred_region
      _
    $region21: #{_lambda_.1} parent=1 // pred_fallthru
      _
    // Predicated region
    $region22: #{_lambda_.1} parent=1 // pred_check
      _
    $region23: #{_lambda_.1} parent=1 // pred_check_branch
      %84 = sbr.rel (0) target = $region25
    $region24: #{_lambda_.1} parent=1 // pred_region
      _
    $region25: #{_lambda_.1} parent=1 // pred_fallthru
      _
    // Predicated region
    $region26: #{_lambda_.1} parent=1 // pred_check
      _
    $region27: #{_lambda_.1} parent=1 // pred_check_branch
      %86 = sbr.rel (0) target = $region29
    $region28: #{_lambda_.1} parent=1 // pred_region
      _
    $region29: #{_lambda_.1} parent=1 // pred_fallthru
      _
    // Predicated region
    $region30: #{_lambda_.1} parent=1 // pred_check
      _
    $region31: #{_lambda_.1} parent=1 // pred_check_branch
      %88 = sbr.rel (0) target = $region33
    $region32: #{_lambda_.1} parent=1 // pred_region
      _
    $region33: #{_lambda_.1} parent=1 // pred_fallthru
      _
    // Predicated region
    $region34: #{_lambda_.1} parent=1 // pred_check
      _
    $region35: #{_lambda_.1} parent=1 // pred_check_branch
      %90 = sbr.rel (0) target = $region37
    $region36: #{_lambda_.1} parent=1 // pred_region
      _
    $region37: #{_lambda_.1} parent=1 // pred_fallthru
      _
    // Predicated region
    $region38: #{_lambda_.1} parent=1 // pred_check
      _
    $region39: #{_lambda_.1} parent=1 // pred_check_branch
      %92 = sbr.rel (0) target = $region41
    $region40: #{_lambda_.1} parent=1 // pred_region
      _
    $region41: #{_lambda_.1} parent=1 // pred_fallthru
      _
    // Predicated region
    $region42: #{_lambda_.1} parent=1 // pred_check
      _
    $region43: #{_lambda_.1} parent=1 // pred_check_branch
      %94 = sbr.rel (0) target = $region45
    $region44: #{_lambda_.1} parent=1 // pred_region
      _
    $region45: #{_lambda_.1} parent=1 // pred_fallthru
      _
    // Predicated region
    $region46: #{_lambda_.1} parent=1 // pred_check
      _
    $region47: #{_lambda_.1} parent=1 // pred_check_branch
      %96 = sbr.rel (0) target = $region49
    $region48: #{_lambda_.1} parent=1 // pred_region
      _
    $region49: #{_lambda_.1} parent=1 // pred_fallthru
      _
    // Predicated region
    $region50: #{_lambda_.1} parent=1 // pred_check
      _
    $region51: #{_lambda_.1} parent=1 // pred_check_branch
      %98 = sbr.rel (0) target = $region53
    $region52: #{_lambda_.1} parent=1 // pred_region
      _
    $region53: #{_lambda_.1} parent=1 // pred_fallthru
      _
    // Predicated region
    $region54: #{_lambda_.1} parent=1 // pred_check
      _
    $region55: #{_lambda_.1} parent=1 // pred_check_branch
      %100 = sbr.rel (0) target = $region57
    $region56: #{_lambda_.1} parent=1 // pred_region
      _
    $region57: #{_lambda_.1} parent=1 // pred_fallthru
      _
    // Predicated region
    $region58: #{_lambda_.1} parent=1 // pred_check
      _
    $region59: #{_lambda_.1} parent=1 // pred_check_branch
      %102 = sbr.rel (0) target = $region61
    $region60: #{_lambda_.1} parent=1 // pred_region
      _
    $region61: #{_lambda_.1} parent=1 // pred_fallthru
      _
    // Predicated region
    $region62: #{_lambda_.1} parent=1 // pred_check
      _
    $region63: #{_lambda_.1} parent=1 // pred_check_branch
      %104 = sbr.rel (0) target = $region65
    $region64: #{_lambda_.1} parent=1 // pred_region
      _
    $region65: #{_lambda_.1} parent=1 // pred_fallthru
      _
    // Predicated region
    $region66: #{_lambda_.1} parent=1 // pred_check
      _
    $region67: #{_lambda_.1} parent=1 // pred_check_branch
      %106 = sbr.rel (0) target = $region69
    $region68: #{_lambda_.1} parent=1 // pred_region
      _
    $region69: #{_lambda_.1} parent=1 // pred_fallthru
      _
    // Predicated region
    $region70: #{_lambda_.1} parent=1 // pred_check
      _
    $region71: #{_lambda_.1} parent=1 // pred_check_branch
      %108 = sbr.rel (0) target = $region73
    $region72: #{_lambda_.1} parent=1 // pred_region
      _
    $region73: #{_lambda_.1} parent=1 // pred_fallthru
      _
    // Predicated region
    $region74: #{_lambda_.1} parent=1 // pred_check
      _
    $region75: #{_lambda_.1} parent=1 // pred_check_branch
      %110 = sbr.rel (0) target = $region77
    $region76: #{_lambda_.1} parent=1 // pred_region
      _
    $region77: #{_lambda_.1} parent=1 // pred_fallthru
      _
    // Predicated region
    $region78: #{_lambda_.1} parent=1 // pred_check
      _
    $region79: #{_lambda_.1} parent=1 // pred_check_branch
      %112 = sbr.rel (0) target = $region81
    $region80: #{_lambda_.1} parent=1 // pred_region
      _
    $region81: #{_lambda_.1} parent=1 // pred_fallthru
      _
    // Predicated region
    $region82: #{_lambda_.1} parent=1 // pred_check
      _
    $region83: #{_lambda_.1} parent=1 // pred_check_branch
      %114 = sbr.rel (0) target = $region85
    $region84: #{_lambda_.1} parent=1 // pred_region
      _
    $region85: #{_lambda_.1} parent=1 // pred_fallthru
      _
    // Predicated region
    $region86: #{_lambda_.1} parent=1 // pred_check
      _
    $region87: #{_lambda_.1} parent=1 // pred_check_branch
      %116 = sbr.rel (0) target = $region89
    $region88: #{_lambda_.1} parent=1 // pred_region
      _
    $region89: #{_lambda_.1} parent=1 // pred_fallthru
      _
    // Predicated region
    $region90: #{_lambda_.1} parent=1 // pred_check
      _
    $region91: #{_lambda_.1} parent=1 // pred_check_branch
      %118 = sbr.rel (0) target = $region93
    $region92: #{_lambda_.1} parent=1 // pred_region
      _
    $region93: #{_lambda_.1} parent=1 // pred_fallthru
      _
    // Predicated region
    $region94: #{_lambda_.1} parent=1 // pred_check
      _
    $region95: #{_lambda_.1} parent=1 // pred_check_branch
      %120 = sbr.rel (0) target = $region97
    $region96: #{_lambda_.1} parent=1 // pred_region
      _
    $region97: #{_lambda_.1} parent=1 // pred_fallthru
      _
    // Predicated region
    $region98: #{_lambda_.1} parent=1 // pred_check
      _
    $region99: #{_lambda_.1} parent=1 // pred_check_branch
      %122 = sbr.rel (0) target = $region101
    $region100: #{_lambda_.1} parent=1 // pred_region
      _
    $region101: #{_lambda_.1} parent=1 // pred_fallthru
      _
    // Predicated region
    $region102: #{_lambda_.1} parent=1 // pred_check
      _
    $region103: #{_lambda_.1} parent=1 // pred_check_branch
      %124 = sbr.rel (0) target = $region105
    $region104: #{_lambda_.1} parent=1 // pred_region
      _
    $region105: #{_lambda_.1} parent=1 // pred_fallthru
      _
    // Predicated region
    $region106: #{_lambda_.1} parent=1 // pred_check
      _
    $region107: #{_lambda_.1} parent=1 // pred_check_branch
      %126 = sbr.rel (0) target = $region109
    $region108: #{_lambda_.1} parent=1 // pred_region
      _
    $region109: #{_lambda_.1} parent=1 // pred_fallthru
      _
    // Predicated region
    $region110: #{_lambda_.1} parent=1 // pred_check
      _
    $region111: #{_lambda_.1} parent=1 // pred_check_branch
      %128 = sbr.rel (0) target = $region113
    $region112: #{_lambda_.1} parent=1 // pred_region
      _
    $region113: #{_lambda_.1} parent=1 // pred_fallthru
      _
    // Predicated region
    $region114: #{_lambda_.1} parent=1 // pred_check
      _
    $region115: #{_lambda_.1} parent=1 // pred_check_branch
      %130 = sbr.rel (0) target = $region117
    $region116: #{_lambda_.1} parent=1 // pred_region
      _
    $region117: #{_lambda_.1} parent=1 // pred_fallthru
      _
    // Predicated region
    $region118: #{_lambda_.1} parent=1 // pred_check
      _
    $region119: #{_lambda_.1} parent=1 // pred_check_branch
      %132 = sbr.rel (0) target = $region121
    $region120: #{_lambda_.1} parent=1 // pred_region
      _
    $region121: #{_lambda_.1} parent=1 // pred_fallthru
      _
    // Predicated region
    $region122: #{_lambda_.1} parent=1 // pred_check
      _
    $region123: #{_lambda_.1} parent=1 // pred_check_branch
      %134 = sbr.rel (0) target = $region125
    $region124: #{_lambda_.1} parent=1 // pred_region
      _
    $region125: #{_lambda_.1} parent=1 // pred_fallthru
      _
    // Predicated region
    $region126: #{_lambda_.1} parent=1 // pred_check
      _
    $region127: #{_lambda_.1} parent=1 // pred_check_branch
      %136 = sbr.rel (0) target = $region129
    $region128: #{_lambda_.1} parent=1 // pred_region
      _
    $region129: #{_lambda_.1} parent=1 // pred_fallthru
      _
    // Predicated region
    $region130: #{_lambda_.1} parent=1 // pred_check
      _
    $region131: #{_lambda_.1} parent=1 // pred_check_branch
      %138 = sbr.rel (0) target = $region133
    $region132: #{_lambda_.1} parent=1 // pred_region
      _
    $region133: #{_lambda_.1} parent=1 // pred_fallthru
      _
    %v140 = vld [vmem:[%s1] sm:$0xff]
    %v141 = vld [vmem:[%s1 + $0x8] sm:$0xff]
    %v142 = vld [vmem:[%s1 + $0x10] sm:$0x3]
    %v143 = vpack.c.bf16 %v141, %v140
    %v144 = vpack.c.bf16 %v142, %v142
    %v145 = vld [vmem:[%s3] sm:$0xff]
    %v146 = vld [vmem:[%s3 + $0x8] sm:$0x11]
    %v149 = vunpack.c.l.b16 %v145
    %v150 = vunpack.c.h.b16 %v145
    %v151 = vunpack.c.l.b16 %v146
    %v152 = vunpack.c.h.b16 %v146
    %v153 = vpack.c.b16 %v151, %v149
    %v154 = vpack.c.b16 %v152, %v150
    %vm155 = vcmask 80896
    %v157 = vsel %vm155, %v143, 0
    %v160 = vsel %vm155, %v144, 0
    %vm162 = vcmask 1044480
    %v164 = vsel %vm162, %v153, 0
    %v167 = vsel %vm162, %v154, 0
    %169 = vmatprep.subr.bf16.mxu0 %v167
    %170 = vmatpush1.bf16.msra.mxu0 %v164
    %171 = vmatprep.subr.bf16.mxu0 0
    %172 = vmatpush1.bf16.msra.mxu0 0
    %173 = vmatprep.subr.bf16.mxu0 0
    %174 = vmatpush1.bf16.msra.mxu0 0
    %175 = vmatprep.subr.bf16.mxu0 0
    %176 = vmatpush1.bf16.msra.mxu0 0
    %177 = vmatprep.subr.bf16.mxu0 0
    %178 = vmatpush1.bf16.msra.mxu0 0
    %179 = vmatprep.subr.bf16.mxu0 0
    %180 = vmatpush1.bf16.msra.mxu0 0
    %181 = vmatprep.subr.bf16.mxu0 0
    %182 = vmatpush1.bf16.msra.mxu0 0
    %183 = vmatprep.subr.bf16.mxu0 0
    %184 = vmatpush1.bf16.msra.mxu0 0
    %185 = vmatprep.subr.bf16.mxu0 0
    %186 = vmatpush1.bf16.msra.mxu0 0
    %187 = vmatprep.subr.bf16.mxu0 0
    %188 = vmatpush1.bf16.msra.mxu0 0
    %189 = vmatprep.subr.bf16.mxu0 0
    %190 = vmatpush1.bf16.msra.mxu0 0
    %191 = vmatprep.subr.bf16.mxu0 0
    %192 = vmatpush1.bf16.msra.mxu0 0
    %193 = vmatprep.subr.bf16.mxu0 0
    %194 = vmatpush1.bf16.msra.mxu0 0
    %195 = vmatprep.subr.bf16.mxu0 0
    %196 = vmatpush1.bf16.msra.mxu0 0
    %197 = vmatprep.subr.bf16.mxu0 0
    %198 = vmatpush1.bf16.msra.mxu0 0
    %199 = vmatprep.subr.bf16.mxu0 0
    %200 = vmatpush1.bf16.msra.mxu0 0
    %201 = vmatprep.mubr.bf16.mxu0 0
    %202 = vmatmul.mubr.bf16.gmra.mrb[0].mxu0 %v157
    %v203 = vpop.f32.mrb[0].mxu0
    %v204 = vadd.f32 0.0, %v203
    %v205 = vpop.f32.mrb[0].mxu0
    %v206 = vadd.f32 0.0, %v205
    %v207 = vpop.f32.mrb[0].mxu0
    %v208 = vadd.f32 0.0, %v207
    %v209 = vpop.f32.mrb[0].mxu0
    %v210 = vadd.f32 0.0, %v209
    %211 = vmatprep.mubr.bf16.mxu0 0
    %212 = vmatmul.mubr.bf16.gmra.mrb[0].mxu0 %v160
    %v213 = vpop.f32.mrb[0].mxu0
    %v214 = vadd.f32 0.0, %v213
    %v215 = vpop.f32.mrb[0].mxu0
    %v216 = vadd.f32 0.0, %v215
    %v217 = vpop.f32.mrb[0].mxu0
    %v218 = vpop.f32.mrb[0].mxu0
    %219 = vdwg.mxu0
    %v220 = vld [vmem:[%s5] sm:$0x3]
    %v222 = vlaneseq
    %v223 = vshrl.u32 %v222, 7
    %v224 = vsub.s32 0, %v223
    %v225 = vrot.slane %v220, %v224
    %v226 = vlaneseq
    %v227 = vshrl.u32 %v226, 7
    %v228 = vsub.s32 1, %v227
    %v229 = vrot.slane %v220, %v228
    %v232 = vmul.f32 %v204, %v225
    %v233 = vmul.f32 %v206, %v229
    %v234 = vmul.f32 %v208, %v225
    %v235 = vmul.f32 %v210, %v229
    %v236 = vmul.f32 %v214, %v225
    %v237 = vmul.f32 %v216, %v229
    %v238 = vld [vmem:[%s7] sm:$0x3]
    %v240 = vlaneseq
    %v241 = vshrl.u32 %v240, 7
    %v242 = vsub.s32 0, %v241
    %v243 = vrot.slane %v238, %v242
    %v244 = vlaneseq
    %v245 = vshrl.u32 %v244, 7
    %v246 = vsub.s32 1, %v245
    %v247 = vrot.slane %v238, %v246
    %v250 = vadd.f32 %v232, %v243
    %v251 = vadd.f32 %v233, %v247
    %v252 = vadd.f32 %v234, %v243
    %v253 = vadd.f32 %v235, %v247
    %v254 = vadd.f32 %v236, %v243
    %v255 = vadd.f32 %v237, %v247
    %v256 = vmul.f32 %v250, %v250
    %v257 = vmul.f32 %v251, %v251
    %v258 = vmul.f32 %v252, %v252
    %v259 = vmul.f32 %v253, %v253
    %v260 = vmul.f32 %v254, %v254
    %v261 = vmul.f32 %v255, %v255
    %v262 = vmul.f32 %v250, %v256
    %v263 = vmul.f32 %v251, %v257
    %v264 = vmul.f32 %v252, %v258
    %v265 = vmul.f32 %v253, %v259
    %v266 = vmul.f32 %v254, %v260
    %v267 = vmul.f32 %v255, %v261
    %v268 = vmul.f32 %v262, 0.044715
    %v269 = vmul.f32 %v263, 0.044715
    %v270 = vmul.f32 %v264, 0.044715
    %v271 = vmul.f32 %v265, 0.044715
    %v272 = vmul.f32 %v266, 0.044715
    %v273 = vmul.f32 %v267, 0.044715
    %v274 = vadd.f32 %v250, %v268
    %v275 = vadd.f32 %v251, %v269
    %v276 = vadd.f32 %v252, %v270
    %v277 = vadd.f32 %v253, %v271
    %v278 = vadd.f32 %v254, %v272
    %v279 = vadd.f32 %v255, %v273
    %v280 = vmul.f32 %v274, 0.7978846
    %v281 = vmul.f32 %v275, 0.7978846
    %v282 = vmul.f32 %v276, 0.7978846
    %v283 = vmul.f32 %v277, 0.7978846
    %v284 = vmul.f32 %v278, 0.7978846
    %v285 = vmul.f32 %v279, 0.7978846
    %v286 = vtanh.pop %v280
    %v287 = vtanh.pop %v281
    %v288 = vtanh.pop %v282
    %v289 = vtanh.pop %v283
    %v290 = vtanh.pop %v284
    %v291 = vtanh.pop %v285
    %v292 = vadd.f32 %v286, 1.0
    %v293 = vadd.f32 %v287, 1.0
    %v294 = vadd.f32 %v288, 1.0
    %v295 = vadd.f32 %v289, 1.0
    %v296 = vadd.f32 %v290, 1.0
    %v297 = vadd.f32 %v291, 1.0
    %v298 = vmul.f32 %v292, 0.5
    %v299 = vmul.f32 %v293, 0.5
    %v300 = vmul.f32 %v294, 0.5
    %v301 = vmul.f32 %v295, 0.5
    %v302 = vmul.f32 %v296, 0.5
    %v303 = vmul.f32 %v297, 0.5
    %v304 = vmul.f32 %v250, %v298
    %v305 = vmul.f32 %v251, %v299
    %v306 = vmul.f32 %v252, %v300
    %v307 = vmul.f32 %v253, %v301
    %v308 = vmul.f32 %v254, %v302
    %v309 = vmul.f32 %v255, %v303
    %v310 = vpack.c.bf16 %v306, %v304
    %v311 = vpack.c.bf16 %v307, %v305
    %v312 = vpack.c.bf16 %v308, %v308
    %v313 = vpack.c.bf16 %v309, %v309
    %v314 = vld [vmem:[%s9] sm:$0xff]
    %v315 = vld [vmem:[%s9 + $0x8] sm:$0xf]
    %v316 = vld [vmem:[%s9 + $0xc] sm:$0xff]
    %v317 = vld [vmem:[%s9 + $0x14] sm:$0xf]
    %v318 = vld [vmem:[%s9 + $0x18] sm:$0xff]
    %v319 = vld [vmem:[%s9 + $0x20] sm:$0xf]
    %v320 = vld [vmem:[%s9 + $0x24] sm:$0xff]
    %v321 = vld [vmem:[%s9 + $0x2c] sm:$0xf]
    %v322 = vld [vmem:[%s9 + $0x30] sm:$0xff]
    %v323 = vld [vmem:[%s9 + $0x38] sm:$0xf]
    %v324 = vld [vmem:[%s9 + $0x3c] sm:$0xff]
    %v325 = vld [vmem:[%s9 + $0x44] sm:$0xf]
    %v326 = vld [vmem:[%s9 + $0x48] sm:$0xff]
    %v327 = vld [vmem:[%s9 + $0x50] sm:$0xf]
    %v328 = vld [vmem:[%s9 + $0x54] sm:$0xff]
    %v329 = vld [vmem:[%s9 + $0x5c] sm:$0xf]
    %v330 = vld [vmem:[%s9 + $0x60] sm:$0xff]
    %v331 = vld [vmem:[%s9 + $0x68] sm:$0xf]
    %v332 = vld [vmem:[%s9 + $0x6c] sm:$0xff]
    %v333 = vld [vmem:[%s9 + $0x74] sm:$0xf]
    %v334 = vld [vmem:[%s9 + $0x78] sm:$0xff]
    %v335 = vld [vmem:[%s9 + $0x80] sm:$0xf]
    %v336 = vld [vmem:[%s9 + $0x84] sm:$0xff]
    %v337 = vld [vmem:[%s9 + $0x8c] sm:$0xf]
    %v338 = vld [vmem:[%s9 + $0x90] sm:$0xff]
    %v339 = vld [vmem:[%s9 + $0x98] sm:$0xf]
    %v340 = vld [vmem:[%s9 + $0x9c] sm:$0xff]
    %v341 = vld [vmem:[%s9 + $0xa4] sm:$0xf]
    %v342 = vld [vmem:[%s9 + $0xa8] sm:$0xff]
    %v343 = vld [vmem:[%s9 + $0xb0] sm:$0xf]
    %v344 = vld [vmem:[%s9 + $0xb4] sm:$0xff]
    %v345 = vld [vmem:[%s9 + $0xbc] sm:$0xf]
    %v346 = vld [vmem:[%s9 + $0xc0] sm:$0xff]
    %v347 = vld [vmem:[%s9 + $0xc8] sm:$0xf]
    %v348 = vld [vmem:[%s9 + $0xcc] sm:$0xff]
    %v349 = vld [vmem:[%s9 + $0xd4] sm:$0xf]
    %v350 = vld [vmem:[%s9 + $0xd8] sm:$0xff]
    %v351 = vld [vmem:[%s9 + $0xe0] sm:$0xf]
    %v352 = vld [vmem:[%s9 + $0xe4] sm:$0xff]
    %v353 = vld [vmem:[%s9 + $0xec] sm:$0xf]
    %v394 = vunpack.c.l.b16 %v314
    %v395 = vunpack.c.h.b16 %v314
    %v396 = vunpack.c.l.b16 %v315
    %v397 = vunpack.c.l.b16 %v316
    %v398 = vunpack.c.h.b16 %v316
    %v399 = vunpack.c.l.b16 %v317
    %v400 = vunpack.c.l.b16 %v318
    %v401 = vunpack.c.h.b16 %v318
    %v402 = vunpack.c.l.b16 %v319
    %v403 = vunpack.c.l.b16 %v320
    %v404 = vunpack.c.h.b16 %v320
    %v405 = vunpack.c.l.b16 %v321
    %v406 = vunpack.c.l.b16 %v322
    %v407 = vunpack.c.h.b16 %v322
    %v408 = vunpack.c.l.b16 %v323
    %v409 = vunpack.c.l.b16 %v324
    %v410 = vunpack.c.h.b16 %v324
    %v411 = vunpack.c.l.b16 %v325
    %v412 = vunpack.c.l.b16 %v326
    %v413 = vunpack.c.h.b16 %v326
    %v414 = vunpack.c.l.b16 %v327
    %v415 = vunpack.c.l.b16 %v328
    %v416 = vunpack.c.h.b16 %v328
    %v417 = vunpack.c.l.b16 %v329
    %v418 = vunpack.c.l.b16 %v330
    %v419 = vunpack.c.h.b16 %v330
    %v420 = vunpack.c.l.b16 %v331
    %v421 = vunpack.c.l.b16 %v332
    %v422 = vunpack.c.h.b16 %v332
    %v423 = vunpack.c.l.b16 %v333
    %v424 = vunpack.c.l.b16 %v334
    %v425 = vunpack.c.h.b16 %v334
    %v426 = vunpack.c.l.b16 %v335
    %v427 = vunpack.c.l.b16 %v336
    %v428 = vunpack.c.h.b16 %v336
    %v429 = vunpack.c.l.b16 %v337
    %v430 = vunpack.c.l.b16 %v338
    %v431 = vunpack.c.h.b16 %v338
    %v432 = vunpack.c.l.b16 %v339
    %v433 = vunpack.c.l.b16 %v340
    %v434 = vunpack.c.h.b16 %v340
    %v435 = vunpack.c.l.b16 %v341
    %v436 = vunpack.c.l.b16 %v342
    %v437 = vunpack.c.h.b16 %v342
    %v438 = vunpack.c.l.b16 %v343
    %v439 = vunpack.c.l.b16 %v344
    %v440 = vunpack.c.h.b16 %v344
    %v441 = vunpack.c.l.b16 %v345
    %v442 = vunpack.c.l.b16 %v346
    %v443 = vunpack.c.h.b16 %v346
    %v444 = vunpack.c.l.b16 %v347
    %v445 = vunpack.c.l.b16 %v348
    %v446 = vunpack.c.h.b16 %v348
    %v447 = vunpack.c.l.b16 %v349
    %v448 = vunpack.c.l.b16 %v350
    %v449 = vunpack.c.h.b16 %v350
    %v450 = vunpack.c.l.b16 %v351
    %v451 = vunpack.c.l.b16 %v352
    %v452 = vunpack.c.h.b16 %v352
    %v453 = vunpack.c.l.b16 %v353
    %v454 = vpack.c.b16 %v397, %v394
    %v455 = vpack.c.b16 %v398, %v395
    %v456 = vpack.c.b16 %v399, %v396
    %v457 = vpack.c.b16 %v403, %v400
    %v458 = vpack.c.b16 %v404, %v401
    %v459 = vpack.c.b16 %v405, %v402
    %v460 = vpack.c.b16 %v409, %v406
    %v461 = vpack.c.b16 %v410, %v407
    %v462 = vpack.c.b16 %v411, %v408
    %v463 = vpack.c.b16 %v415, %v412
    %v464 = vpack.c.b16 %v416, %v413
    %v465 = vpack.c.b16 %v417, %v414
    %v466 = vpack.c.b16 %v421, %v418
    %v467 = vpack.c.b16 %v422, %v419
    %v468 = vpack.c.b16 %v423, %v420
    %v469 = vpack.c.b16 %v427, %v424
    %v470 = vpack.c.b16 %v428, %v425
    %v471 = vpack.c.b16 %v429, %v426
    %v472 = vpack.c.b16 %v433, %v430
    %v473 = vpack.c.b16 %v434, %v431
    %v474 = vpack.c.b16 %v435, %v432
    %v475 = vpack.c.b16 %v439, %v436
    %v476 = vpack.c.b16 %v440, %v437
    %v477 = vpack.c.b16 %v441, %v438
    %v478 = vpack.c.b16 %v445, %v442
    %v479 = vpack.c.b16 %v446, %v443
    %v480 = vpack.c.b16 %v447, %v444
    %v481 = vpack.c.b16 %v451, %v448
    %v482 = vpack.c.b16 %v452, %v449
    %v483 = vpack.c.b16 %v453, %v450
    %vm514 = vcmask 261120
    %v516 = vsel %vm514, %v311, 0
    %v519 = vsel %vm514, %v313, 0
    %521 = vmatprep.subr.bf16.mxu0 %v455
    %522 = vmatpush1.bf16.msra.mxu0 %v454
    %523 = vmatprep.subr.bf16.mxu0 %v458
    %524 = vmatpush1.bf16.msra.mxu0 %v457
    %525 = vmatprep.subr.bf16.mxu0 %v461
    %526 = vmatpush1.bf16.msra.mxu0 %v460
    %527 = vmatprep.subr.bf16.mxu0 %v464
    %528 = vmatpush1.bf16.msra.mxu0 %v463
    %529 = vmatprep.subr.bf16.mxu0 %v467
    %530 = vmatpush1.bf16.msra.mxu0 %v466
    %531 = vmatprep.subr.bf16.mxu0 %v470
    %532 = vmatpush1.bf16.msra.mxu0 %v469
    %533 = vmatprep.subr.bf16.mxu0 %v473
    %534 = vmatpush1.bf16.msra.mxu0 %v472
    %535 = vmatprep.subr.bf16.mxu0 %v476
    %536 = vmatpush1.bf16.msra.mxu0 %v475
    %537 = vmatprep.subr.bf16.mxu0 %v479
    %538 = vmatpush1.bf16.msra.mxu0 %v478
    %539 = vmatprep.subr.bf16.mxu0 %v482
    %540 = vmatpush1.bf16.msra.mxu0 %v481
    %541 = vmatprep.subr.bf16.mxu0 0
    %542 = vmatpush1.bf16.msra.mxu0 0
    %543 = vmatprep.subr.bf16.mxu0 0
    %544 = vmatpush1.bf16.msra.mxu0 0
    %545 = vmatprep.subr.bf16.mxu0 0
    %546 = vmatpush1.bf16.msra.mxu0 0
    %547 = vmatprep.subr.bf16.mxu0 0
    %548 = vmatpush1.bf16.msra.mxu0 0
    %549 = vmatprep.subr.bf16.mxu0 0
    %550 = vmatpush1.bf16.msra.mxu0 0
    %551 = vmatprep.subr.bf16.mxu0 0
    %552 = vmatpush1.bf16.msra.mxu0 0
    %553 = vmatprep.mubr.bf16.mxu0 %v516
    %554 = vmatmul.mubr.bf16.gmra.mrb[0].mxu0 %v310
    %v555 = vpop.f32.mrb[0].mxu0
    %v556 = vadd.f32 0.0, %v555
    %v557 = vpop.f32.mrb[0].mxu0
    %v558 = vadd.f32 0.0, %v557
    %v559 = vpop.f32.mrb[0].mxu0
    %v560 = vadd.f32 0.0, %v559
    %v561 = vpop.f32.mrb[0].mxu0
    %v562 = vadd.f32 0.0, %v561
    %563 = vmatprep.mubr.bf16.mxu0 %v519
    %564 = vmatmul.mubr.bf16.gmra.mrb[0].mxu0 %v312
    %v565 = vpop.f32.mrb[0].mxu0
    %v566 = vadd.f32 0.0, %v565
    %v567 = vpop.f32.mrb[0].mxu0
    %v568 = vadd.f32 0.0, %v567
    %v569 = vpop.f32.mrb[0].mxu0
    %v570 = vpop.f32.mrb[0].mxu0
    %571 = vdwg.mxu0
    %572 = vmatprep.subr.bf16.mxu0 0
    %573 = vmatpush1.bf16.msra.mxu0 %v456
    %574 = vmatprep.subr.bf16.mxu0 0
    %575 = vmatpush1.bf16.msra.mxu0 %v459
    %576 = vmatprep.subr.bf16.mxu0 0
    %577 = vmatpush1.bf16.msra.mxu0 %v462
    %578 = vmatprep.subr.bf16.mxu0 0
    %579 = vmatpush1.bf16.msra.mxu0 %v465
    %580 = vmatprep.subr.bf16.mxu0 0
    %581 = vmatpush1.bf16.msra.mxu0 %v468
    %582 = vmatprep.subr.bf16.mxu0 0
    %583 = vmatpush1.bf16.msra.mxu0 %v471
    %584 = vmatprep.subr.bf16.mxu0 0
    %585 = vmatpush1.bf16.msra.mxu0 %v474
    %586 = vmatprep.subr.bf16.mxu0 0
    %587 = vmatpush1.bf16.msra.mxu0 %v477
    %588 = vmatprep.subr.bf16.mxu0 0
    %589 = vmatpush1.bf16.msra.mxu0 %v480
    %590 = vmatprep.subr.bf16.mxu0 0
    %591 = vmatpush1.bf16.msra.mxu0 %v483
    %592 = vmatprep.subr.bf16.mxu0 0
    %593 = vmatpush1.bf16.msra.mxu0 0
    %594 = vmatprep.subr.bf16.mxu0 0
    %595 = vmatpush1.bf16.msra.mxu0 0
    %596 = vmatprep.subr.bf16.mxu0 0
    %597 = vmatpush1.bf16.msra.mxu0 0
    %598 = vmatprep.subr.bf16.mxu0 0
    %599 = vmatpush1.bf16.msra.mxu0 0
    %600 = vmatprep.subr.bf16.mxu0 0
    %601 = vmatpush1.bf16.msra.mxu0 0
    %602 = vmatprep.subr.bf16.mxu0 0
    %603 = vmatpush1.bf16.msra.mxu0 0
    %604 = vmatprep.mubr.bf16.mxu0 %v516
    %605 = vmatmul.mubr.bf16.gmra.mrb[0].mxu0 %v310
    %v606 = vpop.f32.mrb[0].mxu0
    %v607 = vadd.f32 0.0, %v606
    %v608 = vpop.f32.mrb[0].mxu0
    %v609 = vpop.f32.mrb[0].mxu0
    %v610 = vadd.f32 0.0, %v609
    %v611 = vpop.f32.mrb[0].mxu0
    %612 = vmatprep.mubr.bf16.mxu0 %v519
    %613 = vmatmul.mubr.bf16.gmra.mrb[0].mxu0 %v312
    %v614 = vpop.f32.mrb[0].mxu0
    %v615 = vadd.f32 0.0, %v614
    %v616 = vpop.f32.mrb[0].mxu0
    %v617 = vpop.f32.mrb[0].mxu0
    %v618 = vpop.f32.mrb[0].mxu0
    %619 = vdwg.mxu0
    %v620 = vld [vmem:[%s11] sm:$0x7]
    %v622 = vlaneseq
    %v623 = vshrl.u32 %v622, 7
    %v624 = vsub.s32 0, %v623
    %v625 = vrot.slane %v620, %v624
    %v626 = vlaneseq
    %v627 = vshrl.u32 %v626, 7
    %v628 = vsub.s32 1, %v627
    %v629 = vrot.slane %v620, %v628
    %v630 = vlaneseq
    %v631 = vshrl.u32 %v630, 7
    %v632 = vsub.s32 2, %v631
    %v633 = vrot.slane %v620, %v632
    %v637 = vmul.f32 %v556, %v625
    %v638 = vmul.f32 %v558, %v629
    %v639 = vmul.f32 %v607, %v633
    %v640 = vmul.f32 %v560, %v625
    %v641 = vmul.f32 %v562, %v629
    %v642 = vmul.f32 %v610, %v633
    %v643 = vmul.f32 %v566, %v625
    %v644 = vmul.f32 %v568, %v629
    %v645 = vmul.f32 %v615, %v633
    %v646 = vld [vmem:[%s13] sm:$0x7]
    %v648 = vlaneseq
    %v649 = vshrl.u32 %v648, 7
    %v650 = vsub.s32 0, %v649
    %v651 = vrot.slane %v646, %v650
    %v652 = vlaneseq
    %v653 = vshrl.u32 %v652, 7
    %v654 = vsub.s32 1, %v653
    %v655 = vrot.slane %v646, %v654
    %v656 = vlaneseq
    %v657 = vshrl.u32 %v656, 7
    %v658 = vsub.s32 2, %v657
    %v659 = vrot.slane %v646, %v658
    %v663 = vadd.f32 %v637, %v651
    %v664 = vadd.f32 %v638, %v655
    %v665 = vadd.f32 %v639, %v659
    %v666 = vadd.f32 %v640, %v651
    %v667 = vadd.f32 %v641, %v655
    %v668 = vadd.f32 %v642, %v659
    %v669 = vadd.f32 %v643, %v651
    %v670 = vadd.f32 %v644, %v655
    %v671 = vadd.f32 %v645, %v659
    %v672 = vmul.f32 %v663, %v663
    %v673 = vmul.f32 %v664, %v664
    %v674 = vmul.f32 %v665, %v665
    %v675 = vmul.f32 %v666, %v666
    %v676 = vmul.f32 %v667, %v667
    %v677 = vmul.f32 %v668, %v668
    %v678 = vmul.f32 %v669, %v669
    %v679 = vmul.f32 %v670, %v670
    %v680 = vmul.f32 %v671, %v671
    %v681 = vmul.f32 %v663, %v672
    %v682 = vmul.f32 %v664, %v673
    %v683 = vmul.f32 %v665, %v674
    %v684 = vmul.f32 %v666, %v675
    %v685 = vmul.f32 %v667, %v676
    %v686 = vmul.f32 %v668, %v677
    %v687 = vmul.f32 %v669, %v678
    %v688 = vmul.f32 %v670, %v679
    %v689 = vmul.f32 %v671, %v680
    %v690 = vmul.f32 %v681, 0.044715
    %v691 = vmul.f32 %v682, 0.044715
    %v692 = vmul.f32 %v683, 0.044715
    %v693 = vmul.f32 %v684, 0.044715
    %v694 = vmul.f32 %v685, 0.044715
    %v695 = vmul.f32 %v686, 0.044715
    %v696 = vmul.f32 %v687, 0.044715
    %v697 = vmul.f32 %v688, 0.044715
    %v698 = vmul.f32 %v689, 0.044715
    %v699 = vadd.f32 %v663, %v690
    %v700 = vadd.f32 %v664, %v691
    %v701 = vadd.f32 %v665, %v692
    %v702 = vadd.f32 %v666, %v693
    %v703 = vadd.f32 %v667, %v694
    %v704 = vadd.f32 %v668, %v695
    %v705 = vadd.f32 %v669, %v696
    %v706 = vadd.f32 %v670, %v697
    %v707 = vadd.f32 %v671, %v698
    %v708 = vmul.f32 %v699, 0.7978846
    %v709 = vmul.f32 %v700, 0.7978846
    %v710 = vmul.f32 %v701, 0.7978846
    %v711 = vmul.f32 %v702, 0.7978846
    %v712 = vmul.f32 %v703, 0.7978846
    %v713 = vmul.f32 %v704, 0.7978846
    %v714 = vmul.f32 %v705, 0.7978846
    %v715 = vmul.f32 %v706, 0.7978846
    %v716 = vmul.f32 %v707, 0.7978846
    %v717 = vtanh.pop %v708
    %v718 = vtanh.pop %v709
    %v719 = vtanh.pop %v710
    %v720 = vtanh.pop %v711
    %v721 = vtanh.pop %v712
    %v722 = vtanh.pop %v713
    %v723 = vtanh.pop %v714
    %v724 = vtanh.pop %v715
    %v725 = vtanh.pop %v716
    %v726 = vadd.f32 %v717, 1.0
    %v727 = vadd.f32 %v718, 1.0
    %v728 = vadd.f32 %v719, 1.0
    %v729 = vadd.f32 %v720, 1.0
    %v730 = vadd.f32 %v721, 1.0
    %v731 = vadd.f32 %v722, 1.0
    %v732 = vadd.f32 %v723, 1.0
    %v733 = vadd.f32 %v724, 1.0
    %v734 = vadd.f32 %v725, 1.0
    %v735 = vmul.f32 %v726, 0.5
    %v736 = vmul.f32 %v727, 0.5
    %v737 = vmul.f32 %v728, 0.5
    %v738 = vmul.f32 %v729, 0.5
    %v739 = vmul.f32 %v730, 0.5
    %v740 = vmul.f32 %v731, 0.5
    %v741 = vmul.f32 %v732, 0.5
    %v742 = vmul.f32 %v733, 0.5
    %v743 = vmul.f32 %v734, 0.5
    %v744 = vmul.f32 %v663, %v735
    %v745 = vmul.f32 %v664, %v736
    %v746 = vmul.f32 %v665, %v737
    %v747 = vmul.f32 %v666, %v738
    %v748 = vmul.f32 %v667, %v739
    %v749 = vmul.f32 %v668, %v740
    %v750 = vmul.f32 %v669, %v741
    %v751 = vmul.f32 %v670, %v742
    %v752 = vmul.f32 %v671, %v743
    %v753 = vpack.c.bf16 %v747, %v744
    %v754 = vpack.c.bf16 %v748, %v745
    %v755 = vpack.c.bf16 %v749, %v746
    %v756 = vpack.c.bf16 %v750, %v750
    %v757 = vpack.c.bf16 %v751, %v751
    %v758 = vpack.c.bf16 %v752, %v752
    %v759 = vld [vmem:[%s15] sm:$0xff]
    %v760 = vld [vmem:[%s15 + $0x8] sm:$0xff]
    %v761 = vld [vmem:[%s15 + $0x10] sm:$0xf]
    %v762 = vld [vmem:[%s15 + $0x14] sm:$0xff]
    %v763 = vld [vmem:[%s15 + $0x1c] sm:$0xff]
    %v764 = vld [vmem:[%s15 + $0x24] sm:$0xf]
    %v765 = vld [vmem:[%s15 + $0x28] sm:$0xff]
    %v766 = vld [vmem:[%s15 + $0x30] sm:$0xff]
    %v767 = vld [vmem:[%s15 + $0x38] sm:$0xf]
    %v768 = vld [vmem:[%s15 + $0x3c] sm:$0xff]
    %v769 = vld [vmem:[%s15 + $0x44] sm:$0xff]
    %v770 = vld [vmem:[%s15 + $0x4c] sm:$0xf]
    %v771 = vld [vmem:[%s15 + $0x50] sm:$0xff]
    %v772 = vld [vmem:[%s15 + $0x58] sm:$0xff]
    %v773 = vld [vmem:[%s15 + $0x60] sm:$0xf]
    %v774 = vld [vmem:[%s15 + $0x64] sm:$0xff]
    %v775 = vld [vmem:[%s15 + $0x6c] sm:$0xff]
    %v776 = vld [vmem:[%s15 + $0x74] sm:$0xf]
    %v777 = vld [vmem:[%s15 + $0x78] sm:$0xff]
    %v778 = vld [vmem:[%s15 + $0x80] sm:$0xff]
    %v779 = vld [vmem:[%s15 + $0x88] sm:$0xf]
    %v780 = vld [vmem:[%s15 + $0x8c] sm:$0xff]
    %v781 = vld [vmem:[%s15 + $0x94] sm:$0xff]
    %v782 = vld [vmem:[%s15 + $0x9c] sm:$0xf]
    %v783 = vld [vmem:[%s15 + $0xa0] sm:$0xff]
    %v784 = vld [vmem:[%s15 + $0xa8] sm:$0xff]
    %v785 = vld [vmem:[%s15 + $0xb0] sm:$0xf]
    %v786 = vld [vmem:[%s15 + $0xb4] sm:$0xff]
    %v787 = vld [vmem:[%s15 + $0xbc] sm:$0xff]
    %v788 = vld [vmem:[%s15 + $0xc4] sm:$0xf]
    %v789 = vld [vmem:[%s15 + $0xc8] sm:$0xff]
    %v790 = vld [vmem:[%s15 + $0xd0] sm:$0xff]
    %v791 = vld [vmem:[%s15 + $0xd8] sm:$0xf]
    %v792 = vld [vmem:[%s15 + $0xdc] sm:$0xff]
    %v793 = vld [vmem:[%s15 + $0xe4] sm:$0xff]
    %v794 = vld [vmem:[%s15 + $0xec] sm:$0xf]
    %v795 = vld [vmem:[%s15 + $0xf0] sm:$0xff]
    %v796 = vld [vmem:[%s15 + $0xf8] sm:$0xff]
    %v797 = vld [vmem:[%s15 + $0x100] sm:$0xf]
    %v798 = vld [vmem:[%s15 + $0x104] sm:$0xff]
    %v799 = vld [vmem:[%s15 + $0x10c] sm:$0xff]
    %v800 = vld [vmem:[%s15 + $0x114] sm:$0xf]
    %v801 = vld [vmem:[%s15 + $0x118] sm:$0xff]
    %v802 = vld [vmem:[%s15 + $0x120] sm:$0xff]
    %v803 = vld [vmem:[%s15 + $0x128] sm:$0xf]
    %v804 = vld [vmem:[%s15 + $0x12c] sm:$0xff]
    %v805 = vld [vmem:[%s15 + $0x134] sm:$0xff]
    %v806 = vld [vmem:[%s15 + $0x13c] sm:$0xf]
    %v807 = vld [vmem:[%s15 + $0x140] sm:$0xff]
    %v808 = vld [vmem:[%s15 + $0x148] sm:$0xff]
    %v809 = vld [vmem:[%s15 + $0x150] sm:$0xf]
    %v810 = vld [vmem:[%s15 + $0x154] sm:$0xff]
    %v811 = vld [vmem:[%s15 + $0x15c] sm:$0xff]
    %v812 = vld [vmem:[%s15 + $0x164] sm:$0xf]
    %v813 = vld [vmem:[%s15 + $0x168] sm:$0xff]
    %v814 = vld [vmem:[%s15 + $0x170] sm:$0xff]
    %v815 = vld [vmem:[%s15 + $0x178] sm:$0xf]
    %v816 = vld [vmem:[%s15 + $0x17c] sm:$0xff]
    %v817 = vld [vmem:[%s15 + $0x184] sm:$0xff]
    %v818 = vld [vmem:[%s15 + $0x18c] sm:$0xf]
    %v819 = vld [vmem:[%s15 + $0x190] sm:$0xff]
    %v820 = vld [vmem:[%s15 + $0x198] sm:$0xff]
    %v821 = vld [vmem:[%s15 + $0x1a0] sm:$0xf]
    %v822 = vld [vmem:[%s15 + $0x1a4] sm:$0xff]
    %v823 = vld [vmem:[%s15 + $0x1ac] sm:$0xff]
    %v824 = vld [vmem:[%s15 + $0x1b4] sm:$0xf]
    %v825 = vld [vmem:[%s15 + $0x1b8] sm:$0xff]
    %v826 = vld [vmem:[%s15 + $0x1c0] sm:$0xff]
    %v827 = vld [vmem:[%s15 + $0x1c8] sm:$0xf]
    %v828 = vld [vmem:[%s15 + $0x1cc] sm:$0xff]
    %v829 = vld [vmem:[%s15 + $0x1d4] sm:$0xff]
    %v830 = vld [vmem:[%s15 + $0x1dc] sm:$0xf]
    %v831 = vld [vmem:[%s15 + $0x1e0] sm:$0xff]
    %v832 = vld [vmem:[%s15 + $0x1e8] sm:$0xff]
    %v833 = vld [vmem:[%s15 + $0x1f0] sm:$0xf]
    %v834 = vld [vmem:[%s15 + $0x1f4] sm:$0xff]
    %v835 = vld [vmem:[%s15 + $0x1fc] sm:$0xff]
    %v836 = vld [vmem:[%s15 + $0x204] sm:$0xf]
    %v837 = vld [vmem:[%s15 + $0x208] sm:$0xff]
    %v838 = vld [vmem:[%s15 + $0x210] sm:$0xff]
    %v839 = vld [vmem:[%s15 + $0x218] sm:$0xf]
    %v840 = vld [vmem:[%s15 + $0x21c] sm:$0xff]
    %v841 = vld [vmem:[%s15 + $0x224] sm:$0xff]
    %v842 = vld [vmem:[%s15 + $0x22c] sm:$0xf]
    %v843 = vld [vmem:[%s15 + $0x230] sm:$0xff]
    %v844 = vld [vmem:[%s15 + $0x238] sm:$0xff]
    %v845 = vld [vmem:[%s15 + $0x240] sm:$0xf]
    %v846 = vld [vmem:[%s15 + $0x244] sm:$0xff]
    %v847 = vld [vmem:[%s15 + $0x24c] sm:$0xff]
    %v848 = vld [vmem:[%s15 + $0x254] sm:$0xf]
    %v849 = vld [vmem:[%s15 + $0x258] sm:$0xff]
    %v850 = vld [vmem:[%s15 + $0x260] sm:$0xff]
    %v851 = vld [vmem:[%s15 + $0x268] sm:$0xf]
    %v852 = vld [vmem:[%s15 + $0x26c] sm:$0xff]
    %v853 = vld [vmem:[%s15 + $0x274] sm:$0xff]
    %v854 = vld [vmem:[%s15 + $0x27c] sm:$0xf]
    %v855 = vld [vmem:[%s15 + $0x280] sm:$0xff]
    %v856 = vld [vmem:[%s15 + $0x288] sm:$0xff]
    %v857 = vld [vmem:[%s15 + $0x290] sm:$0xf]
    %v858 = vld [vmem:[%s15 + $0x294] sm:$0xff]
    %v859 = vld [vmem:[%s15 + $0x29c] sm:$0xff]
    %v860 = vld [vmem:[%s15 + $0x2a4] sm:$0xf]
    %v861 = vld [vmem:[%s15 + $0x2a8] sm:$0xff]
    %v862 = vld [vmem:[%s15 + $0x2b0] sm:$0xff]
    %v863 = vld [vmem:[%s15 + $0x2b8] sm:$0xf]
    %v864 = vld [vmem:[%s15 + $0x2bc] sm:$0xff]
    %v865 = vld [vmem:[%s15 + $0x2c4] sm:$0xff]
    %v866 = vld [vmem:[%s15 + $0x2cc] sm:$0xf]
    %v867 = vld [vmem:[%s15 + $0x2d0] sm:$0xff]
    %v868 = vld [vmem:[%s15 + $0x2d8] sm:$0xff]
    %v869 = vld [vmem:[%s15 + $0x2e0] sm:$0xf]
    %v870 = vld [vmem:[%s15 + $0x2e4] sm:$0xff]
    %v871 = vld [vmem:[%s15 + $0x2ec] sm:$0xff]
    %v872 = vld [vmem:[%s15 + $0x2f4] sm:$0xf]
    %v873 = vld [vmem:[%s15 + $0x2f8] sm:$0xff]
    %v874 = vld [vmem:[%s15 + $0x300] sm:$0xff]
    %v875 = vld [vmem:[%s15 + $0x308] sm:$0xf]
    %v876 = vld [vmem:[%s15 + $0x30c] sm:$0xff]
    %v877 = vld [vmem:[%s15 + $0x314] sm:$0xff]
    %v878 = vld [vmem:[%s15 + $0x31c] sm:$0xf]
    %v999 = vunpack.c.l.b16 %v759
    %v1000 = vunpack.c.h.b16 %v759
    %v1001 = vunpack.c.l.b16 %v760
    %v1002 = vunpack.c.h.b16 %v760
    %v1003 = vunpack.c.l.b16 %v761
    %v1004 = vunpack.c.l.b16 %v762
    %v1005 = vunpack.c.h.b16 %v762
    %v1006 = vunpack.c.l.b16 %v763
    %v1007 = vunpack.c.h.b16 %v763
    %v1008 = vunpack.c.l.b16 %v764
    %v1009 = vunpack.c.l.b16 %v765
    %v1010 = vunpack.c.h.b16 %v765
    %v1011 = vunpack.c.l.b16 %v766
    %v1012 = vunpack.c.h.b16 %v766
    %v1013 = vunpack.c.l.b16 %v767
    %v1014 = vunpack.c.l.b16 %v768
    %v1015 = vunpack.c.h.b16 %v768
    %v1016 = vunpack.c.l.b16 %v769
    %v1017 = vunpack.c.h.b16 %v769
    %v1018 = vunpack.c.l.b16 %v770
    %v1019 = vunpack.c.l.b16 %v771
    %v1020 = vunpack.c.h.b16 %v771
    %v1021 = vunpack.c.l.b16 %v772
    %v1022 = vunpack.c.h.b16 %v772
    %v1023 = vunpack.c.l.b16 %v773
    %v1024 = vunpack.c.l.b16 %v774
    %v1025 = vunpack.c.h.b16 %v774
    %v1026 = vunpack.c.l.b16 %v775
    %v1027 = vunpack.c.h.b16 %v775
    %v1028 = vunpack.c.l.b16 %v776
    %v1029 = vunpack.c.l.b16 %v777
    %v1030 = vunpack.c.h.b16 %v777
    %v1031 = vunpack.c.l.b16 %v778
    %v1032 = vunpack.c.h.b16 %v778
    %v1033 = vunpack.c.l.b16 %v779
    %v1034 = vunpack.c.l.b16 %v780
    %v1035 = vunpack.c.h.b16 %v780
    %v1036 = vunpack.c.l.b16 %v781
    %v1037 = vunpack.c.h.b16 %v781
    %v1038 = vunpack.c.l.b16 %v782
    %v1039 = vunpack.c.l.b16 %v783
    %v1040 = vunpack.c.h.b16 %v783
    %v1041 = vunpack.c.l.b16 %v784
    %v1042 = vunpack.c.h.b16 %v784
    %v1043 = vunpack.c.l.b16 %v785
    %v1044 = vunpack.c.l.b16 %v786
    %v1045 = vunpack.c.h.b16 %v786
    %v1046 = vunpack.c.l.b16 %v787
    %v1047 = vunpack.c.h.b16 %v787
    %v1048 = vunpack.c.l.b16 %v788
    %v1049 = vunpack.c.l.b16 %v789
    %v1050 = vunpack.c.h.b16 %v789
    %v1051 = vunpack.c.l.b16 %v790
    %v1052 = vunpack.c.h.b16 %v790
    %v1053 = vunpack.c.l.b16 %v791
    %v1054 = vunpack.c.l.b16 %v792
    %v1055 = vunpack.c.h.b16 %v792
    %v1056 = vunpack.c.l.b16 %v793
    %v1057 = vunpack.c.h.b16 %v793
    %v1058 = vunpack.c.l.b16 %v794
    %v1059 = vunpack.c.l.b16 %v795
    %v1060 = vunpack.c.h.b16 %v795
    %v1061 = vunpack.c.l.b16 %v796
    %v1062 = vunpack.c.h.b16 %v796
    %v1063 = vunpack.c.l.b16 %v797
    %v1064 = vunpack.c.l.b16 %v798
    %v1065 = vunpack.c.h.b16 %v798
    %v1066 = vunpack.c.l.b16 %v799
    %v1067 = vunpack.c.h.b16 %v799
    %v1068 = vunpack.c.l.b16 %v800
    %v1069 = vunpack.c.l.b16 %v801
    %v1070 = vunpack.c.h.b16 %v801
    %v1071 = vunpack.c.l.b16 %v802
    %v1072 = vunpack.c.h.b16 %v802
    %v1073 = vunpack.c.l.b16 %v803
    %v1074 = vunpack.c.l.b16 %v804
    %v1075 = vunpack.c.h.b16 %v804
    %v1076 = vunpack.c.l.b16 %v805
    %v1077 = vunpack.c.h.b16 %v805
    %v1078 = vunpack.c.l.b16 %v806
    %v1079 = vunpack.c.l.b16 %v807
    %v1080 = vunpack.c.h.b16 %v807
    %v1081 = vunpack.c.l.b16 %v808
    %v1082 = vunpack.c.h.b16 %v808
    %v1083 = vunpack.c.l.b16 %v809
    %v1084 = vunpack.c.l.b16 %v810
    %v1085 = vunpack.c.h.b16 %v810
    %v1086 = vunpack.c.l.b16 %v811
    %v1087 = vunpack.c.h.b16 %v811
    %v1088 = vunpack.c.l.b16 %v812
    %v1089 = vunpack.c.l.b16 %v813
    %v1090 = vunpack.c.h.b16 %v813
    %v1091 = vunpack.c.l.b16 %v814
    %v1092 = vunpack.c.h.b16 %v814
    %v1093 = vunpack.c.l.b16 %v815
    %v1094 = vunpack.c.l.b16 %v816
    %v1095 = vunpack.c.h.b16 %v816
    %v1096 = vunpack.c.l.b16 %v817
    %v1097 = vunpack.c.h.b16 %v817
    %v1098 = vunpack.c.l.b16 %v818
    %v1099 = vunpack.c.l.b16 %v819
    %v1100 = vunpack.c.h.b16 %v819
    %v1101 = vunpack.c.l.b16 %v820
    %v1102 = vunpack.c.h.b16 %v820
    %v1103 = vunpack.c.l.b16 %v821
    %v1104 = vunpack.c.l.b16 %v822
    %v1105 = vunpack.c.h.b16 %v822
    %v1106 = vunpack.c.l.b16 %v823
    %v1107 = vunpack.c.h.b16 %v823
    %v1108 = vunpack.c.l.b16 %v824
    %v1109 = vunpack.c.l.b16 %v825
    %v1110 = vunpack.c.h.b16 %v825
    %v1111 = vunpack.c.l.b16 %v826
    %v1112 = vunpack.c.h.b16 %v826
    %v1113 = vunpack.c.l.b16 %v827
    %v1114 = vunpack.c.l.b16 %v828
    %v1115 = vunpack.c.h.b16 %v828
    %v1116 = vunpack.c.l.b16 %v829
    %v1117 = vunpack.c.h.b16 %v829
    %v1118 = vunpack.c.l.b16 %v830
    %v1119 = vunpack.c.l.b16 %v831
    %v1120 = vunpack.c.h.b16 %v831
    %v1121 = vunpack.c.l.b16 %v832
    %v1122 = vunpack.c.h.b16 %v832
    %v1123 = vunpack.c.l.b16 %v833
    %v1124 = vunpack.c.l.b16 %v834
    %v1125 = vunpack.c.h.b16 %v834
    %v1126 = vunpack.c.l.b16 %v835
    %v1127 = vunpack.c.h.b16 %v835
    %v1128 = vunpack.c.l.b16 %v836
    %v1129 = vunpack.c.l.b16 %v837
    %v1130 = vunpack.c.h.b16 %v837
    %v1131 = vunpack.c.l.b16 %v838
    %v1132 = vunpack.c.h.b16 %v838
    %v1133 = vunpack.c.l.b16 %v839
    %v1134 = vunpack.c.l.b16 %v840
    %v1135 = vunpack.c.h.b16 %v840
    %v1136 = vunpack.c.l.b16 %v841
    %v1137 = vunpack.c.h.b16 %v841
    %v1138 = vunpack.c.l.b16 %v842
    %v1139 = vunpack.c.l.b16 %v843
    %v1140 = vunpack.c.h.b16 %v843
    %v1141 = vunpack.c.l.b16 %v844
    %v1142 = vunpack.c.h.b16 %v844
    %v1143 = vunpack.c.l.b16 %v845
    %v1144 = vunpack.c.l.b16 %v846
    %v1145 = vunpack.c.h.b16 %v846
    %v1146 = vunpack.c.l.b16 %v847
    %v1147 = vunpack.c.h.b16 %v847
    %v1148 = vunpack.c.l.b16 %v848
    %v1149 = vunpack.c.l.b16 %v849
    %v1150 = vunpack.c.h.b16 %v849
    %v1151 = vunpack.c.l.b16 %v850
    %v1152 = vunpack.c.h.b16 %v850
    %v1153 = vunpack.c.l.b16 %v851
    %v1154 = vunpack.c.l.b16 %v852
    %v1155 = vunpack.c.h.b16 %v852
    %v1156 = vunpack.c.l.b16 %v853
    %v1157 = vunpack.c.h.b16 %v853
    %v1158 = vunpack.c.l.b16 %v854
    %v1159 = vunpack.c.l.b16 %v855
    %v1160 = vunpack.c.h.b16 %v855
    %v1161 = vunpack.c.l.b16 %v856
    %v1162 = vunpack.c.h.b16 %v856
    %v1163 = vunpack.c.l.b16 %v857
    %v1164 = vunpack.c.l.b16 %v858
    %v1165 = vunpack.c.h.b16 %v858
    %v1166 = vunpack.c.l.b16 %v859
    %v1167 = vunpack.c.h.b16 %v859
    %v1168 = vunpack.c.l.b16 %v860
    %v1169 = vunpack.c.l.b16 %v861
    %v1170 = vunpack.c.h.b16 %v861
    %v1171 = vunpack.c.l.b16 %v862
    %v1172 = vunpack.c.h.b16 %v862
    %v1173 = vunpack.c.l.b16 %v863
    %v1174 = vunpack.c.l.b16 %v864
    %v1175 = vunpack.c.h.b16 %v864
    %v1176 = vunpack.c.l.b16 %v865
    %v1177 = vunpack.c.h.b16 %v865
    %v1178 = vunpack.c.l.b16 %v866
    %v1179 = vunpack.c.l.b16 %v867
    %v1180 = vunpack.c.h.b16 %v867
    %v1181 = vunpack.c.l.b16 %v868
    %v1182 = vunpack.c.h.b16 %v868
    %v1183 = vunpack.c.l.b16 %v869
    %v1184 = vunpack.c.l.b16 %v870
    %v1185 = vunpack.c.h.b16 %v870
    %v1186 = vunpack.c.l.b16 %v871
    %v1187 = vunpack.c.h.b16 %v871
    %v1188 = vunpack.c.l.b16 %v872
    %v1189 = vunpack.c.l.b16 %v873
    %v1190 = vunpack.c.h.b16 %v873
    %v1191 = vunpack.c.l.b16 %v874
    %v1192 = vunpack.c.h.b16 %v874
    %v1193 = vunpack.c.l.b16 %v875
    %v1194 = vunpack.c.l.b16 %v876
    %v1195 = vunpack.c.h.b16 %v876
    %v1196 = vunpack.c.l.b16 %v877
    %v1197 = vunpack.c.h.b16 %v877
    %v1198 = vunpack.c.l.b16 %v878
    %v1199 = vpack.c.b16 %v1004, %v999
    %v1200 = vpack.c.b16 %v1005, %v1000
    %v1201 = vpack.c.b16 %v1006, %v1001
    %v1202 = vpack.c.b16 %v1007, %v1002
    %v1203 = vpack.c.b16 %v1008, %v1003
    %v1204 = vpack.c.b16 %v1014, %v1009
    %v1205 = vpack.c.b16 %v1015, %v1010
    %v1206 = vpack.c.b16 %v1016, %v1011
    %v1207 = vpack.c.b16 %v1017, %v1012
    %v1208 = vpack.c.b16 %v1018, %v1013
    %v1209 = vpack.c.b16 %v1024, %v1019
    %v1210 = vpack.c.b16 %v1025, %v1020
    %v1211 = vpack.c.b16 %v1026, %v1021
    %v1212 = vpack.c.b16 %v1027, %v1022
    %v1213 = vpack.c.b16 %v1028, %v1023
    %v1214 = vpack.c.b16 %v1034, %v1029
    %v1215 = vpack.c.b16 %v1035, %v1030
    %v1216 = vpack.c.b16 %v1036, %v1031
    %v1217 = vpack.c.b16 %v1037, %v1032
    %v1218 = vpack.c.b16 %v1038, %v1033
    %v1219 = vpack.c.b16 %v1044, %v1039
    %v1220 = vpack.c.b16 %v1045, %v1040
    %v1221 = vpack.c.b16 %v1046, %v1041
    %v1222 = vpack.c.b16 %v1047, %v1042
    %v1223 = vpack.c.b16 %v1048, %v1043
    %v1224 = vpack.c.b16 %v1054, %v1049
    %v1225 = vpack.c.b16 %v1055, %v1050
    %v1226 = vpack.c.b16 %v1056, %v1051
    %v1227 = vpack.c.b16 %v1057, %v1052
    %v1228 = vpack.c.b16 %v1058, %v1053
    %v1229 = vpack.c.b16 %v1064, %v1059
    %v1230 = vpack.c.b16 %v1065, %v1060
    %v1231 = vpack.c.b16 %v1066, %v1061
    %v1232 = vpack.c.b16 %v1067, %v1062
    %v1233 = vpack.c.b16 %v1068, %v1063
    %v1234 = vpack.c.b16 %v1074, %v1069
    %v1235 = vpack.c.b16 %v1075, %v1070
    %v1236 = vpack.c.b16 %v1076, %v1071
    %v1237 = vpack.c.b16 %v1077, %v1072
    %v1238 = vpack.c.b16 %v1078, %v1073
    %v1239 = vpack.c.b16 %v1084, %v1079
    %v1240 = vpack.c.b16 %v1085, %v1080
    %v1241 = vpack.c.b16 %v1086, %v1081
    %v1242 = vpack.c.b16 %v1087, %v1082
    %v1243 = vpack.c.b16 %v1088, %v1083
    %v1244 = vpack.c.b16 %v1094, %v1089
    %v1245 = vpack.c.b16 %v1095, %v1090
    %v1246 = vpack.c.b16 %v1096, %v1091
    %v1247 = vpack.c.b16 %v1097, %v1092
    %v1248 = vpack.c.b16 %v1098, %v1093
    %v1249 = vpack.c.b16 %v1104, %v1099
    %v1250 = vpack.c.b16 %v1105, %v1100
    %v1251 = vpack.c.b16 %v1106, %v1101
    %v1252 = vpack.c.b16 %v1107, %v1102
    %v1253 = vpack.c.b16 %v1108, %v1103
    %v1254 = vpack.c.b16 %v1114, %v1109
    %v1255 = vpack.c.b16 %v1115, %v1110
    %v1256 = vpack.c.b16 %v1116, %v1111
    %v1257 = vpack.c.b16 %v1117, %v1112
    %v1258 = vpack.c.b16 %v1118, %v1113
    %v1259 = vpack.c.b16 %v1124, %v1119
    %v1260 = vpack.c.b16 %v1125, %v1120
    %v1261 = vpack.c.b16 %v1126, %v1121
    %v1262 = vpack.c.b16 %v1127, %v1122
    %v1263 = vpack.c.b16 %v1128, %v1123
    %v1264 = vpack.c.b16 %v1134, %v1129
    %v1265 = vpack.c.b16 %v1135, %v1130
    %v1266 = vpack.c.b16 %v1136, %v1131
    %v1267 = vpack.c.b16 %v1137, %v1132
    %v1268 = vpack.c.b16 %v1138, %v1133
    %v1269 = vpack.c.b16 %v1144, %v1139
    %v1270 = vpack.c.b16 %v1145, %v1140
    %v1271 = vpack.c.b16 %v1146, %v1141
    %v1272 = vpack.c.b16 %v1147, %v1142
    %v1273 = vpack.c.b16 %v1148, %v1143
    %v1274 = vpack.c.b16 %v1154, %v1149
    %v1275 = vpack.c.b16 %v1155, %v1150
    %v1276 = vpack.c.b16 %v1156, %v1151
    %v1277 = vpack.c.b16 %v1157, %v1152
    %v1278 = vpack.c.b16 %v1158, %v1153
    %v1279 = vpack.c.b16 %v1164, %v1159
    %v1280 = vpack.c.b16 %v1165, %v1160
    %v1281 = vpack.c.b16 %v1166, %v1161
    %v1282 = vpack.c.b16 %v1167, %v1162
    %v1283 = vpack.c.b16 %v1168, %v1163
    %v1284 = vpack.c.b16 %v1174, %v1169
    %v1285 = vpack.c.b16 %v1175, %v1170
    %v1286 = vpack.c.b16 %v1176, %v1171
    %v1287 = vpack.c.b16 %v1177, %v1172
    %v1288 = vpack.c.b16 %v1178, %v1173
    %v1289 = vpack.c.b16 %v1184, %v1179
    %v1290 = vpack.c.b16 %v1185, %v1180
    %v1291 = vpack.c.b16 %v1186, %v1181
    %v1292 = vpack.c.b16 %v1187, %v1182
    %v1293 = vpack.c.b16 %v1188, %v1183
    %v1294 = vpack.c.b16 %v1194, %v1189
    %v1295 = vpack.c.b16 %v1195, %v1190
    %v1296 = vpack.c.b16 %v1196, %v1191
    %v1297 = vpack.c.b16 %v1197, %v1192
    %v1298 = vpack.c.b16 %v1198, %v1193
    %vm1399 = vcmask 523264
    %v1401 = vsel %vm1399, %v755, 0
    %v1404 = vsel %vm1399, %v758, 0
    %1406 = vmatprep.subr.bf16.mxu0 %v1200
    %1407 = vmatpush1.bf16.msra.mxu0 %v1199
    %1408 = vmatprep.subr.bf16.mxu0 %v1205
    %1409 = vmatpush1.bf16.msra.mxu0 %v1204
    %1410 = vmatprep.subr.bf16.mxu0 %v1210
    %1411 = vmatpush1.bf16.msra.mxu0 %v1209
    %1412 = vmatprep.subr.bf16.mxu0 %v1215
    %1413 = vmatpush1.bf16.msra.mxu0 %v1214
    %1414 = vmatprep.subr.bf16.mxu0 %v1220
    %1415 = vmatpush1.bf16.msra.mxu0 %v1219
    %1416 = vmatprep.subr.bf16.mxu0 %v1225
    %1417 = vmatpush1.bf16.msra.mxu0 %v1224
    %1418 = vmatprep.subr.bf16.mxu0 %v1230
    %1419 = vmatpush1.bf16.msra.mxu0 %v1229
    %1420 = vmatprep.subr.bf16.mxu0 %v1235
    %1421 = vmatpush1.bf16.msra.mxu0 %v1234
    %1422 = vmatprep.subr.bf16.mxu0 %v1240
    %1423 = vmatpush1.bf16.msra.mxu0 %v1239
    %1424 = vmatprep.subr.bf16.mxu0 %v1245
    %1425 = vmatpush1.bf16.msra.mxu0 %v1244
    %1426 = vmatprep.subr.bf16.mxu0 %v1250
    %1427 = vmatpush1.bf16.msra.mxu0 %v1249
    %1428 = vmatprep.subr.bf16.mxu0 %v1255
    %1429 = vmatpush1.bf16.msra.mxu0 %v1254
    %1430 = vmatprep.subr.bf16.mxu0 %v1260
    %1431 = vmatpush1.bf16.msra.mxu0 %v1259
    %1432 = vmatprep.subr.bf16.mxu0 %v1265
    %1433 = vmatpush1.bf16.msra.mxu0 %v1264
    %1434 = vmatprep.subr.bf16.mxu0 %v1270
    %1435 = vmatpush1.bf16.msra.mxu0 %v1269
    %1436 = vmatprep.subr.bf16.mxu0 %v1275
    %1437 = vmatpush1.bf16.msra.mxu0 %v1274
    %1438 = vmatprep.mubr.bf16.mxu0 %v754
    %1439 = vmatmul.mubr.bf16.gmra.mrb[0].mxu0 %v753
    %v1440 = vpop.f32.mrb[0].mxu0
    %v1441 = vadd.f32 0.0, %v1440
    %v1442 = vpop.f32.mrb[0].mxu0
    %v1443 = vadd.f32 0.0, %v1442
    %v1444 = vpop.f32.mrb[0].mxu0
    %v1445 = vadd.f32 0.0, %v1444
    %v1446 = vpop.f32.mrb[0].mxu0
    %v1447 = vadd.f32 0.0, %v1446
    %1448 = vmatprep.mubr.bf16.mxu0 %v757
    %1449 = vmatmul.mubr.bf16.gmra.mrb[0].mxu0 %v756
    %v1450 = vpop.f32.mrb[0].mxu0
    %v1451 = vadd.f32 0.0, %v1450
    %v1452 = vpop.f32.mrb[0].mxu0
    %v1453 = vadd.f32 0.0, %v1452
    %v1454 = vpop.f32.mrb[0].mxu0
    %v1455 = vpop.f32.mrb[0].mxu0
    %1456 = vdwg.mxu0
    %1457 = vmatprep.subr.bf16.mxu0 %v1280
    %1458 = vmatpush1.bf16.msra.mxu0 %v1279
    %1459 = vmatprep.subr.bf16.mxu0 %v1285
    %1460 = vmatpush1.bf16.msra.mxu0 %v1284
    %1461 = vmatprep.subr.bf16.mxu0 %v1290
    %1462 = vmatpush1.bf16.msra.mxu0 %v1289
    %1463 = vmatprep.subr.bf16.mxu0 %v1295
    %1464 = vmatpush1.bf16.msra.mxu0 %v1294
    %1465 = vmatprep.subr.bf16.mxu0 0
    %1466 = vmatpush1.bf16.msra.mxu0 0
    %1467 = vmatprep.subr.bf16.mxu0 0
    %1468 = vmatpush1.bf16.msra.mxu0 0
    %1469 = vmatprep.subr.bf16.mxu0 0
    %1470 = vmatpush1.bf16.msra.mxu0 0
    %1471 = vmatprep.subr.bf16.mxu0 0
    %1472 = vmatpush1.bf16.msra.mxu0 0
    %1473 = vmatprep.subr.bf16.mxu0 0
    %1474 = vmatpush1.bf16.msra.mxu0 0
    %1475 = vmatprep.subr.bf16.mxu0 0
    %1476 = vmatpush1.bf16.msra.mxu0 0
    %1477 = vmatprep.subr.bf16.mxu0 0
    %1478 = vmatpush1.bf16.msra.mxu0 0
    %1479 = vmatprep.subr.bf16.mxu0 0
    %1480 = vmatpush1.bf16.msra.mxu0 0
    %1481 = vmatprep.subr.bf16.mxu0 0
    %1482 = vmatpush1.bf16.msra.mxu0 0
    %1483 = vmatprep.subr.bf16.mxu0 0
    %1484 = vmatpush1.bf16.msra.mxu0 0
    %1485 = vmatprep.subr.bf16.mxu0 0
    %1486 = vmatpush1.bf16.msra.mxu0 0
    %1487 = vmatprep.subr.bf16.mxu0 0
    %1488 = vmatpush1.bf16.msra.mxu0 0
    %1489 = vmatprep.mubr.bf16.mxu0 0
    %1490 = vmatmul.mubr.bf16.gmra.mrb[0].mxu0 %v1401
    %v1491 = vpop.f32.mrb[0].mxu0
    %v1492 = vadd.f32 %v1441, %v1491
    %v1493 = vpop.f32.mrb[0].mxu0
    %v1494 = vadd.f32 %v1443, %v1493
    %v1495 = vpop.f32.mrb[0].mxu0
    %v1496 = vadd.f32 %v1445, %v1495
    %v1497 = vpop.f32.mrb[0].mxu0
    %v1498 = vadd.f32 %v1447, %v1497
    %1499 = vmatprep.mubr.bf16.mxu0 0
    %1500 = vmatmul.mubr.bf16.gmra.mrb[0].mxu0 %v1404
    %v1501 = vpop.f32.mrb[0].mxu0
    %v1502 = vadd.f32 %v1451, %v1501
    %v1503 = vpop.f32.mrb[0].mxu0
    %v1504 = vadd.f32 %v1453, %v1503
    %v1505 = vpop.f32.mrb[0].mxu0
    %v1506 = vpop.f32.mrb[0].mxu0
    %1507 = vdwg.mxu0
    %1508 = vmatprep.subr.bf16.mxu0 %v1202
    %1509 = vmatpush1.bf16.msra.mxu0 %v1201
    %1510 = vmatprep.subr.bf16.mxu0 %v1207
    %1511 = vmatpush1.bf16.msra.mxu0 %v1206
    %1512 = vmatprep.subr.bf16.mxu0 %v1212
    %1513 = vmatpush1.bf16.msra.mxu0 %v1211
    %1514 = vmatprep.subr.bf16.mxu0 %v1217
    %1515 = vmatpush1.bf16.msra.mxu0 %v1216
    %1516 = vmatprep.subr.bf16.mxu0 %v1222
    %1517 = vmatpush1.bf16.msra.mxu0 %v1221
    %1518 = vmatprep.subr.bf16.mxu0 %v1227
    %1519 = vmatpush1.bf16.msra.mxu0 %v1226
    %1520 = vmatprep.subr.bf16.mxu0 %v1232
    %1521 = vmatpush1.bf16.msra.mxu0 %v1231
    %1522 = vmatprep.subr.bf16.mxu0 %v1237
    %1523 = vmatpush1.bf16.msra.mxu0 %v1236
    %1524 = vmatprep.subr.bf16.mxu0 %v1242
    %1525 = vmatpush1.bf16.msra.mxu0 %v1241
    %1526 = vmatprep.subr.bf16.mxu0 %v1247
    %1527 = vmatpush1.bf16.msra.mxu0 %v1246
    %1528 = vmatprep.subr.bf16.mxu0 %v1252
    %1529 = vmatpush1.bf16.msra.mxu0 %v1251
    %1530 = vmatprep.subr.bf16.mxu0 %v1257
    %1531 = vmatpush1.bf16.msra.mxu0 %v1256
    %1532 = vmatprep.subr.bf16.mxu0 %v1262
    %1533 = vmatpush1.bf16.msra.mxu0 %v1261
    %1534 = vmatprep.subr.bf16.mxu0 %v1267
    %1535 = vmatpush1.bf16.msra.mxu0 %v1266
    %1536 = vmatprep.subr.bf16.mxu0 %v1272
    %1537 = vmatpush1.bf16.msra.mxu0 %v1271
    %1538 = vmatprep.subr.bf16.mxu0 %v1277
    %1539 = vmatpush1.bf16.msra.mxu0 %v1276
    %1540 = vmatprep.mubr.bf16.mxu0 %v754
    %1541 = vmatmul.mubr.bf16.gmra.mrb[0].mxu0 %v753
    %v1542 = vpop.f32.mrb[0].mxu0
    %v1543 = vadd.f32 0.0, %v1542
    %v1544 = vpop.f32.mrb[0].mxu0
    %v1545 = vadd.f32 0.0, %v1544
    %v1546 = vpop.f32.mrb[0].mxu0
    %v1547 = vadd.f32 0.0, %v1546
    %v1548 = vpop.f32.mrb[0].mxu0
    %v1549 = vadd.f32 0.0, %v1548
    %1550 = vmatprep.mubr.bf16.mxu0 %v757
    %1551 = vmatmul.mubr.bf16.gmra.mrb[0].mxu0 %v756
    %v1552 = vpop.f32.mrb[0].mxu0
    %v1553 = vadd.f32 0.0, %v1552
    %v1554 = vpop.f32.mrb[0].mxu0
    %v1555 = vadd.f32 0.0, %v1554
    %v1556 = vpop.f32.mrb[0].mxu0
    %v1557 = vpop.f32.mrb[0].mxu0
    %1558 = vdwg.mxu0
    %1559 = vmatprep.subr.bf16.mxu0 %v1282
    %1560 = vmatpush1.bf16.msra.mxu0 %v1281
    %1561 = vmatprep.subr.bf16.mxu0 %v1287
    %1562 = vmatpush1.bf16.msra.mxu0 %v1286
    %1563 = vmatprep.subr.bf16.mxu0 %v1292
    %1564 = vmatpush1.bf16.msra.mxu0 %v1291
    %1565 = vmatprep.subr.bf16.mxu0 %v1297
    %1566 = vmatpush1.bf16.msra.mxu0 %v1296
    %1567 = vmatprep.subr.bf16.mxu0 0
    %1568 = vmatpush1.bf16.msra.mxu0 0
    %1569 = vmatprep.subr.bf16.mxu0 0
    %1570 = vmatpush1.bf16.msra.mxu0 0
    %1571 = vmatprep.subr.bf16.mxu0 0
    %1572 = vmatpush1.bf16.msra.mxu0 0
    %1573 = vmatprep.subr.bf16.mxu0 0
    %1574 = vmatpush1.bf16.msra.mxu0 0
    %1575 = vmatprep.subr.bf16.mxu0 0
    %1576 = vmatpush1.bf16.msra.mxu0 0
    %1577 = vmatprep.subr.bf16.mxu0 0
    %1578 = vmatpush1.bf16.msra.mxu0 0
    %1579 = vmatprep.subr.bf16.mxu0 0
    %1580 = vmatpush1.bf16.msra.mxu0 0
    %1581 = vmatprep.subr.bf16.mxu0 0
    %1582 = vmatpush1.bf16.msra.mxu0 0
    %1583 = vmatprep.subr.bf16.mxu0 0
    %1584 = vmatpush1.bf16.msra.mxu0 0
    %1585 = vmatprep.subr.bf16.mxu0 0
    %1586 = vmatpush1.bf16.msra.mxu0 0
    %1587 = vmatprep.subr.bf16.mxu0 0
    %1588 = vmatpush1.bf16.msra.mxu0 0
    %1589 = vmatprep.subr.bf16.mxu0 0
    %1590 = vmatpush1.bf16.msra.mxu0 0
    %1591 = vmatprep.mubr.bf16.mxu0 0
    %1592 = vmatmul.mubr.bf16.gmra.mrb[0].mxu0 %v1401
    %v1593 = vpop.f32.mrb[0].mxu0
    %v1594 = vadd.f32 %v1543, %v1593
    %v1595 = vpop.f32.mrb[0].mxu0
    %v1596 = vadd.f32 %v1545, %v1595
    %v1597 = vpop.f32.mrb[0].mxu0
    %v1598 = vadd.f32 %v1547, %v1597
    %v1599 = vpop.f32.mrb[0].mxu0
    %v1600 = vadd.f32 %v1549, %v1599
    %1601 = vmatprep.mubr.bf16.mxu0 0
    %1602 = vmatmul.mubr.bf16.gmra.mrb[0].mxu0 %v1404
    %v1603 = vpop.f32.mrb[0].mxu0
    %v1604 = vadd.f32 %v1553, %v1603
    %v1605 = vpop.f32.mrb[0].mxu0
    %v1606 = vadd.f32 %v1555, %v1605
    %v1607 = vpop.f32.mrb[0].mxu0
    %v1608 = vpop.f32.mrb[0].mxu0
    %1609 = vdwg.mxu0
    %1610 = vmatprep.subr.bf16.mxu0 0
    %1611 = vmatpush1.bf16.msra.mxu0 %v1203
    %1612 = vmatprep.subr.bf16.mxu0 0
    %1613 = vmatpush1.bf16.msra.mxu0 %v1208
    %1614 = vmatprep.subr.bf16.mxu0 0
    %1615 = vmatpush1.bf16.msra.mxu0 %v1213
    %1616 = vmatprep.subr.bf16.mxu0 0
    %1617 = vmatpush1.bf16.msra.mxu0 %v1218
    %1618 = vmatprep.subr.bf16.mxu0 0
    %1619 = vmatpush1.bf16.msra.mxu0 %v1223
    %1620 = vmatprep.subr.bf16.mxu0 0
    %1621 = vmatpush1.bf16.msra.mxu0 %v1228
    %1622 = vmatprep.subr.bf16.mxu0 0
    %1623 = vmatpush1.bf16.msra.mxu0 %v1233
    %1624 = vmatprep.subr.bf16.mxu0 0
    %1625 = vmatpush1.bf16.msra.mxu0 %v1238
    %1626 = vmatprep.subr.bf16.mxu0 0
    %1627 = vmatpush1.bf16.msra.mxu0 %v1243
    %1628 = vmatprep.subr.bf16.mxu0 0
    %1629 = vmatpush1.bf16.msra.mxu0 %v1248
    %1630 = vmatprep.subr.bf16.mxu0 0
    %1631 = vmatpush1.bf16.msra.mxu0 %v1253
    %1632 = vmatprep.subr.bf16.mxu0 0
    %1633 = vmatpush1.bf16.msra.mxu0 %v1258
    %1634 = vmatprep.subr.bf16.mxu0 0
    %1635 = vmatpush1.bf16.msra.mxu0 %v1263
    %1636 = vmatprep.subr.bf16.mxu0 0
    %1637 = vmatpush1.bf16.msra.mxu0 %v1268
    %1638 = vmatprep.subr.bf16.mxu0 0
    %1639 = vmatpush1.bf16.msra.mxu0 %v1273
    %1640 = vmatprep.subr.bf16.mxu0 0
    %1641 = vmatpush1.bf16.msra.mxu0 %v1278
    %1642 = vmatprep.mubr.bf16.mxu0 %v754
    %1643 = vmatmul.mubr.bf16.gmra.mrb[0].mxu0 %v753
    %v1644 = vpop.f32.mrb[0].mxu0
    %v1645 = vadd.f32 0.0, %v1644
    %v1646 = vpop.f32.mrb[0].mxu0
    %v1647 = vpop.f32.mrb[0].mxu0
    %v1648 = vadd.f32 0.0, %v1647
    %v1649 = vpop.f32.mrb[0].mxu0
    %1650 = vmatprep.mubr.bf16.mxu0 %v757
    %1651 = vmatmul.mubr.bf16.gmra.mrb[0].mxu0 %v756
    %v1652 = vpop.f32.mrb[0].mxu0
    %v1653 = vadd.f32 0.0, %v1652
    %v1654 = vpop.f32.mrb[0].mxu0
    %v1655 = vpop.f32.mrb[0].mxu0
    %v1656 = vpop.f32.mrb[0].mxu0
    %1657 = vdwg.mxu0
    %1658 = vmatprep.subr.bf16.mxu0 0
    %1659 = vmatpush1.bf16.msra.mxu0 %v1283
    %1660 = vmatprep.subr.bf16.mxu0 0
    %1661 = vmatpush1.bf16.msra.mxu0 %v1288
    %1662 = vmatprep.subr.bf16.mxu0 0
    %1663 = vmatpush1.bf16.msra.mxu0 %v1293
    %1664 = vmatprep.subr.bf16.mxu0 0
    %1665 = vmatpush1.bf16.msra.mxu0 %v1298
    %1666 = vmatprep.subr.bf16.mxu0 0
    %1667 = vmatpush1.bf16.msra.mxu0 0
    %1668 = vmatprep.subr.bf16.mxu0 0
    %1669 = vmatpush1.bf16.msra.mxu0 0
    %1670 = vmatprep.subr.bf16.mxu0 0
    %1671 = vmatpush1.bf16.msra.mxu0 0
    %1672 = vmatprep.subr.bf16.mxu0 0
    %1673 = vmatpush1.bf16.msra.mxu0 0
    %1674 = vmatprep.subr.bf16.mxu0 0
    %1675 = vmatpush1.bf16.msra.mxu0 0
    %1676 = vmatprep.subr.bf16.mxu0 0
    %1677 = vmatpush1.bf16.msra.mxu0 0
    %1678 = vmatprep.subr.bf16.mxu0 0
    %1679 = vmatpush1.bf16.msra.mxu0 0
    %1680 = vmatprep.subr.bf16.mxu0 0
    %1681 = vmatpush1.bf16.msra.mxu0 0
    %1682 = vmatprep.subr.bf16.mxu0 0
    %1683 = vmatpush1.bf16.msra.mxu0 0
    %1684 = vmatprep.subr.bf16.mxu0 0
    %1685 = vmatpush1.bf16.msra.mxu0 0
    %1686 = vmatprep.subr.bf16.mxu0 0
    %1687 = vmatpush1.bf16.msra.mxu0 0
    %1688 = vmatprep.subr.bf16.mxu0 0
    %1689 = vmatpush1.bf16.msra.mxu0 0
    %1690 = vmatprep.mubr.bf16.mxu0 0
    %1691 = vmatmul.mubr.bf16.gmra.mrb[0].mxu0 %v1401
    %v1692 = vpop.f32.mrb[0].mxu0
    %v1693 = vadd.f32 %v1645, %v1692
    %v1694 = vpop.f32.mrb[0].mxu0
    %v1695 = vpop.f32.mrb[0].mxu0
    %v1696 = vadd.f32 %v1648, %v1695
    %v1697 = vpop.f32.mrb[0].mxu0
    %1698 = vmatprep.mubr.bf16.mxu0 0
    %1699 = vmatmul.mubr.bf16.gmra.mrb[0].mxu0 %v1404
    %v1700 = vpop.f32.mrb[0].mxu0
    %v1701 = vadd.f32 %v1653, %v1700
    %v1702 = vpop.f32.mrb[0].mxu0
    %v1703 = vpop.f32.mrb[0].mxu0
    %v1704 = vpop.f32.mrb[0].mxu0
    %1705 = vdwg.mxu0
    %v1706 = vld [vmem:[%s17] sm:$0x1f]
    %v1708 = vlaneseq
    %v1709 = vshrl.u32 %v1708, 7
    %v1710 = vsub.s32 0, %v1709
    %v1711 = vrot.slane %v1706, %v1710
    %v1712 = vlaneseq
    %v1713 = vshrl.u32 %v1712, 7
    %v1714 = vsub.s32 1, %v1713
    %v1715 = vrot.slane %v1706, %v1714
    %v1716 = vlaneseq
    %v1717 = vshrl.u32 %v1716, 7
    %v1718 = vsub.s32 2, %v1717
    %v1719 = vrot.slane %v1706, %v1718
    %v1720 = vlaneseq
    %v1721 = vshrl.u32 %v1720, 7
    %v1722 = vsub.s32 3, %v1721
    %v1723 = vrot.slane %v1706, %v1722
    %v1724 = vlaneseq
    %v1725 = vshrl.u32 %v1724, 7
    %v1726 = vsub.s32 4, %v1725
    %v1727 = vrot.slane %v1706, %v1726
    %v1733 = vmul.f32 %v1492, %v1711
    %v1734 = vmul.f32 %v1494, %v1715
    %v1735 = vmul.f32 %v1594, %v1719
    %v1736 = vmul.f32 %v1596, %v1723
    %v1737 = vmul.f32 %v1693, %v1727
    %v1738 = vmul.f32 %v1496, %v1711
    %v1739 = vmul.f32 %v1498, %v1715
    %v1740 = vmul.f32 %v1598, %v1719
    %v1741 = vmul.f32 %v1600, %v1723
    %v1742 = vmul.f32 %v1696, %v1727
    %v1743 = vmul.f32 %v1502, %v1711
    %v1744 = vmul.f32 %v1504, %v1715
    %v1745 = vmul.f32 %v1604, %v1719
    %v1746 = vmul.f32 %v1606, %v1723
    %v1747 = vmul.f32 %v1701, %v1727
    %v1748 = vld [vmem:[%s19] sm:$0x1f]
    %v1750 = vlaneseq
    %v1751 = vshrl.u32 %v1750, 7
    %v1752 = vsub.s32 0, %v1751
    %v1753 = vrot.slane %v1748, %v1752
    %v1754 = vlaneseq
    %v1755 = vshrl.u32 %v1754, 7
    %v1756 = vsub.s32 1, %v1755
    %v1757 = vrot.slane %v1748, %v1756
    %v1758 = vlaneseq
    %v1759 = vshrl.u32 %v1758, 7
    %v1760 = vsub.s32 2, %v1759
    %v1761 = vrot.slane %v1748, %v1760
    %v1762 = vlaneseq
    %v1763 = vshrl.u32 %v1762, 7
    %v1764 = vsub.s32 3, %v1763
    %v1765 = vrot.slane %v1748, %v1764
    %v1766 = vlaneseq
    %v1767 = vshrl.u32 %v1766, 7
    %v1768 = vsub.s32 4, %v1767
    %v1769 = vrot.slane %v1748, %v1768
    %v1775 = vadd.f32 %v1733, %v1753
    %v1776 = vadd.f32 %v1734, %v1757
    %v1777 = vadd.f32 %v1735, %v1761
    %v1778 = vadd.f32 %v1736, %v1765
    %v1779 = vadd.f32 %v1737, %v1769
    %v1780 = vadd.f32 %v1738, %v1753
    %v1781 = vadd.f32 %v1739, %v1757
    %v1782 = vadd.f32 %v1740, %v1761
    %v1783 = vadd.f32 %v1741, %v1765
    %v1784 = vadd.f32 %v1742, %v1769
    %v1785 = vadd.f32 %v1743, %v1753
    %v1786 = vadd.f32 %v1744, %v1757
    %v1787 = vadd.f32 %v1745, %v1761
    %v1788 = vadd.f32 %v1746, %v1765
    %v1789 = vadd.f32 %v1747, %v1769
    %v1790 = vmul.f32 %v1775, %v1775
    %v1791 = vmul.f32 %v1776, %v1776
    %v1792 = vmul.f32 %v1777, %v1777
    %v1793 = vmul.f32 %v1778, %v1778
    %v1794 = vmul.f32 %v1779, %v1779
    %v1795 = vmul.f32 %v1780, %v1780
    %v1796 = vmul.f32 %v1781, %v1781
    %v1797 = vmul.f32 %v1782, %v1782
    %v1798 = vmul.f32 %v1783, %v1783
    %v1799 = vmul.f32 %v1784, %v1784
    %v1800 = vmul.f32 %v1785, %v1785
    %v1801 = vmul.f32 %v1786, %v1786
    %v1802 = vmul.f32 %v1787, %v1787
    %v1803 = vmul.f32 %v1788, %v1788
    %v1804 = vmul.f32 %v1789, %v1789
    %v1805 = vmul.f32 %v1775, %v1790
    %v1806 = vmul.f32 %v1776, %v1791
    %v1807 = vmul.f32 %v1777, %v1792
    %v1808 = vmul.f32 %v1778, %v1793
    %v1809 = vmul.f32 %v1779, %v1794
    %v1810 = vmul.f32 %v1780, %v1795
    %v1811 = vmul.f32 %v1781, %v1796
    %v1812 = vmul.f32 %v1782, %v1797
    %v1813 = vmul.f32 %v1783, %v1798
    %v1814 = vmul.f32 %v1784, %v1799
    %v1815 = vmul.f32 %v1785, %v1800
    %v1816 = vmul.f32 %v1786, %v1801
    %v1817 = vmul.f32 %v1787, %v1802
    %v1818 = vmul.f32 %v1788, %v1803
    %v1819 = vmul.f32 %v1789, %v1804
    %v1820 = vmul.f32 %v1805, 0.044715
    %v1821 = vmul.f32 %v1806, 0.044715
    %v1822 = vmul.f32 %v1807, 0.044715
    %v1823 = vmul.f32 %v1808, 0.044715
    %v1824 = vmul.f32 %v1809, 0.044715
    %v1825 = vmul.f32 %v1810, 0.044715
    %v1826 = vmul.f32 %v1811, 0.044715
    %v1827 = vmul.f32 %v1812, 0.044715
    %v1828 = vmul.f32 %v1813, 0.044715
    %v1829 = vmul.f32 %v1814, 0.044715
    %v1830 = vmul.f32 %v1815, 0.044715
    %v1831 = vmul.f32 %v1816, 0.044715
    %v1832 = vmul.f32 %v1817, 0.044715
    %v1833 = vmul.f32 %v1818, 0.044715
    %v1834 = vmul.f32 %v1819, 0.044715
    %v1835 = vadd.f32 %v1775, %v1820
    %v1836 = vadd.f32 %v1776, %v1821
    %v1837 = vadd.f32 %v1777, %v1822
    %v1838 = vadd.f32 %v1778, %v1823
    %v1839 = vadd.f32 %v1779, %v1824
    %v1840 = vadd.f32 %v1780, %v1825
    %v1841 = vadd.f32 %v1781, %v1826
    %v1842 = vadd.f32 %v1782, %v1827
    %v1843 = vadd.f32 %v1783, %v1828
    %v1844 = vadd.f32 %v1784, %v1829
    %v1845 = vadd.f32 %v1785, %v1830
    %v1846 = vadd.f32 %v1786, %v1831
    %v1847 = vadd.f32 %v1787, %v1832
    %v1848 = vadd.f32 %v1788, %v1833
    %v1849 = vadd.f32 %v1789, %v1834
    %v1850 = vmul.f32 %v1835, 0.7978846
    %v1851 = vmul.f32 %v1836, 0.7978846
    %v1852 = vmul.f32 %v1837, 0.7978846
    %v1853 = vmul.f32 %v1838, 0.7978846
    %v1854 = vmul.f32 %v1839, 0.7978846
    %v1855 = vmul.f32 %v1840, 0.7978846
    %v1856 = vmul.f32 %v1841, 0.7978846
    %v1857 = vmul.f32 %v1842, 0.7978846
    %v1858 = vmul.f32 %v1843, 0.7978846
    %v1859 = vmul.f32 %v1844, 0.7978846
    %v1860 = vmul.f32 %v1845, 0.7978846
    %v1861 = vmul.f32 %v1846, 0.7978846
    %v1862 = vmul.f32 %v1847, 0.7978846
    %v1863 = vmul.f32 %v1848, 0.7978846
    %v1864 = vmul.f32 %v1849, 0.7978846
    %v1865 = vtanh.pop %v1850
    %v1866 = vtanh.pop %v1851
    %v1867 = vtanh.pop %v1852
    %v1868 = vtanh.pop %v1853
    %v1869 = vtanh.pop %v1854
    %v1870 = vtanh.pop %v1855
    %v1871 = vtanh.pop %v1856
    %v1872 = vtanh.pop %v1857
    %v1873 = vtanh.pop %v1858
    %v1874 = vtanh.pop %v1859
    %v1875 = vtanh.pop %v1860
    %v1876 = vtanh.pop %v1861
    %v1877 = vtanh.pop %v1862
    %v1878 = vtanh.pop %v1863
    %v1879 = vtanh.pop %v1864
    %v1880 = vadd.f32 %v1865, 1.0
    %v1881 = vadd.f32 %v1866, 1.0
    %v1882 = vadd.f32 %v1867, 1.0
    %v1883 = vadd.f32 %v1868, 1.0
    %v1884 = vadd.f32 %v1869, 1.0
    %v1885 = vadd.f32 %v1870, 1.0
    %v1886 = vadd.f32 %v1871, 1.0
    %v1887 = vadd.f32 %v1872, 1.0
    %v1888 = vadd.f32 %v1873, 1.0
    %v1889 = vadd.f32 %v1874, 1.0
    %v1890 = vadd.f32 %v1875, 1.0
    %v1891 = vadd.f32 %v1876, 1.0
    %v1892 = vadd.f32 %v1877, 1.0
    %v1893 = vadd.f32 %v1878, 1.0
    %v1894 = vadd.f32 %v1879, 1.0
    %v1895 = vmul.f32 %v1880, 0.5
    %v1896 = vmul.f32 %v1881, 0.5
    %v1897 = vmul.f32 %v1882, 0.5
    %v1898 = vmul.f32 %v1883, 0.5
    %v1899 = vmul.f32 %v1884, 0.5
    %v1900 = vmul.f32 %v1885, 0.5
    %v1901 = vmul.f32 %v1886, 0.5
    %v1902 = vmul.f32 %v1887, 0.5
    %v1903 = vmul.f32 %v1888, 0.5
    %v1904 = vmul.f32 %v1889, 0.5
    %v1905 = vmul.f32 %v1890, 0.5
    %v1906 = vmul.f32 %v1891, 0.5
    %v1907 = vmul.f32 %v1892, 0.5
    %v1908 = vmul.f32 %v1893, 0.5
    %v1909 = vmul.f32 %v1894, 0.5
    %v1910 = vmul.f32 %v1775, %v1895
    %v1911 = vmul.f32 %v1776, %v1896
    %v1912 = vmul.f32 %v1777, %v1897
    %v1913 = vmul.f32 %v1778, %v1898
    %v1914 = vmul.f32 %v1779, %v1899
    %v1915 = vmul.f32 %v1780, %v1900
    %v1916 = vmul.f32 %v1781, %v1901
    %v1917 = vmul.f32 %v1782, %v1902
    %v1918 = vmul.f32 %v1783, %v1903
    %v1919 = vmul.f32 %v1784, %v1904
    %v1920 = vmul.f32 %v1785, %v1905
    %v1921 = vmul.f32 %v1786, %v1906
    %v1922 = vmul.f32 %v1787, %v1907
    %v1923 = vmul.f32 %v1788, %v1908
    %v1924 = vmul.f32 %v1789, %v1909
    %v1925 = vpack.c.bf16 %v1915, %v1910
    %v1926 = vpack.c.bf16 %v1916, %v1911
    %v1927 = vpack.c.bf16 %v1917, %v1912
    %v1928 = vpack.c.bf16 %v1918, %v1913
    %v1929 = vpack.c.bf16 %v1919, %v1914
    %v1930 = vpack.c.bf16 %v1920, %v1920
    %v1931 = vpack.c.bf16 %v1921, %v1921
    %v1932 = vpack.c.bf16 %v1922, %v1922
    %v1933 = vpack.c.bf16 %v1923, %v1923
    %v1934 = vpack.c.bf16 %v1924, %v1924
    %v1935 = vld [vmem:[%s21] sm:$0xf]
    %v1936 = vld [vmem:[%s21 + $0x4] sm:$0xf]
    %v1937 = vld [vmem:[%s21 + $0x8] sm:$0xf]
    %v1938 = vld [vmem:[%s21 + $0xc] sm:$0xf]
    %v1939 = vld [vmem:[%s21 + $0x10] sm:$0xf]
    %v1940 = vld [vmem:[%s21 + $0x14] sm:$0xf]
    %v1941 = vld [vmem:[%s21 + $0x18] sm:$0xf]
    %v1942 = vld [vmem:[%s21 + $0x1c] sm:$0xf]
    %v1943 = vld [vmem:[%s21 + $0x20] sm:$0xf]
    %v1944 = vld [vmem:[%s21 + $0x24] sm:$0xf]
    %v1945 = vld [vmem:[%s21 + $0x28] sm:$0xf]
    %v1946 = vld [vmem:[%s21 + $0x2c] sm:$0xf]
    %v1947 = vld [vmem:[%s21 + $0x30] sm:$0xf]
    %v1948 = vld [vmem:[%s21 + $0x34] sm:$0xf]
    %v1949 = vld [vmem:[%s21 + $0x38] sm:$0xf]
    %v1950 = vld [vmem:[%s21 + $0x3c] sm:$0xf]
    %v1951 = vld [vmem:[%s21 + $0x40] sm:$0xf]
    %v1952 = vld [vmem:[%s21 + $0x44] sm:$0xf]
    %v1953 = vld [vmem:[%s21 + $0x48] sm:$0xf]
    %v1954 = vld [vmem:[%s21 + $0x4c] sm:$0xf]
    %v1955 = vld [vmem:[%s21 + $0x50] sm:$0xf]
    %v1956 = vld [vmem:[%s21 + $0x54] sm:$0xf]
    %v1957 = vld [vmem:[%s21 + $0x58] sm:$0xf]
    %v1958 = vld [vmem:[%s21 + $0x5c] sm:$0xf]
    %v1959 = vld [vmem:[%s21 + $0x60] sm:$0xf]
    %v1960 = vld [vmem:[%s21 + $0x64] sm:$0xf]
    %v1961 = vld [vmem:[%s21 + $0x68] sm:$0xf]
    %v1962 = vld [vmem:[%s21 + $0x6c] sm:$0xf]
    %v1963 = vld [vmem:[%s21 + $0x70] sm:$0xf]
    %v1964 = vld [vmem:[%s21 + $0x74] sm:$0xf]
    %v1965 = vld [vmem:[%s21 + $0x78] sm:$0xf]
    %v1966 = vld [vmem:[%s21 + $0x7c] sm:$0xf]
    %v1967 = vld [vmem:[%s21 + $0x80] sm:$0xf]
    %v1968 = vld [vmem:[%s21 + $0x84] sm:$0xf]
    %v1969 = vld [vmem:[%s21 + $0x88] sm:$0xf]
    %v1970 = vld [vmem:[%s21 + $0x8c] sm:$0xf]
    %v1971 = vld [vmem:[%s21 + $0x90] sm:$0xf]
    %v1972 = vld [vmem:[%s21 + $0x94] sm:$0xf]
    %v1973 = vld [vmem:[%s21 + $0x98] sm:$0xf]
    %v1974 = vld [vmem:[%s21 + $0x9c] sm:$0xf]
    %v1975 = vld [vmem:[%s21 + $0xa0] sm:$0xf]
    %v1976 = vld [vmem:[%s21 + $0xa4] sm:$0xf]
    %v1977 = vld [vmem:[%s21 + $0xa8] sm:$0xf]
    %v1978 = vld [vmem:[%s21 + $0xac] sm:$0xf]
    %v1979 = vld [vmem:[%s21 + $0xb0] sm:$0xf]
    %v1980 = vld [vmem:[%s21 + $0xb4] sm:$0xf]
    %v1981 = vld [vmem:[%s21 + $0xb8] sm:$0xf]
    %v1982 = vld [vmem:[%s21 + $0xbc] sm:$0xf]
    %v1983 = vld [vmem:[%s21 + $0xc0] sm:$0xf]
    %v1984 = vld [vmem:[%s21 + $0xc4] sm:$0xf]
    %v1985 = vld [vmem:[%s21 + $0xc8] sm:$0xf]
    %v1986 = vld [vmem:[%s21 + $0xcc] sm:$0xf]
    %v1987 = vld [vmem:[%s21 + $0xd0] sm:$0xf]
    %v1988 = vld [vmem:[%s21 + $0xd4] sm:$0xf]
    %v1989 = vld [vmem:[%s21 + $0xd8] sm:$0xf]
    %v1990 = vld [vmem:[%s21 + $0xdc] sm:$0xf]
    %v1991 = vld [vmem:[%s21 + $0xe0] sm:$0xf]
    %v1992 = vld [vmem:[%s21 + $0xe4] sm:$0xf]
    %v1993 = vld [vmem:[%s21 + $0xe8] sm:$0xf]
    %v1994 = vld [vmem:[%s21 + $0xec] sm:$0xf]
    %v1995 = vld [vmem:[%s21 + $0xf0] sm:$0xf]
    %v1996 = vld [vmem:[%s21 + $0xf4] sm:$0xf]
    %v1997 = vld [vmem:[%s21 + $0xf8] sm:$0xf]
    %v1998 = vld [vmem:[%s21 + $0xfc] sm:$0xf]
    %v1999 = vld [vmem:[%s21 + $0x100] sm:$0xf]
    %v2000 = vld [vmem:[%s21 + $0x104] sm:$0xf]
    %v2001 = vld [vmem:[%s21 + $0x108] sm:$0xf]
    %v2002 = vld [vmem:[%s21 + $0x10c] sm:$0xf]
    %v2003 = vld [vmem:[%s21 + $0x110] sm:$0xf]
    %v2004 = vld [vmem:[%s21 + $0x114] sm:$0xf]
    %v2005 = vld [vmem:[%s21 + $0x118] sm:$0xf]
    %v2006 = vld [vmem:[%s21 + $0x11c] sm:$0xf]
    %v2007 = vld [vmem:[%s21 + $0x120] sm:$0xf]
    %v2008 = vld [vmem:[%s21 + $0x124] sm:$0xf]
    %v2009 = vld [vmem:[%s21 + $0x128] sm:$0xf]
    %v2010 = vld [vmem:[%s21 + $0x12c] sm:$0xf]
    %v2011 = vld [vmem:[%s21 + $0x130] sm:$0xf]
    %v2012 = vld [vmem:[%s21 + $0x134] sm:$0xf]
    %v2013 = vld [vmem:[%s21 + $0x138] sm:$0xf]
    %v2014 = vld [vmem:[%s21 + $0x13c] sm:$0xf]
    %v2095 = vunpack.c.l.b16 %v1935
    %v2096 = vunpack.c.l.b16 %v1936
    %v2097 = vunpack.c.l.b16 %v1937
    %v2098 = vunpack.c.l.b16 %v1938
    %v2099 = vunpack.c.l.b16 %v1939
    %v2100 = vunpack.c.l.b16 %v1940
    %v2101 = vunpack.c.l.b16 %v1941
    %v2102 = vunpack.c.l.b16 %v1942
    %v2103 = vunpack.c.l.b16 %v1943
    %v2104 = vunpack.c.l.b16 %v1944
    %v2105 = vunpack.c.l.b16 %v1945
    %v2106 = vunpack.c.l.b16 %v1946
    %v2107 = vunpack.c.l.b16 %v1947
    %v2108 = vunpack.c.l.b16 %v1948
    %v2109 = vunpack.c.l.b16 %v1949
    %v2110 = vunpack.c.l.b16 %v1950
    %v2111 = vunpack.c.l.b16 %v1951
    %v2112 = vunpack.c.l.b16 %v1952
    %v2113 = vunpack.c.l.b16 %v1953
    %v2114 = vunpack.c.l.b16 %v1954
    %v2115 = vunpack.c.l.b16 %v1955
    %v2116 = vunpack.c.l.b16 %v1956
    %v2117 = vunpack.c.l.b16 %v1957
    %v2118 = vunpack.c.l.b16 %v1958
    %v2119 = vunpack.c.l.b16 %v1959
    %v2120 = vunpack.c.l.b16 %v1960
    %v2121 = vunpack.c.l.b16 %v1961
    %v2122 = vunpack.c.l.b16 %v1962
    %v2123 = vunpack.c.l.b16 %v1963
    %v2124 = vunpack.c.l.b16 %v1964
    %v2125 = vunpack.c.l.b16 %v1965
    %v2126 = vunpack.c.l.b16 %v1966
    %v2127 = vunpack.c.l.b16 %v1967
    %v2128 = vunpack.c.l.b16 %v1968
    %v2129 = vunpack.c.l.b16 %v1969
    %v2130 = vunpack.c.l.b16 %v1970
    %v2131 = vunpack.c.l.b16 %v1971
    %v2132 = vunpack.c.l.b16 %v1972
    %v2133 = vunpack.c.l.b16 %v1973
    %v2134 = vunpack.c.l.b16 %v1974
    %v2135 = vunpack.c.l.b16 %v1975
    %v2136 = vunpack.c.l.b16 %v1976
    %v2137 = vunpack.c.l.b16 %v1977
    %v2138 = vunpack.c.l.b16 %v1978
    %v2139 = vunpack.c.l.b16 %v1979
    %v2140 = vunpack.c.l.b16 %v1980
    %v2141 = vunpack.c.l.b16 %v1981
    %v2142 = vunpack.c.l.b16 %v1982
    %v2143 = vunpack.c.l.b16 %v1983
    %v2144 = vunpack.c.l.b16 %v1984
    %v2145 = vunpack.c.l.b16 %v1985
    %v2146 = vunpack.c.l.b16 %v1986
    %v2147 = vunpack.c.l.b16 %v1987
    %v2148 = vunpack.c.l.b16 %v1988
    %v2149 = vunpack.c.l.b16 %v1989
    %v2150 = vunpack.c.l.b16 %v1990
    %v2151 = vunpack.c.l.b16 %v1991
    %v2152 = vunpack.c.l.b16 %v1992
    %v2153 = vunpack.c.l.b16 %v1993
    %v2154 = vunpack.c.l.b16 %v1994
    %v2155 = vunpack.c.l.b16 %v1995
    %v2156 = vunpack.c.l.b16 %v1996
    %v2157 = vunpack.c.l.b16 %v1997
    %v2158 = vunpack.c.l.b16 %v1998
    %v2159 = vunpack.c.l.b16 %v1999
    %v2160 = vunpack.c.l.b16 %v2000
    %v2161 = vunpack.c.l.b16 %v2001
    %v2162 = vunpack.c.l.b16 %v2002
    %v2163 = vunpack.c.l.b16 %v2003
    %v2164 = vunpack.c.l.b16 %v2004
    %v2165 = vunpack.c.l.b16 %v2005
    %v2166 = vunpack.c.l.b16 %v2006
    %v2167 = vunpack.c.l.b16 %v2007
    %v2168 = vunpack.c.l.b16 %v2008
    %v2169 = vunpack.c.l.b16 %v2009
    %v2170 = vunpack.c.l.b16 %v2010
    %v2171 = vunpack.c.l.b16 %v2011
    %v2172 = vunpack.c.l.b16 %v2012
    %v2173 = vunpack.c.l.b16 %v2013
    %v2174 = vunpack.c.l.b16 %v2014
    %v2175 = vpack.c.b16 %v2096, %v2095
    %v2176 = vpack.c.b16 %v2098, %v2097
    %v2177 = vpack.c.b16 %v2100, %v2099
    %v2178 = vpack.c.b16 %v2102, %v2101
    %v2179 = vpack.c.b16 %v2104, %v2103
    %v2180 = vpack.c.b16 %v2106, %v2105
    %v2181 = vpack.c.b16 %v2108, %v2107
    %v2182 = vpack.c.b16 %v2110, %v2109
    %v2183 = vpack.c.b16 %v2112, %v2111
    %v2184 = vpack.c.b16 %v2114, %v2113
    %v2185 = vpack.c.b16 %v2116, %v2115
    %v2186 = vpack.c.b16 %v2118, %v2117
    %v2187 = vpack.c.b16 %v2120, %v2119
    %v2188 = vpack.c.b16 %v2122, %v2121
    %v2189 = vpack.c.b16 %v2124, %v2123
    %v2190 = vpack.c.b16 %v2126, %v2125
    %v2191 = vpack.c.b16 %v2128, %v2127
    %v2192 = vpack.c.b16 %v2130, %v2129
    %v2193 = vpack.c.b16 %v2132, %v2131
    %v2194 = vpack.c.b16 %v2134, %v2133
    %v2195 = vpack.c.b16 %v2136, %v2135
    %v2196 = vpack.c.b16 %v2138, %v2137
    %v2197 = vpack.c.b16 %v2140, %v2139
    %v2198 = vpack.c.b16 %v2142, %v2141
    %v2199 = vpack.c.b16 %v2144, %v2143
    %v2200 = vpack.c.b16 %v2146, %v2145
    %v2201 = vpack.c.b16 %v2148, %v2147
    %v2202 = vpack.c.b16 %v2150, %v2149
    %v2203 = vpack.c.b16 %v2152, %v2151
    %v2204 = vpack.c.b16 %v2154, %v2153
    %v2205 = vpack.c.b16 %v2156, %v2155
    %v2206 = vpack.c.b16 %v2158, %v2157
    %v2207 = vpack.c.b16 %v2160, %v2159
    %v2208 = vpack.c.b16 %v2162, %v2161
    %v2209 = vpack.c.b16 %v2164, %v2163
    %v2210 = vpack.c.b16 %v2166, %v2165
    %v2211 = vpack.c.b16 %v2168, %v2167
    %v2212 = vpack.c.b16 %v2170, %v2169
    %v2213 = vpack.c.b16 %v2172, %v2171
    %v2214 = vpack.c.b16 %v2174, %v2173
    %2255 = vmatprep.subr.bf16.mxu0 0
    %2256 = vmatpush1.bf16.msra.mxu0 %v2175
    %2257 = vmatprep.subr.bf16.mxu0 0
    %2258 = vmatpush1.bf16.msra.mxu0 %v2176
    %2259 = vmatprep.subr.bf16.mxu0 0
    %2260 = vmatpush1.bf16.msra.mxu0 %v2177
    %2261 = vmatprep.subr.bf16.mxu0 0
    %2262 = vmatpush1.bf16.msra.mxu0 %v2178
    %2263 = vmatprep.subr.bf16.mxu0 0
    %2264 = vmatpush1.bf16.msra.mxu0 %v2179
    %2265 = vmatprep.subr.bf16.mxu0 0
    %2266 = vmatpush1.bf16.msra.mxu0 %v2180
    %2267 = vmatprep.subr.bf16.mxu0 0
    %2268 = vmatpush1.bf16.msra.mxu0 %v2181
    %2269 = vmatprep.subr.bf16.mxu0 0
    %2270 = vmatpush1.bf16.msra.mxu0 %v2182
    %2271 = vmatprep.subr.bf16.mxu0 0
    %2272 = vmatpush1.bf16.msra.mxu0 %v2183
    %2273 = vmatprep.subr.bf16.mxu0 0
    %2274 = vmatpush1.bf16.msra.mxu0 %v2184
    %2275 = vmatprep.subr.bf16.mxu0 0
    %2276 = vmatpush1.bf16.msra.mxu0 %v2185
    %2277 = vmatprep.subr.bf16.mxu0 0
    %2278 = vmatpush1.bf16.msra.mxu0 %v2186
    %2279 = vmatprep.subr.bf16.mxu0 0
    %2280 = vmatpush1.bf16.msra.mxu0 %v2187
    %2281 = vmatprep.subr.bf16.mxu0 0
    %2282 = vmatpush1.bf16.msra.mxu0 %v2188
    %2283 = vmatprep.subr.bf16.mxu0 0
    %2284 = vmatpush1.bf16.msra.mxu0 %v2189
    %2285 = vmatprep.subr.bf16.mxu0 0
    %2286 = vmatpush1.bf16.msra.mxu0 %v2190
    %2287 = vmatprep.mubr.bf16.mxu0 %v1926
    %2288 = vmatmul.mubr.bf16.gmra.mrb[0].mxu0 %v1925
    %v2289 = vpop.f32.mrb[0].mxu0
    %v2290 = vadd.f32 0.0, %v2289
    %v2291 = vpop.f32.mrb[0].mxu0
    %v2292 = vpop.f32.mrb[0].mxu0
    %v2293 = vadd.f32 0.0, %v2292
    %v2294 = vpop.f32.mrb[0].mxu0
    %2295 = vmatprep.mubr.bf16.mxu0 %v1931
    %2296 = vmatmul.mubr.bf16.gmra.mrb[0].mxu0 %v1930
    %v2297 = vpop.f32.mrb[0].mxu0
    %v2298 = vadd.f32 0.0, %v2297
    %v2299 = vpop.f32.mrb[0].mxu0
    %v2300 = vpop.f32.mrb[0].mxu0
    %v2301 = vpop.f32.mrb[0].mxu0
    %2302 = vdwg.mxu0
    %2303 = vmatprep.subr.bf16.mxu0 0
    %2304 = vmatpush1.bf16.msra.mxu0 %v2191
    %2305 = vmatprep.subr.bf16.mxu0 0
    %2306 = vmatpush1.bf16.msra.mxu0 %v2192
    %2307 = vmatprep.subr.bf16.mxu0 0
    %2308 = vmatpush1.bf16.msra.mxu0 %v2193
    %2309 = vmatprep.subr.bf16.mxu0 0
    %2310 = vmatpush1.bf16.msra.mxu0 %v2194
    %2311 = vmatprep.subr.bf16.mxu0 0
    %2312 = vmatpush1.bf16.msra.mxu0 %v2195
    %2313 = vmatprep.subr.bf16.mxu0 0
    %2314 = vmatpush1.bf16.msra.mxu0 %v2196
    %2315 = vmatprep.subr.bf16.mxu0 0
    %2316 = vmatpush1.bf16.msra.mxu0 %v2197
    %2317 = vmatprep.subr.bf16.mxu0 0
    %2318 = vmatpush1.bf16.msra.mxu0 %v2198
    %2319 = vmatprep.subr.bf16.mxu0 0
    %2320 = vmatpush1.bf16.msra.mxu0 %v2199
    %2321 = vmatprep.subr.bf16.mxu0 0
    %2322 = vmatpush1.bf16.msra.mxu0 %v2200
    %2323 = vmatprep.subr.bf16.mxu0 0
    %2324 = vmatpush1.bf16.msra.mxu0 %v2201
    %2325 = vmatprep.subr.bf16.mxu0 0
    %2326 = vmatpush1.bf16.msra.mxu0 %v2202
    %2327 = vmatprep.subr.bf16.mxu0 0
    %2328 = vmatpush1.bf16.msra.mxu0 %v2203
    %2329 = vmatprep.subr.bf16.mxu0 0
    %2330 = vmatpush1.bf16.msra.mxu0 %v2204
    %2331 = vmatprep.subr.bf16.mxu0 0
    %2332 = vmatpush1.bf16.msra.mxu0 %v2205
    %2333 = vmatprep.subr.bf16.mxu0 0
    %2334 = vmatpush1.bf16.msra.mxu0 %v2206
    %2335 = vmatprep.mubr.bf16.mxu0 %v1928
    %2336 = vmatmul.mubr.bf16.gmra.mrb[0].mxu0 %v1927
    %v2337 = vpop.f32.mrb[0].mxu0
    %v2338 = vadd.f32 %v2290, %v2337
    %v2339 = vpop.f32.mrb[0].mxu0
    %v2340 = vpop.f32.mrb[0].mxu0
    %v2341 = vadd.f32 %v2293, %v2340
    %v2342 = vpop.f32.mrb[0].mxu0
    %2343 = vmatprep.mubr.bf16.mxu0 %v1933
    %2344 = vmatmul.mubr.bf16.gmra.mrb[0].mxu0 %v1932
    %v2345 = vpop.f32.mrb[0].mxu0
    %v2346 = vadd.f32 %v2298, %v2345
    %v2347 = vpop.f32.mrb[0].mxu0
    %v2348 = vpop.f32.mrb[0].mxu0
    %v2349 = vpop.f32.mrb[0].mxu0
    %2350 = vdwg.mxu0
    %2351 = vmatprep.subr.bf16.mxu0 0
    %2352 = vmatpush1.bf16.msra.mxu0 %v2207
    %2353 = vmatprep.subr.bf16.mxu0 0
    %2354 = vmatpush1.bf16.msra.mxu0 %v2208
    %2355 = vmatprep.subr.bf16.mxu0 0
    %2356 = vmatpush1.bf16.msra.mxu0 %v2209
    %2357 = vmatprep.subr.bf16.mxu0 0
    %2358 = vmatpush1.bf16.msra.mxu0 %v2210
    %2359 = vmatprep.subr.bf16.mxu0 0
    %2360 = vmatpush1.bf16.msra.mxu0 %v2211
    %2361 = vmatprep.subr.bf16.mxu0 0
    %2362 = vmatpush1.bf16.msra.mxu0 %v2212
    %2363 = vmatprep.subr.bf16.mxu0 0
    %2364 = vmatpush1.bf16.msra.mxu0 %v2213
    %2365 = vmatprep.subr.bf16.mxu0 0
    %2366 = vmatpush1.bf16.msra.mxu0 %v2214
    %2367 = vmatprep.subr.bf16.mxu0 0
    %2368 = vmatpush1.bf16.msra.mxu0 0
    %2369 = vmatprep.subr.bf16.mxu0 0
    %2370 = vmatpush1.bf16.msra.mxu0 0
    %2371 = vmatprep.subr.bf16.mxu0 0
    %2372 = vmatpush1.bf16.msra.mxu0 0
    %2373 = vmatprep.subr.bf16.mxu0 0
    %2374 = vmatpush1.bf16.msra.mxu0 0
    %2375 = vmatprep.subr.bf16.mxu0 0
    %2376 = vmatpush1.bf16.msra.mxu0 0
    %2377 = vmatprep.subr.bf16.mxu0 0
    %2378 = vmatpush1.bf16.msra.mxu0 0
    %2379 = vmatprep.subr.bf16.mxu0 0
    %2380 = vmatpush1.bf16.msra.mxu0 0
    %2381 = vmatprep.subr.bf16.mxu0 0
    %2382 = vmatpush1.bf16.msra.mxu0 0
    %2383 = vmatprep.mubr.bf16.mxu0 0
    %2384 = vmatmul.mubr.bf16.gmra.mrb[0].mxu0 %v1929
    %v2385 = vpop.f32.mrb[0].mxu0
    %v2386 = vadd.f32 %v2338, %v2385
    %v2387 = vpop.f32.mrb[0].mxu0
    %v2388 = vpop.f32.mrb[0].mxu0
    %v2389 = vadd.f32 %v2341, %v2388
    %v2390 = vpop.f32.mrb[0].mxu0
    %2391 = vmatprep.mubr.bf16.mxu0 0
    %2392 = vmatmul.mubr.bf16.gmra.mrb[0].mxu0 %v1934
    %v2393 = vpop.f32.mrb[0].mxu0
    %v2394 = vadd.f32 %v2346, %v2393
    %v2395 = vpop.f32.mrb[0].mxu0
    %v2396 = vpop.f32.mrb[0].mxu0
    %v2397 = vpop.f32.mrb[0].mxu0
    %2398 = vdwg.mxu0
    %v2399 = vpack.c.bf16 %v2389, %v2386
    %v2400 = vpack.c.bf16 %v2394, %v2394
    %v2401 = vld [vmem:[%s23] sm:$0xf]
    %v2402 = vld [vmem:[%s23 + $0x4] sm:$0xf]
    %v2403 = vld [vmem:[%s23 + $0x8] sm:$0xf]
    %v2404 = vld [vmem:[%s23 + $0xc] sm:$0xf]
    %v2405 = vld [vmem:[%s23 + $0x10] sm:$0xf]
    %v2406 = vld [vmem:[%s23 + $0x14] sm:$0xf]
    %v2407 = vld [vmem:[%s23 + $0x18] sm:$0xf]
    %v2408 = vld [vmem:[%s23 + $0x1c] sm:$0xf]
    %v2409 = vld [vmem:[%s25] sm:$0x1]
    %v2411 = vlaneseq
    %v2412 = vshrl.u32 %v2411, 7
    %v2413 = vsub.s32 0, %v2412
    %v2414 = vrot.slane %v2409, %v2413
    %v2424 = vunpack.c.l.b16 %v2401
    %v2425 = vunpack.c.l.b16 %v2402
    %v2426 = vunpack.c.l.b16 %v2403
    %v2427 = vunpack.c.l.b16 %v2404
    %v2428 = vunpack.c.l.b16 %v2405
    %v2429 = vunpack.c.l.b16 %v2406
    %v2430 = vunpack.c.l.b16 %v2407
    %v2431 = vunpack.c.l.b16 %v2408
    %v2432 = vpack.c.b16 %v2425, %v2424
    %v2433 = vpack.c.b16 %v2427, %v2426
    %v2434 = vpack.c.b16 %v2429, %v2428
    %v2435 = vpack.c.b16 %v2431, %v2430
    %v2441 = vsel %vm1399, %v2399, 0
    %v2444 = vsel %vm1399, %v2400, 0
    %2446 = vmatprep.subr.bf16.mxu0 0
    %2447 = vmatpush1.bf16.msra.mxu0 %v2432
    %2448 = vmatprep.subr.bf16.mxu0 0
    %2449 = vmatpush1.bf16.msra.mxu0 %v2433
    %2450 = vmatprep.subr.bf16.mxu0 0
    %2451 = vmatpush1.bf16.msra.mxu0 %v2434
    %2452 = vmatprep.subr.bf16.mxu0 0
    %2453 = vmatpush1.bf16.msra.mxu0 %v2435
    %2454 = vmatprep.subr.bf16.mxu0 0
    %2455 = vmatpush1.bf16.msra.mxu0 0
    %2456 = vmatprep.subr.bf16.mxu0 0
    %2457 = vmatpush1.bf16.msra.mxu0 0
    %2458 = vmatprep.subr.bf16.mxu0 0
    %2459 = vmatpush1.bf16.msra.mxu0 0
    %2460 = vmatprep.subr.bf16.mxu0 0
    %2461 = vmatpush1.bf16.msra.mxu0 0
    %2462 = vmatprep.subr.bf16.mxu0 0
    %2463 = vmatpush1.bf16.msra.mxu0 0
    %2464 = vmatprep.subr.bf16.mxu0 0
    %2465 = vmatpush1.bf16.msra.mxu0 0
    %2466 = vmatprep.subr.bf16.mxu0 0
    %2467 = vmatpush1.bf16.msra.mxu0 0
    %2468 = vmatprep.subr.bf16.mxu0 0
    %2469 = vmatpush1.bf16.msra.mxu0 0
    %2470 = vmatprep.subr.bf16.mxu0 0
    %2471 = vmatpush1.bf16.msra.mxu0 0
    %2472 = vmatprep.subr.bf16.mxu0 0
    %2473 = vmatpush1.bf16.msra.mxu0 0
    %2474 = vmatprep.subr.bf16.mxu0 0
    %2475 = vmatpush1.bf16.msra.mxu0 0
    %2476 = vmatprep.subr.bf16.mxu0 0
    %2477 = vmatpush1.bf16.msra.mxu0 0
    %2478 = vmatprep.mubr.bf16.mxu0 0
    %2479 = vmatmul.mubr.bf16.gmra.mrb[0].mxu0 %v2441
    %v2480 = vpop.f32.mrb[0].mxu0
    %v2481 = vadd.f32 %v2414, %v2480
    %v2482 = vpop.f32.mrb[0].mxu0
    %v2483 = vpop.f32.mrb[0].mxu0
    %v2484 = vadd.f32 %v2414, %v2483
    %v2485 = vpop.f32.mrb[0].mxu0
    %2486 = vmatprep.mubr.bf16.mxu0 0
    %2487 = vmatmul.mubr.bf16.gmra.mrb[0].mxu0 %v2444
    %v2488 = vpop.f32.mrb[0].mxu0
    %v2489 = vadd.f32 %v2414, %v2488
    %v2490 = vpop.f32.mrb[0].mxu0
    %v2491 = vpop.f32.mrb[0].mxu0
    %v2492 = vpop.f32.mrb[0].mxu0
    %2493 = vdwg.mxu0
    %vm2494 = vcmp.eq.f32.partialorder %v140, -100.0
    %vm2495 = vcmp.eq.f32.partialorder %v141, -100.0
    %vm2496 = vcmp.eq.f32.partialorder %v142, -100.0
    %v2497 = vsel %vm2494, 1, 0
    %v2498 = vsel %vm2495, 1, 0
    %v2499 = vsel %vm2496, 1, 0
    %v2500 = vcvt.s32.f32 %v2497
    %v2501 = vcvt.s32.f32 %v2498
    %v2502 = vcvt.s32.f32 %v2499
    %v2503 = vsel %vm155, %v2500, 0.0
    %2504 = vadd.xlane.f32.xlu0 %v2503
    %v2505 = vpop.xlane.xlu0 %2504
    %v2506 = vsel %vm155, %v2501, 0.0
    %2507 = vadd.xlane.f32.xlu0 %v2506
    %v2508 = vpop.xlane.xlu0 %2507
    %vm2509 = vcmask 74752
    %v2510 = vsel %vm2509, %v2502, 0.0
    %2511 = vadd.xlane.f32.xlu0 %v2510
    %v2512 = vpop.xlane.xlu0 %2511
    %vm2513 = vcmp.eq.f32.partialorder %v2505, 10.0
    %vm2514 = vcmp.eq.f32.partialorder %v2508, 10.0
    %vm2515 = vcmp.eq.f32.partialorder %v2512, 10.0
    %v2516 = vld [vmem:[%s29] sm:$0x1]
    %v2517 = vsel %vm2513, 1, 0
    %v2518 = vsel %vm2514, 1, 0
    %v2519 = vsel %vm2515, 1, 0
    %vm2520 = vcmp.eq.s32.totalorder %v2517, 1
    %vm2521 = vcmp.eq.s32.totalorder %v2518, 1
    %vm2522 = vcmp.eq.s32.totalorder %v2519, 1
    %v2524 = vlaneseq
    %v2525 = vshrl.u32 %v2524, 7
    %v2526 = vsub.s32 0, %v2525
    %v2527 = vrot.slane %v2516, %v2526
    %v2529 = vsel %vm2520, %v2527, %v2481
    %v2530 = vsel %vm2521, %v2527, %v2484
    %v2531 = vsel %vm2522, %v2527, %v2489
    %v2532 = vld [vmem:[%s33] sm:$0xff]
    %v2533 = vld [vmem:[%s33 + $0x8] sm:$0xff]
    %v2534 = vld [vmem:[%s33 + $0x10] sm:$0x3]
    %vm2535 = vcmp.gt.f32.partialorder %v2532, 0.5
    %vm2536 = vcmp.gt.f32.partialorder %v2533, 0.5
    %vm2537 = vcmp.gt.f32.partialorder %v2534, 0.5
    %v2538 = vld [vmem:[%s27] sm:$0x1]
    %v2539 = vsel %vm2535, 1, 0
    %v2540 = vsel %vm2536, 1, 0
    %v2541 = vsel %vm2537, 1, 0
    %2542 = vset.pattern.permute.xlu0 0
    %2543 = vperm.xlu0 %2542, %v2539
    %v2544 = vpop.permute.xlu0 %2543
    %2545 = vset.pattern.permute.xlu0 0
    %2546 = vperm.xlu0 %2545, %v2540
    %v2547 = vpop.permute.xlu0 %2546
    %2548 = vset.pattern.permute.xlu0 0
    %2549 = vperm.xlu0 %2548, %v2541
    %v2550 = vpop.permute.xlu0 %2549
    %vm2551 = vcmp.eq.s32.totalorder %v2544, 1
    %vm2552 = vcmp.eq.s32.totalorder %v2547, 1
    %vm2553 = vcmp.eq.s32.totalorder %v2550, 1
    %v2555 = vlaneseq
    %v2556 = vshrl.u32 %v2555, 7
    %v2557 = vsub.s32 0, %v2556
    %v2558 = vrot.slane %v2538, %v2557
    %v2560 = vsel %vm2551, %v2558, %v2529
    %v2561 = vsel %vm2552, %v2558, %v2530
    %v2562 = vsel %vm2553, %v2558, %v2531
    %v2563 = vld [vmem:[%s31] sm:$0xff]
    %v2564 = vld [vmem:[%s31 + $0x8] sm:$0xff]
    %v2565 = vld [vmem:[%s31 + $0x10] sm:$0x3]
    %v2566 = vadd.f32 %v2560, %v2563
    %v2567 = vadd.f32 %v2561, %v2564
    %v2568 = vadd.f32 %v2562, %v2565
    %v2569 = vld [vmem:[%s35] sm:$0xff]
    %v2570 = vld [vmem:[%s35 + $0x8] sm:$0xff]
    %v2571 = vld [vmem:[%s35 + $0x10] sm:$0x3]
    %v2572 = vld [vmem:[%s39] sm:$0x1]
    %v2573 = vld [vmem:[%s41] sm:$0x1]
    %2574 = vadd.xlane.f32.xlu0 %v2566
    %v2575 = vpop.xlane.xlu0 %2574
    %2576 = vadd.xlane.f32.xlu0 %v2567
    %v2577 = vpop.xlane.xlu0 %2576
    %vm2578 = vcmask 1041408
    %v2579 = vsel %vm2578, %v2568, 0.0
    %2580 = vadd.xlane.f32.xlu0 %v2579
    %v2581 = vpop.xlane.xlu0 %2580
    %v2582 = vrcp.pop 128.0
    %v2583 = vmul.f32 %v2575, %v2582
    %v2584 = vmul.f32 %v2577, %v2582
    %v2585 = vmul.f32 %v2581, %v2582
    %v2586 = vsub.f32 %v2566, %v2583
    %v2587 = vsub.f32 %v2567, %v2584
    %v2588 = vsub.f32 %v2568, %v2585
    %v2589 = vmul.f32 %v2586, %v2586
    %v2590 = vmul.f32 %v2587, %v2587
    %v2591 = vmul.f32 %v2588, %v2588
    %2592 = vadd.xlane.f32.xlu0 %v2589
    %v2593 = vpop.xlane.xlu0 %2592
    %2594 = vadd.xlane.f32.xlu0 %v2590
    %v2595 = vpop.xlane.xlu0 %2594
    %v2596 = vsel %vm2578, %v2591, 0.0
    %2597 = vadd.xlane.f32.xlu0 %v2596
    %v2598 = vpop.xlane.xlu0 %2597
    %v2599 = vmul.f32 %v2593, %v2582
    %v2600 = vmul.f32 %v2595, %v2582
    %v2601 = vmul.f32 %v2598, %v2582
    %v2602 = vadd.f32 %v2599, 1e-05
    %v2603 = vadd.f32 %v2600, 1e-05
    %v2604 = vadd.f32 %v2601, 1e-05
    %v2605 = vrsqrt.pop %v2602
    %v2606 = vrsqrt.pop %v2603
    %v2607 = vrsqrt.pop %v2604
    %v2608 = vmul.f32 %v2586, %v2605
    %v2609 = vmul.f32 %v2587, %v2606
    %v2610 = vmul.f32 %v2588, %v2607
    %v2612 = vlaneseq
    %v2613 = vshrl.u32 %v2612, 7
    %v2614 = vsub.s32 0, %v2613
    %v2615 = vrot.slane %v2572, %v2614
    %v2617 = vmul.f32 %v2608, %v2615
    %v2618 = vmul.f32 %v2609, %v2615
    %v2619 = vmul.f32 %v2610, %v2615
    %v2621 = vlaneseq
    %v2622 = vshrl.u32 %v2621, 7
    %v2623 = vsub.s32 0, %v2622
    %v2624 = vrot.slane %v2573, %v2623
    %v2626 = vadd.f32 %v2617, %v2624
    %v2627 = vadd.f32 %v2618, %v2624
    %v2628 = vadd.f32 %v2619, %v2624
    %v2629 = vpack.c.bf16 %v2627, %v2626
    %v2630 = vpack.c.bf16 %v2628, %v2628
    %v2631 = vld [vmem:[%s43] sm:$0xff]
    %v2632 = vld [vmem:[%s43 + $0x8] sm:$0xf]
    %v2633 = vld [vmem:[%s43 + $0xc] sm:$0xff]
    %v2634 = vld [vmem:[%s43 + $0x14] sm:$0xf]
    %v2635 = vld [vmem:[%s43 + $0x18] sm:$0xff]
    %v2636 = vld [vmem:[%s43 + $0x20] sm:$0xf]
    %v2637 = vld [vmem:[%s43 + $0x24] sm:$0xff]
    %v2638 = vld [vmem:[%s43 + $0x2c] sm:$0xf]
    %v2639 = vld [vmem:[%s43 + $0x30] sm:$0xff]
    %v2640 = vld [vmem:[%s43 + $0x38] sm:$0xf]
    %v2641 = vld [vmem:[%s43 + $0x3c] sm:$0xff]
    %v2642 = vld [vmem:[%s43 + $0x44] sm:$0xf]
    %v2643 = vld [vmem:[%s43 + $0x48] sm:$0xff]
    %v2644 = vld [vmem:[%s43 + $0x50] sm:$0xf]
    %v2645 = vld [vmem:[%s43 + $0x54] sm:$0xff]
    %v2646 = vld [vmem:[%s43 + $0x5c] sm:$0xf]
    %v2647 = vld [vmem:[%s43 + $0x60] sm:$0xff]
    %v2648 = vld [vmem:[%s43 + $0x68] sm:$0xf]
    %v2649 = vld [vmem:[%s43 + $0x6c] sm:$0xff]
    %v2650 = vld [vmem:[%s43 + $0x74] sm:$0xf]
    %v2651 = vld [vmem:[%s43 + $0x78] sm:$0xff]
    %v2652 = vld [vmem:[%s43 + $0x80] sm:$0xf]
    %v2653 = vld [vmem:[%s43 + $0x84] sm:$0xff]
    %v2654 = vld [vmem:[%s43 + $0x8c] sm:$0xf]
    %v2655 = vld [vmem:[%s43 + $0x90] sm:$0xff]
    %v2656 = vld [vmem:[%s43 + $0x98] sm:$0xf]
    %v2657 = vld [vmem:[%s43 + $0x9c] sm:$0xff]
    %v2658 = vld [vmem:[%s43 + $0xa4] sm:$0xf]
    %v2659 = vld [vmem:[%s43 + $0xa8] sm:$0xff]
    %v2660 = vld [vmem:[%s43 + $0xb0] sm:$0xf]
    %v2661 = vld [vmem:[%s43 + $0xb4] sm:$0xff]
    %v2662 = vld [vmem:[%s43 + $0xbc] sm:$0xf]
    %v2663 = vld [vmem:[%s45] sm:$0x7]
    %v2665 = vlaneseq
    %v2666 = vshrl.u32 %v2665, 7
    %v2667 = vsub.s32 0, %v2666
    %v2668 = vrot.slane %v2663, %v2667
    %v2669 = vlaneseq
    %v2670 = vshrl.u32 %v2669, 7
    %v2671 = vsub.s32 1, %v2670
    %v2672 = vrot.slane %v2663, %v2671
    %v2673 = vlaneseq
    %v2674 = vshrl.u32 %v2673, 7
    %v2675 = vsub.s32 2, %v2674
    %v2676 = vrot.slane %v2663, %v2675
    %v2712 = vunpack.c.l.b16 %v2631
    %v2713 = vunpack.c.h.b16 %v2631
    %v2714 = vunpack.c.l.b16 %v2632
    %v2715 = vunpack.c.l.b16 %v2633
    %v2716 = vunpack.c.h.b16 %v2633
    %v2717 = vunpack.c.l.b16 %v2634
    %v2718 = vunpack.c.l.b16 %v2635
    %v2719 = vunpack.c.h.b16 %v2635
    %v2720 = vunpack.c.l.b16 %v2636
    %v2721 = vunpack.c.l.b16 %v2637
    %v2722 = vunpack.c.h.b16 %v2637
    %v2723 = vunpack.c.l.b16 %v2638
    %v2724 = vunpack.c.l.b16 %v2639
    %v2725 = vunpack.c.h.b16 %v2639
    %v2726 = vunpack.c.l.b16 %v2640
    %v2727 = vunpack.c.l.b16 %v2641
    %v2728 = vunpack.c.h.b16 %v2641
    %v2729 = vunpack.c.l.b16 %v2642
    %v2730 = vunpack.c.l.b16 %v2643
    %v2731 = vunpack.c.h.b16 %v2643
    %v2732 = vunpack.c.l.b16 %v2644
    %v2733 = vunpack.c.l.b16 %v2645
    %v2734 = vunpack.c.h.b16 %v2645
    %v2735 = vunpack.c.l.b16 %v2646
    %v2736 = vunpack.c.l.b16 %v2647
    %v2737 = vunpack.c.h.b16 %v2647
    %v2738 = vunpack.c.l.b16 %v2648
    %v2739 = vunpack.c.l.b16 %v2649
    %v2740 = vunpack.c.h.b16 %v2649
    %v2741 = vunpack.c.l.b16 %v2650
    %v2742 = vunpack.c.l.b16 %v2651
    %v2743 = vunpack.c.h.b16 %v2651
    %v2744 = vunpack.c.l.b16 %v2652
    %v2745 = vunpack.c.l.b16 %v2653
    %v2746 = vunpack.c.h.b16 %v2653
    %v2747 = vunpack.c.l.b16 %v2654
    %v2748 = vunpack.c.l.b16 %v2655
    %v2749 = vunpack.c.h.b16 %v2655
    %v2750 = vunpack.c.l.b16 %v2656
    %v2751 = vunpack.c.l.b16 %v2657
    %v2752 = vunpack.c.h.b16 %v2657
    %v2753 = vunpack.c.l.b16 %v2658
    %v2754 = vunpack.c.l.b16 %v2659
    %v2755 = vunpack.c.h.b16 %v2659
    %v2756 = vunpack.c.l.b16 %v2660
    %v2757 = vunpack.c.l.b16 %v2661
    %v2758 = vunpack.c.h.b16 %v2661
    %v2759 = vunpack.c.l.b16 %v2662
    %v2760 = vpack.c.b16 %v2715, %v2712
    %v2761 = vpack.c.b16 %v2716, %v2713
    %v2762 = vpack.c.b16 %v2717, %v2714
    %v2763 = vpack.c.b16 %v2721, %v2718
    %v2764 = vpack.c.b16 %v2722, %v2719
    %v2765 = vpack.c.b16 %v2723, %v2720
    %v2766 = vpack.c.b16 %v2727, %v2724
    %v2767 = vpack.c.b16 %v2728, %v2725
    %v2768 = vpack.c.b16 %v2729, %v2726
    %v2769 = vpack.c.b16 %v2733, %v2730
    %v2770 = vpack.c.b16 %v2734, %v2731
    %v2771 = vpack.c.b16 %v2735, %v2732
    %v2772 = vpack.c.b16 %v2739, %v2736
    %v2773 = vpack.c.b16 %v2740, %v2737
    %v2774 = vpack.c.b16 %v2741, %v2738
    %v2775 = vpack.c.b16 %v2745, %v2742
    %v2776 = vpack.c.b16 %v2746, %v2743
    %v2777 = vpack.c.b16 %v2747, %v2744
    %v2778 = vpack.c.b16 %v2751, %v2748
    %v2779 = vpack.c.b16 %v2752, %v2749
    %v2780 = vpack.c.b16 %v2753, %v2750
    %v2781 = vpack.c.b16 %v2757, %v2754
    %v2782 = vpack.c.b16 %v2758, %v2755
    %v2783 = vpack.c.b16 %v2759, %v2756
    %2808 = vmatprep.subr.bf16.mxu0 %v2761
    %2809 = vmatpush1.bf16.msra.mxu0 %v2760
    %2810 = vmatprep.subr.bf16.mxu0 %v2764
    %2811 = vmatpush1.bf16.msra.mxu0 %v2763
    %2812 = vmatprep.subr.bf16.mxu0 %v2767
    %2813 = vmatpush1.bf16.msra.mxu0 %v2766
    %2814 = vmatprep.subr.bf16.mxu0 %v2770
    %2815 = vmatpush1.bf16.msra.mxu0 %v2769
    %2816 = vmatprep.subr.bf16.mxu0 %v2773
    %2817 = vmatpush1.bf16.msra.mxu0 %v2772
    %2818 = vmatprep.subr.bf16.mxu0 %v2776
    %2819 = vmatpush1.bf16.msra.mxu0 %v2775
    %2820 = vmatprep.subr.bf16.mxu0 %v2779
    %2821 = vmatpush1.bf16.msra.mxu0 %v2778
    %2822 = vmatprep.subr.bf16.mxu0 %v2782
    %2823 = vmatpush1.bf16.msra.mxu0 %v2781
    %2824 = vmatprep.subr.bf16.mxu0 0
    %2825 = vmatpush1.bf16.msra.mxu0 0
    %2826 = vmatprep.subr.bf16.mxu0 0
    %2827 = vmatpush1.bf16.msra.mxu0 0
    %2828 = vmatprep.subr.bf16.mxu0 0
    %2829 = vmatpush1.bf16.msra.mxu0 0
    %2830 = vmatprep.subr.bf16.mxu0 0
    %2831 = vmatpush1.bf16.msra.mxu0 0
    %2832 = vmatprep.subr.bf16.mxu0 0
    %2833 = vmatpush1.bf16.msra.mxu0 0
    %2834 = vmatprep.subr.bf16.mxu0 0
    %2835 = vmatpush1.bf16.msra.mxu0 0
    %2836 = vmatprep.subr.bf16.mxu0 0
    %2837 = vmatpush1.bf16.msra.mxu0 0
    %2838 = vmatprep.subr.bf16.mxu0 0
    %2839 = vmatpush1.bf16.msra.mxu0 0
    %2840 = vmatprep.mubr.bf16.mxu0 0
    %2841 = vmatmul.mubr.bf16.gmra.mrb[0].mxu0 %v2629
    %v2842 = vpop.f32.mrb[0].mxu0
    %v2843 = vadd.f32 %v2668, %v2842
    %v2844 = vpop.f32.mrb[0].mxu0
    %v2845 = vadd.f32 %v2672, %v2844
    %v2846 = vpop.f32.mrb[0].mxu0
    %v2847 = vadd.f32 %v2668, %v2846
    %v2848 = vpop.f32.mrb[0].mxu0
    %v2849 = vadd.f32 %v2672, %v2848
    %2850 = vmatprep.mubr.bf16.mxu0 0
    %2851 = vmatmul.mubr.bf16.gmra.mrb[0].mxu0 %v2630
    %v2852 = vpop.f32.mrb[0].mxu0
    %v2853 = vadd.f32 %v2668, %v2852
    %v2854 = vpop.f32.mrb[0].mxu0
    %v2855 = vadd.f32 %v2672, %v2854
    %v2856 = vpop.f32.mrb[0].mxu0
    %v2857 = vpop.f32.mrb[0].mxu0
    %2858 = vdwg.mxu0
    %2859 = vmatprep.subr.bf16.mxu0 0
    %2860 = vmatpush1.bf16.msra.mxu0 %v2762
    %2861 = vmatprep.subr.bf16.mxu0 0
    %2862 = vmatpush1.bf16.msra.mxu0 %v2765
    %2863 = vmatprep.subr.bf16.mxu0 0
    %2864 = vmatpush1.bf16.msra.mxu0 %v2768
    %2865 = vmatprep.subr.bf16.mxu0 0
    %2866 = vmatpush1.bf16.msra.mxu0 %v2771
    %2867 = vmatprep.subr.bf16.mxu0 0
    %2868 = vmatpush1.bf16.msra.mxu0 %v2774
    %2869 = vmatprep.subr.bf16.mxu0 0
    %2870 = vmatpush1.bf16.msra.mxu0 %v2777
    %2871 = vmatprep.subr.bf16.mxu0 0
    %2872 = vmatpush1.bf16.msra.mxu0 %v2780
    %2873 = vmatprep.subr.bf16.mxu0 0
    %2874 = vmatpush1.bf16.msra.mxu0 %v2783
    %2875 = vmatprep.subr.bf16.mxu0 0
    %2876 = vmatpush1.bf16.msra.mxu0 0
    %2877 = vmatprep.subr.bf16.mxu0 0
    %2878 = vmatpush1.bf16.msra.mxu0 0
    %2879 = vmatprep.subr.bf16.mxu0 0
    %2880 = vmatpush1.bf16.msra.mxu0 0
    %2881 = vmatprep.subr.bf16.mxu0 0
    %2882 = vmatpush1.bf16.msra.mxu0 0
    %2883 = vmatprep.subr.bf16.mxu0 0
    %2884 = vmatpush1.bf16.msra.mxu0 0
    %2885 = vmatprep.subr.bf16.mxu0 0
    %2886 = vmatpush1.bf16.msra.mxu0 0
    %2887 = vmatprep.subr.bf16.mxu0 0
    %2888 = vmatpush1.bf16.msra.mxu0 0
    %2889 = vmatprep.subr.bf16.mxu0 0
    %2890 = vmatpush1.bf16.msra.mxu0 0
    %2891 = vmatprep.mubr.bf16.mxu0 0
    %2892 = vmatmul.mubr.bf16.gmra.mrb[0].mxu0 %v2629
    %v2893 = vpop.f32.mrb[0].mxu0
    %v2894 = vadd.f32 %v2676, %v2893
    %v2895 = vpop.f32.mrb[0].mxu0
    %v2896 = vpop.f32.mrb[0].mxu0
    %v2897 = vadd.f32 %v2676, %v2896
    %v2898 = vpop.f32.mrb[0].mxu0
    %2899 = vmatprep.mubr.bf16.mxu0 0
    %2900 = vmatmul.mubr.bf16.gmra.mrb[0].mxu0 %v2630
    %v2901 = vpop.f32.mrb[0].mxu0
    %v2902 = vadd.f32 %v2676, %v2901
    %v2903 = vpop.f32.mrb[0].mxu0
    %v2904 = vpop.f32.mrb[0].mxu0
    %v2905 = vpop.f32.mrb[0].mxu0
    %2906 = vdwg.mxu0
    %v2907 = vld [vmem:[%s47] sm:$0xf]
    %v2908 = vld [vmem:[%s47 + $0x4] sm:$0xf]
    %v2909 = vld [vmem:[%s47 + $0x8] sm:$0xf]
    %v2910 = vld [vmem:[%s47 + $0xc] sm:$0xf]
    %v2911 = vld [vmem:[%s47 + $0x10] sm:$0xf]
    %v2912 = vld [vmem:[%s47 + $0x14] sm:$0xf]
    %v2913 = vld [vmem:[%s47 + $0x18] sm:$0xf]
    %v2914 = vld [vmem:[%s47 + $0x1c] sm:$0xf]
    %v2915 = vld [vmem:[%s47 + $0x20] sm:$0xf]
    %v2916 = vld [vmem:[%s47 + $0x24] sm:$0xf]
    %v2917 = vld [vmem:[%s47 + $0x28] sm:$0xf]
    %v2918 = vld [vmem:[%s47 + $0x2c] sm:$0xf]
    %v2919 = vld [vmem:[%s47 + $0x30] sm:$0xf]
    %v2920 = vld [vmem:[%s47 + $0x34] sm:$0xf]
    %v2921 = vld [vmem:[%s47 + $0x38] sm:$0xf]
    %v2922 = vld [vmem:[%s47 + $0x3c] sm:$0xf]
    %v2924 = vsel %vm514, %v2843, 0
    %v2927 = vsel %vm514, %v2847, 0
    %v2930 = vsel %vm514, %v2853, 0
    %v2933 = vsel %vm514, %v2845, 0
    %v2936 = vsel %vm514, %v2849, 0
    %v2939 = vsel %vm514, %v2855, 0
    %2941 = vmatprep.subr.mxu0 0.0
    %2942 = vmatpush1.xpose.msra.mxu0 %v2933
    %2943 = vmatprep.subr.mxu0 0.0
    %2944 = vmatpush1.xpose.msra.mxu0 %v2936
    %2945 = vmatprep.subr.mxu0 0.0
    %2946 = vmatpush1.xpose.msra.mxu0 %v2939
    %2947 = vmatprep.subr.mxu0 0.0
    %2948 = vmatpush1.xpose.msra.mxu0 0.0
    %2949 = vmatprep.subr.mxu0 0.0
    %2950 = vmatpush1.xpose.msra.mxu0 0.0
    %2951 = vmatprep.subr.mxu0 0.0
    %2952 = vmatpush1.xpose.msra.mxu0 0.0
    %2953 = vmatprep.subr.mxu0 0.0
    %2954 = vmatpush1.xpose.msra.mxu0 0.0
    %2955 = vmatprep.subr.mxu0 0.0
    %2956 = vmatpush1.xpose.msra.mxu0 0.0
    %2957 = vmatprep.subr.mxu0 0.0
    %2958 = vmatpush1.xpose.msra.mxu0 0.0
    %2959 = vmatprep.subr.mxu0 0.0
    %2960 = vmatpush1.xpose.msra.mxu0 0.0
    %2961 = vmatprep.subr.mxu0 0.0
    %2962 = vmatpush1.xpose.msra.mxu0 0.0
    %2963 = vmatprep.subr.mxu0 0.0
    %2964 = vmatpush1.xpose.msra.mxu0 0.0
    %2965 = vmatprep.subr.mxu0 0.0
    %2966 = vmatpush1.xpose.msra.mxu0 0.0
    %2967 = vmatprep.subr.mxu0 0.0
    %2968 = vmatpush1.xpose.msra.mxu0 0.0
    %2969 = vmatprep.subr.mxu0 0.0
    %2970 = vmatpush1.xpose.msra.mxu0 0.0
    %2971 = vmatprep.subr.mxu0 0.0
    %2972 = vmatpush1.xpose.msra.mxu0 0.0
    %2973 = vmatprep.subr.mxu0 0.0
    %2974 = vmatpush1.xpose.msra.mxu0 0.0
    %2975 = vmatprep.subr.mxu0 0.0
    %2976 = vmatpush1.xpose.msra.mxu0 0.0
    %2977 = vmatprep.subr.mxu0 0.0
    %2978 = vmatpush1.xpose.msra.mxu0 0.0
    %2979 = vmatprep.subr.mxu0 0.0
    %2980 = vmatpush1.xpose.msra.mxu0 0.0
    %2981 = vmatprep.subr.mxu0 0.0
    %2982 = vmatpush1.xpose.msra.mxu0 0.0
    %2983 = vmatprep.subr.mxu0 0.0
    %2984 = vmatpush1.xpose.msra.mxu0 0.0
    %2985 = vmatprep.subr.mxu0 0.0
    %2986 = vmatpush1.xpose.msra.mxu0 0.0
    %2987 = vmatprep.subr.mxu0 0.0
    %2988 = vmatpush1.xpose.msra.mxu0 0.0
    %2989 = vmatprep.subr.mxu0 0.0
    %2990 = vmatpush1.xpose.msra.mxu0 0.0
    %2991 = vmatprep.subr.mxu0 0.0
    %2992 = vmatpush1.xpose.msra.mxu0 0.0
    %2993 = vmatprep.subr.mxu0 0.0
    %2994 = vmatpush1.xpose.msra.mxu0 0.0
    %2995 = vmatprep.subr.mxu0 0.0
    %2996 = vmatpush1.xpose.msra.mxu0 0.0
    %2997 = vmatprep.subr.mxu0 0.0
    %2998 = vmatpush1.xpose.msra.mxu0 0.0
    %2999 = vmatprep.subr.mxu0 0.0
    %3000 = vmatpush1.xpose.msra.mxu0 0.0
    %3001 = vmatprep.subr.mxu0 0.0
    %3002 = vmatpush1.xpose.msra.mxu0 0.0
    %3003 = vmatprep.subr.mxu0 0.0
    %3004 = vmatpush1.xpose.msra.mxu0 0.0
    %3005 = vmatprep.mubr.f32.mxu0 0.0
    %3006 = vmatmul.mubr.f32.gmra.mrb[0].mxu0 %v2924
    %v3007 = vpop.f32.mrb[0].mxu0
    %v3008 = vadd.f32 0.0, %v3007
    %v3009 = vpop.f32.mrb[0].mxu0
    %3010 = vmatprep.mubr.f32.mxu0 0.0
    %3011 = vmatmul.mubr.f32.gmra.mrb[0].mxu0 %v2927
    %v3012 = vpop.f32.mrb[0].mxu0
    %v3013 = vadd.f32 0.0, %v3012
    %v3014 = vpop.f32.mrb[0].mxu0
    %3015 = vmatprep.mubr.f32.mxu0 0.0
    %3016 = vmatmul.mubr.f32.gmra.mrb[0].mxu0 %v2930
    %v3017 = vpop.f32.mrb[0].mxu0
    %v3018 = vadd.f32 0.0, %v3017
    %v3019 = vpop.f32.mrb[0].mxu0
    %3020 = vdwg.mxu0
    %v3021 = vmul.f32 %v3008, 0.17677669
    %v3022 = vmul.f32 %v3013, 0.17677669
    %v3023 = vmul.f32 %v3018, 0.17677669
    %v3024 = vadd.f32 %v3021, %v2569
    %v3025 = vadd.f32 %v3022, %v2570
    %v3026 = vadd.f32 %v3023, %v2571
    %vm3027 = vcmask 146432
    %v3028 = vsel %vm3027, %v3024, -inf
    %3029 = vmax.xlane.f32.xlu0 %v3028
    %v3030 = vpop.xlane.xlu0 %3029
    %v3031 = vsel %vm3027, %v3025, -inf
    %3032 = vmax.xlane.f32.xlu0 %v3031
    %v3033 = vpop.xlane.xlu0 %3032
    %vm3034 = vcmask 140288
    %v3035 = vsel %vm3034, %v3026, -inf
    %3036 = vmax.xlane.f32.xlu0 %v3035
    %v3037 = vpop.xlane.xlu0 %3036
    %v3038 = vsub.f32 %v3024, %v3030
    %v3039 = vsub.f32 %v3025, %v3033
    %v3040 = vsub.f32 %v3026, %v3037
    %v3041 = vmul.f32 %v3038, 1.442695
    %v3042 = vpow.pop %v3041
    %v3043 = vmul.f32 %v3039, 1.442695
    %v3044 = vpow.pop %v3043
    %v3045 = vmul.f32 %v3040, 1.442695
    %v3046 = vpow.pop %v3045
    %v3047 = vsel %vm3027, %v3042, 0.0
    %3048 = vadd.xlane.f32.xlu0 %v3047
    %v3049 = vpop.xlane.xlu0 %3048
    %v3050 = vsel %vm3027, %v3044, 0.0
    %3051 = vadd.xlane.f32.xlu0 %v3050
    %v3052 = vpop.xlane.xlu0 %3051
    %v3053 = vsel %vm3034, %v3046, 0.0
    %3054 = vadd.xlane.f32.xlu0 %v3053
    %v3055 = vpop.xlane.xlu0 %3054
    %v3056 = vrcp.pop %v3049
    %v3057 = vrcp.pop %v3052
    %v3058 = vrcp.pop %v3055
    %v3059 = vmul.f32 %v3042, %v3056
    %v3060 = vmul.f32 %v3044, %v3057
    %v3061 = vmul.f32 %v3046, %v3058
    %v3063 = vsel %vm3027, %v3059, 0
    %v3066 = vsel %vm3027, %v3060, 0
    %v3069 = vsel %vm3027, %v3061, 0
    %v3072 = vsel %vm2578, %v2902, 0
    %3074 = vmatprep.subr.mxu0 0.0
    %3075 = vmatpush1.msra.mxu0 %v2894
    %3076 = vmatprep.subr.mxu0 0.0
    %3077 = vmatpush1.msra.mxu0 %v2897
    %3078 = vmatprep.subr.mxu0 0.0
    %3079 = vmatpush1.msra.mxu0 %v3072
    %3080 = vmatprep.subr.mxu0 0.0
    %3081 = vmatpush1.msra.mxu0 0.0
    %3082 = vmatprep.subr.mxu0 0.0
    %3083 = vmatpush1.msra.mxu0 0.0
    %3084 = vmatprep.subr.mxu0 0.0
    %3085 = vmatpush1.msra.mxu0 0.0
    %3086 = vmatprep.subr.mxu0 0.0
    %3087 = vmatpush1.msra.mxu0 0.0
    %3088 = vmatprep.subr.mxu0 0.0
    %3089 = vmatpush1.msra.mxu0 0.0
    %3090 = vmatprep.subr.mxu0 0.0
    %3091 = vmatpush1.msra.mxu0 0.0
    %3092 = vmatprep.subr.mxu0 0.0
    %3093 = vmatpush1.msra.mxu0 0.0
    %3094 = vmatprep.subr.mxu0 0.0
    %3095 = vmatpush1.msra.mxu0 0.0
    %3096 = vmatprep.subr.mxu0 0.0
    %3097 = vmatpush1.msra.mxu0 0.0
    %3098 = vmatprep.subr.mxu0 0.0
    %3099 = vmatpush1.msra.mxu0 0.0
    %3100 = vmatprep.subr.mxu0 0.0
    %3101 = vmatpush1.msra.mxu0 0.0
    %3102 = vmatprep.subr.mxu0 0.0
    %3103 = vmatpush1.msra.mxu0 0.0
    %3104 = vmatprep.subr.mxu0 0.0
    %3105 = vmatpush1.msra.mxu0 0.0
    %3106 = vmatprep.subr.mxu0 0.0
    %3107 = vmatpush1.msra.mxu0 0.0
    %3108 = vmatprep.subr.mxu0 0.0
    %3109 = vmatpush1.msra.mxu0 0.0
    %3110 = vmatprep.subr.mxu0 0.0
    %3111 = vmatpush1.msra.mxu0 0.0
    %3112 = vmatprep.subr.mxu0 0.0
    %3113 = vmatpush1.msra.mxu0 0.0
    %3114 = vmatprep.subr.mxu0 0.0
    %3115 = vmatpush1.msra.mxu0 0.0
    %3116 = vmatprep.subr.mxu0 0.0
    %3117 = vmatpush1.msra.mxu0 0.0
    %3118 = vmatprep.subr.mxu0 0.0
    %3119 = vmatpush1.msra.mxu0 0.0
    %3120 = vmatprep.subr.mxu0 0.0
    %3121 = vmatpush1.msra.mxu0 0.0
    %3122 = vmatprep.subr.mxu0 0.0
    %3123 = vmatpush1.msra.mxu0 0.0
    %3124 = vmatprep.subr.mxu0 0.0
    %3125 = vmatpush1.msra.mxu0 0.0
    %3126 = vmatprep.subr.mxu0 0.0
    %3127 = vmatpush1.msra.mxu0 0.0
    %3128 = vmatprep.subr.mxu0 0.0
    %3129 = vmatpush1.msra.mxu0 0.0
    %3130 = vmatprep.subr.mxu0 0.0
    %3131 = vmatpush1.msra.mxu0 0.0
    %3132 = vmatprep.subr.mxu0 0.0
    %3133 = vmatpush1.msra.mxu0 0.0
    %3134 = vmatprep.subr.mxu0 0.0
    %3135 = vmatpush1.msra.mxu0 0.0
    %3136 = vmatprep.subr.mxu0 0.0
    %3137 = vmatpush1.msra.mxu0 0.0
    %3138 = vmatprep.mubr.f32.mxu0 0.0
    %3139 = vmatmul.mubr.f32.gmra.mrb[0].mxu0 %v3063
    %v3140 = vpop.f32.mrb[0].mxu0
    %v3141 = vadd.f32 0.0, %v3140
    %v3142 = vpop.f32.mrb[0].mxu0
    %3143 = vmatprep.mubr.f32.mxu0 0.0
    %3144 = vmatmul.mubr.f32.gmra.mrb[0].mxu0 %v3066
    %v3145 = vpop.f32.mrb[0].mxu0
    %v3146 = vadd.f32 0.0, %v3145
    %v3147 = vpop.f32.mrb[0].mxu0
    %3148 = vmatprep.mubr.f32.mxu0 0.0
    %3149 = vmatmul.mubr.f32.gmra.mrb[0].mxu0 %v3069
    %v3150 = vpop.f32.mrb[0].mxu0
    %v3151 = vadd.f32 0.0, %v3150
    %v3152 = vpop.f32.mrb[0].mxu0
    %3153 = vdwg.mxu0
    %v3154 = vpack.c.bf16 %v3146, %v3141
    %v3155 = vpack.c.bf16 %v3151, %v3151
    %3156 = vrot.lane.b32.xlu0 %v2843, 96
    %v3157 = vpop.permute.xlu0 %3156
    %3158 = vrot.lane.b32.xlu0 %v2847, 96
    %v3159 = vpop.permute.xlu0 %3158
    %3160 = vrot.lane.b32.xlu0 %v2853, 96
    %v3161 = vpop.permute.xlu0 %3160
    %3162 = vrot.lane.b32.xlu0 %v2845, 96
    %v3163 = vpop.permute.xlu0 %3162
    %3164 = vrot.lane.b32.xlu0 %v2849, 96
    %v3165 = vpop.permute.xlu0 %3164
    %3166 = vrot.lane.b32.xlu0 %v2855, 96
    %v3167 = vpop.permute.xlu0 %3166
    %v3168 = vsel %vm514, %v3157, 0
    %v3170 = vsel %vm514, %v3159, 0
    %v3172 = vsel %vm514, %v3161, 0
    %v3174 = vsel %vm514, %v3163, 0
    %v3176 = vsel %vm514, %v3165, 0
    %v3178 = vsel %vm514, %v3167, 0
    %3180 = vmatprep.subr.mxu0 0.0
    %3181 = vmatpush1.xpose.msra.mxu0 %v3174
    %3182 = vmatprep.subr.mxu0 0.0
    %3183 = vmatpush1.xpose.msra.mxu0 %v3176
    %3184 = vmatprep.subr.mxu0 0.0
    %3185 = vmatpush1.xpose.msra.mxu0 %v3178
    %3186 = vmatprep.subr.mxu0 0.0
    %3187 = vmatpush1.xpose.msra.mxu0 0.0
    %3188 = vmatprep.subr.mxu0 0.0
    %3189 = vmatpush1.xpose.msra.mxu0 0.0
    %3190 = vmatprep.subr.mxu0 0.0
    %3191 = vmatpush1.xpose.msra.mxu0 0.0
    %3192 = vmatprep.subr.mxu0 0.0
    %3193 = vmatpush1.xpose.msra.mxu0 0.0
    %3194 = vmatprep.subr.mxu0 0.0
    %3195 = vmatpush1.xpose.msra.mxu0 0.0
    %3196 = vmatprep.subr.mxu0 0.0
    %3197 = vmatpush1.xpose.msra.mxu0 0.0
    %3198 = vmatprep.subr.mxu0 0.0
    %3199 = vmatpush1.xpose.msra.mxu0 0.0
    %3200 = vmatprep.subr.mxu0 0.0
    %3201 = vmatpush1.xpose.msra.mxu0 0.0
    %3202 = vmatprep.subr.mxu0 0.0
    %3203 = vmatpush1.xpose.msra.mxu0 0.0
    %3204 = vmatprep.subr.mxu0 0.0
    %3205 = vmatpush1.xpose.msra.mxu0 0.0
    %3206 = vmatprep.subr.mxu0 0.0
    %3207 = vmatpush1.xpose.msra.mxu0 0.0
    %3208 = vmatprep.subr.mxu0 0.0
    %3209 = vmatpush1.xpose.msra.mxu0 0.0
    %3210 = vmatprep.subr.mxu0 0.0
    %3211 = vmatpush1.xpose.msra.mxu0 0.0
    %3212 = vmatprep.subr.mxu0 0.0
    %3213 = vmatpush1.xpose.msra.mxu0 0.0
    %3214 = vmatprep.subr.mxu0 0.0
    %3215 = vmatpush1.xpose.msra.mxu0 0.0
    %3216 = vmatprep.subr.mxu0 0.0
    %3217 = vmatpush1.xpose.msra.mxu0 0.0
    %3218 = vmatprep.subr.mxu0 0.0
    %3219 = vmatpush1.xpose.msra.mxu0 0.0
    %3220 = vmatprep.subr.mxu0 0.0
    %3221 = vmatpush1.xpose.msra.mxu0 0.0
    %3222 = vmatprep.subr.mxu0 0.0
    %3223 = vmatpush1.xpose.msra.mxu0 0.0
    %3224 = vmatprep.subr.mxu0 0.0
    %3225 = vmatpush1.xpose.msra.mxu0 0.0
    %3226 = vmatprep.subr.mxu0 0.0
    %3227 = vmatpush1.xpose.msra.mxu0 0.0
    %3228 = vmatprep.subr.mxu0 0.0
    %3229 = vmatpush1.xpose.msra.mxu0 0.0
    %3230 = vmatprep.subr.mxu0 0.0
    %3231 = vmatpush1.xpose.msra.mxu0 0.0
    %3232 = vmatprep.subr.mxu0 0.0
    %3233 = vmatpush1.xpose.msra.mxu0 0.0
    %3234 = vmatprep.subr.mxu0 0.0
    %3235 = vmatpush1.xpose.msra.mxu0 0.0
    %3236 = vmatprep.subr.mxu0 0.0
    %3237 = vmatpush1.xpose.msra.mxu0 0.0
    %3238 = vmatprep.subr.mxu0 0.0
    %3239 = vmatpush1.xpose.msra.mxu0 0.0
    %3240 = vmatprep.subr.mxu0 0.0
    %3241 = vmatpush1.xpose.msra.mxu0 0.0
    %3242 = vmatprep.subr.mxu0 0.0
    %3243 = vmatpush1.xpose.msra.mxu0 0.0
    %3244 = vmatprep.mubr.f32.mxu0 0.0
    %3245 = vmatmul.mubr.f32.gmra.mrb[0].mxu0 %v3168
    %v3246 = vpop.f32.mrb[0].mxu0
    %v3247 = vadd.f32 0.0, %v3246
    %v3248 = vpop.f32.mrb[0].mxu0
    %3249 = vmatprep.mubr.f32.mxu0 0.0
    %3250 = vmatmul.mubr.f32.gmra.mrb[0].mxu0 %v3170
    %v3251 = vpop.f32.mrb[0].mxu0
    %v3252 = vadd.f32 0.0, %v3251
    %v3253 = vpop.f32.mrb[0].mxu0
    %3254 = vmatprep.mubr.f32.mxu0 0.0
    %3255 = vmatmul.mubr.f32.gmra.mrb[0].mxu0 %v3172
    %v3256 = vpop.f32.mrb[0].mxu0
    %v3257 = vadd.f32 0.0, %v3256
    %v3258 = vpop.f32.mrb[0].mxu0
    %3259 = vdwg.mxu0
    %v3260 = vmul.f32 %v3247, 0.17677669
    %v3261 = vmul.f32 %v3252, 0.17677669
    %v3262 = vmul.f32 %v3257, 0.17677669
    %v3263 = vadd.f32 %v3260, %v2569
    %v3264 = vadd.f32 %v3261, %v2570
    %v3265 = vadd.f32 %v3262, %v2571
    %v3266 = vsel %vm3027, %v3263, -inf
    %3267 = vmax.xlane.f32.xlu0 %v3266
    %v3268 = vpop.xlane.xlu0 %3267
    %v3269 = vsel %vm3027, %v3264, -inf
    %3270 = vmax.xlane.f32.xlu0 %v3269
    %v3271 = vpop.xlane.xlu0 %3270
    %v3272 = vsel %vm3034, %v3265, -inf
    %3273 = vmax.xlane.f32.xlu0 %v3272
    %v3274 = vpop.xlane.xlu0 %3273
    %v3275 = vsub.f32 %v3263, %v3268
    %v3276 = vsub.f32 %v3264, %v3271
    %v3277 = vsub.f32 %v3265, %v3274
    %v3278 = vmul.f32 %v3275, 1.442695
    %v3279 = vpow.pop %v3278
    %v3280 = vmul.f32 %v3276, 1.442695
    %v3281 = vpow.pop %v3280
    %v3282 = vmul.f32 %v3277, 1.442695
    %v3283 = vpow.pop %v3282
    %v3284 = vsel %vm3027, %v3279, 0.0
    %3285 = vadd.xlane.f32.xlu0 %v3284
    %v3286 = vpop.xlane.xlu0 %3285
    %v3287 = vsel %vm3027, %v3281, 0.0
    %3288 = vadd.xlane.f32.xlu0 %v3287
    %v3289 = vpop.xlane.xlu0 %3288
    %v3290 = vsel %vm3034, %v3283, 0.0
    %3291 = vadd.xlane.f32.xlu0 %v3290
    %v3292 = vpop.xlane.xlu0 %3291
    %v3293 = vrcp.pop %v3286
    %v3294 = vrcp.pop %v3289
    %v3295 = vrcp.pop %v3292
    %v3296 = vmul.f32 %v3279, %v3293
    %v3297 = vmul.f32 %v3281, %v3294
    %v3298 = vmul.f32 %v3283, %v3295
    %3301 = vrot.lane.b32.xlu0 %v2894, 96
    %v3302 = vpop.permute.xlu0 %3301
    %3303 = vrot.lane.b32.xlu0 %v2897, 96
    %v3304 = vpop.permute.xlu0 %3303
    %3305 = vrot.lane.b32.xlu0 %v2902, 96
    %v3306 = vpop.permute.xlu0 %3305
    %v3310 = vsel %vm3027, %v3296, 0
    %v3313 = vsel %vm3027, %v3297, 0
    %v3316 = vsel %vm3027, %v3298, 0
    %v3318 = vsel %vm2578, %v3306, 0
    %3320 = vmatprep.subr.mxu0 0.0
    %3321 = vmatpush1.msra.mxu0 %v3302
    %3322 = vmatprep.subr.mxu0 0.0
    %3323 = vmatpush1.msra.mxu0 %v3304
    %3324 = vmatprep.subr.mxu0 0.0
    %3325 = vmatpush1.msra.mxu0 %v3318
    %3326 = vmatprep.subr.mxu0 0.0
    %3327 = vmatpush1.msra.mxu0 0.0
    %3328 = vmatprep.subr.mxu0 0.0
    %3329 = vmatpush1.msra.mxu0 0.0
    %3330 = vmatprep.subr.mxu0 0.0
    %3331 = vmatpush1.msra.mxu0 0.0
    %3332 = vmatprep.subr.mxu0 0.0
    %3333 = vmatpush1.msra.mxu0 0.0
    %3334 = vmatprep.subr.mxu0 0.0
    %3335 = vmatpush1.msra.mxu0 0.0
    %3336 = vmatprep.subr.mxu0 0.0
    %3337 = vmatpush1.msra.mxu0 0.0
    %3338 = vmatprep.subr.mxu0 0.0
    %3339 = vmatpush1.msra.mxu0 0.0
    %3340 = vmatprep.subr.mxu0 0.0
    %3341 = vmatpush1.msra.mxu0 0.0
    %3342 = vmatprep.subr.mxu0 0.0
    %3343 = vmatpush1.msra.mxu0 0.0
    %3344 = vmatprep.subr.mxu0 0.0
    %3345 = vmatpush1.msra.mxu0 0.0
    %3346 = vmatprep.subr.mxu0 0.0
    %3347 = vmatpush1.msra.mxu0 0.0
    %3348 = vmatprep.subr.mxu0 0.0
    %3349 = vmatpush1.msra.mxu0 0.0
    %3350 = vmatprep.subr.mxu0 0.0
    %3351 = vmatpush1.msra.mxu0 0.0
    %3352 = vmatprep.subr.mxu0 0.0
    %3353 = vmatpush1.msra.mxu0 0.0
    %3354 = vmatprep.subr.mxu0 0.0
    %3355 = vmatpush1.msra.mxu0 0.0
    %3356 = vmatprep.subr.mxu0 0.0
    %3357 = vmatpush1.msra.mxu0 0.0
    %3358 = vmatprep.subr.mxu0 0.0
    %3359 = vmatpush1.msra.mxu0 0.0
    %3360 = vmatprep.subr.mxu0 0.0
    %3361 = vmatpush1.msra.mxu0 0.0
    %3362 = vmatprep.subr.mxu0 0.0
    %3363 = vmatpush1.msra.mxu0 0.0
    %3364 = vmatprep.subr.mxu0 0.0
    %3365 = vmatpush1.msra.mxu0 0.0
    %3366 = vmatprep.subr.mxu0 0.0
    %3367 = vmatpush1.msra.mxu0 0.0
    %3368 = vmatprep.subr.mxu0 0.0
    %3369 = vmatpush1.msra.mxu0 0.0
    %3370 = vmatprep.subr.mxu0 0.0
    %3371 = vmatpush1.msra.mxu0 0.0
    %3372 = vmatprep.subr.mxu0 0.0
    %3373 = vmatpush1.msra.mxu0 0.0
    %3374 = vmatprep.subr.mxu0 0.0
    %3375 = vmatpush1.msra.mxu0 0.0
    %3376 = vmatprep.subr.mxu0 0.0
    %3377 = vmatpush1.msra.mxu0 0.0
    %3378 = vmatprep.subr.mxu0 0.0
    %3379 = vmatpush1.msra.mxu0 0.0
    %3380 = vmatprep.subr.mxu0 0.0
    %3381 = vmatpush1.msra.mxu0 0.0
    %3382 = vmatprep.subr.mxu0 0.0
    %3383 = vmatpush1.msra.mxu0 0.0
    %3384 = vmatprep.mubr.f32.mxu0 0.0
    %3385 = vmatmul.mubr.f32.gmra.mrb[0].mxu0 %v3310
    %v3386 = vpop.f32.mrb[0].mxu0
    %v3387 = vadd.f32 0.0, %v3386
    %v3388 = vpop.f32.mrb[0].mxu0
    %3389 = vmatprep.mubr.f32.mxu0 0.0
    %3390 = vmatmul.mubr.f32.gmra.mrb[0].mxu0 %v3313
    %v3391 = vpop.f32.mrb[0].mxu0
    %v3392 = vadd.f32 0.0, %v3391
    %v3393 = vpop.f32.mrb[0].mxu0
    %3394 = vmatprep.mubr.f32.mxu0 0.0
    %3395 = vmatmul.mubr.f32.gmra.mrb[0].mxu0 %v3316
    %v3396 = vpop.f32.mrb[0].mxu0
    %v3397 = vadd.f32 0.0, %v3396
    %v3398 = vpop.f32.mrb[0].mxu0
    %3399 = vdwg.mxu0
    %v3400 = vpack.c.bf16 %v3392, %v3387
    %v3401 = vpack.c.bf16 %v3397, %v3397
    %v3406 = vunpack.c.l.b16 %v2911
    %v3407 = vunpack.c.l.b16 %v2912
    %v3408 = vunpack.c.l.b16 %v2913
    %v3409 = vunpack.c.l.b16 %v2914
    %v3410 = vpack.c.b16 %v3407, %v3406
    %v3411 = vpack.c.b16 %v3409, %v3408
    %v3415 = vsel %vm514, %v3400, 0
    %v3418 = vsel %vm514, %v3401, 0
    %3420 = vmatprep.subr.bf16.mxu0 0
    %3421 = vmatpush1.bf16.msra.mxu0 %v3410
    %3422 = vmatprep.subr.bf16.mxu0 0
    %3423 = vmatpush1.bf16.msra.mxu0 %v3411
    %3424 = vmatprep.subr.bf16.mxu0 0
    %3425 = vmatpush1.bf16.msra.mxu0 0
    %3426 = vmatprep.subr.bf16.mxu0 0
    %3427 = vmatpush1.bf16.msra.mxu0 0
    %3428 = vmatprep.subr.bf16.mxu0 0
    %3429 = vmatpush1.bf16.msra.mxu0 0
    %3430 = vmatprep.subr.bf16.mxu0 0
    %3431 = vmatpush1.bf16.msra.mxu0 0
    %3432 = vmatprep.subr.bf16.mxu0 0
    %3433 = vmatpush1.bf16.msra.mxu0 0
    %3434 = vmatprep.subr.bf16.mxu0 0
    %3435 = vmatpush1.bf16.msra.mxu0 0
    %3436 = vmatprep.subr.bf16.mxu0 0
    %3437 = vmatpush1.bf16.msra.mxu0 0
    %3438 = vmatprep.subr.bf16.mxu0 0
    %3439 = vmatpush1.bf16.msra.mxu0 0
    %3440 = vmatprep.subr.bf16.mxu0 0
    %3441 = vmatpush1.bf16.msra.mxu0 0
    %3442 = vmatprep.subr.bf16.mxu0 0
    %3443 = vmatpush1.bf16.msra.mxu0 0
    %3444 = vmatprep.subr.bf16.mxu0 0
    %3445 = vmatpush1.bf16.msra.mxu0 0
    %3446 = vmatprep.subr.bf16.mxu0 0
    %3447 = vmatpush1.bf16.msra.mxu0 0
    %3448 = vmatprep.subr.bf16.mxu0 0
    %3449 = vmatpush1.bf16.msra.mxu0 0
    %3450 = vmatprep.subr.bf16.mxu0 0
    %3451 = vmatpush1.bf16.msra.mxu0 0
    %3452 = vmatprep.mubr.bf16.mxu0 0
    %3453 = vmatmul.mubr.bf16.gmra.mrb[0].mxu0 %v3415
    %v3454 = vpop.f32.mrb[0].mxu0
    %v3455 = vadd.f32 0.0, %v3454
    %v3456 = vpop.f32.mrb[0].mxu0
    %v3457 = vpop.f32.mrb[0].mxu0
    %v3458 = vadd.f32 0.0, %v3457
    %v3459 = vpop.f32.mrb[0].mxu0
    %3460 = vmatprep.mubr.bf16.mxu0 0
    %3461 = vmatmul.mubr.bf16.gmra.mrb[0].mxu0 %v3418
    %v3462 = vpop.f32.mrb[0].mxu0
    %v3463 = vadd.f32 0.0, %v3462
    %v3464 = vpop.f32.mrb[0].mxu0
    %v3465 = vpop.f32.mrb[0].mxu0
    %v3466 = vpop.f32.mrb[0].mxu0
    %3467 = vdwg.mxu0
    %v3472 = vunpack.c.l.b16 %v2907
    %v3473 = vunpack.c.l.b16 %v2908
    %v3474 = vunpack.c.l.b16 %v2909
    %v3475 = vunpack.c.l.b16 %v2910
    %v3476 = vpack.c.b16 %v3473, %v3472
    %v3477 = vpack.c.b16 %v3475, %v3474
    %v3481 = vsel %vm514, %v3154, 0
    %v3484 = vsel %vm514, %v3155, 0
    %3486 = vmatprep.subr.bf16.mxu0 0
    %3487 = vmatpush1.bf16.msra.mxu0 %v3476
    %3488 = vmatprep.subr.bf16.mxu0 0
    %3489 = vmatpush1.bf16.msra.mxu0 %v3477
    %3490 = vmatprep.subr.bf16.mxu0 0
    %3491 = vmatpush1.bf16.msra.mxu0 0
    %3492 = vmatprep.subr.bf16.mxu0 0
    %3493 = vmatpush1.bf16.msra.mxu0 0
    %3494 = vmatprep.subr.bf16.mxu0 0
    %3495 = vmatpush1.bf16.msra.mxu0 0
    %3496 = vmatprep.subr.bf16.mxu0 0
    %3497 = vmatpush1.bf16.msra.mxu0 0
    %3498 = vmatprep.subr.bf16.mxu0 0
    %3499 = vmatpush1.bf16.msra.mxu0 0
    %3500 = vmatprep.subr.bf16.mxu0 0
    %3501 = vmatpush1.bf16.msra.mxu0 0
    %3502 = vmatprep.subr.bf16.mxu0 0
    %3503 = vmatpush1.bf16.msra.mxu0 0
    %3504 = vmatprep.subr.bf16.mxu0 0
    %3505 = vmatpush1.bf16.msra.mxu0 0
    %3506 = vmatprep.subr.bf16.mxu0 0
    %3507 = vmatpush1.bf16.msra.mxu0 0
    %3508 = vmatprep.subr.bf16.mxu0 0
    %3509 = vmatpush1.bf16.msra.mxu0 0
    %3510 = vmatprep.subr.bf16.mxu0 0
    %3511 = vmatpush1.bf16.msra.mxu0 0
    %3512 = vmatprep.subr.bf16.mxu0 0
    %3513 = vmatpush1.bf16.msra.mxu0 0
    %3514 = vmatprep.subr.bf16.mxu0 0
    %3515 = vmatpush1.bf16.msra.mxu0 0
    %3516 = vmatprep.subr.bf16.mxu0 0
    %3517 = vmatpush1.bf16.msra.mxu0 0
    %3518 = vmatprep.mubr.bf16.mxu0 0
    %3519 = vmatmul.mubr.bf16.gmra.mrb[0].mxu0 %v3481
    %v3520 = vpop.f32.mrb[0].mxu0
    %v3521 = vadd.f32 %v3455, %v3520
    %v3522 = vpop.f32.mrb[0].mxu0
    %v3523 = vpop.f32.mrb[0].mxu0
    %v3524 = vadd.f32 %v3458, %v3523
    %v3525 = vpop.f32.mrb[0].mxu0
    %3526 = vmatprep.mubr.bf16.mxu0 0
    %3527 = vmatmul.mubr.bf16.gmra.mrb[0].mxu0 %v3484
    %v3528 = vpop.f32.mrb[0].mxu0
    %v3529 = vadd.f32 %v3463, %v3528
    %v3530 = vpop.f32.mrb[0].mxu0
    %v3531 = vpop.f32.mrb[0].mxu0
    %v3532 = vpop.f32.mrb[0].mxu0
    %3533 = vdwg.mxu0
    %3534 = vrot.lane.b32.xlu0 %v2843, 64
    %v3535 = vpop.permute.xlu0 %3534
    %3536 = vrot.lane.b32.xlu0 %v2847, 64
    %v3537 = vpop.permute.xlu0 %3536
    %3538 = vrot.lane.b32.xlu0 %v2853, 64
    %v3539 = vpop.permute.xlu0 %3538
    %3540 = vrot.lane.b32.xlu0 %v2845, 64
    %v3541 = vpop.permute.xlu0 %3540
    %3542 = vrot.lane.b32.xlu0 %v2849, 64
    %v3543 = vpop.permute.xlu0 %3542
    %3544 = vrot.lane.b32.xlu0 %v2855, 64
    %v3545 = vpop.permute.xlu0 %3544
    %v3546 = vsel %vm514, %v3535, 0
    %v3548 = vsel %vm514, %v3537, 0
    %v3550 = vsel %vm514, %v3539, 0
    %v3552 = vsel %vm514, %v3541, 0
    %v3554 = vsel %vm514, %v3543, 0
    %v3556 = vsel %vm514, %v3545, 0
    %3558 = vmatprep.subr.mxu0 0.0
    %3559 = vmatpush1.xpose.msra.mxu0 %v3552
    %3560 = vmatprep.subr.mxu0 0.0
    %3561 = vmatpush1.xpose.msra.mxu0 %v3554
    %3562 = vmatprep.subr.mxu0 0.0
    %3563 = vmatpush1.xpose.msra.mxu0 %v3556
    %3564 = vmatprep.subr.mxu0 0.0
    %3565 = vmatpush1.xpose.msra.mxu0 0.0
    %3566 = vmatprep.subr.mxu0 0.0
    %3567 = vmatpush1.xpose.msra.mxu0 0.0
    %3568 = vmatprep.subr.mxu0 0.0
    %3569 = vmatpush1.xpose.msra.mxu0 0.0
    %3570 = vmatprep.subr.mxu0 0.0
    %3571 = vmatpush1.xpose.msra.mxu0 0.0
    %3572 = vmatprep.subr.mxu0 0.0
    %3573 = vmatpush1.xpose.msra.mxu0 0.0
    %3574 = vmatprep.subr.mxu0 0.0
    %3575 = vmatpush1.xpose.msra.mxu0 0.0
    %3576 = vmatprep.subr.mxu0 0.0
    %3577 = vmatpush1.xpose.msra.mxu0 0.0
    %3578 = vmatprep.subr.mxu0 0.0
    %3579 = vmatpush1.xpose.msra.mxu0 0.0
    %3580 = vmatprep.subr.mxu0 0.0
    %3581 = vmatpush1.xpose.msra.mxu0 0.0
    %3582 = vmatprep.subr.mxu0 0.0
    %3583 = vmatpush1.xpose.msra.mxu0 0.0
    %3584 = vmatprep.subr.mxu0 0.0
    %3585 = vmatpush1.xpose.msra.mxu0 0.0
    %3586 = vmatprep.subr.mxu0 0.0
    %3587 = vmatpush1.xpose.msra.mxu0 0.0
    %3588 = vmatprep.subr.mxu0 0.0
    %3589 = vmatpush1.xpose.msra.mxu0 0.0
    %3590 = vmatprep.subr.mxu0 0.0
    %3591 = vmatpush1.xpose.msra.mxu0 0.0
    %3592 = vmatprep.subr.mxu0 0.0
    %3593 = vmatpush1.xpose.msra.mxu0 0.0
    %3594 = vmatprep.subr.mxu0 0.0
    %3595 = vmatpush1.xpose.msra.mxu0 0.0
    %3596 = vmatprep.subr.mxu0 0.0
    %3597 = vmatpush1.xpose.msra.mxu0 0.0
    %3598 = vmatprep.subr.mxu0 0.0
    %3599 = vmatpush1.xpose.msra.mxu0 0.0
    %3600 = vmatprep.subr.mxu0 0.0
    %3601 = vmatpush1.xpose.msra.mxu0 0.0
    %3602 = vmatprep.subr.mxu0 0.0
    %3603 = vmatpush1.xpose.msra.mxu0 0.0
    %3604 = vmatprep.subr.mxu0 0.0
    %3605 = vmatpush1.xpose.msra.mxu0 0.0
    %3606 = vmatprep.subr.mxu0 0.0
    %3607 = vmatpush1.xpose.msra.mxu0 0.0
    %3608 = vmatprep.subr.mxu0 0.0
    %3609 = vmatpush1.xpose.msra.mxu0 0.0
    %3610 = vmatprep.subr.mxu0 0.0
    %3611 = vmatpush1.xpose.msra.mxu0 0.0
    %3612 = vmatprep.subr.mxu0 0.0
    %3613 = vmatpush1.xpose.msra.mxu0 0.0
    %3614 = vmatprep.subr.mxu0 0.0
    %3615 = vmatpush1.xpose.msra.mxu0 0.0
    %3616 = vmatprep.subr.mxu0 0.0
    %3617 = vmatpush1.xpose.msra.mxu0 0.0
    %3618 = vmatprep.subr.mxu0 0.0
    %3619 = vmatpush1.xpose.msra.mxu0 0.0
    %3620 = vmatprep.subr.mxu0 0.0
    %3621 = vmatpush1.xpose.msra.mxu0 0.0
    %3622 = vmatprep.mubr.f32.mxu0 0.0
    %3623 = vmatmul.mubr.f32.gmra.mrb[0].mxu0 %v3546
    %v3624 = vpop.f32.mrb[0].mxu0
    %v3625 = vadd.f32 0.0, %v3624
    %v3626 = vpop.f32.mrb[0].mxu0
    %3627 = vmatprep.mubr.f32.mxu0 0.0
    %3628 = vmatmul.mubr.f32.gmra.mrb[0].mxu0 %v3548
    %v3629 = vpop.f32.mrb[0].mxu0
    %v3630 = vadd.f32 0.0, %v3629
    %v3631 = vpop.f32.mrb[0].mxu0
    %3632 = vmatprep.mubr.f32.mxu0 0.0
    %3633 = vmatmul.mubr.f32.gmra.mrb[0].mxu0 %v3550
    %v3634 = vpop.f32.mrb[0].mxu0
    %v3635 = vadd.f32 0.0, %v3634
    %v3636 = vpop.f32.mrb[0].mxu0
    %3637 = vdwg.mxu0
    %v3638 = vmul.f32 %v3625, 0.17677669
    %v3639 = vmul.f32 %v3630, 0.17677669
    %v3640 = vmul.f32 %v3635, 0.17677669
    %v3641 = vadd.f32 %v3638, %v2569
    %v3642 = vadd.f32 %v3639, %v2570
    %v3643 = vadd.f32 %v3640, %v2571
    %v3644 = vsel %vm3027, %v3641, -inf
    %3645 = vmax.xlane.f32.xlu0 %v3644
    %v3646 = vpop.xlane.xlu0 %3645
    %v3647 = vsel %vm3027, %v3642, -inf
    %3648 = vmax.xlane.f32.xlu0 %v3647
    %v3649 = vpop.xlane.xlu0 %3648
    %v3650 = vsel %vm3034, %v3643, -inf
    %3651 = vmax.xlane.f32.xlu0 %v3650
    %v3652 = vpop.xlane.xlu0 %3651
    %v3653 = vsub.f32 %v3641, %v3646
    %v3654 = vsub.f32 %v3642, %v3649
    %v3655 = vsub.f32 %v3643, %v3652
    %v3656 = vmul.f32 %v3653, 1.442695
    %v3657 = vpow.pop %v3656
    %v3658 = vmul.f32 %v3654, 1.442695
    %v3659 = vpow.pop %v3658
    %v3660 = vmul.f32 %v3655, 1.442695
    %v3661 = vpow.pop %v3660
    %v3662 = vsel %vm3027, %v3657, 0.0
    %3663 = vadd.xlane.f32.xlu0 %v3662
    %v3664 = vpop.xlane.xlu0 %3663
    %v3665 = vsel %vm3027, %v3659, 0.0
    %3666 = vadd.xlane.f32.xlu0 %v3665
    %v3667 = vpop.xlane.xlu0 %3666
    %v3668 = vsel %vm3034, %v3661, 0.0
    %3669 = vadd.xlane.f32.xlu0 %v3668
    %v3670 = vpop.xlane.xlu0 %3669
    %v3671 = vrcp.pop %v3664
    %v3672 = vrcp.pop %v3667
    %v3673 = vrcp.pop %v3670
    %v3674 = vmul.f32 %v3657, %v3671
    %v3675 = vmul.f32 %v3659, %v3672
    %v3676 = vmul.f32 %v3661, %v3673
    %3677 = vrot.lane.b32.xlu0 %v2894, 64
    %v3678 = vpop.permute.xlu0 %3677
    %3679 = vrot.lane.b32.xlu0 %v2897, 64
    %v3680 = vpop.permute.xlu0 %3679
    %3681 = vrot.lane.b32.xlu0 %v2902, 64
    %v3682 = vpop.permute.xlu0 %3681
    %v3686 = vsel %vm3027, %v3674, 0
    %v3689 = vsel %vm3027, %v3675, 0
    %v3692 = vsel %vm3027, %v3676, 0
    %v3694 = vsel %vm2578, %v3682, 0
    %3696 = vmatprep.subr.mxu0 0.0
    %3697 = vmatpush1.msra.mxu0 %v3678
    %3698 = vmatprep.subr.mxu0 0.0
    %3699 = vmatpush1.msra.mxu0 %v3680
    %3700 = vmatprep.subr.mxu0 0.0
    %3701 = vmatpush1.msra.mxu0 %v3694
    %3702 = vmatprep.subr.mxu0 0.0
    %3703 = vmatpush1.msra.mxu0 0.0
    %3704 = vmatprep.subr.mxu0 0.0
    %3705 = vmatpush1.msra.mxu0 0.0
    %3706 = vmatprep.subr.mxu0 0.0
    %3707 = vmatpush1.msra.mxu0 0.0
    %3708 = vmatprep.subr.mxu0 0.0
    %3709 = vmatpush1.msra.mxu0 0.0
    %3710 = vmatprep.subr.mxu0 0.0
    %3711 = vmatpush1.msra.mxu0 0.0
    %3712 = vmatprep.subr.mxu0 0.0
    %3713 = vmatpush1.msra.mxu0 0.0
    %3714 = vmatprep.subr.mxu0 0.0
    %3715 = vmatpush1.msra.mxu0 0.0
    %3716 = vmatprep.subr.mxu0 0.0
    %3717 = vmatpush1.msra.mxu0 0.0
    %3718 = vmatprep.subr.mxu0 0.0
    %3719 = vmatpush1.msra.mxu0 0.0
    %3720 = vmatprep.subr.mxu0 0.0
    %3721 = vmatpush1.msra.mxu0 0.0
    %3722 = vmatprep.subr.mxu0 0.0
    %3723 = vmatpush1.msra.mxu0 0.0
    %3724 = vmatprep.subr.mxu0 0.0
    %3725 = vmatpush1.msra.mxu0 0.0
    %3726 = vmatprep.subr.mxu0 0.0
    %3727 = vmatpush1.msra.mxu0 0.0
    %3728 = vmatprep.subr.mxu0 0.0
    %3729 = vmatpush1.msra.mxu0 0.0
    %3730 = vmatprep.subr.mxu0 0.0
    %3731 = vmatpush1.msra.mxu0 0.0
    %3732 = vmatprep.subr.mxu0 0.0
    %3733 = vmatpush1.msra.mxu0 0.0
    %3734 = vmatprep.subr.mxu0 0.0
    %3735 = vmatpush1.msra.mxu0 0.0
    %3736 = vmatprep.subr.mxu0 0.0
    %3737 = vmatpush1.msra.mxu0 0.0
    %3738 = vmatprep.subr.mxu0 0.0
    %3739 = vmatpush1.msra.mxu0 0.0
    %3740 = vmatprep.subr.mxu0 0.0
    %3741 = vmatpush1.msra.mxu0 0.0
    %3742 = vmatprep.subr.mxu0 0.0
    %3743 = vmatpush1.msra.mxu0 0.0
    %3744 = vmatprep.subr.mxu0 0.0
    %3745 = vmatpush1.msra.mxu0 0.0
    %3746 = vmatprep.subr.mxu0 0.0
    %3747 = vmatpush1.msra.mxu0 0.0
    %3748 = vmatprep.subr.mxu0 0.0
    %3749 = vmatpush1.msra.mxu0 0.0
    %3750 = vmatprep.subr.mxu0 0.0
    %3751 = vmatpush1.msra.mxu0 0.0
    %3752 = vmatprep.subr.mxu0 0.0
    %3753 = vmatpush1.msra.mxu0 0.0
    %3754 = vmatprep.subr.mxu0 0.0
    %3755 = vmatpush1.msra.mxu0 0.0
    %3756 = vmatprep.subr.mxu0 0.0
    %3757 = vmatpush1.msra.mxu0 0.0
    %3758 = vmatprep.subr.mxu0 0.0
    %3759 = vmatpush1.msra.mxu0 0.0
    %3760 = vmatprep.mubr.f32.mxu0 0.0
    %3761 = vmatmul.mubr.f32.gmra.mrb[0].mxu0 %v3686
    %v3762 = vpop.f32.mrb[0].mxu0
    %v3763 = vadd.f32 0.0, %v3762
    %v3764 = vpop.f32.mrb[0].mxu0
    %3765 = vmatprep.mubr.f32.mxu0 0.0
    %3766 = vmatmul.mubr.f32.gmra.mrb[0].mxu0 %v3689
    %v3767 = vpop.f32.mrb[0].mxu0
    %v3768 = vadd.f32 0.0, %v3767
    %v3769 = vpop.f32.mrb[0].mxu0
    %3770 = vmatprep.mubr.f32.mxu0 0.0
    %3771 = vmatmul.mubr.f32.gmra.mrb[0].mxu0 %v3692
    %v3772 = vpop.f32.mrb[0].mxu0
    %v3773 = vadd.f32 0.0, %v3772
    %v3774 = vpop.f32.mrb[0].mxu0
    %3775 = vdwg.mxu0
    %v3776 = vpack.c.bf16 %v3768, %v3763
    %v3777 = vpack.c.bf16 %v3773, %v3773
    %v3782 = vunpack.c.l.b16 %v2915
    %v3783 = vunpack.c.l.b16 %v2916
    %v3784 = vunpack.c.l.b16 %v2917
    %v3785 = vunpack.c.l.b16 %v2918
    %v3786 = vpack.c.b16 %v3783, %v3782
    %v3787 = vpack.c.b16 %v3785, %v3784
    %v3791 = vsel %vm514, %v3776, 0
    %v3794 = vsel %vm514, %v3777, 0
    %3796 = vmatprep.subr.bf16.mxu0 0
    %3797 = vmatpush1.bf16.msra.mxu0 %v3786
    %3798 = vmatprep.subr.bf16.mxu0 0
    %3799 = vmatpush1.bf16.msra.mxu0 %v3787
    %3800 = vmatprep.subr.bf16.mxu0 0
    %3801 = vmatpush1.bf16.msra.mxu0 0
    %3802 = vmatprep.subr.bf16.mxu0 0
    %3803 = vmatpush1.bf16.msra.mxu0 0
    %3804 = vmatprep.subr.bf16.mxu0 0
    %3805 = vmatpush1.bf16.msra.mxu0 0
    %3806 = vmatprep.subr.bf16.mxu0 0
    %3807 = vmatpush1.bf16.msra.mxu0 0
    %3808 = vmatprep.subr.bf16.mxu0 0
    %3809 = vmatpush1.bf16.msra.mxu0 0
    %3810 = vmatprep.subr.bf16.mxu0 0
    %3811 = vmatpush1.bf16.msra.mxu0 0
    %3812 = vmatprep.subr.bf16.mxu0 0
    %3813 = vmatpush1.bf16.msra.mxu0 0
    %3814 = vmatprep.subr.bf16.mxu0 0
    %3815 = vmatpush1.bf16.msra.mxu0 0
    %3816 = vmatprep.subr.bf16.mxu0 0
    %3817 = vmatpush1.bf16.msra.mxu0 0
    %3818 = vmatprep.subr.bf16.mxu0 0
    %3819 = vmatpush1.bf16.msra.mxu0 0
    %3820 = vmatprep.subr.bf16.mxu0 0
    %3821 = vmatpush1.bf16.msra.mxu0 0
    %3822 = vmatprep.subr.bf16.mxu0 0
    %3823 = vmatpush1.bf16.msra.mxu0 0
    %3824 = vmatprep.subr.bf16.mxu0 0
    %3825 = vmatpush1.bf16.msra.mxu0 0
    %3826 = vmatprep.subr.bf16.mxu0 0
    %3827 = vmatpush1.bf16.msra.mxu0 0
    %3828 = vmatprep.mubr.bf16.mxu0 0
    %3829 = vmatmul.mubr.bf16.gmra.mrb[0].mxu0 %v3791
    %v3830 = vpop.f32.mrb[0].mxu0
    %v3831 = vadd.f32 0.0, %v3830
    %v3832 = vpop.f32.mrb[0].mxu0
    %v3833 = vpop.f32.mrb[0].mxu0
    %v3834 = vadd.f32 0.0, %v3833
    %v3835 = vpop.f32.mrb[0].mxu0
    %3836 = vmatprep.mubr.bf16.mxu0 0
    %3837 = vmatmul.mubr.bf16.gmra.mrb[0].mxu0 %v3794
    %v3838 = vpop.f32.mrb[0].mxu0
    %v3839 = vadd.f32 0.0, %v3838
    %v3840 = vpop.f32.mrb[0].mxu0
    %v3841 = vpop.f32.mrb[0].mxu0
    %v3842 = vpop.f32.mrb[0].mxu0
    %3843 = vdwg.mxu0
    %v3844 = vadd.f32 %v3521, %v3831
    %v3845 = vadd.f32 %v3524, %v3834
    %v3846 = vadd.f32 %v3529, %v3839
    %3847 = vrot.lane.b32.xlu0 %v2843, 32
    %v3848 = vpop.permute.xlu0 %3847
    %3849 = vrot.lane.b32.xlu0 %v2847, 32
    %v3850 = vpop.permute.xlu0 %3849
    %3851 = vrot.lane.b32.xlu0 %v2853, 32
    %v3852 = vpop.permute.xlu0 %3851
    %3853 = vrot.lane.b32.xlu0 %v2845, 32
    %v3854 = vpop.permute.xlu0 %3853
    %3855 = vrot.lane.b32.xlu0 %v2849, 32
    %v3856 = vpop.permute.xlu0 %3855
    %3857 = vrot.lane.b32.xlu0 %v2855, 32
    %v3858 = vpop.permute.xlu0 %3857
    %v3859 = vsel %vm514, %v3848, 0
    %v3861 = vsel %vm514, %v3850, 0
    %v3863 = vsel %vm514, %v3852, 0
    %v3865 = vsel %vm514, %v3854, 0
    %v3867 = vsel %vm514, %v3856, 0
    %v3869 = vsel %vm514, %v3858, 0
    %3871 = vmatprep.subr.mxu0 0.0
    %3872 = vmatpush1.xpose.msra.mxu0 %v3865
    %3873 = vmatprep.subr.mxu0 0.0
    %3874 = vmatpush1.xpose.msra.mxu0 %v3867
    %3875 = vmatprep.subr.mxu0 0.0
    %3876 = vmatpush1.xpose.msra.mxu0 %v3869
    %3877 = vmatprep.subr.mxu0 0.0
    %3878 = vmatpush1.xpose.msra.mxu0 0.0
    %3879 = vmatprep.subr.mxu0 0.0
    %3880 = vmatpush1.xpose.msra.mxu0 0.0
    %3881 = vmatprep.subr.mxu0 0.0
    %3882 = vmatpush1.xpose.msra.mxu0 0.0
    %3883 = vmatprep.subr.mxu0 0.0
    %3884 = vmatpush1.xpose.msra.mxu0 0.0
    %3885 = vmatprep.subr.mxu0 0.0
    %3886 = vmatpush1.xpose.msra.mxu0 0.0
    %3887 = vmatprep.subr.mxu0 0.0
    %3888 = vmatpush1.xpose.msra.mxu0 0.0
    %3889 = vmatprep.subr.mxu0 0.0
    %3890 = vmatpush1.xpose.msra.mxu0 0.0
    %3891 = vmatprep.subr.mxu0 0.0
    %3892 = vmatpush1.xpose.msra.mxu0 0.0
    %3893 = vmatprep.subr.mxu0 0.0
    %3894 = vmatpush1.xpose.msra.mxu0 0.0
    %3895 = vmatprep.subr.mxu0 0.0
    %3896 = vmatpush1.xpose.msra.mxu0 0.0
    %3897 = vmatprep.subr.mxu0 0.0
    %3898 = vmatpush1.xpose.msra.mxu0 0.0
    %3899 = vmatprep.subr.mxu0 0.0
    %3900 = vmatpush1.xpose.msra.mxu0 0.0
    %3901 = vmatprep.subr.mxu0 0.0
    %3902 = vmatpush1.xpose.msra.mxu0 0.0
    %3903 = vmatprep.subr.mxu0 0.0
    %3904 = vmatpush1.xpose.msra.mxu0 0.0
    %3905 = vmatprep.subr.mxu0 0.0
    %3906 = vmatpush1.xpose.msra.mxu0 0.0
    %3907 = vmatprep.subr.mxu0 0.0
    %3908 = vmatpush1.xpose.msra.mxu0 0.0
    %3909 = vmatprep.subr.mxu0 0.0
    %3910 = vmatpush1.xpose.msra.mxu0 0.0
    %3911 = vmatprep.subr.mxu0 0.0
    %3912 = vmatpush1.xpose.msra.mxu0 0.0
    %3913 = vmatprep.subr.mxu0 0.0
    %3914 = vmatpush1.xpose.msra.mxu0 0.0
    %3915 = vmatprep.subr.mxu0 0.0
    %3916 = vmatpush1.xpose.msra.mxu0 0.0
    %3917 = vmatprep.subr.mxu0 0.0
    %3918 = vmatpush1.xpose.msra.mxu0 0.0
    %3919 = vmatprep.subr.mxu0 0.0
    %3920 = vmatpush1.xpose.msra.mxu0 0.0
    %3921 = vmatprep.subr.mxu0 0.0
    %3922 = vmatpush1.xpose.msra.mxu0 0.0
    %3923 = vmatprep.subr.mxu0 0.0
    %3924 = vmatpush1.xpose.msra.mxu0 0.0
    %3925 = vmatprep.subr.mxu0 0.0
    %3926 = vmatpush1.xpose.msra.mxu0 0.0
    %3927 = vmatprep.subr.mxu0 0.0
    %3928 = vmatpush1.xpose.msra.mxu0 0.0
    %3929 = vmatprep.subr.mxu0 0.0
    %3930 = vmatpush1.xpose.msra.mxu0 0.0
    %3931 = vmatprep.subr.mxu0 0.0
    %3932 = vmatpush1.xpose.msra.mxu0 0.0
    %3933 = vmatprep.subr.mxu0 0.0
    %3934 = vmatpush1.xpose.msra.mxu0 0.0
    %3935 = vmatprep.mubr.f32.mxu0 0.0
    %3936 = vmatmul.mubr.f32.gmra.mrb[0].mxu0 %v3859
    %v3937 = vpop.f32.mrb[0].mxu0
    %v3938 = vadd.f32 0.0, %v3937
    %v3939 = vpop.f32.mrb[0].mxu0
    %3940 = vmatprep.mubr.f32.mxu0 0.0
    %3941 = vmatmul.mubr.f32.gmra.mrb[0].mxu0 %v3861
    %v3942 = vpop.f32.mrb[0].mxu0
    %v3943 = vadd.f32 0.0, %v3942
    %v3944 = vpop.f32.mrb[0].mxu0
    %3945 = vmatprep.mubr.f32.mxu0 0.0
    %3946 = vmatmul.mubr.f32.gmra.mrb[0].mxu0 %v3863
    %v3947 = vpop.f32.mrb[0].mxu0
    %v3948 = vadd.f32 0.0, %v3947
    %v3949 = vpop.f32.mrb[0].mxu0
    %3950 = vdwg.mxu0
    %v3951 = vmul.f32 %v3938, 0.17677669
    %v3952 = vmul.f32 %v3943, 0.17677669
    %v3953 = vmul.f32 %v3948, 0.17677669
    %v3954 = vadd.f32 %v3951, %v2569
    %v3955 = vadd.f32 %v3952, %v2570
    %v3956 = vadd.f32 %v3953, %v2571
    %v3957 = vsel %vm3027, %v3954, -inf
    %3958 = vmax.xlane.f32.xlu0 %v3957
    %v3959 = vpop.xlane.xlu0 %3958
    %v3960 = vsel %vm3027, %v3955, -inf
    %3961 = vmax.xlane.f32.xlu0 %v3960
    %v3962 = vpop.xlane.xlu0 %3961
    %v3963 = vsel %vm3034, %v3956, -inf
    %3964 = vmax.xlane.f32.xlu0 %v3963
    %v3965 = vpop.xlane.xlu0 %3964
    %v3966 = vsub.f32 %v3954, %v3959
    %v3967 = vsub.f32 %v3955, %v3962
    %v3968 = vsub.f32 %v3956, %v3965
    %v3969 = vmul.f32 %v3966, 1.442695
    %v3970 = vpow.pop %v3969
    %v3971 = vmul.f32 %v3967, 1.442695
    %v3972 = vpow.pop %v3971
    %v3973 = vmul.f32 %v3968, 1.442695
    %v3974 = vpow.pop %v3973
    %v3975 = vsel %vm3027, %v3970, 0.0
    %3976 = vadd.xlane.f32.xlu0 %v3975
    %v3977 = vpop.xlane.xlu0 %3976
    %v3978 = vsel %vm3027, %v3972, 0.0
    %3979 = vadd.xlane.f32.xlu0 %v3978
    %v3980 = vpop.xlane.xlu0 %3979
    %v3981 = vsel %vm3034, %v3974, 0.0
    %3982 = vadd.xlane.f32.xlu0 %v3981
    %v3983 = vpop.xlane.xlu0 %3982
    %v3984 = vrcp.pop %v3977
    %v3985 = vrcp.pop %v3980
    %v3986 = vrcp.pop %v3983
    %v3987 = vmul.f32 %v3970, %v3984
    %v3988 = vmul.f32 %v3972, %v3985
    %v3989 = vmul.f32 %v3974, %v3986
    %3990 = vrot.lane.b32.xlu0 %v2894, 32
    %v3991 = vpop.permute.xlu0 %3990
    %3992 = vrot.lane.b32.xlu0 %v2897, 32
    %v3993 = vpop.permute.xlu0 %3992
    %3994 = vrot.lane.b32.xlu0 %v2902, 32
    %v3995 = vpop.permute.xlu0 %3994
    %v3999 = vsel %vm3027, %v3987, 0
    %v4002 = vsel %vm3027, %v3988, 0
    %v4005 = vsel %vm3027, %v3989, 0
    %v4007 = vsel %vm2578, %v3995, 0
    %4009 = vmatprep.subr.mxu0 0.0
    %4010 = vmatpush1.msra.mxu0 %v3991
    %4011 = vmatprep.subr.mxu0 0.0
    %4012 = vmatpush1.msra.mxu0 %v3993
    %4013 = vmatprep.subr.mxu0 0.0
    %4014 = vmatpush1.msra.mxu0 %v4007
    %4015 = vmatprep.subr.mxu0 0.0
    %4016 = vmatpush1.msra.mxu0 0.0
    %4017 = vmatprep.subr.mxu0 0.0
    %4018 = vmatpush1.msra.mxu0 0.0
    %4019 = vmatprep.subr.mxu0 0.0
    %4020 = vmatpush1.msra.mxu0 0.0
    %4021 = vmatprep.subr.mxu0 0.0
    %4022 = vmatpush1.msra.mxu0 0.0
    %4023 = vmatprep.subr.mxu0 0.0
    %4024 = vmatpush1.msra.mxu0 0.0
    %4025 = vmatprep.subr.mxu0 0.0
    %4026 = vmatpush1.msra.mxu0 0.0
    %4027 = vmatprep.subr.mxu0 0.0
    %4028 = vmatpush1.msra.mxu0 0.0
    %4029 = vmatprep.subr.mxu0 0.0
    %4030 = vmatpush1.msra.mxu0 0.0
    %4031 = vmatprep.subr.mxu0 0.0
    %4032 = vmatpush1.msra.mxu0 0.0
    %4033 = vmatprep.subr.mxu0 0.0
    %4034 = vmatpush1.msra.mxu0 0.0
    %4035 = vmatprep.subr.mxu0 0.0
    %4036 = vmatpush1.msra.mxu0 0.0
    %4037 = vmatprep.subr.mxu0 0.0
    %4038 = vmatpush1.msra.mxu0 0.0
    %4039 = vmatprep.subr.mxu0 0.0
    %4040 = vmatpush1.msra.mxu0 0.0
    %4041 = vmatprep.subr.mxu0 0.0
    %4042 = vmatpush1.msra.mxu0 0.0
    %4043 = vmatprep.subr.mxu0 0.0
    %4044 = vmatpush1.msra.mxu0 0.0
    %4045 = vmatprep.subr.mxu0 0.0
    %4046 = vmatpush1.msra.mxu0 0.0
    %4047 = vmatprep.subr.mxu0 0.0
    %4048 = vmatpush1.msra.mxu0 0.0
    %4049 = vmatprep.subr.mxu0 0.0
    %4050 = vmatpush1.msra.mxu0 0.0
    %4051 = vmatprep.subr.mxu0 0.0
    %4052 = vmatpush1.msra.mxu0 0.0
    %4053 = vmatprep.subr.mxu0 0.0
    %4054 = vmatpush1.msra.mxu0 0.0
    %4055 = vmatprep.subr.mxu0 0.0
    %4056 = vmatpush1.msra.mxu0 0.0
    %4057 = vmatprep.subr.mxu0 0.0
    %4058 = vmatpush1.msra.mxu0 0.0
    %4059 = vmatprep.subr.mxu0 0.0
    %4060 = vmatpush1.msra.mxu0 0.0
    %4061 = vmatprep.subr.mxu0 0.0
    %4062 = vmatpush1.msra.mxu0 0.0
    %4063 = vmatprep.subr.mxu0 0.0
    %4064 = vmatpush1.msra.mxu0 0.0
    %4065 = vmatprep.subr.mxu0 0.0
    %4066 = vmatpush1.msra.mxu0 0.0
    %4067 = vmatprep.subr.mxu0 0.0
    %4068 = vmatpush1.msra.mxu0 0.0
    %4069 = vmatprep.subr.mxu0 0.0
    %4070 = vmatpush1.msra.mxu0 0.0
    %4071 = vmatprep.subr.mxu0 0.0
    %4072 = vmatpush1.msra.mxu0 0.0
    %4073 = vmatprep.mubr.f32.mxu0 0.0
    %4074 = vmatmul.mubr.f32.gmra.mrb[0].mxu0 %v3999
    %v4075 = vpop.f32.mrb[0].mxu0
    %v4076 = vadd.f32 0.0, %v4075
    %v4077 = vpop.f32.mrb[0].mxu0
    %4078 = vmatprep.mubr.f32.mxu0 0.0
    %4079 = vmatmul.mubr.f32.gmra.mrb[0].mxu0 %v4002
    %v4080 = vpop.f32.mrb[0].mxu0
    %v4081 = vadd.f32 0.0, %v4080
    %v4082 = vpop.f32.mrb[0].mxu0
    %4083 = vmatprep.mubr.f32.mxu0 0.0
    %4084 = vmatmul.mubr.f32.gmra.mrb[0].mxu0 %v4005
    %v4085 = vpop.f32.mrb[0].mxu0
    %v4086 = vadd.f32 0.0, %v4085
    %v4087 = vpop.f32.mrb[0].mxu0
    %4088 = vdwg.mxu0
    %v4089 = vpack.c.bf16 %v4081, %v4076
    %v4090 = vpack.c.bf16 %v4086, %v4086
    %v4095 = vunpack.c.l.b16 %v2919
    %v4096 = vunpack.c.l.b16 %v2920
    %v4097 = vunpack.c.l.b16 %v2921
    %v4098 = vunpack.c.l.b16 %v2922
    %v4099 = vpack.c.b16 %v4096, %v4095
    %v4100 = vpack.c.b16 %v4098, %v4097
    %v4104 = vsel %vm514, %v4089, 0
    %v4107 = vsel %vm514, %v4090, 0
    %4109 = vmatprep.subr.bf16.mxu0 0
    %4110 = vmatpush1.bf16.msra.mxu0 %v4099
    %4111 = vmatprep.subr.bf16.mxu0 0
    %4112 = vmatpush1.bf16.msra.mxu0 %v4100
    %4113 = vmatprep.subr.bf16.mxu0 0
    %4114 = vmatpush1.bf16.msra.mxu0 0
    %4115 = vmatprep.subr.bf16.mxu0 0
    %4116 = vmatpush1.bf16.msra.mxu0 0
    %4117 = vmatprep.subr.bf16.mxu0 0
    %4118 = vmatpush1.bf16.msra.mxu0 0
    %4119 = vmatprep.subr.bf16.mxu0 0
    %4120 = vmatpush1.bf16.msra.mxu0 0
    %4121 = vmatprep.subr.bf16.mxu0 0
    %4122 = vmatpush1.bf16.msra.mxu0 0
    %4123 = vmatprep.subr.bf16.mxu0 0
    %4124 = vmatpush1.bf16.msra.mxu0 0
    %4125 = vmatprep.subr.bf16.mxu0 0
    %4126 = vmatpush1.bf16.msra.mxu0 0
    %4127 = vmatprep.subr.bf16.mxu0 0
    %4128 = vmatpush1.bf16.msra.mxu0 0
    %4129 = vmatprep.subr.bf16.mxu0 0
    %4130 = vmatpush1.bf16.msra.mxu0 0
    %4131 = vmatprep.subr.bf16.mxu0 0
    %4132 = vmatpush1.bf16.msra.mxu0 0
    %4133 = vmatprep.subr.bf16.mxu0 0
    %4134 = vmatpush1.bf16.msra.mxu0 0
    %4135 = vmatprep.subr.bf16.mxu0 0
    %4136 = vmatpush1.bf16.msra.mxu0 0
    %4137 = vmatprep.subr.bf16.mxu0 0
    %4138 = vmatpush1.bf16.msra.mxu0 0
    %4139 = vmatprep.subr.bf16.mxu0 0
    %4140 = vmatpush1.bf16.msra.mxu0 0
    %4141 = vmatprep.mubr.bf16.mxu0 0
    %4142 = vmatmul.mubr.bf16.gmra.mrb[0].mxu0 %v4104
    %v4143 = vpop.f32.mrb[0].mxu0
    %v4144 = vadd.f32 0.0, %v4143
    %v4145 = vpop.f32.mrb[0].mxu0
    %v4146 = vpop.f32.mrb[0].mxu0
    %v4147 = vadd.f32 0.0, %v4146
    %v4148 = vpop.f32.mrb[0].mxu0
    %4149 = vmatprep.mubr.bf16.mxu0 0
    %4150 = vmatmul.mubr.bf16.gmra.mrb[0].mxu0 %v4107
    %v4151 = vpop.f32.mrb[0].mxu0
    %v4152 = vadd.f32 0.0, %v4151
    %v4153 = vpop.f32.mrb[0].mxu0
    %v4154 = vpop.f32.mrb[0].mxu0
    %v4155 = vpop.f32.mrb[0].mxu0
    %4156 = vdwg.mxu0
    %v4157 = vadd.f32 %v3844, %v4144
    %v4158 = vadd.f32 %v3845, %v4147
    %v4159 = vadd.f32 %v3846, %v4152
    %v4160 = vadd.f32 %v2566, %v4157
    %v4161 = vadd.f32 %v2567, %v4158
    %v4162 = vadd.f32 %v2568, %v4159
    %v4163 = vld [vmem:[%s49] sm:$0x1]
    %v4165 = vlaneseq
    %v4166 = vshrl.u32 %v4165, 7
    %v4167 = vsub.s32 0, %v4166
    %v4168 = vrot.slane %v4163, %v4167
    %v4170 = vadd.f32 %v4160, %v4168
    %v4171 = vadd.f32 %v4161, %v4168
    %v4172 = vadd.f32 %v4162, %v4168
    %v4173 = vld [vmem:[%s51] sm:$0x1]
    %v4174 = vld [vmem:[%s53] sm:$0x1]
    %4175 = vadd.xlane.f32.xlu0 %v4170
    %v4176 = vpop.xlane.xlu0 %4175
    %4177 = vadd.xlane.f32.xlu0 %v4171
    %v4178 = vpop.xlane.xlu0 %4177
    %v4179 = vsel %vm2578, %v4172, 0.0
    %4180 = vadd.xlane.f32.xlu0 %v4179
    %v4181 = vpop.xlane.xlu0 %4180
    %v4182 = vmul.f32 %v4176, %v2582
    %v4183 = vmul.f32 %v4178, %v2582
    %v4184 = vmul.f32 %v4181, %v2582
    %v4185 = vsub.f32 %v4170, %v4182
    %v4186 = vsub.f32 %v4171, %v4183
    %v4187 = vsub.f32 %v4172, %v4184
    %v4188 = vmul.f32 %v4185, %v4185
    %v4189 = vmul.f32 %v4186, %v4186
    %v4190 = vmul.f32 %v4187, %v4187
    %4191 = vadd.xlane.f32.xlu0 %v4188
    %v4192 = vpop.xlane.xlu0 %4191
    %4193 = vadd.xlane.f32.xlu0 %v4189
    %v4194 = vpop.xlane.xlu0 %4193
    %v4195 = vsel %vm2578, %v4190, 0.0
    %4196 = vadd.xlane.f32.xlu0 %v4195
    %v4197 = vpop.xlane.xlu0 %4196
    %v4198 = vmul.f32 %v4192, %v2582
    %v4199 = vmul.f32 %v4194, %v2582
    %v4200 = vmul.f32 %v4197, %v2582
    %v4201 = vadd.f32 %v4198, 1e-05
    %v4202 = vadd.f32 %v4199, 1e-05
    %v4203 = vadd.f32 %v4200, 1e-05
    %v4204 = vrsqrt.pop %v4201
    %v4205 = vrsqrt.pop %v4202
    %v4206 = vrsqrt.pop %v4203
    %v4207 = vmul.f32 %v4185, %v4204
    %v4208 = vmul.f32 %v4186, %v4205
    %v4209 = vmul.f32 %v4187, %v4206
    %v4211 = vlaneseq
    %v4212 = vshrl.u32 %v4211, 7
    %v4213 = vsub.s32 0, %v4212
    %v4214 = vrot.slane %v4173, %v4213
    %v4216 = vmul.f32 %v4207, %v4214
    %v4217 = vmul.f32 %v4208, %v4214
    %v4218 = vmul.f32 %v4209, %v4214
    %v4220 = vlaneseq
    %v4221 = vshrl.u32 %v4220, 7
    %v4222 = vsub.s32 0, %v4221
    %v4223 = vrot.slane %v4174, %v4222
    %v4225 = vadd.f32 %v4216, %v4223
    %v4226 = vadd.f32 %v4217, %v4223
    %v4227 = vadd.f32 %v4218, %v4223
    %v4228 = vld [vmem:[%s55] sm:$0xff]
    %v4229 = vld [vmem:[%s55 + $0x8] sm:$0xff]
    %v4230 = vld [vmem:[%s55 + $0x10] sm:$0xff]
    %v4231 = vld [vmem:[%s55 + $0x18] sm:$0xff]
    %v4232 = vld [vmem:[%s55 + $0x20] sm:$0xff]
    %v4233 = vld [vmem:[%s55 + $0x28] sm:$0xff]
    %v4234 = vld [vmem:[%s55 + $0x30] sm:$0xff]
    %v4235 = vld [vmem:[%s55 + $0x38] sm:$0xff]
    %v4236 = vld [vmem:[%s55 + $0x40] sm:$0xff]
    %v4237 = vld [vmem:[%s55 + $0x48] sm:$0xff]
    %v4238 = vld [vmem:[%s55 + $0x50] sm:$0xff]
    %v4239 = vld [vmem:[%s55 + $0x58] sm:$0xff]
    %v4240 = vld [vmem:[%s55 + $0x60] sm:$0xff]
    %v4241 = vld [vmem:[%s55 + $0x68] sm:$0xff]
    %v4242 = vld [vmem:[%s55 + $0x70] sm:$0xff]
    %v4243 = vld [vmem:[%s55 + $0x78] sm:$0xff]
    %v4244 = vld [vmem:[%s57] sm:$0x1]
    %v4246 = vlaneseq
    %v4247 = vshrl.u32 %v4246, 7
    %v4248 = vsub.s32 0, %v4247
    %v4249 = vrot.slane %v4244, %v4248
    %4251 = vmatprep.subr.mxu0 0.0
    %4252 = vmatpush1.msra.mxu0 %v4228
    %4253 = vmatprep.subr.mxu0 0.0
    %4254 = vmatpush1.msra.mxu0 %v4229
    %4255 = vmatprep.subr.mxu0 0.0
    %4256 = vmatpush1.msra.mxu0 %v4230
    %4257 = vmatprep.subr.mxu0 0.0
    %4258 = vmatpush1.msra.mxu0 %v4231
    %4259 = vmatprep.subr.mxu0 0.0
    %4260 = vmatpush1.msra.mxu0 %v4232
    %4261 = vmatprep.subr.mxu0 0.0
    %4262 = vmatpush1.msra.mxu0 %v4233
    %4263 = vmatprep.subr.mxu0 0.0
    %4264 = vmatpush1.msra.mxu0 %v4234
    %4265 = vmatprep.subr.mxu0 0.0
    %4266 = vmatpush1.msra.mxu0 %v4235
    %4267 = vmatprep.subr.mxu0 0.0
    %4268 = vmatpush1.msra.mxu0 %v4236
    %4269 = vmatprep.subr.mxu0 0.0
    %4270 = vmatpush1.msra.mxu0 %v4237
    %4271 = vmatprep.subr.mxu0 0.0
    %4272 = vmatpush1.msra.mxu0 %v4238
    %4273 = vmatprep.subr.mxu0 0.0
    %4274 = vmatpush1.msra.mxu0 %v4239
    %4275 = vmatprep.subr.mxu0 0.0
    %4276 = vmatpush1.msra.mxu0 %v4240
    %4277 = vmatprep.subr.mxu0 0.0
    %4278 = vmatpush1.msra.mxu0 %v4241
    %4279 = vmatprep.subr.mxu0 0.0
    %4280 = vmatpush1.msra.mxu0 %v4242
    %4281 = vmatprep.subr.mxu0 0.0
    %4282 = vmatpush1.msra.mxu0 %v4243
    %4283 = vmatprep.subr.mxu0 0.0
    %4284 = vmatpush1.msra.mxu0 0.0
    %4285 = vmatprep.subr.mxu0 0.0
    %4286 = vmatpush1.msra.mxu0 0.0
    %4287 = vmatprep.subr.mxu0 0.0
    %4288 = vmatpush1.msra.mxu0 0.0
    %4289 = vmatprep.subr.mxu0 0.0
    %4290 = vmatpush1.msra.mxu0 0.0
    %4291 = vmatprep.subr.mxu0 0.0
    %4292 = vmatpush1.msra.mxu0 0.0
    %4293 = vmatprep.subr.mxu0 0.0
    %4294 = vmatpush1.msra.mxu0 0.0
    %4295 = vmatprep.subr.mxu0 0.0
    %4296 = vmatpush1.msra.mxu0 0.0
    %4297 = vmatprep.subr.mxu0 0.0
    %4298 = vmatpush1.msra.mxu0 0.0
    %4299 = vmatprep.subr.mxu0 0.0
    %4300 = vmatpush1.msra.mxu0 0.0
    %4301 = vmatprep.subr.mxu0 0.0
    %4302 = vmatpush1.msra.mxu0 0.0
    %4303 = vmatprep.subr.mxu0 0.0
    %4304 = vmatpush1.msra.mxu0 0.0
    %4305 = vmatprep.subr.mxu0 0.0
    %4306 = vmatpush1.msra.mxu0 0.0
    %4307 = vmatprep.subr.mxu0 0.0
    %4308 = vmatpush1.msra.mxu0 0.0
    %4309 = vmatprep.subr.mxu0 0.0
    %4310 = vmatpush1.msra.mxu0 0.0
    %4311 = vmatprep.subr.mxu0 0.0
    %4312 = vmatpush1.msra.mxu0 0.0
    %4313 = vmatprep.subr.mxu0 0.0
    %4314 = vmatpush1.msra.mxu0 0.0
    %4315 = vmatprep.mubr.f32.mxu0 0.0
    %4316 = vmatmul.mubr.f32.gmra.mrb[0].mxu0 %v4225
    %v4317 = vpop.f32.mrb[0].mxu0
    %v4318 = vadd.f32 %v4249, %v4317
    %v4319 = vpop.f32.mrb[0].mxu0
    %4320 = vmatprep.mubr.f32.mxu0 0.0
    %4321 = vmatmul.mubr.f32.gmra.mrb[0].mxu0 %v4226
    %v4322 = vpop.f32.mrb[0].mxu0
    %v4323 = vadd.f32 %v4249, %v4322
    %v4324 = vpop.f32.mrb[0].mxu0
    %4325 = vmatprep.mubr.f32.mxu0 0.0
    %4326 = vmatmul.mubr.f32.gmra.mrb[0].mxu0 %v4227
    %v4327 = vpop.f32.mrb[0].mxu0
    %v4328 = vadd.f32 %v4249, %v4327
    %v4329 = vpop.f32.mrb[0].mxu0
    %4330 = vdwg.mxu0
    %v4331 = vlaneseq
    %v4332 = vand.u32 %v4331, 127
    %4334 = vset.pattern.permute.xlu0 0
    %4335 = vperm.xlu0 %4334, %v4318
    %v4336 = vpop.permute.xlu0 %4335
    %4339 = vset.pattern.permute.xlu0 0
    %4340 = vperm.xlu0 %4339, %v4323
    %v4341 = vpop.permute.xlu0 %4340
    %4344 = vset.pattern.permute.xlu0 0
    %4345 = vperm.xlu0 %4344, %v4328
    %v4346 = vpop.permute.xlu0 %4345
    %vm4348 = vcmp.gt.f32.partialorder %v4318, %v4336
    %vm4349 = vcmp.gt.f32.partialorder %v4323, %v4341
    %vm4350 = vcmp.gt.f32.partialorder %v4328, %v4346
    %v4351 = vsel %vm4348, 1, 0
    %v4352 = vsel %vm4349, 1, 0
    %v4353 = vsel %vm4350, 1, 0
    %v4354 = vcvt.s32.f32 %v4351
    %v4355 = vcvt.s32.f32 %v4352
    %v4356 = vcvt.s32.f32 %v4353
    %vm4357 = vcmask 31744
    %v4358 = vsel %vm4357, %v4354, 0.0
    %4359 = vadd.xlane.f32.xlu0 %v4358
    %v4360 = vpop.xlane.xlu0 %4359
    %v4361 = vsel %vm4357, %v4355, 0.0
    %4362 = vadd.xlane.f32.xlu0 %v4361
    %v4363 = vpop.xlane.xlu0 %4362
    %vm4364 = vcmask 25600
    %v4365 = vsel %vm4364, %v4356, 0.0
    %4366 = vadd.xlane.f32.xlu0 %v4365
    %v4367 = vpop.xlane.xlu0 %4366
    %vm4368 = vcmp.eq.f32.partialorder %v4318, %v4336
    %vm4369 = vcmp.eq.f32.partialorder %v4323, %v4341
    %vm4370 = vcmp.eq.f32.partialorder %v4328, %v4346
    %vm4371 = vcmp.lt.s32.totalorder %v4332, 0
    %v4372 = vsel %vm4371, 1, 0
    %vm4373 = vcmp.eq.s32.totalorder %v4372, 1
    %vm4374 = vmand %vm4368, %vm4373
    %vm4375 = vmand %vm4369, %vm4373
    %vm4376 = vmand %vm4370, %vm4373
    %v4377 = vsel %vm4374, 1, 0
    %v4378 = vsel %vm4375, 1, 0
    %v4379 = vsel %vm4376, 1, 0
    %v4380 = vcvt.s32.f32 %v4377
    %v4381 = vcvt.s32.f32 %v4378
    %v4382 = vcvt.s32.f32 %v4379
    %v4383 = vsel %vm4357, %v4380, 0.0
    %4384 = vadd.xlane.f32.xlu0 %v4383
    %v4385 = vpop.xlane.xlu0 %4384
    %v4386 = vsel %vm4357, %v4381, 0.0
    %4387 = vadd.xlane.f32.xlu0 %v4386
    %v4388 = vpop.xlane.xlu0 %4387
    %v4389 = vsel %vm4364, %v4382, 0.0
    %4390 = vadd.xlane.f32.xlu0 %v4389
    %v4391 = vpop.xlane.xlu0 %4390
    %v4392 = vadd.f32 %v4360, %v4385
    %v4393 = vadd.f32 %v4363, %v4388
    %v4394 = vadd.f32 %v4367, %v4391
    %vm4395 = vcmp.lt.f32.partialorder %v4392, 2.0
    %vm4396 = vcmp.lt.f32.partialorder %v4393, 2.0
    %vm4397 = vcmp.lt.f32.partialorder %v4394, 2.0
    %v4398 = vsel %vm4395, 1, 0
    %v4399 = vsel %vm4396, 1, 0
    %v4400 = vsel %vm4397, 1, 0
    %v4401 = vcvt.s32.f32 %v4398
    %v4402 = vcvt.s32.f32 %v4399
    %v4403 = vcvt.s32.f32 %v4400
    %vm4404 = vcmp.eq.s32.totalorder %v4332, 0
    %v4405 = vsel %vm4404, 1, 0
    %v4406 = vcvt.s32.f32 %v4405
    %v4407 = vmul.f32 %v4401, %v4406
    %v4408 = vmul.f32 %v4402, %v4406
    %v4409 = vmul.f32 %v4403, %v4406
    %v4410 = vadd.f32 %v4407, 0.0
    %v4411 = vadd.f32 %v4408, 0.0
    %v4412 = vadd.f32 %v4409, 0.0
    %4413 = vset.pattern.permute.xlu0 1
    %4414 = vperm.xlu0 %4413, %v4318
    %v4415 = vpop.permute.xlu0 %4414
    %4417 = vset.pattern.permute.xlu0 1
    %4418 = vperm.xlu0 %4417, %v4323
    %v4419 = vpop.permute.xlu0 %4418
    %4421 = vset.pattern.permute.xlu0 1
    %4422 = vperm.xlu0 %4421, %v4328
    %v4423 = vpop.permute.xlu0 %4422
    %vm4425 = vcmp.gt.f32.partialorder %v4318, %v4415
    %vm4426 = vcmp.gt.f32.partialorder %v4323, %v4419
    %vm4427 = vcmp.gt.f32.partialorder %v4328, %v4423
    %v4428 = vsel %vm4425, 1, 0
    %v4429 = vsel %vm4426, 1, 0
    %v4430 = vsel %vm4427, 1, 0
    %v4431 = vcvt.s32.f32 %v4428
    %v4432 = vcvt.s32.f32 %v4429
    %v4433 = vcvt.s32.f32 %v4430
    %v4434 = vsel %vm4357, %v4431, 0.0
    %4435 = vadd.xlane.f32.xlu0 %v4434
    %v4436 = vpop.xlane.xlu0 %4435
    %v4437 = vsel %vm4357, %v4432, 0.0
    %4438 = vadd.xlane.f32.xlu0 %v4437
    %v4439 = vpop.xlane.xlu0 %4438
    %v4440 = vsel %vm4364, %v4433, 0.0
    %4441 = vadd.xlane.f32.xlu0 %v4440
    %v4442 = vpop.xlane.xlu0 %4441
    %vm4443 = vcmp.eq.f32.partialorder %v4318, %v4415
    %vm4444 = vcmp.eq.f32.partialorder %v4323, %v4419
    %vm4445 = vcmp.eq.f32.partialorder %v4328, %v4423
    %vm4446 = vcmp.lt.s32.totalorder %v4332, 1
    %v4447 = vsel %vm4446, 1, 0
    %vm4448 = vcmp.eq.s32.totalorder %v4447, 1
    %vm4449 = vmand %vm4443, %vm4448
    %vm4450 = vmand %vm4444, %vm4448
    %vm4451 = vmand %vm4445, %vm4448
    %v4452 = vsel %vm4449, 1, 0
    %v4453 = vsel %vm4450, 1, 0
    %v4454 = vsel %vm4451, 1, 0
    %v4455 = vcvt.s32.f32 %v4452
    %v4456 = vcvt.s32.f32 %v4453
    %v4457 = vcvt.s32.f32 %v4454
    %v4458 = vsel %vm4357, %v4455, 0.0
    %4459 = vadd.xlane.f32.xlu0 %v4458
    %v4460 = vpop.xlane.xlu0 %4459
    %v4461 = vsel %vm4357, %v4456, 0.0
    %4462 = vadd.xlane.f32.xlu0 %v4461
    %v4463 = vpop.xlane.xlu0 %4462
    %v4464 = vsel %vm4364, %v4457, 0.0
    %4465 = vadd.xlane.f32.xlu0 %v4464
    %v4466 = vpop.xlane.xlu0 %4465
    %v4467 = vadd.f32 %v4436, %v4460
    %v4468 = vadd.f32 %v4439, %v4463
    %v4469 = vadd.f32 %v4442, %v4466
    %vm4470 = vcmp.lt.f32.partialorder %v4467, 2.0
    %vm4471 = vcmp.lt.f32.partialorder %v4468, 2.0
    %vm4472 = vcmp.lt.f32.partialorder %v4469, 2.0
    %v4473 = vsel %vm4470, 1, 0
    %v4474 = vsel %vm4471, 1, 0
    %v4475 = vsel %vm4472, 1, 0
    %v4476 = vcvt.s32.f32 %v4473
    %v4477 = vcvt.s32.f32 %v4474
    %v4478 = vcvt.s32.f32 %v4475
    %vm4479 = vcmp.eq.s32.totalorder %v4332, 1
    %v4480 = vsel %vm4479, 1, 0
    %v4481 = vcvt.s32.f32 %v4480
    %v4482 = vmul.f32 %v4476, %v4481
    %v4483 = vmul.f32 %v4477, %v4481
    %v4484 = vmul.f32 %v4478, %v4481
    %v4485 = vadd.f32 %v4410, %v4482
    %v4486 = vadd.f32 %v4411, %v4483
    %v4487 = vadd.f32 %v4412, %v4484
    %4488 = vset.pattern.permute.xlu0 2
    %4489 = vperm.xlu0 %4488, %v4318
    %v4490 = vpop.permute.xlu0 %4489
    %4492 = vset.pattern.permute.xlu0 2
    %4493 = vperm.xlu0 %4492, %v4323
    %v4494 = vpop.permute.xlu0 %4493
    %4496 = vset.pattern.permute.xlu0 2
    %4497 = vperm.xlu0 %4496, %v4328
    %v4498 = vpop.permute.xlu0 %4497
    %vm4500 = vcmp.gt.f32.partialorder %v4318, %v4490
    %vm4501 = vcmp.gt.f32.partialorder %v4323, %v4494
    %vm4502 = vcmp.gt.f32.partialorder %v4328, %v4498
    %v4503 = vsel %vm4500, 1, 0
    %v4504 = vsel %vm4501, 1, 0
    %v4505 = vsel %vm4502, 1, 0
    %v4506 = vcvt.s32.f32 %v4503
    %v4507 = vcvt.s32.f32 %v4504
    %v4508 = vcvt.s32.f32 %v4505
    %v4509 = vsel %vm4357, %v4506, 0.0
    %4510 = vadd.xlane.f32.xlu0 %v4509
    %v4511 = vpop.xlane.xlu0 %4510
    %v4512 = vsel %vm4357, %v4507, 0.0
    %4513 = vadd.xlane.f32.xlu0 %v4512
    %v4514 = vpop.xlane.xlu0 %4513
    %v4515 = vsel %vm4364, %v4508, 0.0
    %4516 = vadd.xlane.f32.xlu0 %v4515
    %v4517 = vpop.xlane.xlu0 %4516
    %vm4518 = vcmp.eq.f32.partialorder %v4318, %v4490
    %vm4519 = vcmp.eq.f32.partialorder %v4323, %v4494
    %vm4520 = vcmp.eq.f32.partialorder %v4328, %v4498
    %vm4521 = vcmp.lt.s32.totalorder %v4332, 2
    %v4522 = vsel %vm4521, 1, 0
    %vm4523 = vcmp.eq.s32.totalorder %v4522, 1
    %vm4524 = vmand %vm4518, %vm4523
    %vm4525 = vmand %vm4519, %vm4523
    %vm4526 = vmand %vm4520, %vm4523
    %v4527 = vsel %vm4524, 1, 0
    %v4528 = vsel %vm4525, 1, 0
    %v4529 = vsel %vm4526, 1, 0
    %v4530 = vcvt.s32.f32 %v4527
    %v4531 = vcvt.s32.f32 %v4528
    %v4532 = vcvt.s32.f32 %v4529
    %v4533 = vsel %vm4357, %v4530, 0.0
    %4534 = vadd.xlane.f32.xlu0 %v4533
    %v4535 = vpop.xlane.xlu0 %4534
    %v4536 = vsel %vm4357, %v4531, 0.0
    %4537 = vadd.xlane.f32.xlu0 %v4536
    %v4538 = vpop.xlane.xlu0 %4537
    %v4539 = vsel %vm4364, %v4532, 0.0
    %4540 = vadd.xlane.f32.xlu0 %v4539
    %v4541 = vpop.xlane.xlu0 %4540
    %v4542 = vadd.f32 %v4511, %v4535
    %v4543 = vadd.f32 %v4514, %v4538
    %v4544 = vadd.f32 %v4517, %v4541
    %vm4545 = vcmp.lt.f32.partialorder %v4542, 2.0
    %vm4546 = vcmp.lt.f32.partialorder %v4543, 2.0
    %vm4547 = vcmp.lt.f32.partialorder %v4544, 2.0
    %v4548 = vsel %vm4545, 1, 0
    %v4549 = vsel %vm4546, 1, 0
    %v4550 = vsel %vm4547, 1, 0
    %v4551 = vcvt.s32.f32 %v4548
    %v4552 = vcvt.s32.f32 %v4549
    %v4553 = vcvt.s32.f32 %v4550
    %vm4554 = vcmp.eq.s32.totalorder %v4332, 2
    %v4555 = vsel %vm4554, 1, 0
    %v4556 = vcvt.s32.f32 %v4555
    %v4557 = vmul.f32 %v4551, %v4556
    %v4558 = vmul.f32 %v4552, %v4556
    %v4559 = vmul.f32 %v4553, %v4556
    %v4560 = vadd.f32 %v4485, %v4557
    %v4561 = vadd.f32 %v4486, %v4558
    %v4562 = vadd.f32 %v4487, %v4559
    %4563 = vset.pattern.permute.xlu0 3
    %4564 = vperm.xlu0 %4563, %v4318
    %v4565 = vpop.permute.xlu0 %4564
    %4567 = vset.pattern.permute.xlu0 3
    %4568 = vperm.xlu0 %4567, %v4323
    %v4569 = vpop.permute.xlu0 %4568
    %4571 = vset.pattern.permute.xlu0 3
    %4572 = vperm.xlu0 %4571, %v4328
    %v4573 = vpop.permute.xlu0 %4572
    %vm4575 = vcmp.gt.f32.partialorder %v4318, %v4565
    %vm4576 = vcmp.gt.f32.partialorder %v4323, %v4569
    %vm4577 = vcmp.gt.f32.partialorder %v4328, %v4573
    %v4578 = vsel %vm4575, 1, 0
    %v4579 = vsel %vm4576, 1, 0
    %v4580 = vsel %vm4577, 1, 0
    %v4581 = vcvt.s32.f32 %v4578
    %v4582 = vcvt.s32.f32 %v4579
    %v4583 = vcvt.s32.f32 %v4580
    %v4584 = vsel %vm4357, %v4581, 0.0
    %4585 = vadd.xlane.f32.xlu0 %v4584
    %v4586 = vpop.xlane.xlu0 %4585
    %v4587 = vsel %vm4357, %v4582, 0.0
    %4588 = vadd.xlane.f32.xlu0 %v4587
    %v4589 = vpop.xlane.xlu0 %4588
    %v4590 = vsel %vm4364, %v4583, 0.0
    %4591 = vadd.xlane.f32.xlu0 %v4590
    %v4592 = vpop.xlane.xlu0 %4591
    %vm4593 = vcmp.eq.f32.partialorder %v4318, %v4565
    %vm4594 = vcmp.eq.f32.partialorder %v4323, %v4569
    %vm4595 = vcmp.eq.f32.partialorder %v4328, %v4573
    %vm4596 = vcmp.lt.s32.totalorder %v4332, 3
    %v4597 = vsel %vm4596, 1, 0
    %vm4598 = vcmp.eq.s32.totalorder %v4597, 1
    %vm4599 = vmand %vm4593, %vm4598
    %vm4600 = vmand %vm4594, %vm4598
    %vm4601 = vmand %vm4595, %vm4598
    %v4602 = vsel %vm4599, 1, 0
    %v4603 = vsel %vm4600, 1, 0
    %v4604 = vsel %vm4601, 1, 0
    %v4605 = vcvt.s32.f32 %v4602
    %v4606 = vcvt.s32.f32 %v4603
    %v4607 = vcvt.s32.f32 %v4604
    %v4608 = vsel %vm4357, %v4605, 0.0
    %4609 = vadd.xlane.f32.xlu0 %v4608
    %v4610 = vpop.xlane.xlu0 %4609
    %v4611 = vsel %vm4357, %v4606, 0.0
    %4612 = vadd.xlane.f32.xlu0 %v4611
    %v4613 = vpop.xlane.xlu0 %4612
    %v4614 = vsel %vm4364, %v4607, 0.0
    %4615 = vadd.xlane.f32.xlu0 %v4614
    %v4616 = vpop.xlane.xlu0 %4615
    %v4617 = vadd.f32 %v4586, %v4610
    %v4618 = vadd.f32 %v4589, %v4613
    %v4619 = vadd.f32 %v4592, %v4616
    %vm4620 = vcmp.lt.f32.partialorder %v4617, 2.0
    %vm4621 = vcmp.lt.f32.partialorder %v4618, 2.0
    %vm4622 = vcmp.lt.f32.partialorder %v4619, 2.0
    %v4623 = vsel %vm4620, 1, 0
    %v4624 = vsel %vm4621, 1, 0
    %v4625 = vsel %vm4622, 1, 0
    %v4626 = vcvt.s32.f32 %v4623
    %v4627 = vcvt.s32.f32 %v4624
    %v4628 = vcvt.s32.f32 %v4625
    %vm4629 = vcmp.eq.s32.totalorder %v4332, 3
    %v4630 = vsel %vm4629, 1, 0
    %v4631 = vcvt.s32.f32 %v4630
    %v4632 = vmul.f32 %v4626, %v4631
    %v4633 = vmul.f32 %v4627, %v4631
    %v4634 = vmul.f32 %v4628, %v4631
    %v4635 = vadd.f32 %v4560, %v4632
    %v4636 = vadd.f32 %v4561, %v4633
    %v4637 = vadd.f32 %v4562, %v4634
    %vm4638 = vcmp.gt.f32.partialorder %v4635, 0.5
    %vm4639 = vcmp.gt.f32.partialorder %v4636, 0.5
    %vm4640 = vcmp.gt.f32.partialorder %v4637, 0.5
    %v4641 = vsel %vm4638, %v4318, -1e+30
    %v4642 = vsel %vm4639, %v4323, -1e+30
    %v4643 = vsel %vm4640, %v4328, -1e+30
    %v4644 = vsel %vm4357, %v4641, -inf
    %4645 = vmax.xlane.f32.xlu0 %v4644
    %v4646 = vpop.xlane.xlu0 %4645
    %v4647 = vsel %vm4357, %v4642, -inf
    %4648 = vmax.xlane.f32.xlu0 %v4647
    %v4649 = vpop.xlane.xlu0 %4648
    %v4650 = vsel %vm4364, %v4643, -inf
    %4651 = vmax.xlane.f32.xlu0 %v4650
    %v4652 = vpop.xlane.xlu0 %4651
    %v4653 = vsub.f32 %v4641, %v4646
    %v4654 = vsub.f32 %v4642, %v4649
    %v4655 = vsub.f32 %v4643, %v4652
    %v4656 = vmul.f32 %v4653, 1.442695
    %v4657 = vpow.pop %v4656
    %v4658 = vmul.f32 %v4654, 1.442695
    %v4659 = vpow.pop %v4658
    %v4660 = vmul.f32 %v4655, 1.442695
    %v4661 = vpow.pop %v4660
    %v4662 = vsel %vm4357, %v4657, 0.0
    %4663 = vadd.xlane.f32.xlu0 %v4662
    %v4664 = vpop.xlane.xlu0 %4663
    %v4665 = vsel %vm4357, %v4659, 0.0
    %4666 = vadd.xlane.f32.xlu0 %v4665
    %v4667 = vpop.xlane.xlu0 %4666
    %v4668 = vsel %vm4364, %v4661, 0.0
    %4669 = vadd.xlane.f32.xlu0 %v4668
    %v4670 = vpop.xlane.xlu0 %4669
    %v4671 = vrcp.pop %v4664
    %v4672 = vrcp.pop %v4667
    %v4673 = vrcp.pop %v4670
    %v4674 = vmul.f32 %v4657, %v4671
    %v4675 = vmul.f32 %v4659, %v4672
    %v4676 = vmul.f32 %v4661, %v4673
    %v4677 = vpack.c.bf16 %v4226, %v4225
    %v4678 = vpack.c.bf16 %v4227, %v4227
    %v4679 = vld [vmem:[%s59] sm:$0xff]
    %v4680 = vld [vmem:[%s59 + $0x8] sm:$0xff]
    %v4681 = vld [vmem:[%s59 + $0x10] sm:$0xff]
    %v4682 = vld [vmem:[%s59 + $0x18] sm:$0xff]
    %v4683 = vld [vmem:[%s59 + $0x20] sm:$0xff]
    %v4684 = vld [vmem:[%s59 + $0x28] sm:$0xff]
    %v4685 = vld [vmem:[%s59 + $0x30] sm:$0xff]
    %v4686 = vld [vmem:[%s59 + $0x38] sm:$0xff]
    %v4687 = vld [vmem:[%s59 + $0x40] sm:$0xff]
    %v4688 = vld [vmem:[%s59 + $0x48] sm:$0xff]
    %v4689 = vld [vmem:[%s59 + $0x50] sm:$0xff]
    %v4690 = vld [vmem:[%s59 + $0x58] sm:$0xff]
    %v4691 = vld [vmem:[%s59 + $0x60] sm:$0xff]
    %v4692 = vld [vmem:[%s59 + $0x68] sm:$0xff]
    %v4693 = vld [vmem:[%s59 + $0x70] sm:$0xff]
    %v4694 = vld [vmem:[%s59 + $0x78] sm:$0xff]
    %v4695 = vld [vmem:[%s59 + $0x80] sm:$0xff]
    %v4696 = vld [vmem:[%s59 + $0x88] sm:$0xff]
    %v4697 = vld [vmem:[%s59 + $0x90] sm:$0xff]
    %v4698 = vld [vmem:[%s59 + $0x98] sm:$0xff]
    %v4699 = vld [vmem:[%s59 + $0xa0] sm:$0xff]
    %v4700 = vld [vmem:[%s59 + $0xa8] sm:$0xff]
    %v4701 = vld [vmem:[%s59 + $0xb0] sm:$0xff]
    %v4702 = vld [vmem:[%s59 + $0xb8] sm:$0xff]
    %v4703 = vld [vmem:[%s59 + $0xc0] sm:$0xff]
    %v4704 = vld [vmem:[%s59 + $0xc8] sm:$0xff]
    %v4705 = vld [vmem:[%s59 + $0xd0] sm:$0xff]
    %v4706 = vld [vmem:[%s59 + $0xd8] sm:$0xff]
    %v4707 = vld [vmem:[%s59 + $0xe0] sm:$0xff]
    %v4708 = vld [vmem:[%s59 + $0xe8] sm:$0xff]
    %v4709 = vld [vmem:[%s59 + $0xf0] sm:$0xff]
    %v4710 = vld [vmem:[%s59 + $0xf8] sm:$0xff]
    %v4711 = vld [vmem:[%s61] sm:$0xf]
    %v4713 = vlaneseq
    %v4714 = vshrl.u32 %v4713, 7
    %v4715 = vsub.s32 0, %v4714
    %v4716 = vrot.slane %v4711, %v4715
    %v4717 = vlaneseq
    %v4718 = vshrl.u32 %v4717, 7
    %v4719 = vsub.s32 1, %v4718
    %v4720 = vrot.slane %v4711, %v4719
    %v4721 = vlaneseq
    %v4722 = vshrl.u32 %v4721, 7
    %v4723 = vsub.s32 2, %v4722
    %v4724 = vrot.slane %v4711, %v4723
    %v4725 = vlaneseq
    %v4726 = vshrl.u32 %v4725, 7
    %v4727 = vsub.s32 3, %v4726
    %v4728 = vrot.slane %v4711, %v4727
    %v4765 = vunpack.c.l.b16 %v4679
    %v4766 = vunpack.c.h.b16 %v4679
    %v4767 = vunpack.c.l.b16 %v4680
    %v4768 = vunpack.c.h.b16 %v4680
    %v4769 = vunpack.c.l.b16 %v4681
    %v4770 = vunpack.c.h.b16 %v4681
    %v4771 = vunpack.c.l.b16 %v4682
    %v4772 = vunpack.c.h.b16 %v4682
    %v4773 = vunpack.c.l.b16 %v4683
    %v4774 = vunpack.c.h.b16 %v4683
    %v4775 = vunpack.c.l.b16 %v4684
    %v4776 = vunpack.c.h.b16 %v4684
    %v4777 = vunpack.c.l.b16 %v4685
    %v4778 = vunpack.c.h.b16 %v4685
    %v4779 = vunpack.c.l.b16 %v4686
    %v4780 = vunpack.c.h.b16 %v4686
    %v4781 = vunpack.c.l.b16 %v4687
    %v4782 = vunpack.c.h.b16 %v4687
    %v4783 = vunpack.c.l.b16 %v4688
    %v4784 = vunpack.c.h.b16 %v4688
    %v4785 = vunpack.c.l.b16 %v4689
    %v4786 = vunpack.c.h.b16 %v4689
    %v4787 = vunpack.c.l.b16 %v4690
    %v4788 = vunpack.c.h.b16 %v4690
    %v4789 = vunpack.c.l.b16 %v4691
    %v4790 = vunpack.c.h.b16 %v4691
    %v4791 = vunpack.c.l.b16 %v4692
    %v4792 = vunpack.c.h.b16 %v4692
    %v4793 = vunpack.c.l.b16 %v4693
    %v4794 = vunpack.c.h.b16 %v4693
    %v4795 = vunpack.c.l.b16 %v4694
    %v4796 = vunpack.c.h.b16 %v4694
    %v4797 = vunpack.c.l.b16 %v4695
    %v4798 = vunpack.c.h.b16 %v4695
    %v4799 = vunpack.c.l.b16 %v4696
    %v4800 = vunpack.c.h.b16 %v4696
    %v4801 = vunpack.c.l.b16 %v4697
    %v4802 = vunpack.c.h.b16 %v4697
    %v4803 = vunpack.c.l.b16 %v4698
    %v4804 = vunpack.c.h.b16 %v4698
    %v4805 = vunpack.c.l.b16 %v4699
    %v4806 = vunpack.c.h.b16 %v4699
    %v4807 = vunpack.c.l.b16 %v4700
    %v4808 = vunpack.c.h.b16 %v4700
    %v4809 = vunpack.c.l.b16 %v4701
    %v4810 = vunpack.c.h.b16 %v4701
    %v4811 = vunpack.c.l.b16 %v4702
    %v4812 = vunpack.c.h.b16 %v4702
    %v4813 = vunpack.c.l.b16 %v4703
    %v4814 = vunpack.c.h.b16 %v4703
    %v4815 = vunpack.c.l.b16 %v4704
    %v4816 = vunpack.c.h.b16 %v4704
    %v4817 = vunpack.c.l.b16 %v4705
    %v4818 = vunpack.c.h.b16 %v4705
    %v4819 = vunpack.c.l.b16 %v4706
    %v4820 = vunpack.c.h.b16 %v4706
    %v4821 = vunpack.c.l.b16 %v4707
    %v4822 = vunpack.c.h.b16 %v4707
    %v4823 = vunpack.c.l.b16 %v4708
    %v4824 = vunpack.c.h.b16 %v4708
    %v4825 = vunpack.c.l.b16 %v4709
    %v4826 = vunpack.c.h.b16 %v4709
    %v4827 = vunpack.c.l.b16 %v4710
    %v4828 = vunpack.c.h.b16 %v4710
    %v4829 = vpack.c.b16 %v4769, %v4765
    %v4830 = vpack.c.b16 %v4770, %v4766
    %v4831 = vpack.c.b16 %v4771, %v4767
    %v4832 = vpack.c.b16 %v4772, %v4768
    %v4833 = vpack.c.b16 %v4777, %v4773
    %v4834 = vpack.c.b16 %v4778, %v4774
    %v4835 = vpack.c.b16 %v4779, %v4775
    %v4836 = vpack.c.b16 %v4780, %v4776
    %v4837 = vpack.c.b16 %v4785, %v4781
    %v4838 = vpack.c.b16 %v4786, %v4782
    %v4839 = vpack.c.b16 %v4787, %v4783
    %v4840 = vpack.c.b16 %v4788, %v4784
    %v4841 = vpack.c.b16 %v4793, %v4789
    %v4842 = vpack.c.b16 %v4794, %v4790
    %v4843 = vpack.c.b16 %v4795, %v4791
    %v4844 = vpack.c.b16 %v4796, %v4792
    %v4845 = vpack.c.b16 %v4801, %v4797
    %v4846 = vpack.c.b16 %v4802, %v4798
    %v4847 = vpack.c.b16 %v4803, %v4799
    %v4848 = vpack.c.b16 %v4804, %v4800
    %v4849 = vpack.c.b16 %v4809, %v4805
    %v4850 = vpack.c.b16 %v4810, %v4806
    %v4851 = vpack.c.b16 %v4811, %v4807
    %v4852 = vpack.c.b16 %v4812, %v4808
    %v4853 = vpack.c.b16 %v4817, %v4813
    %v4854 = vpack.c.b16 %v4818, %v4814
    %v4855 = vpack.c.b16 %v4819, %v4815
    %v4856 = vpack.c.b16 %v4820, %v4816
    %v4857 = vpack.c.b16 %v4825, %v4821
    %v4858 = vpack.c.b16 %v4826, %v4822
    %v4859 = vpack.c.b16 %v4827, %v4823
    %v4860 = vpack.c.b16 %v4828, %v4824
    %4893 = vmatprep.subr.bf16.mxu0 %v4830
    %4894 = vmatpush1.bf16.msra.mxu0 %v4829
    %4895 = vmatprep.subr.bf16.mxu0 %v4834
    %4896 = vmatpush1.bf16.msra.mxu0 %v4833
    %4897 = vmatprep.subr.bf16.mxu0 %v4838
    %4898 = vmatpush1.bf16.msra.mxu0 %v4837
    %4899 = vmatprep.subr.bf16.mxu0 %v4842
    %4900 = vmatpush1.bf16.msra.mxu0 %v4841
    %4901 = vmatprep.subr.bf16.mxu0 %v4846
    %4902 = vmatpush1.bf16.msra.mxu0 %v4845
    %4903 = vmatprep.subr.bf16.mxu0 %v4850
    %4904 = vmatpush1.bf16.msra.mxu0 %v4849
    %4905 = vmatprep.subr.bf16.mxu0 %v4854
    %4906 = vmatpush1.bf16.msra.mxu0 %v4853
    %4907 = vmatprep.subr.bf16.mxu0 %v4858
    %4908 = vmatpush1.bf16.msra.mxu0 %v4857
    %4909 = vmatprep.subr.bf16.mxu0 0
    %4910 = vmatpush1.bf16.msra.mxu0 0
    %4911 = vmatprep.subr.bf16.mxu0 0
    %4912 = vmatpush1.bf16.msra.mxu0 0
    %4913 = vmatprep.subr.bf16.mxu0 0
    %4914 = vmatpush1.bf16.msra.mxu0 0
    %4915 = vmatprep.subr.bf16.mxu0 0
    %4916 = vmatpush1.bf16.msra.mxu0 0
    %4917 = vmatprep.subr.bf16.mxu0 0
    %4918 = vmatpush1.bf16.msra.mxu0 0
    %4919 = vmatprep.subr.bf16.mxu0 0
    %4920 = vmatpush1.bf16.msra.mxu0 0
    %4921 = vmatprep.subr.bf16.mxu0 0
    %4922 = vmatpush1.bf16.msra.mxu0 0
    %4923 = vmatprep.subr.bf16.mxu0 0
    %4924 = vmatpush1.bf16.msra.mxu0 0
    %4925 = vmatprep.mubr.bf16.mxu0 0
    %4926 = vmatmul.mubr.bf16.gmra.mrb[0].mxu0 %v4677
    %v4927 = vpop.f32.mrb[0].mxu0
    %v4928 = vadd.f32 %v4716, %v4927
    %v4929 = vpop.f32.mrb[0].mxu0
    %v4930 = vadd.f32 %v4720, %v4929
    %v4931 = vpop.f32.mrb[0].mxu0
    %v4932 = vadd.f32 %v4716, %v4931
    %v4933 = vpop.f32.mrb[0].mxu0
    %v4934 = vadd.f32 %v4720, %v4933
    %4935 = vmatprep.mubr.bf16.mxu0 0
    %4936 = vmatmul.mubr.bf16.gmra.mrb[0].mxu0 %v4678
    %v4937 = vpop.f32.mrb[0].mxu0
    %v4938 = vadd.f32 %v4716, %v4937
    %v4939 = vpop.f32.mrb[0].mxu0
    %v4940 = vadd.f32 %v4720, %v4939
    %v4941 = vpop.f32.mrb[0].mxu0
    %v4942 = vpop.f32.mrb[0].mxu0
    %4943 = vdwg.mxu0
    %4944 = vmatprep.subr.bf16.mxu0 %v4832
    %4945 = vmatpush1.bf16.msra.mxu0 %v4831
    %4946 = vmatprep.subr.bf16.mxu0 %v4836
    %4947 = vmatpush1.bf16.msra.mxu0 %v4835
    %4948 = vmatprep.subr.bf16.mxu0 %v4840
    %4949 = vmatpush1.bf16.msra.mxu0 %v4839
    %4950 = vmatprep.subr.bf16.mxu0 %v4844
    %4951 = vmatpush1.bf16.msra.mxu0 %v4843
    %4952 = vmatprep.subr.bf16.mxu0 %v4848
    %4953 = vmatpush1.bf16.msra.mxu0 %v4847
    %4954 = vmatprep.subr.bf16.mxu0 %v4852
    %4955 = vmatpush1.bf16.msra.mxu0 %v4851
    %4956 = vmatprep.subr.bf16.mxu0 %v4856
    %4957 = vmatpush1.bf16.msra.mxu0 %v4855
    %4958 = vmatprep.subr.bf16.mxu0 %v4860
    %4959 = vmatpush1.bf16.msra.mxu0 %v4859
    %4960 = vmatprep.subr.bf16.mxu0 0
    %4961 = vmatpush1.bf16.msra.mxu0 0
    %4962 = vmatprep.subr.bf16.mxu0 0
    %4963 = vmatpush1.bf16.msra.mxu0 0
    %4964 = vmatprep.subr.bf16.mxu0 0
    %4965 = vmatpush1.bf16.msra.mxu0 0
    %4966 = vmatprep.subr.bf16.mxu0 0
    %4967 = vmatpush1.bf16.msra.mxu0 0
    %4968 = vmatprep.subr.bf16.mxu0 0
    %4969 = vmatpush1.bf16.msra.mxu0 0
    %4970 = vmatprep.subr.bf16.mxu0 0
    %4971 = vmatpush1.bf16.msra.mxu0 0
    %4972 = vmatprep.subr.bf16.mxu0 0
    %4973 = vmatpush1.bf16.msra.mxu0 0
    %4974 = vmatprep.subr.bf16.mxu0 0
    %4975 = vmatpush1.bf16.msra.mxu0 0
    %4976 = vmatprep.mubr.bf16.mxu0 0
    %4977 = vmatmul.mubr.bf16.gmra.mrb[0].mxu0 %v4677
    %v4978 = vpop.f32.mrb[0].mxu0
    %v4979 = vadd.f32 %v4724, %v4978
    %v4980 = vpop.f32.mrb[0].mxu0
    %v4981 = vadd.f32 %v4728, %v4980
    %v4982 = vpop.f32.mrb[0].mxu0
    %v4983 = vadd.f32 %v4724, %v4982
    %v4984 = vpop.f32.mrb[0].mxu0
    %v4985 = vadd.f32 %v4728, %v4984
    %4986 = vmatprep.mubr.bf16.mxu0 0
    %4987 = vmatmul.mubr.bf16.gmra.mrb[0].mxu0 %v4678
    %v4988 = vpop.f32.mrb[0].mxu0
    %v4989 = vadd.f32 %v4724, %v4988
    %v4990 = vpop.f32.mrb[0].mxu0
    %v4991 = vadd.f32 %v4728, %v4990
    %v4992 = vpop.f32.mrb[0].mxu0
    %v4993 = vpop.f32.mrb[0].mxu0
    %4994 = vdwg.mxu0
    %v4995 = vmul.f32 %v4928, %v4928
    %v4996 = vmul.f32 %v4930, %v4930
    %v4997 = vmul.f32 %v4979, %v4979
    %v4998 = vmul.f32 %v4981, %v4981
    %v4999 = vmul.f32 %v4932, %v4932
    %v5000 = vmul.f32 %v4934, %v4934
    %v5001 = vmul.f32 %v4983, %v4983
    %v5002 = vmul.f32 %v4985, %v4985
    %v5003 = vmul.f32 %v4938, %v4938
    %v5004 = vmul.f32 %v4940, %v4940
    %v5005 = vmul.f32 %v4989, %v4989
    %v5006 = vmul.f32 %v4991, %v4991
    %v5007 = vmul.f32 %v4928, %v4995
    %v5008 = vmul.f32 %v4930, %v4996
    %v5009 = vmul.f32 %v4979, %v4997
    %v5010 = vmul.f32 %v4981, %v4998
    %v5011 = vmul.f32 %v4932, %v4999
    %v5012 = vmul.f32 %v4934, %v5000
    %v5013 = vmul.f32 %v4983, %v5001
    %v5014 = vmul.f32 %v4985, %v5002
    %v5015 = vmul.f32 %v4938, %v5003
    %v5016 = vmul.f32 %v4940, %v5004
    %v5017 = vmul.f32 %v4989, %v5005
    %v5018 = vmul.f32 %v4991, %v5006
    %v5019 = vmul.f32 %v5007, 0.044715
    %v5020 = vmul.f32 %v5008, 0.044715
    %v5021 = vmul.f32 %v5009, 0.044715
    %v5022 = vmul.f32 %v5010, 0.044715
    %v5023 = vmul.f32 %v5011, 0.044715
    %v5024 = vmul.f32 %v5012, 0.044715
    %v5025 = vmul.f32 %v5013, 0.044715
    %v5026 = vmul.f32 %v5014, 0.044715
    %v5027 = vmul.f32 %v5015, 0.044715
    %v5028 = vmul.f32 %v5016, 0.044715
    %v5029 = vmul.f32 %v5017, 0.044715
    %v5030 = vmul.f32 %v5018, 0.044715
    %v5031 = vadd.f32 %v4928, %v5019
    %v5032 = vadd.f32 %v4930, %v5020
    %v5033 = vadd.f32 %v4979, %v5021
    %v5034 = vadd.f32 %v4981, %v5022
    %v5035 = vadd.f32 %v4932, %v5023
    %v5036 = vadd.f32 %v4934, %v5024
    %v5037 = vadd.f32 %v4983, %v5025
    %v5038 = vadd.f32 %v4985, %v5026
    %v5039 = vadd.f32 %v4938, %v5027
    %v5040 = vadd.f32 %v4940, %v5028
    %v5041 = vadd.f32 %v4989, %v5029
    %v5042 = vadd.f32 %v4991, %v5030
    %v5043 = vmul.f32 %v5031, 0.7978846
    %v5044 = vmul.f32 %v5032, 0.7978846
    %v5045 = vmul.f32 %v5033, 0.7978846
    %v5046 = vmul.f32 %v5034, 0.7978846
    %v5047 = vmul.f32 %v5035, 0.7978846
    %v5048 = vmul.f32 %v5036, 0.7978846
    %v5049 = vmul.f32 %v5037, 0.7978846
    %v5050 = vmul.f32 %v5038, 0.7978846
    %v5051 = vmul.f32 %v5039, 0.7978846
    %v5052 = vmul.f32 %v5040, 0.7978846
    %v5053 = vmul.f32 %v5041, 0.7978846
    %v5054 = vmul.f32 %v5042, 0.7978846
    %v5055 = vtanh.pop %v5043
    %v5056 = vtanh.pop %v5044
    %v5057 = vtanh.pop %v5045
    %v5058 = vtanh.pop %v5046
    %v5059 = vtanh.pop %v5047
    %v5060 = vtanh.pop %v5048
    %v5061 = vtanh.pop %v5049
    %v5062 = vtanh.pop %v5050
    %v5063 = vtanh.pop %v5051
    %v5064 = vtanh.pop %v5052
    %v5065 = vtanh.pop %v5053
    %v5066 = vtanh.pop %v5054
    %v5067 = vadd.f32 %v5055, 1.0
    %v5068 = vadd.f32 %v5056, 1.0
    %v5069 = vadd.f32 %v5057, 1.0
    %v5070 = vadd.f32 %v5058, 1.0
    %v5071 = vadd.f32 %v5059, 1.0
    %v5072 = vadd.f32 %v5060, 1.0
    %v5073 = vadd.f32 %v5061, 1.0
    %v5074 = vadd.f32 %v5062, 1.0
    %v5075 = vadd.f32 %v5063, 1.0
    %v5076 = vadd.f32 %v5064, 1.0
    %v5077 = vadd.f32 %v5065, 1.0
    %v5078 = vadd.f32 %v5066, 1.0
    %v5079 = vmul.f32 %v5067, 0.5
    %v5080 = vmul.f32 %v5068, 0.5
    %v5081 = vmul.f32 %v5069, 0.5
    %v5082 = vmul.f32 %v5070, 0.5
    %v5083 = vmul.f32 %v5071, 0.5
    %v5084 = vmul.f32 %v5072, 0.5
    %v5085 = vmul.f32 %v5073, 0.5
    %v5086 = vmul.f32 %v5074, 0.5
    %v5087 = vmul.f32 %v5075, 0.5
    %v5088 = vmul.f32 %v5076, 0.5
    %v5089 = vmul.f32 %v5077, 0.5
    %v5090 = vmul.f32 %v5078, 0.5
    %v5091 = vmul.f32 %v4928, %v5079
    %v5092 = vmul.f32 %v4930, %v5080
    %v5093 = vmul.f32 %v4979, %v5081
    %v5094 = vmul.f32 %v4981, %v5082
    %v5095 = vmul.f32 %v4932, %v5083
    %v5096 = vmul.f32 %v4934, %v5084
    %v5097 = vmul.f32 %v4983, %v5085
    %v5098 = vmul.f32 %v4985, %v5086
    %v5099 = vmul.f32 %v4938, %v5087
    %v5100 = vmul.f32 %v4940, %v5088
    %v5101 = vmul.f32 %v4989, %v5089
    %v5102 = vmul.f32 %v4991, %v5090
    %5104 = vset.pattern.permute.xlu0 0
    %5105 = vperm.xlu0 %5104, %v4674
    %v5106 = vpop.permute.xlu0 %5105
    %5109 = vset.pattern.permute.xlu0 0
    %5110 = vperm.xlu0 %5109, %v4675
    %v5111 = vpop.permute.xlu0 %5110
    %5114 = vset.pattern.permute.xlu0 0
    %5115 = vperm.xlu0 %5114, %v4676
    %v5116 = vpop.permute.xlu0 %5115
    %v5118 = vmul.f32 %v5091, %v5106
    %v5119 = vmul.f32 %v5095, %v5111
    %v5120 = vmul.f32 %v5099, %v5116
    %5121 = vset.pattern.permute.xlu0 1
    %5122 = vperm.xlu0 %5121, %v4674
    %v5123 = vpop.permute.xlu0 %5122
    %5125 = vset.pattern.permute.xlu0 1
    %5126 = vperm.xlu0 %5125, %v4675
    %v5127 = vpop.permute.xlu0 %5126
    %5129 = vset.pattern.permute.xlu0 1
    %5130 = vperm.xlu0 %5129, %v4676
    %v5131 = vpop.permute.xlu0 %5130
    %v5133 = vmul.f32 %v5092, %v5123
    %v5134 = vmul.f32 %v5096, %v5127
    %v5135 = vmul.f32 %v5100, %v5131
    %5136 = vset.pattern.permute.xlu0 2
    %5137 = vperm.xlu0 %5136, %v4674
    %v5138 = vpop.permute.xlu0 %5137
    %5140 = vset.pattern.permute.xlu0 2
    %5141 = vperm.xlu0 %5140, %v4675
    %v5142 = vpop.permute.xlu0 %5141
    %5144 = vset.pattern.permute.xlu0 2
    %5145 = vperm.xlu0 %5144, %v4676
    %v5146 = vpop.permute.xlu0 %5145
    %v5148 = vmul.f32 %v5093, %v5138
    %v5149 = vmul.f32 %v5097, %v5142
    %v5150 = vmul.f32 %v5101, %v5146
    %5151 = vset.pattern.permute.xlu0 3
    %5152 = vperm.xlu0 %5151, %v4674
    %v5153 = vpop.permute.xlu0 %5152
    %5155 = vset.pattern.permute.xlu0 3
    %5156 = vperm.xlu0 %5155, %v4675
    %v5157 = vpop.permute.xlu0 %5156
    %5159 = vset.pattern.permute.xlu0 3
    %5160 = vperm.xlu0 %5159, %v4676
    %v5161 = vpop.permute.xlu0 %5160
    %v5163 = vmul.f32 %v5094, %v5153
    %v5164 = vmul.f32 %v5098, %v5157
    %v5165 = vmul.f32 %v5102, %v5161
    %v5166 = vpack.c.bf16 %v5119, %v5118
    %v5167 = vpack.c.bf16 %v5134, %v5133
    %v5168 = vpack.c.bf16 %v5149, %v5148
    %v5169 = vpack.c.bf16 %v5164, %v5163
    %v5170 = vpack.c.bf16 %v5120, %v5120
    %v5171 = vpack.c.bf16 %v5135, %v5135
    %v5172 = vpack.c.bf16 %v5150, %v5150
    %v5173 = vpack.c.bf16 %v5165, %v5165
    %v5174 = vld [vmem:[%s63] sm:$0xf]
    %v5175 = vld [vmem:[%s63 + $0x4] sm:$0xf]
    %v5176 = vld [vmem:[%s63 + $0x8] sm:$0xf]
    %v5177 = vld [vmem:[%s63 + $0xc] sm:$0xf]
    %v5178 = vld [vmem:[%s63 + $0x10] sm:$0xf]
    %v5179 = vld [vmem:[%s63 + $0x14] sm:$0xf]
    %v5180 = vld [vmem:[%s63 + $0x18] sm:$0xf]
    %v5181 = vld [vmem:[%s63 + $0x1c] sm:$0xf]
    %v5182 = vld [vmem:[%s63 + $0x20] sm:$0xf]
    %v5183 = vld [vmem:[%s63 + $0x24] sm:$0xf]
    %v5184 = vld [vmem:[%s63 + $0x28] sm:$0xf]
    %v5185 = vld [vmem:[%s63 + $0x2c] sm:$0xf]
    %v5186 = vld [vmem:[%s63 + $0x30] sm:$0xf]
    %v5187 = vld [vmem:[%s63 + $0x34] sm:$0xf]
    %v5188 = vld [vmem:[%s63 + $0x38] sm:$0xf]
    %v5189 = vld [vmem:[%s63 + $0x3c] sm:$0xf]
    %v5190 = vld [vmem:[%s63 + $0x40] sm:$0xf]
    %v5191 = vld [vmem:[%s63 + $0x44] sm:$0xf]
    %v5192 = vld [vmem:[%s63 + $0x48] sm:$0xf]
    %v5193 = vld [vmem:[%s63 + $0x4c] sm:$0xf]
    %v5194 = vld [vmem:[%s63 + $0x50] sm:$0xf]
    %v5195 = vld [vmem:[%s63 + $0x54] sm:$0xf]
    %v5196 = vld [vmem:[%s63 + $0x58] sm:$0xf]
    %v5197 = vld [vmem:[%s63 + $0x5c] sm:$0xf]
    %v5198 = vld [vmem:[%s63 + $0x60] sm:$0xf]
    %v5199 = vld [vmem:[%s63 + $0x64] sm:$0xf]
    %v5200 = vld [vmem:[%s63 + $0x68] sm:$0xf]
    %v5201 = vld [vmem:[%s63 + $0x6c] sm:$0xf]
    %v5202 = vld [vmem:[%s63 + $0x70] sm:$0xf]
    %v5203 = vld [vmem:[%s63 + $0x74] sm:$0xf]
    %v5204 = vld [vmem:[%s63 + $0x78] sm:$0xf]
    %v5205 = vld [vmem:[%s63 + $0x7c] sm:$0xf]
    %v5206 = vld [vmem:[%s63 + $0x80] sm:$0xf]
    %v5207 = vld [vmem:[%s63 + $0x84] sm:$0xf]
    %v5208 = vld [vmem:[%s63 + $0x88] sm:$0xf]
    %v5209 = vld [vmem:[%s63 + $0x8c] sm:$0xf]
    %v5210 = vld [vmem:[%s63 + $0x90] sm:$0xf]
    %v5211 = vld [vmem:[%s63 + $0x94] sm:$0xf]
    %v5212 = vld [vmem:[%s63 + $0x98] sm:$0xf]
    %v5213 = vld [vmem:[%s63 + $0x9c] sm:$0xf]
    %v5214 = vld [vmem:[%s63 + $0xa0] sm:$0xf]
    %v5215 = vld [vmem:[%s63 + $0xa4] sm:$0xf]
    %v5216 = vld [vmem:[%s63 + $0xa8] sm:$0xf]
    %v5217 = vld [vmem:[%s63 + $0xac] sm:$0xf]
    %v5218 = vld [vmem:[%s63 + $0xb0] sm:$0xf]
    %v5219 = vld [vmem:[%s63 + $0xb4] sm:$0xf]
    %v5220 = vld [vmem:[%s63 + $0xb8] sm:$0xf]
    %v5221 = vld [vmem:[%s63 + $0xbc] sm:$0xf]
    %v5222 = vld [vmem:[%s63 + $0xc0] sm:$0xf]
    %v5223 = vld [vmem:[%s63 + $0xc4] sm:$0xf]
    %v5224 = vld [vmem:[%s63 + $0xc8] sm:$0xf]
    %v5225 = vld [vmem:[%s63 + $0xcc] sm:$0xf]
    %v5226 = vld [vmem:[%s63 + $0xd0] sm:$0xf]
    %v5227 = vld [vmem:[%s63 + $0xd4] sm:$0xf]
    %v5228 = vld [vmem:[%s63 + $0xd8] sm:$0xf]
    %v5229 = vld [vmem:[%s63 + $0xdc] sm:$0xf]
    %v5230 = vld [vmem:[%s63 + $0xe0] sm:$0xf]
    %v5231 = vld [vmem:[%s63 + $0xe4] sm:$0xf]
    %v5232 = vld [vmem:[%s63 + $0xe8] sm:$0xf]
    %v5233 = vld [vmem:[%s63 + $0xec] sm:$0xf]
    %v5234 = vld [vmem:[%s63 + $0xf0] sm:$0xf]
    %v5235 = vld [vmem:[%s63 + $0xf4] sm:$0xf]
    %v5236 = vld [vmem:[%s63 + $0xf8] sm:$0xf]
    %v5237 = vld [vmem:[%s63 + $0xfc] sm:$0xf]
    %v5238 = vld [vmem:[%s65] sm:$0xf]
    %v5239 = vsel %vm4357, %v4674, 0
    %v5241 = vsel %vm4357, %v4675, 0
    %v5243 = vsel %vm4357, %v4676, 0
    %vm5245 = vcmask 1043456
    %v5247 = vsel %vm5245, %v5238, 0
    %5249 = vmatprep.subr.mxu0 0.0
    %5250 = vmatpush1.msra.mxu0 %v5247
    %5251 = vmatprep.subr.mxu0 0.0
    %5252 = vmatpush1.msra.mxu0 0.0
    %5253 = vmatprep.subr.mxu0 0.0
    %5254 = vmatpush1.msra.mxu0 0.0
    %5255 = vmatprep.subr.mxu0 0.0
    %5256 = vmatpush1.msra.mxu0 0.0
    %5257 = vmatprep.subr.mxu0 0.0
    %5258 = vmatpush1.msra.mxu0 0.0
    %5259 = vmatprep.subr.mxu0 0.0
    %5260 = vmatpush1.msra.mxu0 0.0
    %5261 = vmatprep.subr.mxu0 0.0
    %5262 = vmatpush1.msra.mxu0 0.0
    %5263 = vmatprep.subr.mxu0 0.0
    %5264 = vmatpush1.msra.mxu0 0.0
    %5265 = vmatprep.subr.mxu0 0.0
    %5266 = vmatpush1.msra.mxu0 0.0
    %5267 = vmatprep.subr.mxu0 0.0
    %5268 = vmatpush1.msra.mxu0 0.0
    %5269 = vmatprep.subr.mxu0 0.0
    %5270 = vmatpush1.msra.mxu0 0.0
    %5271 = vmatprep.subr.mxu0 0.0
    %5272 = vmatpush1.msra.mxu0 0.0
    %5273 = vmatprep.subr.mxu0 0.0
    %5274 = vmatpush1.msra.mxu0 0.0
    %5275 = vmatprep.subr.mxu0 0.0
    %5276 = vmatpush1.msra.mxu0 0.0
    %5277 = vmatprep.subr.mxu0 0.0
    %5278 = vmatpush1.msra.mxu0 0.0
    %5279 = vmatprep.subr.mxu0 0.0
    %5280 = vmatpush1.msra.mxu0 0.0
    %5281 = vmatprep.subr.mxu0 0.0
    %5282 = vmatpush1.msra.mxu0 0.0
    %5283 = vmatprep.subr.mxu0 0.0
    %5284 = vmatpush1.msra.mxu0 0.0
    %5285 = vmatprep.subr.mxu0 0.0
    %5286 = vmatpush1.msra.mxu0 0.0
    %5287 = vmatprep.subr.mxu0 0.0
    %5288 = vmatpush1.msra.mxu0 0.0
    %5289 = vmatprep.subr.mxu0 0.0
    %5290 = vmatpush1.msra.mxu0 0.0
    %5291 = vmatprep.subr.mxu0 0.0
    %5292 = vmatpush1.msra.mxu0 0.0
    %5293 = vmatprep.subr.mxu0 0.0
    %5294 = vmatpush1.msra.mxu0 0.0
    %5295 = vmatprep.subr.mxu0 0.0
    %5296 = vmatpush1.msra.mxu0 0.0
    %5297 = vmatprep.subr.mxu0 0.0
    %5298 = vmatpush1.msra.mxu0 0.0
    %5299 = vmatprep.subr.mxu0 0.0
    %5300 = vmatpush1.msra.mxu0 0.0
    %5301 = vmatprep.subr.mxu0 0.0
    %5302 = vmatpush1.msra.mxu0 0.0
    %5303 = vmatprep.subr.mxu0 0.0
    %5304 = vmatpush1.msra.mxu0 0.0
    %5305 = vmatprep.subr.mxu0 0.0
    %5306 = vmatpush1.msra.mxu0 0.0
    %5307 = vmatprep.subr.mxu0 0.0
    %5308 = vmatpush1.msra.mxu0 0.0
    %5309 = vmatprep.subr.mxu0 0.0
    %5310 = vmatpush1.msra.mxu0 0.0
    %5311 = vmatprep.subr.mxu0 0.0
    %5312 = vmatpush1.msra.mxu0 0.0
    %5313 = vmatprep.mubr.f32.mxu0 0.0
    %5314 = vmatmul.mubr.f32.gmra.mrb[0].mxu0 %v5239
    %v5315 = vpop.f32.mrb[0].mxu0
    %v5316 = vadd.f32 0.0, %v5315
    %v5317 = vpop.f32.mrb[0].mxu0
    %5318 = vmatprep.mubr.f32.mxu0 0.0
    %5319 = vmatmul.mubr.f32.gmra.mrb[0].mxu0 %v5241
    %v5320 = vpop.f32.mrb[0].mxu0
    %v5321 = vadd.f32 0.0, %v5320
    %v5322 = vpop.f32.mrb[0].mxu0
    %5323 = vmatprep.mubr.f32.mxu0 0.0
    %5324 = vmatmul.mubr.f32.gmra.mrb[0].mxu0 %v5243
    %v5325 = vpop.f32.mrb[0].mxu0
    %v5326 = vadd.f32 0.0, %v5325
    %v5327 = vpop.f32.mrb[0].mxu0
    %5328 = vdwg.mxu0
    %v5393 = vunpack.c.l.b16 %v5174
    %v5394 = vunpack.c.l.b16 %v5175
    %v5395 = vunpack.c.l.b16 %v5176
    %v5396 = vunpack.c.l.b16 %v5177
    %v5397 = vunpack.c.l.b16 %v5178
    %v5398 = vunpack.c.l.b16 %v5179
    %v5399 = vunpack.c.l.b16 %v5180
    %v5400 = vunpack.c.l.b16 %v5181
    %v5401 = vunpack.c.l.b16 %v5182
    %v5402 = vunpack.c.l.b16 %v5183
    %v5403 = vunpack.c.l.b16 %v5184
    %v5404 = vunpack.c.l.b16 %v5185
    %v5405 = vunpack.c.l.b16 %v5186
    %v5406 = vunpack.c.l.b16 %v5187
    %v5407 = vunpack.c.l.b16 %v5188
    %v5408 = vunpack.c.l.b16 %v5189
    %v5409 = vunpack.c.l.b16 %v5190
    %v5410 = vunpack.c.l.b16 %v5191
    %v5411 = vunpack.c.l.b16 %v5192
    %v5412 = vunpack.c.l.b16 %v5193
    %v5413 = vunpack.c.l.b16 %v5194
    %v5414 = vunpack.c.l.b16 %v5195
    %v5415 = vunpack.c.l.b16 %v5196
    %v5416 = vunpack.c.l.b16 %v5197
    %v5417 = vunpack.c.l.b16 %v5198
    %v5418 = vunpack.c.l.b16 %v5199
    %v5419 = vunpack.c.l.b16 %v5200
    %v5420 = vunpack.c.l.b16 %v5201
    %v5421 = vunpack.c.l.b16 %v5202
    %v5422 = vunpack.c.l.b16 %v5203
    %v5423 = vunpack.c.l.b16 %v5204
    %v5424 = vunpack.c.l.b16 %v5205
    %v5425 = vunpack.c.l.b16 %v5206
    %v5426 = vunpack.c.l.b16 %v5207
    %v5427 = vunpack.c.l.b16 %v5208
    %v5428 = vunpack.c.l.b16 %v5209
    %v5429 = vunpack.c.l.b16 %v5210
    %v5430 = vunpack.c.l.b16 %v5211
    %v5431 = vunpack.c.l.b16 %v5212
    %v5432 = vunpack.c.l.b16 %v5213
    %v5433 = vunpack.c.l.b16 %v5214
    %v5434 = vunpack.c.l.b16 %v5215
    %v5435 = vunpack.c.l.b16 %v5216
    %v5436 = vunpack.c.l.b16 %v5217
    %v5437 = vunpack.c.l.b16 %v5218
    %v5438 = vunpack.c.l.b16 %v5219
    %v5439 = vunpack.c.l.b16 %v5220
    %v5440 = vunpack.c.l.b16 %v5221
    %v5441 = vunpack.c.l.b16 %v5222
    %v5442 = vunpack.c.l.b16 %v5223
    %v5443 = vunpack.c.l.b16 %v5224
    %v5444 = vunpack.c.l.b16 %v5225
    %v5445 = vunpack.c.l.b16 %v5226
    %v5446 = vunpack.c.l.b16 %v5227
    %v5447 = vunpack.c.l.b16 %v5228
    %v5448 = vunpack.c.l.b16 %v5229
    %v5449 = vunpack.c.l.b16 %v5230
    %v5450 = vunpack.c.l.b16 %v5231
    %v5451 = vunpack.c.l.b16 %v5232
    %v5452 = vunpack.c.l.b16 %v5233
    %v5453 = vunpack.c.l.b16 %v5234
    %v5454 = vunpack.c.l.b16 %v5235
    %v5455 = vunpack.c.l.b16 %v5236
    %v5456 = vunpack.c.l.b16 %v5237
    %v5457 = vpack.c.b16 %v5394, %v5393
    %v5458 = vpack.c.b16 %v5396, %v5395
    %v5459 = vpack.c.b16 %v5398, %v5397
    %v5460 = vpack.c.b16 %v5400, %v5399
    %v5461 = vpack.c.b16 %v5402, %v5401
    %v5462 = vpack.c.b16 %v5404, %v5403
    %v5463 = vpack.c.b16 %v5406, %v5405
    %v5464 = vpack.c.b16 %v5408, %v5407
    %v5465 = vpack.c.b16 %v5410, %v5409
    %v5466 = vpack.c.b16 %v5412, %v5411
    %v5467 = vpack.c.b16 %v5414, %v5413
    %v5468 = vpack.c.b16 %v5416, %v5415
    %v5469 = vpack.c.b16 %v5418, %v5417
    %v5470 = vpack.c.b16 %v5420, %v5419
    %v5471 = vpack.c.b16 %v5422, %v5421
    %v5472 = vpack.c.b16 %v5424, %v5423
    %v5473 = vpack.c.b16 %v5426, %v5425
    %v5474 = vpack.c.b16 %v5428, %v5427
    %v5475 = vpack.c.b16 %v5430, %v5429
    %v5476 = vpack.c.b16 %v5432, %v5431
    %v5477 = vpack.c.b16 %v5434, %v5433
    %v5478 = vpack.c.b16 %v5436, %v5435
    %v5479 = vpack.c.b16 %v5438, %v5437
    %v5480 = vpack.c.b16 %v5440, %v5439
    %v5481 = vpack.c.b16 %v5442, %v5441
    %v5482 = vpack.c.b16 %v5444, %v5443
    %v5483 = vpack.c.b16 %v5446, %v5445
    %v5484 = vpack.c.b16 %v5448, %v5447
    %v5485 = vpack.c.b16 %v5450, %v5449
    %v5486 = vpack.c.b16 %v5452, %v5451
    %v5487 = vpack.c.b16 %v5454, %v5453
    %v5488 = vpack.c.b16 %v5456, %v5455
    %5521 = vmatprep.subr.bf16.mxu0 0
    %5522 = vmatpush1.bf16.msra.mxu0 %v5457
    %5523 = vmatprep.subr.bf16.mxu0 0
    %5524 = vmatpush1.bf16.msra.mxu0 %v5458
    %5525 = vmatprep.subr.bf16.mxu0 0
    %5526 = vmatpush1.bf16.msra.mxu0 %v5459
    %5527 = vmatprep.subr.bf16.mxu0 0
    %5528 = vmatpush1.bf16.msra.mxu0 %v5460
    %5529 = vmatprep.subr.bf16.mxu0 0
    %5530 = vmatpush1.bf16.msra.mxu0 %v5461
    %5531 = vmatprep.subr.bf16.mxu0 0
    %5532 = vmatpush1.bf16.msra.mxu0 %v5462
    %5533 = vmatprep.subr.bf16.mxu0 0
    %5534 = vmatpush1.bf16.msra.mxu0 %v5463
    %5535 = vmatprep.subr.bf16.mxu0 0
    %5536 = vmatpush1.bf16.msra.mxu0 %v5464
    %5537 = vmatprep.subr.bf16.mxu0 0
    %5538 = vmatpush1.bf16.msra.mxu0 %v5465
    %5539 = vmatprep.subr.bf16.mxu0 0
    %5540 = vmatpush1.bf16.msra.mxu0 %v5466
    %5541 = vmatprep.subr.bf16.mxu0 0
    %5542 = vmatpush1.bf16.msra.mxu0 %v5467
    %5543 = vmatprep.subr.bf16.mxu0 0
    %5544 = vmatpush1.bf16.msra.mxu0 %v5468
    %5545 = vmatprep.subr.bf16.mxu0 0
    %5546 = vmatpush1.bf16.msra.mxu0 %v5469
    %5547 = vmatprep.subr.bf16.mxu0 0
    %5548 = vmatpush1.bf16.msra.mxu0 %v5470
    %5549 = vmatprep.subr.bf16.mxu0 0
    %5550 = vmatpush1.bf16.msra.mxu0 %v5471
    %5551 = vmatprep.subr.bf16.mxu0 0
    %5552 = vmatpush1.bf16.msra.mxu0 %v5472
    %5553 = vmatprep.mubr.bf16.mxu0 %v5167
    %5554 = vmatmul.mubr.bf16.gmra.mrb[0].mxu0 %v5166
    %v5555 = vpop.f32.mrb[0].mxu0
    %v5556 = vadd.f32 %v5316, %v5555
    %v5557 = vpop.f32.mrb[0].mxu0
    %v5558 = vpop.f32.mrb[0].mxu0
    %v5559 = vadd.f32 %v5321, %v5558
    %v5560 = vpop.f32.mrb[0].mxu0
    %5561 = vmatprep.mubr.bf16.mxu0 %v5171
    %5562 = vmatmul.mubr.bf16.gmra.mrb[0].mxu0 %v5170
    %v5563 = vpop.f32.mrb[0].mxu0
    %v5564 = vadd.f32 %v5326, %v5563
    %v5565 = vpop.f32.mrb[0].mxu0
    %v5566 = vpop.f32.mrb[0].mxu0
    %v5567 = vpop.f32.mrb[0].mxu0
    %5568 = vdwg.mxu0
    %5569 = vmatprep.subr.bf16.mxu0 0
    %5570 = vmatpush1.bf16.msra.mxu0 %v5473
    %5571 = vmatprep.subr.bf16.mxu0 0
    %5572 = vmatpush1.bf16.msra.mxu0 %v5474
    %5573 = vmatprep.subr.bf16.mxu0 0
    %5574 = vmatpush1.bf16.msra.mxu0 %v5475
    %5575 = vmatprep.subr.bf16.mxu0 0
    %5576 = vmatpush1.bf16.msra.mxu0 %v5476
    %5577 = vmatprep.subr.bf16.mxu0 0
    %5578 = vmatpush1.bf16.msra.mxu0 %v5477
    %5579 = vmatprep.subr.bf16.mxu0 0
    %5580 = vmatpush1.bf16.msra.mxu0 %v5478
    %5581 = vmatprep.subr.bf16.mxu0 0
    %5582 = vmatpush1.bf16.msra.mxu0 %v5479
    %5583 = vmatprep.subr.bf16.mxu0 0
    %5584 = vmatpush1.bf16.msra.mxu0 %v5480
    %5585 = vmatprep.subr.bf16.mxu0 0
    %5586 = vmatpush1.bf16.msra.mxu0 %v5481
    %5587 = vmatprep.subr.bf16.mxu0 0
    %5588 = vmatpush1.bf16.msra.mxu0 %v5482
    %5589 = vmatprep.subr.bf16.mxu0 0
    %5590 = vmatpush1.bf16.msra.mxu0 %v5483
    %5591 = vmatprep.subr.bf16.mxu0 0
    %5592 = vmatpush1.bf16.msra.mxu0 %v5484
    %5593 = vmatprep.subr.bf16.mxu0 0
    %5594 = vmatpush1.bf16.msra.mxu0 %v5485
    %5595 = vmatprep.subr.bf16.mxu0 0
    %5596 = vmatpush1.bf16.msra.mxu0 %v5486
    %5597 = vmatprep.subr.bf16.mxu0 0
    %5598 = vmatpush1.bf16.msra.mxu0 %v5487
    %5599 = vmatprep.subr.bf16.mxu0 0
    %5600 = vmatpush1.bf16.msra.mxu0 %v5488
    %5601 = vmatprep.mubr.bf16.mxu0 %v5169
    %5602 = vmatmul.mubr.bf16.gmra.mrb[0].mxu0 %v5168
    %v5603 = vpop.f32.mrb[0].mxu0
    %v5604 = vadd.f32 %v5556, %v5603
    %v5605 = vpop.f32.mrb[0].mxu0
    %v5606 = vpop.f32.mrb[0].mxu0
    %v5607 = vadd.f32 %v5559, %v5606
    %v5608 = vpop.f32.mrb[0].mxu0
    %5609 = vmatprep.mubr.bf16.mxu0 %v5173
    %5610 = vmatmul.mubr.bf16.gmra.mrb[0].mxu0 %v5172
    %v5611 = vpop.f32.mrb[0].mxu0
    %v5612 = vadd.f32 %v5564, %v5611
    %v5613 = vpop.f32.mrb[0].mxu0
    %v5614 = vpop.f32.mrb[0].mxu0
    %v5615 = vpop.f32.mrb[0].mxu0
    %5616 = vdwg.mxu0
    %v5617 = vadd.f32 %v4170, %v5604
    %v5618 = vadd.f32 %v4171, %v5607
    %v5619 = vadd.f32 %v4172, %v5612
    %s5620 = scalar_lea.vmem %s39, 1
    %v5621 = vld [vmem:[%s5620] sm:$0x1]
    %s5622 = scalar_lea.vmem %s41, 1
    %v5623 = vld [vmem:[%s5622] sm:$0x1]
    %5624 = vadd.xlane.f32.xlu0 %v5617
    %v5625 = vpop.xlane.xlu0 %5624
    %5626 = vadd.xlane.f32.xlu0 %v5618
    %v5627 = vpop.xlane.xlu0 %5626
    %v5628 = vsel %vm2578, %v5619, 0.0
    %5629 = vadd.xlane.f32.xlu0 %v5628
    %v5630 = vpop.xlane.xlu0 %5629
    %v5631 = vmul.f32 %v5625, %v2582
    %v5632 = vmul.f32 %v5627, %v2582
    %v5633 = vmul.f32 %v5630, %v2582
    %v5634 = vsub.f32 %v5617, %v5631
    %v5635 = vsub.f32 %v5618, %v5632
    %v5636 = vsub.f32 %v5619, %v5633
    %v5637 = vmul.f32 %v5634, %v5634
    %v5638 = vmul.f32 %v5635, %v5635
    %v5639 = vmul.f32 %v5636, %v5636
    %5640 = vadd.xlane.f32.xlu0 %v5637
    %v5641 = vpop.xlane.xlu0 %5640
    %5642 = vadd.xlane.f32.xlu0 %v5638
    %v5643 = vpop.xlane.xlu0 %5642
    %v5644 = vsel %vm2578, %v5639, 0.0
    %5645 = vadd.xlane.f32.xlu0 %v5644
    %v5646 = vpop.xlane.xlu0 %5645
    %v5647 = vmul.f32 %v5641, %v2582
    %v5648 = vmul.f32 %v5643, %v2582
    %v5649 = vmul.f32 %v5646, %v2582
    %v5650 = vadd.f32 %v5647, 1e-05
    %v5651 = vadd.f32 %v5648, 1e-05
    %v5652 = vadd.f32 %v5649, 1e-05
    %v5653 = vrsqrt.pop %v5650
    %v5654 = vrsqrt.pop %v5651
    %v5655 = vrsqrt.pop %v5652
    %v5656 = vmul.f32 %v5634, %v5653
    %v5657 = vmul.f32 %v5635, %v5654
    %v5658 = vmul.f32 %v5636, %v5655
    %v5660 = vlaneseq
    %v5661 = vshrl.u32 %v5660, 7
    %v5662 = vsub.s32 0, %v5661
    %v5663 = vrot.slane %v5621, %v5662
    %v5665 = vmul.f32 %v5656, %v5663
    %v5666 = vmul.f32 %v5657, %v5663
    %v5667 = vmul.f32 %v5658, %v5663
    %v5669 = vlaneseq
    %v5670 = vshrl.u32 %v5669, 7
    %v5671 = vsub.s32 0, %v5670
    %v5672 = vrot.slane %v5623, %v5671
    %v5674 = vadd.f32 %v5665, %v5672
    %v5675 = vadd.f32 %v5666, %v5672
    %v5676 = vadd.f32 %v5667, %v5672
    %v5677 = vpack.c.bf16 %v5675, %v5674
    %v5678 = vpack.c.bf16 %v5676, %v5676
    %s5679 = scalar_lea.vmem %s43, 192
    %v5680 = vld [vmem:[%s5679] sm:$0xff]
    %v5681 = vld [vmem:[%s5679 + $0x8] sm:$0xf]
    %v5682 = vld [vmem:[%s5679 + $0xc] sm:$0xff]
    %v5683 = vld [vmem:[%s5679 + $0x14] sm:$0xf]
    %v5684 = vld [vmem:[%s5679 + $0x18] sm:$0xff]
    %v5685 = vld [vmem:[%s5679 + $0x20] sm:$0xf]
    %v5686 = vld [vmem:[%s5679 + $0x24] sm:$0xff]
    %v5687 = vld [vmem:[%s5679 + $0x2c] sm:$0xf]
    %v5688 = vld [vmem:[%s5679 + $0x30] sm:$0xff]
    %v5689 = vld [vmem:[%s5679 + $0x38] sm:$0xf]
    %v5690 = vld [vmem:[%s5679 + $0x3c] sm:$0xff]
    %v5691 = vld [vmem:[%s5679 + $0x44] sm:$0xf]
    %v5692 = vld [vmem:[%s5679 + $0x48] sm:$0xff]
    %v5693 = vld [vmem:[%s5679 + $0x50] sm:$0xf]
    %v5694 = vld [vmem:[%s5679 + $0x54] sm:$0xff]
    %v5695 = vld [vmem:[%s5679 + $0x5c] sm:$0xf]
    %v5696 = vld [vmem:[%s5679 + $0x60] sm:$0xff]
    %v5697 = vld [vmem:[%s5679 + $0x68] sm:$0xf]
    %v5698 = vld [vmem:[%s5679 + $0x6c] sm:$0xff]
    %v5699 = vld [vmem:[%s5679 + $0x74] sm:$0xf]
    %v5700 = vld [vmem:[%s5679 + $0x78] sm:$0xff]
    %v5701 = vld [vmem:[%s5679 + $0x80] sm:$0xf]
    %v5702 = vld [vmem:[%s5679 + $0x84] sm:$0xff]
    %v5703 = vld [vmem:[%s5679 + $0x8c] sm:$0xf]
    %v5704 = vld [vmem:[%s5679 + $0x90] sm:$0xff]
    %v5705 = vld [vmem:[%s5679 + $0x98] sm:$0xf]
    %v5706 = vld [vmem:[%s5679 + $0x9c] sm:$0xff]
    %v5707 = vld [vmem:[%s5679 + $0xa4] sm:$0xf]
    %v5708 = vld [vmem:[%s5679 + $0xa8] sm:$0xff]
    %v5709 = vld [vmem:[%s5679 + $0xb0] sm:$0xf]
    %v5710 = vld [vmem:[%s5679 + $0xb4] sm:$0xff]
    %v5711 = vld [vmem:[%s5679 + $0xbc] sm:$0xf]
    %s5712 = scalar_lea.vmem %s45, 3
    %v5713 = vld [vmem:[%s5712] sm:$0x7]
    %v5715 = vlaneseq
    %v5716 = vshrl.u32 %v5715, 7
    %v5717 = vsub.s32 0, %v5716
    %v5718 = vrot.slane %v5713, %v5717
    %v5719 = vlaneseq
    %v5720 = vshrl.u32 %v5719, 7
    %v5721 = vsub.s32 1, %v5720
    %v5722 = vrot.slane %v5713, %v5721
    %v5723 = vlaneseq
    %v5724 = vshrl.u32 %v5723, 7
    %v5725 = vsub.s32 2, %v5724
    %v5726 = vrot.slane %v5713, %v5725
    %v5762 = vunpack.c.l.b16 %v5680
    %v5763 = vunpack.c.h.b16 %v5680
    %v5764 = vunpack.c.l.b16 %v5681
    %v5765 = vunpack.c.l.b16 %v5682
    %v5766 = vunpack.c.h.b16 %v5682
    %v5767 = vunpack.c.l.b16 %v5683
    %v5768 = vunpack.c.l.b16 %v5684
    %v5769 = vunpack.c.h.b16 %v5684
    %v5770 = vunpack.c.l.b16 %v5685
    %v5771 = vunpack.c.l.b16 %v5686
    %v5772 = vunpack.c.h.b16 %v5686
    %v5773 = vunpack.c.l.b16 %v5687
    %v5774 = vunpack.c.l.b16 %v5688
    %v5775 = vunpack.c.h.b16 %v5688
    %v5776 = vunpack.c.l.b16 %v5689
    %v5777 = vunpack.c.l.b16 %v5690
    %v5778 = vunpack.c.h.b16 %v5690
    %v5779 = vunpack.c.l.b16 %v5691
    %v5780 = vunpack.c.l.b16 %v5692
    %v5781 = vunpack.c.h.b16 %v5692
    %v5782 = vunpack.c.l.b16 %v5693
    %v5783 = vunpack.c.l.b16 %v5694
    %v5784 = vunpack.c.h.b16 %v5694
    %v5785 = vunpack.c.l.b16 %v5695
    %v5786 = vunpack.c.l.b16 %v5696
    %v5787 = vunpack.c.h.b16 %v5696
    %v5788 = vunpack.c.l.b16 %v5697
    %v5789 = vunpack.c.l.b16 %v5698
    %v5790 = vunpack.c.h.b16 %v5698
    %v5791 = vunpack.c.l.b16 %v5699
    %v5792 = vunpack.c.l.b16 %v5700
    %v5793 = vunpack.c.h.b16 %v5700
    %v5794 = vunpack.c.l.b16 %v5701
    %v5795 = vunpack.c.l.b16 %v5702
    %v5796 = vunpack.c.h.b16 %v5702
    %v5797 = vunpack.c.l.b16 %v5703
    %v5798 = vunpack.c.l.b16 %v5704
    %v5799 = vunpack.c.h.b16 %v5704
    %v5800 = vunpack.c.l.b16 %v5705
    %v5801 = vunpack.c.l.b16 %v5706
    %v5802 = vunpack.c.h.b16 %v5706
    %v5803 = vunpack.c.l.b16 %v5707
    %v5804 = vunpack.c.l.b16 %v5708
    %v5805 = vunpack.c.h.b16 %v5708
    %v5806 = vunpack.c.l.b16 %v5709
    %v5807 = vunpack.c.l.b16 %v5710
    %v5808 = vunpack.c.h.b16 %v5710
    %v5809 = vunpack.c.l.b16 %v5711
    %v5810 = vpack.c.b16 %v5765, %v5762
    %v5811 = vpack.c.b16 %v5766, %v5763
    %v5812 = vpack.c.b16 %v5767, %v5764
    %v5813 = vpack.c.b16 %v5771, %v5768
    %v5814 = vpack.c.b16 %v5772, %v5769
    %v5815 = vpack.c.b16 %v5773, %v5770
    %v5816 = vpack.c.b16 %v5777, %v5774
    %v5817 = vpack.c.b16 %v5778, %v5775
    %v5818 = vpack.c.b16 %v5779, %v5776
    %v5819 = vpack.c.b16 %v5783, %v5780
    %v5820 = vpack.c.b16 %v5784, %v5781
    %v5821 = vpack.c.b16 %v5785, %v5782
    %v5822 = vpack.c.b16 %v5789, %v5786
    %v5823 = vpack.c.b16 %v5790, %v5787
    %v5824 = vpack.c.b16 %v5791, %v5788
    %v5825 = vpack.c.b16 %v5795, %v5792
    %v5826 = vpack.c.b16 %v5796, %v5793
    %v5827 = vpack.c.b16 %v5797, %v5794
    %v5828 = vpack.c.b16 %v5801, %v5798
    %v5829 = vpack.c.b16 %v5802, %v5799
    %v5830 = vpack.c.b16 %v5803, %v5800
    %v5831 = vpack.c.b16 %v5807, %v5804
    %v5832 = vpack.c.b16 %v5808, %v5805
    %v5833 = vpack.c.b16 %v5809, %v5806
    %5858 = vmatprep.subr.bf16.mxu0 %v5811
    %5859 = vmatpush1.bf16.msra.mxu0 %v5810
    %5860 = vmatprep.subr.bf16.mxu0 %v5814
    %5861 = vmatpush1.bf16.msra.mxu0 %v5813
    %5862 = vmatprep.subr.bf16.mxu0 %v5817
    %5863 = vmatpush1.bf16.msra.mxu0 %v5816
    %5864 = vmatprep.subr.bf16.mxu0 %v5820
    %5865 = vmatpush1.bf16.msra.mxu0 %v5819
    %5866 = vmatprep.subr.bf16.mxu0 %v5823
    %5867 = vmatpush1.bf16.msra.mxu0 %v5822
    %5868 = vmatprep.subr.bf16.mxu0 %v5826
    %5869 = vmatpush1.bf16.msra.mxu0 %v5825
    %5870 = vmatprep.subr.bf16.mxu0 %v5829
    %5871 = vmatpush1.bf16.msra.mxu0 %v5828
    %5872 = vmatprep.subr.bf16.mxu0 %v5832
    %5873 = vmatpush1.bf16.msra.mxu0 %v5831
    %5874 = vmatprep.subr.bf16.mxu0 0
    %5875 = vmatpush1.bf16.msra.mxu0 0
    %5876 = vmatprep.subr.bf16.mxu0 0
    %5877 = vmatpush1.bf16.msra.mxu0 0
    %5878 = vmatprep.subr.bf16.mxu0 0
    %5879 = vmatpush1.bf16.msra.mxu0 0
    %5880 = vmatprep.subr.bf16.mxu0 0
    %5881 = vmatpush1.bf16.msra.mxu0 0
    %5882 = vmatprep.subr.bf16.mxu0 0
    %5883 = vmatpush1.bf16.msra.mxu0 0
    %5884 = vmatprep.subr.bf16.mxu0 0
    %5885 = vmatpush1.bf16.msra.mxu0 0
    %5886 = vmatprep.subr.bf16.mxu0 0
    %5887 = vmatpush1.bf16.msra.mxu0 0
    %5888 = vmatprep.subr.bf16.mxu0 0
    %5889 = vmatpush1.bf16.msra.mxu0 0
    %5890 = vmatprep.mubr.bf16.mxu0 0
    %5891 = vmatmul.mubr.bf16.gmra.mrb[0].mxu0 %v5677
    %v5892 = vpop.f32.mrb[0].mxu0
    %v5893 = vadd.f32 %v5718, %v5892
    %v5894 = vpop.f32.mrb[0].mxu0
    %v5895 = vadd.f32 %v5722, %v5894
    %v5896 = vpop.f32.mrb[0].mxu0
    %v5897 = vadd.f32 %v5718, %v5896
    %v5898 = vpop.f32.mrb[0].mxu0
    %v5899 = vadd.f32 %v5722, %v5898
    %5900 = vmatprep.mubr.bf16.mxu0 0
    %5901 = vmatmul.mubr.bf16.gmra.mrb[0].mxu0 %v5678
    %v5902 = vpop.f32.mrb[0].mxu0
    %v5903 = vadd.f32 %v5718, %v5902
    %v5904 = vpop.f32.mrb[0].mxu0
    %v5905 = vadd.f32 %v5722, %v5904
    %v5906 = vpop.f32.mrb[0].mxu0
    %v5907 = vpop.f32.mrb[0].mxu0
    %5908 = vdwg.mxu0
    %5909 = vmatprep.subr.bf16.mxu0 0
    %5910 = vmatpush1.bf16.msra.mxu0 %v5812
    %5911 = vmatprep.subr.bf16.mxu0 0
    %5912 = vmatpush1.bf16.msra.mxu0 %v5815
    %5913 = vmatprep.subr.bf16.mxu0 0
    %5914 = vmatpush1.bf16.msra.mxu0 %v5818
    %5915 = vmatprep.subr.bf16.mxu0 0
    %5916 = vmatpush1.bf16.msra.mxu0 %v5821
    %5917 = vmatprep.subr.bf16.mxu0 0
    %5918 = vmatpush1.bf16.msra.mxu0 %v5824
    %5919 = vmatprep.subr.bf16.mxu0 0
    %5920 = vmatpush1.bf16.msra.mxu0 %v5827
    %5921 = vmatprep.subr.bf16.mxu0 0
    %5922 = vmatpush1.bf16.msra.mxu0 %v5830
    %5923 = vmatprep.subr.bf16.mxu0 0
    %5924 = vmatpush1.bf16.msra.mxu0 %v5833
    %5925 = vmatprep.subr.bf16.mxu0 0
    %5926 = vmatpush1.bf16.msra.mxu0 0
    %5927 = vmatprep.subr.bf16.mxu0 0
    %5928 = vmatpush1.bf16.msra.mxu0 0
    %5929 = vmatprep.subr.bf16.mxu0 0
    %5930 = vmatpush1.bf16.msra.mxu0 0
    %5931 = vmatprep.subr.bf16.mxu0 0
    %5932 = vmatpush1.bf16.msra.mxu0 0
    %5933 = vmatprep.subr.bf16.mxu0 0
    %5934 = vmatpush1.bf16.msra.mxu0 0
    %5935 = vmatprep.subr.bf16.mxu0 0
    %5936 = vmatpush1.bf16.msra.mxu0 0
    %5937 = vmatprep.subr.bf16.mxu0 0
    %5938 = vmatpush1.bf16.msra.mxu0 0
    %5939 = vmatprep.subr.bf16.mxu0 0
    %5940 = vmatpush1.bf16.msra.mxu0 0
    %5941 = vmatprep.mubr.bf16.mxu0 0
    %5942 = vmatmul.mubr.bf16.gmra.mrb[0].mxu0 %v5677
    %v5943 = vpop.f32.mrb[0].mxu0
    %v5944 = vadd.f32 %v5726, %v5943
    %v5945 = vpop.f32.mrb[0].mxu0
    %v5946 = vpop.f32.mrb[0].mxu0
    %v5947 = vadd.f32 %v5726, %v5946
    %v5948 = vpop.f32.mrb[0].mxu0
    %5949 = vmatprep.mubr.bf16.mxu0 0
    %5950 = vmatmul.mubr.bf16.gmra.mrb[0].mxu0 %v5678
    %v5951 = vpop.f32.mrb[0].mxu0
    %v5952 = vadd.f32 %v5726, %v5951
    %v5953 = vpop.f32.mrb[0].mxu0
    %v5954 = vpop.f32.mrb[0].mxu0
    %v5955 = vpop.f32.mrb[0].mxu0
    %5956 = vdwg.mxu0
    %s5957 = scalar_lea.vmem %s47, 64
    %v5958 = vld [vmem:[%s5957] sm:$0xf]
    %v5959 = vld [vmem:[%s5957 + $0x4] sm:$0xf]
    %v5960 = vld [vmem:[%s5957 + $0x8] sm:$0xf]
    %v5961 = vld [vmem:[%s5957 + $0xc] sm:$0xf]
    %v5962 = vld [vmem:[%s5957 + $0x10] sm:$0xf]
    %v5963 = vld [vmem:[%s5957 + $0x14] sm:$0xf]
    %v5964 = vld [vmem:[%s5957 + $0x18] sm:$0xf]
    %v5965 = vld [vmem:[%s5957 + $0x1c] sm:$0xf]
    %v5966 = vld [vmem:[%s5957 + $0x20] sm:$0xf]
    %v5967 = vld [vmem:[%s5957 + $0x24] sm:$0xf]
    %v5968 = vld [vmem:[%s5957 + $0x28] sm:$0xf]
    %v5969 = vld [vmem:[%s5957 + $0x2c] sm:$0xf]
    %v5970 = vld [vmem:[%s5957 + $0x30] sm:$0xf]
    %v5971 = vld [vmem:[%s5957 + $0x34] sm:$0xf]
    %v5972 = vld [vmem:[%s5957 + $0x38] sm:$0xf]
    %v5973 = vld [vmem:[%s5957 + $0x3c] sm:$0xf]
    %v5975 = vsel %vm514, %v5893, 0
    %v5978 = vsel %vm514, %v5897, 0
    %v5981 = vsel %vm514, %v5903, 0
    %v5984 = vsel %vm514, %v5895, 0
    %v5987 = vsel %vm514, %v5899, 0
    %v5990 = vsel %vm514, %v5905, 0
    %5992 = vmatprep.subr.mxu0 0.0
    %5993 = vmatpush1.xpose.msra.mxu0 %v5984
    %5994 = vmatprep.subr.mxu0 0.0
    %5995 = vmatpush1.xpose.msra.mxu0 %v5987
    %5996 = vmatprep.subr.mxu0 0.0
    %5997 = vmatpush1.xpose.msra.mxu0 %v5990
    %5998 = vmatprep.subr.mxu0 0.0
    %5999 = vmatpush1.xpose.msra.mxu0 0.0
    %6000 = vmatprep.subr.mxu0 0.0
    %6001 = vmatpush1.xpose.msra.mxu0 0.0
    %6002 = vmatprep.subr.mxu0 0.0
    %6003 = vmatpush1.xpose.msra.mxu0 0.0
    %6004 = vmatprep.subr.mxu0 0.0
    %6005 = vmatpush1.xpose.msra.mxu0 0.0
    %6006 = vmatprep.subr.mxu0 0.0
    %6007 = vmatpush1.xpose.msra.mxu0 0.0
    %6008 = vmatprep.subr.mxu0 0.0
    %6009 = vmatpush1.xpose.msra.mxu0 0.0
    %6010 = vmatprep.subr.mxu0 0.0
    %6011 = vmatpush1.xpose.msra.mxu0 0.0
    %6012 = vmatprep.subr.mxu0 0.0
    %6013 = vmatpush1.xpose.msra.mxu0 0.0
    %6014 = vmatprep.subr.mxu0 0.0
    %6015 = vmatpush1.xpose.msra.mxu0 0.0
    %6016 = vmatprep.subr.mxu0 0.0
    %6017 = vmatpush1.xpose.msra.mxu0 0.0
    %6018 = vmatprep.subr.mxu0 0.0
    %6019 = vmatpush1.xpose.msra.mxu0 0.0
    %6020 = vmatprep.subr.mxu0 0.0
    %6021 = vmatpush1.xpose.msra.mxu0 0.0
    %6022 = vmatprep.subr.mxu0 0.0
    %6023 = vmatpush1.xpose.msra.mxu0 0.0
    %6024 = vmatprep.subr.mxu0 0.0
    %6025 = vmatpush1.xpose.msra.mxu0 0.0
    %6026 = vmatprep.subr.mxu0 0.0
    %6027 = vmatpush1.xpose.msra.mxu0 0.0
    %6028 = vmatprep.subr.mxu0 0.0
    %6029 = vmatpush1.xpose.msra.mxu0 0.0
    %6030 = vmatprep.subr.mxu0 0.0
    %6031 = vmatpush1.xpose.msra.mxu0 0.0
    %6032 = vmatprep.subr.mxu0 0.0
    %6033 = vmatpush1.xpose.msra.mxu0 0.0
    %6034 = vmatprep.subr.mxu0 0.0
    %6035 = vmatpush1.xpose.msra.mxu0 0.0
    %6036 = vmatprep.subr.mxu0 0.0
    %6037 = vmatpush1.xpose.msra.mxu0 0.0
    %6038 = vmatprep.subr.mxu0 0.0
    %6039 = vmatpush1.xpose.msra.mxu0 0.0
    %6040 = vmatprep.subr.mxu0 0.0
    %6041 = vmatpush1.xpose.msra.mxu0 0.0
    %6042 = vmatprep.subr.mxu0 0.0
    %6043 = vmatpush1.xpose.msra.mxu0 0.0
    %6044 = vmatprep.subr.mxu0 0.0
    %6045 = vmatpush1.xpose.msra.mxu0 0.0
    %6046 = vmatprep.subr.mxu0 0.0
    %6047 = vmatpush1.xpose.msra.mxu0 0.0
    %6048 = vmatprep.subr.mxu0 0.0
    %6049 = vmatpush1.xpose.msra.mxu0 0.0
    %6050 = vmatprep.subr.mxu0 0.0
    %6051 = vmatpush1.xpose.msra.mxu0 0.0
    %6052 = vmatprep.subr.mxu0 0.0
    %6053 = vmatpush1.xpose.msra.mxu0 0.0
    %6054 = vmatprep.subr.mxu0 0.0
    %6055 = vmatpush1.xpose.msra.mxu0 0.0
    %6056 = vmatprep.mubr.f32.mxu0 0.0
    %6057 = vmatmul.mubr.f32.gmra.mrb[0].mxu0 %v5975
    %v6058 = vpop.f32.mrb[0].mxu0
    %v6059 = vadd.f32 0.0, %v6058
    %v6060 = vpop.f32.mrb[0].mxu0
    %6061 = vmatprep.mubr.f32.mxu0 0.0
    %6062 = vmatmul.mubr.f32.gmra.mrb[0].mxu0 %v5978
    %v6063 = vpop.f32.mrb[0].mxu0
    %v6064 = vadd.f32 0.0, %v6063
    %v6065 = vpop.f32.mrb[0].mxu0
    %6066 = vmatprep.mubr.f32.mxu0 0.0
    %6067 = vmatmul.mubr.f32.gmra.mrb[0].mxu0 %v5981
    %v6068 = vpop.f32.mrb[0].mxu0
    %v6069 = vadd.f32 0.0, %v6068
    %v6070 = vpop.f32.mrb[0].mxu0
    %6071 = vdwg.mxu0
    %v6072 = vmul.f32 %v6059, 0.17677669
    %v6073 = vmul.f32 %v6064, 0.17677669
    %v6074 = vmul.f32 %v6069, 0.17677669
    %v6075 = vadd.f32 %v6072, %v2569
    %v6076 = vadd.f32 %v6073, %v2570
    %v6077 = vadd.f32 %v6074, %v2571
    %v6078 = vsel %vm3027, %v6075, -inf
    %6079 = vmax.xlane.f32.xlu0 %v6078
    %v6080 = vpop.xlane.xlu0 %6079
    %v6081 = vsel %vm3027, %v6076, -inf
    %6082 = vmax.xlane.f32.xlu0 %v6081
    %v6083 = vpop.xlane.xlu0 %6082
    %v6084 = vsel %vm3034, %v6077, -inf
    %6085 = vmax.xlane.f32.xlu0 %v6084
    %v6086 = vpop.xlane.xlu0 %6085
    %v6087 = vsub.f32 %v6075, %v6080
    %v6088 = vsub.f32 %v6076, %v6083
    %v6089 = vsub.f32 %v6077, %v6086
    %v6090 = vmul.f32 %v6087, 1.442695
    %v6091 = vpow.pop %v6090
    %v6092 = vmul.f32 %v6088, 1.442695
    %v6093 = vpow.pop %v6092
    %v6094 = vmul.f32 %v6089, 1.442695
    %v6095 = vpow.pop %v6094
    %v6096 = vsel %vm3027, %v6091, 0.0
    %6097 = vadd.xlane.f32.xlu0 %v6096
    %v6098 = vpop.xlane.xlu0 %6097
    %v6099 = vsel %vm3027, %v6093, 0.0
    %6100 = vadd.xlane.f32.xlu0 %v6099
    %v6101 = vpop.xlane.xlu0 %6100
    %v6102 = vsel %vm3034, %v6095, 0.0
    %6103 = vadd.xlane.f32.xlu0 %v6102
    %v6104 = vpop.xlane.xlu0 %6103
    %v6105 = vrcp.pop %v6098
    %v6106 = vrcp.pop %v6101
    %v6107 = vrcp.pop %v6104
    %v6108 = vmul.f32 %v6091, %v6105
    %v6109 = vmul.f32 %v6093, %v6106
    %v6110 = vmul.f32 %v6095, %v6107
    %v6112 = vsel %vm3027, %v6108, 0
    %v6115 = vsel %vm3027, %v6109, 0
    %v6118 = vsel %vm3027, %v6110, 0
    %v6121 = vsel %vm2578, %v5952, 0
    %6123 = vmatprep.subr.mxu0 0.0
    %6124 = vmatpush1.msra.mxu0 %v5944
    %6125 = vmatprep.subr.mxu0 0.0
    %6126 = vmatpush1.msra.mxu0 %v5947
    %6127 = vmatprep.subr.mxu0 0.0
    %6128 = vmatpush1.msra.mxu0 %v6121
    %6129 = vmatprep.subr.mxu0 0.0
    %6130 = vmatpush1.msra.mxu0 0.0
    %6131 = vmatprep.subr.mxu0 0.0
    %6132 = vmatpush1.msra.mxu0 0.0
    %6133 = vmatprep.subr.mxu0 0.0
    %6134 = vmatpush1.msra.mxu0 0.0
    %6135 = vmatprep.subr.mxu0 0.0
    %6136 = vmatpush1.msra.mxu0 0.0
    %6137 = vmatprep.subr.mxu0 0.0
    %6138 = vmatpush1.msra.mxu0 0.0
    %6139 = vmatprep.subr.mxu0 0.0
    %6140 = vmatpush1.msra.mxu0 0.0
    %6141 = vmatprep.subr.mxu0 0.0
    %6142 = vmatpush1.msra.mxu0 0.0
    %6143 = vmatprep.subr.mxu0 0.0
    %6144 = vmatpush1.msra.mxu0 0.0
    %6145 = vmatprep.subr.mxu0 0.0
    %6146 = vmatpush1.msra.mxu0 0.0
    %6147 = vmatprep.subr.mxu0 0.0
    %6148 = vmatpush1.msra.mxu0 0.0
    %6149 = vmatprep.subr.mxu0 0.0
    %6150 = vmatpush1.msra.mxu0 0.0
    %6151 = vmatprep.subr.mxu0 0.0
    %6152 = vmatpush1.msra.mxu0 0.0
    %6153 = vmatprep.subr.mxu0 0.0
    %6154 = vmatpush1.msra.mxu0 0.0
    %6155 = vmatprep.subr.mxu0 0.0
    %6156 = vmatpush1.msra.mxu0 0.0
    %6157 = vmatprep.subr.mxu0 0.0
    %6158 = vmatpush1.msra.mxu0 0.0
    %6159 = vmatprep.subr.mxu0 0.0
    %6160 = vmatpush1.msra.mxu0 0.0
    %6161 = vmatprep.subr.mxu0 0.0
    %6162 = vmatpush1.msra.mxu0 0.0
    %6163 = vmatprep.subr.mxu0 0.0
    %6164 = vmatpush1.msra.mxu0 0.0
    %6165 = vmatprep.subr.mxu0 0.0
    %6166 = vmatpush1.msra.mxu0 0.0
    %6167 = vmatprep.subr.mxu0 0.0
    %6168 = vmatpush1.msra.mxu0 0.0
    %6169 = vmatprep.subr.mxu0 0.0
    %6170 = vmatpush1.msra.mxu0 0.0
    %6171 = vmatprep.subr.mxu0 0.0
    %6172 = vmatpush1.msra.mxu0 0.0
    %6173 = vmatprep.subr.mxu0 0.0
    %6174 = vmatpush1.msra.mxu0 0.0
    %6175 = vmatprep.subr.mxu0 0.0
    %6176 = vmatpush1.msra.mxu0 0.0
    %6177 = vmatprep.subr.mxu0 0.0
    %6178 = vmatpush1.msra.mxu0 0.0
    %6179 = vmatprep.subr.mxu0 0.0
    %6180 = vmatpush1.msra.mxu0 0.0
    %6181 = vmatprep.subr.mxu0 0.0
    %6182 = vmatpush1.msra.mxu0 0.0
    %6183 = vmatprep.subr.mxu0 0.0
    %6184 = vmatpush1.msra.mxu0 0.0
    %6185 = vmatprep.subr.mxu0 0.0
    %6186 = vmatpush1.msra.mxu0 0.0
    %6187 = vmatprep.mubr.f32.mxu0 0.0
    %6188 = vmatmul.mubr.f32.gmra.mrb[0].mxu0 %v6112
    %v6189 = vpop.f32.mrb[0].mxu0
    %v6190 = vadd.f32 0.0, %v6189
    %v6191 = vpop.f32.mrb[0].mxu0
    %6192 = vmatprep.mubr.f32.mxu0 0.0
    %6193 = vmatmul.mubr.f32.gmra.mrb[0].mxu0 %v6115
    %v6194 = vpop.f32.mrb[0].mxu0
    %v6195 = vadd.f32 0.0, %v6194
    %v6196 = vpop.f32.mrb[0].mxu0
    %6197 = vmatprep.mubr.f32.mxu0 0.0
    %6198 = vmatmul.mubr.f32.gmra.mrb[0].mxu0 %v6118
    %v6199 = vpop.f32.mrb[0].mxu0
    %v6200 = vadd.f32 0.0, %v6199
    %v6201 = vpop.f32.mrb[0].mxu0
    %6202 = vdwg.mxu0
    %v6203 = vpack.c.bf16 %v6195, %v6190
    %v6204 = vpack.c.bf16 %v6200, %v6200
    %6205 = vrot.lane.b32.xlu0 %v5893, 96
    %v6206 = vpop.permute.xlu0 %6205
    %6207 = vrot.lane.b32.xlu0 %v5897, 96
    %v6208 = vpop.permute.xlu0 %6207
    %6209 = vrot.lane.b32.xlu0 %v5903, 96
    %v6210 = vpop.permute.xlu0 %6209
    %6211 = vrot.lane.b32.xlu0 %v5895, 96
    %v6212 = vpop.permute.xlu0 %6211
    %6213 = vrot.lane.b32.xlu0 %v5899, 96
    %v6214 = vpop.permute.xlu0 %6213
    %6215 = vrot.lane.b32.xlu0 %v5905, 96
    %v6216 = vpop.permute.xlu0 %6215
    %v6217 = vsel %vm514, %v6206, 0
    %v6219 = vsel %vm514, %v6208, 0
    %v6221 = vsel %vm514, %v6210, 0
    %v6223 = vsel %vm514, %v6212, 0
    %v6225 = vsel %vm514, %v6214, 0
    %v6227 = vsel %vm514, %v6216, 0
    %6229 = vmatprep.subr.mxu0 0.0
    %6230 = vmatpush1.xpose.msra.mxu0 %v6223
    %6231 = vmatprep.subr.mxu0 0.0
    %6232 = vmatpush1.xpose.msra.mxu0 %v6225
    %6233 = vmatprep.subr.mxu0 0.0
    %6234 = vmatpush1.xpose.msra.mxu0 %v6227
    %6235 = vmatprep.subr.mxu0 0.0
    %6236 = vmatpush1.xpose.msra.mxu0 0.0
    %6237 = vmatprep.subr.mxu0 0.0
    %6238 = vmatpush1.xpose.msra.mxu0 0.0
    %6239 = vmatprep.subr.mxu0 0.0
    %6240 = vmatpush1.xpose.msra.mxu0 0.0
    %6241 = vmatprep.subr.mxu0 0.0
    %6242 = vmatpush1.xpose.msra.mxu0 0.0
    %6243 = vmatprep.subr.mxu0 0.0
    %6244 = vmatpush1.xpose.msra.mxu0 0.0
    %6245 = vmatprep.subr.mxu0 0.0
    %6246 = vmatpush1.xpose.msra.mxu0 0.0
    %6247 = vmatprep.subr.mxu0 0.0
    %6248 = vmatpush1.xpose.msra.mxu0 0.0
    %6249 = vmatprep.subr.mxu0 0.0
    %6250 = vmatpush1.xpose.msra.mxu0 0.0
    %6251 = vmatprep.subr.mxu0 0.0
    %6252 = vmatpush1.xpose.msra.mxu0 0.0
    %6253 = vmatprep.subr.mxu0 0.0
    %6254 = vmatpush1.xpose.msra.mxu0 0.0
    %6255 = vmatprep.subr.mxu0 0.0
    %6256 = vmatpush1.xpose.msra.mxu0 0.0
    %6257 = vmatprep.subr.mxu0 0.0
    %6258 = vmatpush1.xpose.msra.mxu0 0.0
    %6259 = vmatprep.subr.mxu0 0.0
    %6260 = vmatpush1.xpose.msra.mxu0 0.0
    %6261 = vmatprep.subr.mxu0 0.0
    %6262 = vmatpush1.xpose.msra.mxu0 0.0
    %6263 = vmatprep.subr.mxu0 0.0
    %6264 = vmatpush1.xpose.msra.mxu0 0.0
    %6265 = vmatprep.subr.mxu0 0.0
    %6266 = vmatpush1.xpose.msra.mxu0 0.0
    %6267 = vmatprep.subr.mxu0 0.0
    %6268 = vmatpush1.xpose.msra.mxu0 0.0
    %6269 = vmatprep.subr.mxu0 0.0
    %6270 = vmatpush1.xpose.msra.mxu0 0.0
    %6271 = vmatprep.subr.mxu0 0.0
    %6272 = vmatpush1.xpose.msra.mxu0 0.0
    %6273 = vmatprep.subr.mxu0 0.0
    %6274 = vmatpush1.xpose.msra.mxu0 0.0
    %6275 = vmatprep.subr.mxu0 0.0
    %6276 = vmatpush1.xpose.msra.mxu0 0.0
    %6277 = vmatprep.subr.mxu0 0.0
    %6278 = vmatpush1.xpose.msra.mxu0 0.0
    %6279 = vmatprep.subr.mxu0 0.0
    %6280 = vmatpush1.xpose.msra.mxu0 0.0
    %6281 = vmatprep.subr.mxu0 0.0
    %6282 = vmatpush1.xpose.msra.mxu0 0.0
    %6283 = vmatprep.subr.mxu0 0.0
    %6284 = vmatpush1.xpose.msra.mxu0 0.0
    %6285 = vmatprep.subr.mxu0 0.0
    %6286 = vmatpush1.xpose.msra.mxu0 0.0
    %6287 = vmatprep.subr.mxu0 0.0
    %6288 = vmatpush1.xpose.msra.mxu0 0.0
    %6289 = vmatprep.subr.mxu0 0.0
    %6290 = vmatpush1.xpose.msra.mxu0 0.0
    %6291 = vmatprep.subr.mxu0 0.0
    %6292 = vmatpush1.xpose.msra.mxu0 0.0
    %6293 = vmatprep.mubr.f32.mxu0 0.0
    %6294 = vmatmul.mubr.f32.gmra.mrb[0].mxu0 %v6217
    %v6295 = vpop.f32.mrb[0].mxu0
    %v6296 = vadd.f32 0.0, %v6295
    %v6297 = vpop.f32.mrb[0].mxu0
    %6298 = vmatprep.mubr.f32.mxu0 0.0
    %6299 = vmatmul.mubr.f32.gmra.mrb[0].mxu0 %v6219
    %v6300 = vpop.f32.mrb[0].mxu0
    %v6301 = vadd.f32 0.0, %v6300
    %v6302 = vpop.f32.mrb[0].mxu0
    %6303 = vmatprep.mubr.f32.mxu0 0.0
    %6304 = vmatmul.mubr.f32.gmra.mrb[0].mxu0 %v6221
    %v6305 = vpop.f32.mrb[0].mxu0
    %v6306 = vadd.f32 0.0, %v6305
    %v6307 = vpop.f32.mrb[0].mxu0
    %6308 = vdwg.mxu0
    %v6309 = vmul.f32 %v6296, 0.17677669
    %v6310 = vmul.f32 %v6301, 0.17677669
    %v6311 = vmul.f32 %v6306, 0.17677669
    %v6312 = vadd.f32 %v6309, %v2569
    %v6313 = vadd.f32 %v6310, %v2570
    %v6314 = vadd.f32 %v6311, %v2571
    %v6315 = vsel %vm3027, %v6312, -inf
    %6316 = vmax.xlane.f32.xlu0 %v6315
    %v6317 = vpop.xlane.xlu0 %6316
    %v6318 = vsel %vm3027, %v6313, -inf
    %6319 = vmax.xlane.f32.xlu0 %v6318
    %v6320 = vpop.xlane.xlu0 %6319
    %v6321 = vsel %vm3034, %v6314, -inf
    %6322 = vmax.xlane.f32.xlu0 %v6321
    %v6323 = vpop.xlane.xlu0 %6322
    %v6324 = vsub.f32 %v6312, %v6317
    %v6325 = vsub.f32 %v6313, %v6320
    %v6326 = vsub.f32 %v6314, %v6323
    %v6327 = vmul.f32 %v6324, 1.442695
    %v6328 = vpow.pop %v6327
    %v6329 = vmul.f32 %v6325, 1.442695
    %v6330 = vpow.pop %v6329
    %v6331 = vmul.f32 %v6326, 1.442695
    %v6332 = vpow.pop %v6331
    %v6333 = vsel %vm3027, %v6328, 0.0
    %6334 = vadd.xlane.f32.xlu0 %v6333
    %v6335 = vpop.xlane.xlu0 %6334
    %v6336 = vsel %vm3027, %v6330, 0.0
    %6337 = vadd.xlane.f32.xlu0 %v6336
    %v6338 = vpop.xlane.xlu0 %6337
    %v6339 = vsel %vm3034, %v6332, 0.0
    %6340 = vadd.xlane.f32.xlu0 %v6339
    %v6341 = vpop.xlane.xlu0 %6340
    %v6342 = vrcp.pop %v6335
    %v6343 = vrcp.pop %v6338
    %v6344 = vrcp.pop %v6341
    %v6345 = vmul.f32 %v6328, %v6342
    %v6346 = vmul.f32 %v6330, %v6343
    %v6347 = vmul.f32 %v6332, %v6344
    %6350 = vrot.lane.b32.xlu0 %v5944, 96
    %v6351 = vpop.permute.xlu0 %6350
    %6352 = vrot.lane.b32.xlu0 %v5947, 96
    %v6353 = vpop.permute.xlu0 %6352
    %6354 = vrot.lane.b32.xlu0 %v5952, 96
    %v6355 = vpop.permute.xlu0 %6354
    %v6359 = vsel %vm3027, %v6345, 0
    %v6362 = vsel %vm3027, %v6346, 0
    %v6365 = vsel %vm3027, %v6347, 0
    %v6367 = vsel %vm2578, %v6355, 0
    %6369 = vmatprep.subr.mxu0 0.0
    %6370 = vmatpush1.msra.mxu0 %v6351
    %6371 = vmatprep.subr.mxu0 0.0
    %6372 = vmatpush1.msra.mxu0 %v6353
    %6373 = vmatprep.subr.mxu0 0.0
    %6374 = vmatpush1.msra.mxu0 %v6367
    %6375 = vmatprep.subr.mxu0 0.0
    %6376 = vmatpush1.msra.mxu0 0.0
    %6377 = vmatprep.subr.mxu0 0.0
    %6378 = vmatpush1.msra.mxu0 0.0
    %6379 = vmatprep.subr.mxu0 0.0
    %6380 = vmatpush1.msra.mxu0 0.0
    %6381 = vmatprep.subr.mxu0 0.0
    %6382 = vmatpush1.msra.mxu0 0.0
    %6383 = vmatprep.subr.mxu0 0.0
    %6384 = vmatpush1.msra.mxu0 0.0
    %6385 = vmatprep.subr.mxu0 0.0
    %6386 = vmatpush1.msra.mxu0 0.0
    %6387 = vmatprep.subr.mxu0 0.0
    %6388 = vmatpush1.msra.mxu0 0.0
    %6389 = vmatprep.subr.mxu0 0.0
    %6390 = vmatpush1.msra.mxu0 0.0
    %6391 = vmatprep.subr.mxu0 0.0
    %6392 = vmatpush1.msra.mxu0 0.0
    %6393 = vmatprep.subr.mxu0 0.0
    %6394 = vmatpush1.msra.mxu0 0.0
    %6395 = vmatprep.subr.mxu0 0.0
    %6396 = vmatpush1.msra.mxu0 0.0
    %6397 = vmatprep.subr.mxu0 0.0
    %6398 = vmatpush1.msra.mxu0 0.0
    %6399 = vmatprep.subr.mxu0 0.0
    %6400 = vmatpush1.msra.mxu0 0.0
    %6401 = vmatprep.subr.mxu0 0.0
    %6402 = vmatpush1.msra.mxu0 0.0
    %6403 = vmatprep.subr.mxu0 0.0
    %6404 = vmatpush1.msra.mxu0 0.0
    %6405 = vmatprep.subr.mxu0 0.0
    %6406 = vmatpush1.msra.mxu0 0.0
    %6407 = vmatprep.subr.mxu0 0.0
    %6408 = vmatpush1.msra.mxu0 0.0
    %6409 = vmatprep.subr.mxu0 0.0
    %6410 = vmatpush1.msra.mxu0 0.0
    %6411 = vmatprep.subr.mxu0 0.0
    %6412 = vmatpush1.msra.mxu0 0.0
    %6413 = vmatprep.subr.mxu0 0.0
    %6414 = vmatpush1.msra.mxu0 0.0
    %6415 = vmatprep.subr.mxu0 0.0
    %6416 = vmatpush1.msra.mxu0 0.0
    %6417 = vmatprep.subr.mxu0 0.0
    %6418 = vmatpush1.msra.mxu0 0.0
    %6419 = vmatprep.subr.mxu0 0.0
    %6420 = vmatpush1.msra.mxu0 0.0
    %6421 = vmatprep.subr.mxu0 0.0
    %6422 = vmatpush1.msra.mxu0 0.0
    %6423 = vmatprep.subr.mxu0 0.0
    %6424 = vmatpush1.msra.mxu0 0.0
    %6425 = vmatprep.subr.mxu0 0.0
    %6426 = vmatpush1.msra.mxu0 0.0
    %6427 = vmatprep.subr.mxu0 0.0
    %6428 = vmatpush1.msra.mxu0 0.0
    %6429 = vmatprep.subr.mxu0 0.0
    %6430 = vmatpush1.msra.mxu0 0.0
    %6431 = vmatprep.subr.mxu0 0.0
    %6432 = vmatpush1.msra.mxu0 0.0
    %6433 = vmatprep.mubr.f32.mxu0 0.0
    %6434 = vmatmul.mubr.f32.gmra.mrb[0].mxu0 %v6359
    %v6435 = vpop.f32.mrb[0].mxu0
    %v6436 = vadd.f32 0.0, %v6435
    %v6437 = vpop.f32.mrb[0].mxu0
    %6438 = vmatprep.mubr.f32.mxu0 0.0
    %6439 = vmatmul.mubr.f32.gmra.mrb[0].mxu0 %v6362
    %v6440 = vpop.f32.mrb[0].mxu0
    %v6441 = vadd.f32 0.0, %v6440
    %v6442 = vpop.f32.mrb[0].mxu0
    %6443 = vmatprep.mubr.f32.mxu0 0.0
    %6444 = vmatmul.mubr.f32.gmra.mrb[0].mxu0 %v6365
    %v6445 = vpop.f32.mrb[0].mxu0
    %v6446 = vadd.f32 0.0, %v6445
    %v6447 = vpop.f32.mrb[0].mxu0
    %6448 = vdwg.mxu0
    %v6449 = vpack.c.bf16 %v6441, %v6436
    %v6450 = vpack.c.bf16 %v6446, %v6446
    %v6455 = vunpack.c.l.b16 %v5962
    %v6456 = vunpack.c.l.b16 %v5963
    %v6457 = vunpack.c.l.b16 %v5964
    %v6458 = vunpack.c.l.b16 %v5965
    %v6459 = vpack.c.b16 %v6456, %v6455
    %v6460 = vpack.c.b16 %v6458, %v6457
    %v6464 = vsel %vm514, %v6449, 0
    %v6467 = vsel %vm514, %v6450, 0
    %6469 = vmatprep.subr.bf16.mxu0 0
    %6470 = vmatpush1.bf16.msra.mxu0 %v6459
    %6471 = vmatprep.subr.bf16.mxu0 0
    %6472 = vmatpush1.bf16.msra.mxu0 %v6460
    %6473 = vmatprep.subr.bf16.mxu0 0
    %6474 = vmatpush1.bf16.msra.mxu0 0
    %6475 = vmatprep.subr.bf16.mxu0 0
    %6476 = vmatpush1.bf16.msra.mxu0 0
    %6477 = vmatprep.subr.bf16.mxu0 0
    %6478 = vmatpush1.bf16.msra.mxu0 0
    %6479 = vmatprep.subr.bf16.mxu0 0
    %6480 = vmatpush1.bf16.msra.mxu0 0
    %6481 = vmatprep.subr.bf16.mxu0 0
    %6482 = vmatpush1.bf16.msra.mxu0 0
    %6483 = vmatprep.subr.bf16.mxu0 0
    %6484 = vmatpush1.bf16.msra.mxu0 0
    %6485 = vmatprep.subr.bf16.mxu0 0
    %6486 = vmatpush1.bf16.msra.mxu0 0
    %6487 = vmatprep.subr.bf16.mxu0 0
    %6488 = vmatpush1.bf16.msra.mxu0 0
    %6489 = vmatprep.subr.bf16.mxu0 0
    %6490 = vmatpush1.bf16.msra.mxu0 0
    %6491 = vmatprep.subr.bf16.mxu0 0
    %6492 = vmatpush1.bf16.msra.mxu0 0
    %6493 = vmatprep.subr.bf16.mxu0 0
    %6494 = vmatpush1.bf16.msra.mxu0 0
    %6495 = vmatprep.subr.bf16.mxu0 0
    %6496 = vmatpush1.bf16.msra.mxu0 0
    %6497 = vmatprep.subr.bf16.mxu0 0
    %6498 = vmatpush1.bf16.msra.mxu0 0
    %6499 = vmatprep.subr.bf16.mxu0 0
    %6500 = vmatpush1.bf16.msra.mxu0 0
    %6501 = vmatprep.mubr.bf16.mxu0 0
    %6502 = vmatmul.mubr.bf16.gmra.mrb[0].mxu0 %v6464
    %v6503 = vpop.f32.mrb[0].mxu0
    %v6504 = vadd.f32 0.0, %v6503
    %v6505 = vpop.f32.mrb[0].mxu0
    %v6506 = vpop.f32.mrb[0].mxu0
    %v6507 = vadd.f32 0.0, %v6506
    %v6508 = vpop.f32.mrb[0].mxu0
    %6509 = vmatprep.mubr.bf16.mxu0 0
    %6510 = vmatmul.mubr.bf16.gmra.mrb[0].mxu0 %v6467
    %v6511 = vpop.f32.mrb[0].mxu0
    %v6512 = vadd.f32 0.0, %v6511
    %v6513 = vpop.f32.mrb[0].mxu0
    %v6514 = vpop.f32.mrb[0].mxu0
    %v6515 = vpop.f32.mrb[0].mxu0
    %6516 = vdwg.mxu0
    %v6521 = vunpack.c.l.b16 %v5958
    %v6522 = vunpack.c.l.b16 %v5959
    %v6523 = vunpack.c.l.b16 %v5960
    %v6524 = vunpack.c.l.b16 %v5961
    %v6525 = vpack.c.b16 %v6522, %v6521
    %v6526 = vpack.c.b16 %v6524, %v6523
    %v6530 = vsel %vm514, %v6203, 0
    %v6533 = vsel %vm514, %v6204, 0
    %6535 = vmatprep.subr.bf16.mxu0 0
    %6536 = vmatpush1.bf16.msra.mxu0 %v6525
    %6537 = vmatprep.subr.bf16.mxu0 0
    %6538 = vmatpush1.bf16.msra.mxu0 %v6526
    %6539 = vmatprep.subr.bf16.mxu0 0
    %6540 = vmatpush1.bf16.msra.mxu0 0
    %6541 = vmatprep.subr.bf16.mxu0 0
    %6542 = vmatpush1.bf16.msra.mxu0 0
    %6543 = vmatprep.subr.bf16.mxu0 0
    %6544 = vmatpush1.bf16.msra.mxu0 0
    %6545 = vmatprep.subr.bf16.mxu0 0
    %6546 = vmatpush1.bf16.msra.mxu0 0
    %6547 = vmatprep.subr.bf16.mxu0 0
    %6548 = vmatpush1.bf16.msra.mxu0 0
    %6549 = vmatprep.subr.bf16.mxu0 0
    %6550 = vmatpush1.bf16.msra.mxu0 0
    %6551 = vmatprep.subr.bf16.mxu0 0
    %6552 = vmatpush1.bf16.msra.mxu0 0
    %6553 = vmatprep.subr.bf16.mxu0 0
    %6554 = vmatpush1.bf16.msra.mxu0 0
    %6555 = vmatprep.subr.bf16.mxu0 0
    %6556 = vmatpush1.bf16.msra.mxu0 0
    %6557 = vmatprep.subr.bf16.mxu0 0
    %6558 = vmatpush1.bf16.msra.mxu0 0
    %6559 = vmatprep.subr.bf16.mxu0 0
    %6560 = vmatpush1.bf16.msra.mxu0 0
    %6561 = vmatprep.subr.bf16.mxu0 0
    %6562 = vmatpush1.bf16.msra.mxu0 0
    %6563 = vmatprep.subr.bf16.mxu0 0
    %6564 = vmatpush1.bf16.msra.mxu0 0
    %6565 = vmatprep.subr.bf16.mxu0 0
    %6566 = vmatpush1.bf16.msra.mxu0 0
    %6567 = vmatprep.mubr.bf16.mxu0 0
    %6568 = vmatmul.mubr.bf16.gmra.mrb[0].mxu0 %v6530
    %v6569 = vpop.f32.mrb[0].mxu0
    %v6570 = vadd.f32 %v6504, %v6569
    %v6571 = vpop.f32.mrb[0].mxu0
    %v6572 = vpop.f32.mrb[0].mxu0
    %v6573 = vadd.f32 %v6507, %v6572
    %v6574 = vpop.f32.mrb[0].mxu0
    %6575 = vmatprep.mubr.bf16.mxu0 0
    %6576 = vmatmul.mubr.bf16.gmra.mrb[0].mxu0 %v6533
    %v6577 = vpop.f32.mrb[0].mxu0
    %v6578 = vadd.f32 %v6512, %v6577
    %v6579 = vpop.f32.mrb[0].mxu0
    %v6580 = vpop.f32.mrb[0].mxu0
    %v6581 = vpop.f32.mrb[0].mxu0
    %6582 = vdwg.mxu0
    %6583 = vrot.lane.b32.xlu0 %v5893, 64
    %v6584 = vpop.permute.xlu0 %6583
    %6585 = vrot.lane.b32.xlu0 %v5897, 64
    %v6586 = vpop.permute.xlu0 %6585
    %6587 = vrot.lane.b32.xlu0 %v5903, 64
    %v6588 = vpop.permute.xlu0 %6587
    %6589 = vrot.lane.b32.xlu0 %v5895, 64
    %v6590 = vpop.permute.xlu0 %6589
    %6591 = vrot.lane.b32.xlu0 %v5899, 64
    %v6592 = vpop.permute.xlu0 %6591
    %6593 = vrot.lane.b32.xlu0 %v5905, 64
    %v6594 = vpop.permute.xlu0 %6593
    %v6595 = vsel %vm514, %v6584, 0
    %v6597 = vsel %vm514, %v6586, 0
    %v6599 = vsel %vm514, %v6588, 0
    %v6601 = vsel %vm514, %v6590, 0
    %v6603 = vsel %vm514, %v6592, 0
    %v6605 = vsel %vm514, %v6594, 0
    %6607 = vmatprep.subr.mxu0 0.0
    %6608 = vmatpush1.xpose.msra.mxu0 %v6601
    %6609 = vmatprep.subr.mxu0 0.0
    %6610 = vmatpush1.xpose.msra.mxu0 %v6603
    %6611 = vmatprep.subr.mxu0 0.0
    %6612 = vmatpush1.xpose.msra.mxu0 %v6605
    %6613 = vmatprep.subr.mxu0 0.0
    %6614 = vmatpush1.xpose.msra.mxu0 0.0
    %6615 = vmatprep.subr.mxu0 0.0
    %6616 = vmatpush1.xpose.msra.mxu0 0.0
    %6617 = vmatprep.subr.mxu0 0.0
    %6618 = vmatpush1.xpose.msra.mxu0 0.0
    %6619 = vmatprep.subr.mxu0 0.0
    %6620 = vmatpush1.xpose.msra.mxu0 0.0
    %6621 = vmatprep.subr.mxu0 0.0
    %6622 = vmatpush1.xpose.msra.mxu0 0.0
    %6623 = vmatprep.subr.mxu0 0.0
    %6624 = vmatpush1.xpose.msra.mxu0 0.0
    %6625 = vmatprep.subr.mxu0 0.0
    %6626 = vmatpush1.xpose.msra.mxu0 0.0
    %6627 = vmatprep.subr.mxu0 0.0
    %6628 = vmatpush1.xpose.msra.mxu0 0.0
    %6629 = vmatprep.subr.mxu0 0.0
    %6630 = vmatpush1.xpose.msra.mxu0 0.0
    %6631 = vmatprep.subr.mxu0 0.0
    %6632 = vmatpush1.xpose.msra.mxu0 0.0
    %6633 = vmatprep.subr.mxu0 0.0
    %6634 = vmatpush1.xpose.msra.mxu0 0.0
    %6635 = vmatprep.subr.mxu0 0.0
    %6636 = vmatpush1.xpose.msra.mxu0 0.0
    %6637 = vmatprep.subr.mxu0 0.0
    %6638 = vmatpush1.xpose.msra.mxu0 0.0
    %6639 = vmatprep.subr.mxu0 0.0
    %6640 = vmatpush1.xpose.msra.mxu0 0.0
    %6641 = vmatprep.subr.mxu0 0.0
    %6642 = vmatpush1.xpose.msra.mxu0 0.0
    %6643 = vmatprep.subr.mxu0 0.0
    %6644 = vmatpush1.xpose.msra.mxu0 0.0
    %6645 = vmatprep.subr.mxu0 0.0
    %6646 = vmatpush1.xpose.msra.mxu0 0.0
    %6647 = vmatprep.subr.mxu0 0.0
    %6648 = vmatpush1.xpose.msra.mxu0 0.0
    %6649 = vmatprep.subr.mxu0 0.0
    %6650 = vmatpush1.xpose.msra.mxu0 0.0
    %6651 = vmatprep.subr.mxu0 0.0
    %6652 = vmatpush1.xpose.msra.mxu0 0.0
    %6653 = vmatprep.subr.mxu0 0.0
    %6654 = vmatpush1.xpose.msra.mxu0 0.0
    %6655 = vmatprep.subr.mxu0 0.0
    %6656 = vmatpush1.xpose.msra.mxu0 0.0
    %6657 = vmatprep.subr.mxu0 0.0
    %6658 = vmatpush1.xpose.msra.mxu0 0.0
    %6659 = vmatprep.subr.mxu0 0.0
    %6660 = vmatpush1.xpose.msra.mxu0 0.0
    %6661 = vmatprep.subr.mxu0 0.0
    %6662 = vmatpush1.xpose.msra.mxu0 0.0
    %6663 = vmatprep.subr.mxu0 0.0
    %6664 = vmatpush1.xpose.msra.mxu0 0.0
    %6665 = vmatprep.subr.mxu0 0.0
    %6666 = vmatpush1.xpose.msra.mxu0 0.0
    %6667 = vmatprep.subr.mxu0 0.0
    %6668 = vmatpush1.xpose.msra.mxu0 0.0
    %6669 = vmatprep.subr.mxu0 0.0
    %6670 = vmatpush1.xpose.msra.mxu0 0.0
    %6671 = vmatprep.mubr.f32.mxu0 0.0
    %6672 = vmatmul.mubr.f32.gmra.mrb[0].mxu0 %v6595
    %v6673 = vpop.f32.mrb[0].mxu0
    %v6674 = vadd.f32 0.0, %v6673
    %v6675 = vpop.f32.mrb[0].mxu0
    %6676 = vmatprep.mubr.f32.mxu0 0.0
    %6677 = vmatmul.mubr.f32.gmra.mrb[0].mxu0 %v6597
    %v6678 = vpop.f32.mrb[0].mxu0
    %v6679 = vadd.f32 0.0, %v6678
    %v6680 = vpop.f32.mrb[0].mxu0
    %6681 = vmatprep.mubr.f32.mxu0 0.0
    %6682 = vmatmul.mubr.f32.gmra.mrb[0].mxu0 %v6599
    %v6683 = vpop.f32.mrb[0].mxu0
    %v6684 = vadd.f32 0.0, %v6683
    %v6685 = vpop.f32.mrb[0].mxu0
    %6686 = vdwg.mxu0
    %v6687 = vmul.f32 %v6674, 0.17677669
    %v6688 = vmul.f32 %v6679, 0.17677669
    %v6689 = vmul.f32 %v6684, 0.17677669
    %v6690 = vadd.f32 %v6687, %v2569
    %v6691 = vadd.f32 %v6688, %v2570
    %v6692 = vadd.f32 %v6689, %v2571
    %v6693 = vsel %vm3027, %v6690, -inf
    %6694 = vmax.xlane.f32.xlu0 %v6693
    %v6695 = vpop.xlane.xlu0 %6694
    %v6696 = vsel %vm3027, %v6691, -inf
    %6697 = vmax.xlane.f32.xlu0 %v6696
    %v6698 = vpop.xlane.xlu0 %6697
    %v6699 = vsel %vm3034, %v6692, -inf
    %6700 = vmax.xlane.f32.xlu0 %v6699
    %v6701 = vpop.xlane.xlu0 %6700
    %v6702 = vsub.f32 %v6690, %v6695
    %v6703 = vsub.f32 %v6691, %v6698
    %v6704 = vsub.f32 %v6692, %v6701
    %v6705 = vmul.f32 %v6702, 1.442695
    %v6706 = vpow.pop %v6705
    %v6707 = vmul.f32 %v6703, 1.442695
    %v6708 = vpow.pop %v6707
    %v6709 = vmul.f32 %v6704, 1.442695
    %v6710 = vpow.pop %v6709
    %v6711 = vsel %vm3027, %v6706, 0.0
    %6712 = vadd.xlane.f32.xlu0 %v6711
    %v6713 = vpop.xlane.xlu0 %6712
    %v6714 = vsel %vm3027, %v6708, 0.0
    %6715 = vadd.xlane.f32.xlu0 %v6714
    %v6716 = vpop.xlane.xlu0 %6715
    %v6717 = vsel %vm3034, %v6710, 0.0
    %6718 = vadd.xlane.f32.xlu0 %v6717
    %v6719 = vpop.xlane.xlu0 %6718
    %v6720 = vrcp.pop %v6713
    %v6721 = vrcp.pop %v6716
    %v6722 = vrcp.pop %v6719
    %v6723 = vmul.f32 %v6706, %v6720
    %v6724 = vmul.f32 %v6708, %v6721
    %v6725 = vmul.f32 %v6710, %v6722
    %6726 = vrot.lane.b32.xlu0 %v5944, 64
    %v6727 = vpop.permute.xlu0 %6726
    %6728 = vrot.lane.b32.xlu0 %v5947, 64
    %v6729 = vpop.permute.xlu0 %6728
    %6730 = vrot.lane.b32.xlu0 %v5952, 64
    %v6731 = vpop.permute.xlu0 %6730
    %v6735 = vsel %vm3027, %v6723, 0
    %v6738 = vsel %vm3027, %v6724, 0
    %v6741 = vsel %vm3027, %v6725, 0
    %v6743 = vsel %vm2578, %v6731, 0
    %6745 = vmatprep.subr.mxu0 0.0
    %6746 = vmatpush1.msra.mxu0 %v6727
    %6747 = vmatprep.subr.mxu0 0.0
    %6748 = vmatpush1.msra.mxu0 %v6729
    %6749 = vmatprep.subr.mxu0 0.0
    %6750 = vmatpush1.msra.mxu0 %v6743
    %6751 = vmatprep.subr.mxu0 0.0
    %6752 = vmatpush1.msra.mxu0 0.0
    %6753 = vmatprep.subr.mxu0 0.0
    %6754 = vmatpush1.msra.mxu0 0.0
    %6755 = vmatprep.subr.mxu0 0.0
    %6756 = vmatpush1.msra.mxu0 0.0
    %6757 = vmatprep.subr.mxu0 0.0
    %6758 = vmatpush1.msra.mxu0 0.0
    %6759 = vmatprep.subr.mxu0 0.0
    %6760 = vmatpush1.msra.mxu0 0.0
    %6761 = vmatprep.subr.mxu0 0.0
    %6762 = vmatpush1.msra.mxu0 0.0
    %6763 = vmatprep.subr.mxu0 0.0
    %6764 = vmatpush1.msra.mxu0 0.0
    %6765 = vmatprep.subr.mxu0 0.0
    %6766 = vmatpush1.msra.mxu0 0.0
    %6767 = vmatprep.subr.mxu0 0.0
    %6768 = vmatpush1.msra.mxu0 0.0
    %6769 = vmatprep.subr.mxu0 0.0
    %6770 = vmatpush1.msra.mxu0 0.0
    %6771 = vmatprep.subr.mxu0 0.0
    %6772 = vmatpush1.msra.mxu0 0.0
    %6773 = vmatprep.subr.mxu0 0.0
    %6774 = vmatpush1.msra.mxu0 0.0
    %6775 = vmatprep.subr.mxu0 0.0
    %6776 = vmatpush1.msra.mxu0 0.0
    %6777 = vmatprep.subr.mxu0 0.0
    %6778 = vmatpush1.msra.mxu0 0.0
    %6779 = vmatprep.subr.mxu0 0.0
    %6780 = vmatpush1.msra.mxu0 0.0
    %6781 = vmatprep.subr.mxu0 0.0
    %6782 = vmatpush1.msra.mxu0 0.0
    %6783 = vmatprep.subr.mxu0 0.0
    %6784 = vmatpush1.msra.mxu0 0.0
    %6785 = vmatprep.subr.mxu0 0.0
    %6786 = vmatpush1.msra.mxu0 0.0
    %6787 = vmatprep.subr.mxu0 0.0
    %6788 = vmatpush1.msra.mxu0 0.0
    %6789 = vmatprep.subr.mxu0 0.0
    %6790 = vmatpush1.msra.mxu0 0.0
    %6791 = vmatprep.subr.mxu0 0.0
    %6792 = vmatpush1.msra.mxu0 0.0
    %6793 = vmatprep.subr.mxu0 0.0
    %6794 = vmatpush1.msra.mxu0 0.0
    %6795 = vmatprep.subr.mxu0 0.0
    %6796 = vmatpush1.msra.mxu0 0.0
    %6797 = vmatprep.subr.mxu0 0.0
    %6798 = vmatpush1.msra.mxu0 0.0
    %6799 = vmatprep.subr.mxu0 0.0
    %6800 = vmatpush1.msra.mxu0 0.0
    %6801 = vmatprep.subr.mxu0 0.0
    %6802 = vmatpush1.msra.mxu0 0.0
    %6803 = vmatprep.subr.mxu0 0.0
    %6804 = vmatpush1.msra.mxu0 0.0
    %6805 = vmatprep.subr.mxu0 0.0
    %6806 = vmatpush1.msra.mxu0 0.0
    %6807 = vmatprep.subr.mxu0 0.0
    %6808 = vmatpush1.msra.mxu0 0.0
    %6809 = vmatprep.mubr.f32.mxu0 0.0
    %6810 = vmatmul.mubr.f32.gmra.mrb[0].mxu0 %v6735
    %v6811 = vpop.f32.mrb[0].mxu0
    %v6812 = vadd.f32 0.0, %v6811
    %v6813 = vpop.f32.mrb[0].mxu0
    %6814 = vmatprep.mubr.f32.mxu0 0.0
    %6815 = vmatmul.mubr.f32.gmra.mrb[0].mxu0 %v6738
    %v6816 = vpop.f32.mrb[0].mxu0
    %v6817 = vadd.f32 0.0, %v6816
    %v6818 = vpop.f32.mrb[0].mxu0
    %6819 = vmatprep.mubr.f32.mxu0 0.0
    %6820 = vmatmul.mubr.f32.gmra.mrb[0].mxu0 %v6741
    %v6821 = vpop.f32.mrb[0].mxu0
    %v6822 = vadd.f32 0.0, %v6821
    %v6823 = vpop.f32.mrb[0].mxu0
    %6824 = vdwg.mxu0
    %v6825 = vpack.c.bf16 %v6817, %v6812
    %v6826 = vpack.c.bf16 %v6822, %v6822
    %v6831 = vunpack.c.l.b16 %v5966
    %v6832 = vunpack.c.l.b16 %v5967
    %v6833 = vunpack.c.l.b16 %v5968
    %v6834 = vunpack.c.l.b16 %v5969
    %v6835 = vpack.c.b16 %v6832, %v6831
    %v6836 = vpack.c.b16 %v6834, %v6833
    %v6840 = vsel %vm514, %v6825, 0
    %v6843 = vsel %vm514, %v6826, 0
    %6845 = vmatprep.subr.bf16.mxu0 0
    %6846 = vmatpush1.bf16.msra.mxu0 %v6835
    %6847 = vmatprep.subr.bf16.mxu0 0
    %6848 = vmatpush1.bf16.msra.mxu0 %v6836
    %6849 = vmatprep.subr.bf16.mxu0 0
    %6850 = vmatpush1.bf16.msra.mxu0 0
    %6851 = vmatprep.subr.bf16.mxu0 0
    %6852 = vmatpush1.bf16.msra.mxu0 0
    %6853 = vmatprep.subr.bf16.mxu0 0
    %6854 = vmatpush1.bf16.msra.mxu0 0
    %6855 = vmatprep.subr.bf16.mxu0 0
    %6856 = vmatpush1.bf16.msra.mxu0 0
    %6857 = vmatprep.subr.bf16.mxu0 0
    %6858 = vmatpush1.bf16.msra.mxu0 0
    %6859 = vmatprep.subr.bf16.mxu0 0
    %6860 = vmatpush1.bf16.msra.mxu0 0
    %6861 = vmatprep.subr.bf16.mxu0 0
    %6862 = vmatpush1.bf16.msra.mxu0 0
    %6863 = vmatprep.subr.bf16.mxu0 0
    %6864 = vmatpush1.bf16.msra.mxu0 0
    %6865 = vmatprep.subr.bf16.mxu0 0
    %6866 = vmatpush1.bf16.msra.mxu0 0
    %6867 = vmatprep.subr.bf16.mxu0 0
    %6868 = vmatpush1.bf16.msra.mxu0 0
    %6869 = vmatprep.subr.bf16.mxu0 0
    %6870 = vmatpush1.bf16.msra.mxu0 0
    %6871 = vmatprep.subr.bf16.mxu0 0
    %6872 = vmatpush1.bf16.msra.mxu0 0
    %6873 = vmatprep.subr.bf16.mxu0 0
    %6874 = vmatpush1.bf16.msra.mxu0 0
    %6875 = vmatprep.subr.bf16.mxu0 0
    %6876 = vmatpush1.bf16.msra.mxu0 0
    %6877 = vmatprep.mubr.bf16.mxu0 0
    %6878 = vmatmul.mubr.bf16.gmra.mrb[0].mxu0 %v6840
    %v6879 = vpop.f32.mrb[0].mxu0
    %v6880 = vadd.f32 0.0, %v6879
    %v6881 = vpop.f32.mrb[0].mxu0
    %v6882 = vpop.f32.mrb[0].mxu0
    %v6883 = vadd.f32 0.0, %v6882
    %v6884 = vpop.f32.mrb[0].mxu0
    %6885 = vmatprep.mubr.bf16.mxu0 0
    %6886 = vmatmul.mubr.bf16.gmra.mrb[0].mxu0 %v6843
    %v6887 = vpop.f32.mrb[0].mxu0
    %v6888 = vadd.f32 0.0, %v6887
    %v6889 = vpop.f32.mrb[0].mxu0
    %v6890 = vpop.f32.mrb[0].mxu0
    %v6891 = vpop.f32.mrb[0].mxu0
    %6892 = vdwg.mxu0
    %v6893 = vadd.f32 %v6570, %v6880
    %v6894 = vadd.f32 %v6573, %v6883
    %v6895 = vadd.f32 %v6578, %v6888
    %6896 = vrot.lane.b32.xlu0 %v5893, 32
    %v6897 = vpop.permute.xlu0 %6896
    %6898 = vrot.lane.b32.xlu0 %v5897, 32
    %v6899 = vpop.permute.xlu0 %6898
    %6900 = vrot.lane.b32.xlu0 %v5903, 32
    %v6901 = vpop.permute.xlu0 %6900
    %6902 = vrot.lane.b32.xlu0 %v5895, 32
    %v6903 = vpop.permute.xlu0 %6902
    %6904 = vrot.lane.b32.xlu0 %v5899, 32
    %v6905 = vpop.permute.xlu0 %6904
    %6906 = vrot.lane.b32.xlu0 %v5905, 32
    %v6907 = vpop.permute.xlu0 %6906
    %v6908 = vsel %vm514, %v6897, 0
    %v6910 = vsel %vm514, %v6899, 0
    %v6912 = vsel %vm514, %v6901, 0
    %v6914 = vsel %vm514, %v6903, 0
    %v6916 = vsel %vm514, %v6905, 0
    %v6918 = vsel %vm514, %v6907, 0
    %6920 = vmatprep.subr.mxu0 0.0
    %6921 = vmatpush1.xpose.msra.mxu0 %v6914
    %6922 = vmatprep.subr.mxu0 0.0
    %6923 = vmatpush1.xpose.msra.mxu0 %v6916
    %6924 = vmatprep.subr.mxu0 0.0
    %6925 = vmatpush1.xpose.msra.mxu0 %v6918
    %6926 = vmatprep.subr.mxu0 0.0
    %6927 = vmatpush1.xpose.msra.mxu0 0.0
    %6928 = vmatprep.subr.mxu0 0.0
    %6929 = vmatpush1.xpose.msra.mxu0 0.0
    %6930 = vmatprep.subr.mxu0 0.0
    %6931 = vmatpush1.xpose.msra.mxu0 0.0
    %6932 = vmatprep.subr.mxu0 0.0
    %6933 = vmatpush1.xpose.msra.mxu0 0.0
    %6934 = vmatprep.subr.mxu0 0.0
    %6935 = vmatpush1.xpose.msra.mxu0 0.0
    %6936 = vmatprep.subr.mxu0 0.0
    %6937 = vmatpush1.xpose.msra.mxu0 0.0
    %6938 = vmatprep.subr.mxu0 0.0
    %6939 = vmatpush1.xpose.msra.mxu0 0.0
    %6940 = vmatprep.subr.mxu0 0.0
    %6941 = vmatpush1.xpose.msra.mxu0 0.0
    %6942 = vmatprep.subr.mxu0 0.0
    %6943 = vmatpush1.xpose.msra.mxu0 0.0
    %6944 = vmatprep.subr.mxu0 0.0
    %6945 = vmatpush1.xpose.msra.mxu0 0.0
    %6946 = vmatprep.subr.mxu0 0.0
    %6947 = vmatpush1.xpose.msra.mxu0 0.0
    %6948 = vmatprep.subr.mxu0 0.0
    %6949 = vmatpush1.xpose.msra.mxu0 0.0
    %6950 = vmatprep.subr.mxu0 0.0
    %6951 = vmatpush1.xpose.msra.mxu0 0.0
    %6952 = vmatprep.subr.mxu0 0.0
    %6953 = vmatpush1.xpose.msra.mxu0 0.0
    %6954 = vmatprep.subr.mxu0 0.0
    %6955 = vmatpush1.xpose.msra.mxu0 0.0
    %6956 = vmatprep.subr.mxu0 0.0
    %6957 = vmatpush1.xpose.msra.mxu0 0.0
    %6958 = vmatprep.subr.mxu0 0.0
    %6959 = vmatpush1.xpose.msra.mxu0 0.0
    %6960 = vmatprep.subr.mxu0 0.0
    %6961 = vmatpush1.xpose.msra.mxu0 0.0
    %6962 = vmatprep.subr.mxu0 0.0
    %6963 = vmatpush1.xpose.msra.mxu0 0.0
    %6964 = vmatprep.subr.mxu0 0.0
    %6965 = vmatpush1.xpose.msra.mxu0 0.0
    %6966 = vmatprep.subr.mxu0 0.0
    %6967 = vmatpush1.xpose.msra.mxu0 0.0
    %6968 = vmatprep.subr.mxu0 0.0
    %6969 = vmatpush1.xpose.msra.mxu0 0.0
    %6970 = vmatprep.subr.mxu0 0.0
    %6971 = vmatpush1.xpose.msra.mxu0 0.0
    %6972 = vmatprep.subr.mxu0 0.0
    %6973 = vmatpush1.xpose.msra.mxu0 0.0
    %6974 = vmatprep.subr.mxu0 0.0
    %6975 = vmatpush1.xpose.msra.mxu0 0.0
    %6976 = vmatprep.subr.mxu0 0.0
    %6977 = vmatpush1.xpose.msra.mxu0 0.0
    %6978 = vmatprep.subr.mxu0 0.0
    %6979 = vmatpush1.xpose.msra.mxu0 0.0
    %6980 = vmatprep.subr.mxu0 0.0
    %6981 = vmatpush1.xpose.msra.mxu0 0.0
    %6982 = vmatprep.subr.mxu0 0.0
    %6983 = vmatpush1.xpose.msra.mxu0 0.0
    %6984 = vmatprep.mubr.f32.mxu0 0.0
    %6985 = vmatmul.mubr.f32.gmra.mrb[0].mxu0 %v6908
    %v6986 = vpop.f32.mrb[0].mxu0
    %v6987 = vadd.f32 0.0, %v6986
    %v6988 = vpop.f32.mrb[0].mxu0
    %6989 = vmatprep.mubr.f32.mxu0 0.0
    %6990 = vmatmul.mubr.f32.gmra.mrb[0].mxu0 %v6910
    %v6991 = vpop.f32.mrb[0].mxu0
    %v6992 = vadd.f32 0.0, %v6991
    %v6993 = vpop.f32.mrb[0].mxu0
    %6994 = vmatprep.mubr.f32.mxu0 0.0
    %6995 = vmatmul.mubr.f32.gmra.mrb[0].mxu0 %v6912
    %v6996 = vpop.f32.mrb[0].mxu0
    %v6997 = vadd.f32 0.0, %v6996
    %v6998 = vpop.f32.mrb[0].mxu0
    %6999 = vdwg.mxu0
    %v7000 = vmul.f32 %v6987, 0.17677669
    %v7001 = vmul.f32 %v6992, 0.17677669
    %v7002 = vmul.f32 %v6997, 0.17677669
    %v7003 = vadd.f32 %v7000, %v2569
    %v7004 = vadd.f32 %v7001, %v2570
    %v7005 = vadd.f32 %v7002, %v2571
    %v7006 = vsel %vm3027, %v7003, -inf
    %7007 = vmax.xlane.f32.xlu0 %v7006
    %v7008 = vpop.xlane.xlu0 %7007
    %v7009 = vsel %vm3027, %v7004, -inf
    %7010 = vmax.xlane.f32.xlu0 %v7009
    %v7011 = vpop.xlane.xlu0 %7010
    %v7012 = vsel %vm3034, %v7005, -inf
    %7013 = vmax.xlane.f32.xlu0 %v7012
    %v7014 = vpop.xlane.xlu0 %7013
    %v7015 = vsub.f32 %v7003, %v7008
    %v7016 = vsub.f32 %v7004, %v7011
    %v7017 = vsub.f32 %v7005, %v7014
    %v7018 = vmul.f32 %v7015, 1.442695
    %v7019 = vpow.pop %v7018
    %v7020 = vmul.f32 %v7016, 1.442695
    %v7021 = vpow.pop %v7020
    %v7022 = vmul.f32 %v7017, 1.442695
    %v7023 = vpow.pop %v7022
    %v7024 = vsel %vm3027, %v7019, 0.0
    %7025 = vadd.xlane.f32.xlu0 %v7024
    %v7026 = vpop.xlane.xlu0 %7025
    %v7027 = vsel %vm3027, %v7021, 0.0
    %7028 = vadd.xlane.f32.xlu0 %v7027
    %v7029 = vpop.xlane.xlu0 %7028
    %v7030 = vsel %vm3034, %v7023, 0.0
    %7031 = vadd.xlane.f32.xlu0 %v7030
    %v7032 = vpop.xlane.xlu0 %7031
    %v7033 = vrcp.pop %v7026
    %v7034 = vrcp.pop %v7029
    %v7035 = vrcp.pop %v7032
    %v7036 = vmul.f32 %v7019, %v7033
    %v7037 = vmul.f32 %v7021, %v7034
    %v7038 = vmul.f32 %v7023, %v7035
    %7039 = vrot.lane.b32.xlu0 %v5944, 32
    %v7040 = vpop.permute.xlu0 %7039
    %7041 = vrot.lane.b32.xlu0 %v5947, 32
    %v7042 = vpop.permute.xlu0 %7041
    %7043 = vrot.lane.b32.xlu0 %v5952, 32
    %v7044 = vpop.permute.xlu0 %7043
    %v7048 = vsel %vm3027, %v7036, 0
    %v7051 = vsel %vm3027, %v7037, 0
    %v7054 = vsel %vm3027, %v7038, 0
    %v7056 = vsel %vm2578, %v7044, 0
    %7058 = vmatprep.subr.mxu0 0.0
    %7059 = vmatpush1.msra.mxu0 %v7040
    %7060 = vmatprep.subr.mxu0 0.0
    %7061 = vmatpush1.msra.mxu0 %v7042
    %7062 = vmatprep.subr.mxu0 0.0
    %7063 = vmatpush1.msra.mxu0 %v7056
    %7064 = vmatprep.subr.mxu0 0.0
    %7065 = vmatpush1.msra.mxu0 0.0
    %7066 = vmatprep.subr.mxu0 0.0
    %7067 = vmatpush1.msra.mxu0 0.0
    %7068 = vmatprep.subr.mxu0 0.0
    %7069 = vmatpush1.msra.mxu0 0.0
    %7070 = vmatprep.subr.mxu0 0.0
    %7071 = vmatpush1.msra.mxu0 0.0
    %7072 = vmatprep.subr.mxu0 0.0
    %7073 = vmatpush1.msra.mxu0 0.0
    %7074 = vmatprep.subr.mxu0 0.0
    %7075 = vmatpush1.msra.mxu0 0.0
    %7076 = vmatprep.subr.mxu0 0.0
    %7077 = vmatpush1.msra.mxu0 0.0
    %7078 = vmatprep.subr.mxu0 0.0
    %7079 = vmatpush1.msra.mxu0 0.0
    %7080 = vmatprep.subr.mxu0 0.0
    %7081 = vmatpush1.msra.mxu0 0.0
    %7082 = vmatprep.subr.mxu0 0.0
    %7083 = vmatpush1.msra.mxu0 0.0
    %7084 = vmatprep.subr.mxu0 0.0
    %7085 = vmatpush1.msra.mxu0 0.0
    %7086 = vmatprep.subr.mxu0 0.0
    %7087 = vmatpush1.msra.mxu0 0.0
    %7088 = vmatprep.subr.mxu0 0.0
    %7089 = vmatpush1.msra.mxu0 0.0
    %7090 = vmatprep.subr.mxu0 0.0
    %7091 = vmatpush1.msra.mxu0 0.0
    %7092 = vmatprep.subr.mxu0 0.0
    %7093 = vmatpush1.msra.mxu0 0.0
    %7094 = vmatprep.subr.mxu0 0.0
    %7095 = vmatpush1.msra.mxu0 0.0
    %7096 = vmatprep.subr.mxu0 0.0
    %7097 = vmatpush1.msra.mxu0 0.0
    %7098 = vmatprep.subr.mxu0 0.0
    %7099 = vmatpush1.msra.mxu0 0.0
    %7100 = vmatprep.subr.mxu0 0.0
    %7101 = vmatpush1.msra.mxu0 0.0
    %7102 = vmatprep.subr.mxu0 0.0
    %7103 = vmatpush1.msra.mxu0 0.0
    %7104 = vmatprep.subr.mxu0 0.0
    %7105 = vmatpush1.msra.mxu0 0.0
    %7106 = vmatprep.subr.mxu0 0.0
    %7107 = vmatpush1.msra.mxu0 0.0
    %7108 = vmatprep.subr.mxu0 0.0
    %7109 = vmatpush1.msra.mxu0 0.0
    %7110 = vmatprep.subr.mxu0 0.0
    %7111 = vmatpush1.msra.mxu0 0.0
    %7112 = vmatprep.subr.mxu0 0.0
    %7113 = vmatpush1.msra.mxu0 0.0
    %7114 = vmatprep.subr.mxu0 0.0
    %7115 = vmatpush1.msra.mxu0 0.0
    %7116 = vmatprep.subr.mxu0 0.0
    %7117 = vmatpush1.msra.mxu0 0.0
    %7118 = vmatprep.subr.mxu0 0.0
    %7119 = vmatpush1.msra.mxu0 0.0
    %7120 = vmatprep.subr.mxu0 0.0
    %7121 = vmatpush1.msra.mxu0 0.0
    %7122 = vmatprep.mubr.f32.mxu0 0.0
    %7123 = vmatmul.mubr.f32.gmra.mrb[0].mxu0 %v7048
    %v7124 = vpop.f32.mrb[0].mxu0
    %v7125 = vadd.f32 0.0, %v7124
    %v7126 = vpop.f32.mrb[0].mxu0
    %7127 = vmatprep.mubr.f32.mxu0 0.0
    %7128 = vmatmul.mubr.f32.gmra.mrb[0].mxu0 %v7051
    %v7129 = vpop.f32.mrb[0].mxu0
    %v7130 = vadd.f32 0.0, %v7129
    %v7131 = vpop.f32.mrb[0].mxu0
    %7132 = vmatprep.mubr.f32.mxu0 0.0
    %7133 = vmatmul.mubr.f32.gmra.mrb[0].mxu0 %v7054
    %v7134 = vpop.f32.mrb[0].mxu0
    %v7135 = vadd.f32 0.0, %v7134
    %v7136 = vpop.f32.mrb[0].mxu0
    %7137 = vdwg.mxu0
    %v7138 = vpack.c.bf16 %v7130, %v7125
    %v7139 = vpack.c.bf16 %v7135, %v7135
    %v7144 = vunpack.c.l.b16 %v5970
    %v7145 = vunpack.c.l.b16 %v5971
    %v7146 = vunpack.c.l.b16 %v5972
    %v7147 = vunpack.c.l.b16 %v5973
    %v7148 = vpack.c.b16 %v7145, %v7144
    %v7149 = vpack.c.b16 %v7147, %v7146
    %v7153 = vsel %vm514, %v7138, 0
    %v7156 = vsel %vm514, %v7139, 0
    %7158 = vmatprep.subr.bf16.mxu0 0
    %7159 = vmatpush1.bf16.msra.mxu0 %v7148
    %7160 = vmatprep.subr.bf16.mxu0 0
    %7161 = vmatpush1.bf16.msra.mxu0 %v7149
    %7162 = vmatprep.subr.bf16.mxu0 0
    %7163 = vmatpush1.bf16.msra.mxu0 0
    %7164 = vmatprep.subr.bf16.mxu0 0
    %7165 = vmatpush1.bf16.msra.mxu0 0
    %7166 = vmatprep.subr.bf16.mxu0 0
    %7167 = vmatpush1.bf16.msra.mxu0 0
    %7168 = vmatprep.subr.bf16.mxu0 0
    %7169 = vmatpush1.bf16.msra.mxu0 0
    %7170 = vmatprep.subr.bf16.mxu0 0
    %7171 = vmatpush1.bf16.msra.mxu0 0
    %7172 = vmatprep.subr.bf16.mxu0 0
    %7173 = vmatpush1.bf16.msra.mxu0 0
    %7174 = vmatprep.subr.bf16.mxu0 0
    %7175 = vmatpush1.bf16.msra.mxu0 0
    %7176 = vmatprep.subr.bf16.mxu0 0
    %7177 = vmatpush1.bf16.msra.mxu0 0
    %7178 = vmatprep.subr.bf16.mxu0 0
    %7179 = vmatpush1.bf16.msra.mxu0 0
    %7180 = vmatprep.subr.bf16.mxu0 0
    %7181 = vmatpush1.bf16.msra.mxu0 0
    %7182 = vmatprep.subr.bf16.mxu0 0
    %7183 = vmatpush1.bf16.msra.mxu0 0
    %7184 = vmatprep.subr.bf16.mxu0 0
    %7185 = vmatpush1.bf16.msra.mxu0 0
    %7186 = vmatprep.subr.bf16.mxu0 0
    %7187 = vmatpush1.bf16.msra.mxu0 0
    %7188 = vmatprep.subr.bf16.mxu0 0
    %7189 = vmatpush1.bf16.msra.mxu0 0
    %7190 = vmatprep.mubr.bf16.mxu0 0
    %7191 = vmatmul.mubr.bf16.gmra.mrb[0].mxu0 %v7153
    %v7192 = vpop.f32.mrb[0].mxu0
    %v7193 = vadd.f32 0.0, %v7192
    %v7194 = vpop.f32.mrb[0].mxu0
    %v7195 = vpop.f32.mrb[0].mxu0
    %v7196 = vadd.f32 0.0, %v7195
    %v7197 = vpop.f32.mrb[0].mxu0
    %7198 = vmatprep.mubr.bf16.mxu0 0
    %7199 = vmatmul.mubr.bf16.gmra.mrb[0].mxu0 %v7156
    %v7200 = vpop.f32.mrb[0].mxu0
    %v7201 = vadd.f32 0.0, %v7200
    %v7202 = vpop.f32.mrb[0].mxu0
    %v7203 = vpop.f32.mrb[0].mxu0
    %v7204 = vpop.f32.mrb[0].mxu0
    %7205 = vdwg.mxu0
    %v7206 = vadd.f32 %v6893, %v7193
    %v7207 = vadd.f32 %v6894, %v7196
    %v7208 = vadd.f32 %v6895, %v7201
    %v7209 = vadd.f32 %v5617, %v7206
    %v7210 = vadd.f32 %v5618, %v7207
    %v7211 = vadd.f32 %v5619, %v7208
    %s7212 = scalar_lea.vmem %s49, 1
    %v7213 = vld [vmem:[%s7212] sm:$0x1]
    %v7215 = vlaneseq
    %v7216 = vshrl.u32 %v7215, 7
    %v7217 = vsub.s32 0, %v7216
    %v7218 = vrot.slane %v7213, %v7217
    %v7220 = vadd.f32 %v7209, %v7218
    %v7221 = vadd.f32 %v7210, %v7218
    %v7222 = vadd.f32 %v7211, %v7218
    %s7223 = scalar_lea.vmem %s51, 1
    %v7224 = vld [vmem:[%s7223] sm:$0x1]
    %s7225 = scalar_lea.vmem %s53, 1
    %v7226 = vld [vmem:[%s7225] sm:$0x1]
    %7227 = vadd.xlane.f32.xlu0 %v7220
    %v7228 = vpop.xlane.xlu0 %7227
    %7229 = vadd.xlane.f32.xlu0 %v7221
    %v7230 = vpop.xlane.xlu0 %7229
    %v7231 = vsel %vm2578, %v7222, 0.0
    %7232 = vadd.xlane.f32.xlu0 %v7231
    %v7233 = vpop.xlane.xlu0 %7232
    %v7234 = vmul.f32 %v7228, %v2582
    %v7235 = vmul.f32 %v7230, %v2582
    %v7236 = vmul.f32 %v7233, %v2582
    %v7237 = vsub.f32 %v7220, %v7234
    %v7238 = vsub.f32 %v7221, %v7235
    %v7239 = vsub.f32 %v7222, %v7236
    %v7240 = vmul.f32 %v7237, %v7237
    %v7241 = vmul.f32 %v7238, %v7238
    %v7242 = vmul.f32 %v7239, %v7239
    %7243 = vadd.xlane.f32.xlu0 %v7240
    %v7244 = vpop.xlane.xlu0 %7243
    %7245 = vadd.xlane.f32.xlu0 %v7241
    %v7246 = vpop.xlane.xlu0 %7245
    %v7247 = vsel %vm2578, %v7242, 0.0
    %7248 = vadd.xlane.f32.xlu0 %v7247
    %v7249 = vpop.xlane.xlu0 %7248
    %v7250 = vmul.f32 %v7244, %v2582
    %v7251 = vmul.f32 %v7246, %v2582
    %v7252 = vmul.f32 %v7249, %v2582
    %v7253 = vadd.f32 %v7250, 1e-05
    %v7254 = vadd.f32 %v7251, 1e-05
    %v7255 = vadd.f32 %v7252, 1e-05
    %v7256 = vrsqrt.pop %v7253
    %v7257 = vrsqrt.pop %v7254
    %v7258 = vrsqrt.pop %v7255
    %v7259 = vmul.f32 %v7237, %v7256
    %v7260 = vmul.f32 %v7238, %v7257
    %v7261 = vmul.f32 %v7239, %v7258
    %v7263 = vlaneseq
    %v7264 = vshrl.u32 %v7263, 7
    %v7265 = vsub.s32 0, %v7264
    %v7266 = vrot.slane %v7224, %v7265
    %v7268 = vmul.f32 %v7259, %v7266
    %v7269 = vmul.f32 %v7260, %v7266
    %v7270 = vmul.f32 %v7261, %v7266
    %v7272 = vlaneseq
    %v7273 = vshrl.u32 %v7272, 7
    %v7274 = vsub.s32 0, %v7273
    %v7275 = vrot.slane %v7226, %v7274
    %v7277 = vadd.f32 %v7268, %v7275
    %v7278 = vadd.f32 %v7269, %v7275
    %v7279 = vadd.f32 %v7270, %v7275
    %s7280 = scalar_lea.vmem %s55, 128
    %v7281 = vld [vmem:[%s7280] sm:$0xff]
    %v7282 = vld [vmem:[%s7280 + $0x8] sm:$0xff]
    %v7283 = vld [vmem:[%s7280 + $0x10] sm:$0xff]
    %v7284 = vld [vmem:[%s7280 + $0x18] sm:$0xff]
    %v7285 = vld [vmem:[%s7280 + $0x20] sm:$0xff]
    %v7286 = vld [vmem:[%s7280 + $0x28] sm:$0xff]
    %v7287 = vld [vmem:[%s7280 + $0x30] sm:$0xff]
    %v7288 = vld [vmem:[%s7280 + $0x38] sm:$0xff]
    %v7289 = vld [vmem:[%s7280 + $0x40] sm:$0xff]
    %v7290 = vld [vmem:[%s7280 + $0x48] sm:$0xff]
    %v7291 = vld [vmem:[%s7280 + $0x50] sm:$0xff]
    %v7292 = vld [vmem:[%s7280 + $0x58] sm:$0xff]
    %v7293 = vld [vmem:[%s7280 + $0x60] sm:$0xff]
    %v7294 = vld [vmem:[%s7280 + $0x68] sm:$0xff]
    %v7295 = vld [vmem:[%s7280 + $0x70] sm:$0xff]
    %v7296 = vld [vmem:[%s7280 + $0x78] sm:$0xff]
    %s7297 = scalar_lea.vmem %s57, 1
    %v7298 = vld [vmem:[%s7297] sm:$0x1]
    %v7300 = vlaneseq
    %v7301 = vshrl.u32 %v7300, 7
    %v7302 = vsub.s32 0, %v7301
    %v7303 = vrot.slane %v7298, %v7302
    %7305 = vmatprep.subr.mxu0 0.0
    %7306 = vmatpush1.msra.mxu0 %v7281
    %7307 = vmatprep.subr.mxu0 0.0
    %7308 = vmatpush1.msra.mxu0 %v7282
    %7309 = vmatprep.subr.mxu0 0.0
    %7310 = vmatpush1.msra.mxu0 %v7283
    %7311 = vmatprep.subr.mxu0 0.0
    %7312 = vmatpush1.msra.mxu0 %v7284
    %7313 = vmatprep.subr.mxu0 0.0
    %7314 = vmatpush1.msra.mxu0 %v7285
    %7315 = vmatprep.subr.mxu0 0.0
    %7316 = vmatpush1.msra.mxu0 %v7286
    %7317 = vmatprep.subr.mxu0 0.0
    %7318 = vmatpush1.msra.mxu0 %v7287
    %7319 = vmatprep.subr.mxu0 0.0
    %7320 = vmatpush1.msra.mxu0 %v7288
    %7321 = vmatprep.subr.mxu0 0.0
    %7322 = vmatpush1.msra.mxu0 %v7289
    %7323 = vmatprep.subr.mxu0 0.0
    %7324 = vmatpush1.msra.mxu0 %v7290
    %7325 = vmatprep.subr.mxu0 0.0
    %7326 = vmatpush1.msra.mxu0 %v7291
    %7327 = vmatprep.subr.mxu0 0.0
    %7328 = vmatpush1.msra.mxu0 %v7292
    %7329 = vmatprep.subr.mxu0 0.0
    %7330 = vmatpush1.msra.mxu0 %v7293
    %7331 = vmatprep.subr.mxu0 0.0
    %7332 = vmatpush1.msra.mxu0 %v7294
    %7333 = vmatprep.subr.mxu0 0.0
    %7334 = vmatpush1.msra.mxu0 %v7295
    %7335 = vmatprep.subr.mxu0 0.0
    %7336 = vmatpush1.msra.mxu0 %v7296
    %7337 = vmatprep.subr.mxu0 0.0
    %7338 = vmatpush1.msra.mxu0 0.0
    %7339 = vmatprep.subr.mxu0 0.0
    %7340 = vmatpush1.msra.mxu0 0.0
    %7341 = vmatprep.subr.mxu0 0.0
    %7342 = vmatpush1.msra.mxu0 0.0
    %7343 = vmatprep.subr.mxu0 0.0
    %7344 = vmatpush1.msra.mxu0 0.0
    %7345 = vmatprep.subr.mxu0 0.0
    %7346 = vmatpush1.msra.mxu0 0.0
    %7347 = vmatprep.subr.mxu0 0.0
    %7348 = vmatpush1.msra.mxu0 0.0
    %7349 = vmatprep.subr.mxu0 0.0
    %7350 = vmatpush1.msra.mxu0 0.0
    %7351 = vmatprep.subr.mxu0 0.0
    %7352 = vmatpush1.msra.mxu0 0.0
    %7353 = vmatprep.subr.mxu0 0.0
    %7354 = vmatpush1.msra.mxu0 0.0
    %7355 = vmatprep.subr.mxu0 0.0
    %7356 = vmatpush1.msra.mxu0 0.0
    %7357 = vmatprep.subr.mxu0 0.0
    %7358 = vmatpush1.msra.mxu0 0.0
    %7359 = vmatprep.subr.mxu0 0.0
    %7360 = vmatpush1.msra.mxu0 0.0
    %7361 = vmatprep.subr.mxu0 0.0
    %7362 = vmatpush1.msra.mxu0 0.0
    %7363 = vmatprep.subr.mxu0 0.0
    %7364 = vmatpush1.msra.mxu0 0.0
    %7365 = vmatprep.subr.mxu0 0.0
    %7366 = vmatpush1.msra.mxu0 0.0
    %7367 = vmatprep.subr.mxu0 0.0
    %7368 = vmatpush1.msra.mxu0 0.0
    %7369 = vmatprep.mubr.f32.mxu0 0.0
    %7370 = vmatmul.mubr.f32.gmra.mrb[0].mxu0 %v7277
    %v7371 = vpop.f32.mrb[0].mxu0
    %v7372 = vadd.f32 %v7303, %v7371
    %v7373 = vpop.f32.mrb[0].mxu0
    %7374 = vmatprep.mubr.f32.mxu0 0.0
    %7375 = vmatmul.mubr.f32.gmra.mrb[0].mxu0 %v7278
    %v7376 = vpop.f32.mrb[0].mxu0
    %v7377 = vadd.f32 %v7303, %v7376
    %v7378 = vpop.f32.mrb[0].mxu0
    %7379 = vmatprep.mubr.f32.mxu0 0.0
    %7380 = vmatmul.mubr.f32.gmra.mrb[0].mxu0 %v7279
    %v7381 = vpop.f32.mrb[0].mxu0
    %v7382 = vadd.f32 %v7303, %v7381
    %v7383 = vpop.f32.mrb[0].mxu0
    %7384 = vdwg.mxu0
    %7386 = vset.pattern.permute.xlu0 0
    %7387 = vperm.xlu0 %7386, %v7372
    %v7388 = vpop.permute.xlu0 %7387
    %7391 = vset.pattern.permute.xlu0 0
    %7392 = vperm.xlu0 %7391, %v7377
    %v7393 = vpop.permute.xlu0 %7392
    %7396 = vset.pattern.permute.xlu0 0
    %7397 = vperm.xlu0 %7396, %v7382
    %v7398 = vpop.permute.xlu0 %7397
    %vm7400 = vcmp.gt.f32.partialorder %v7372, %v7388
    %vm7401 = vcmp.gt.f32.partialorder %v7377, %v7393
    %vm7402 = vcmp.gt.f32.partialorder %v7382, %v7398
    %v7403 = vsel %vm7400, 1, 0
    %v7404 = vsel %vm7401, 1, 0
    %v7405 = vsel %vm7402, 1, 0
    %v7406 = vcvt.s32.f32 %v7403
    %v7407 = vcvt.s32.f32 %v7404
    %v7408 = vcvt.s32.f32 %v7405
    %v7409 = vsel %vm4357, %v7406, 0.0
    %7410 = vadd.xlane.f32.xlu0 %v7409
    %v7411 = vpop.xlane.xlu0 %7410
    %v7412 = vsel %vm4357, %v7407, 0.0
    %7413 = vadd.xlane.f32.xlu0 %v7412
    %v7414 = vpop.xlane.xlu0 %7413
    %v7415 = vsel %vm4364, %v7408, 0.0
    %7416 = vadd.xlane.f32.xlu0 %v7415
    %v7417 = vpop.xlane.xlu0 %7416
    %vm7418 = vcmp.eq.f32.partialorder %v7372, %v7388
    %vm7419 = vcmp.eq.f32.partialorder %v7377, %v7393
    %vm7420 = vcmp.eq.f32.partialorder %v7382, %v7398
    %vm7421 = vmand %vm7418, %vm4373
    %vm7422 = vmand %vm7419, %vm4373
    %vm7423 = vmand %vm7420, %vm4373
    %v7424 = vsel %vm7421, 1, 0
    %v7425 = vsel %vm7422, 1, 0
    %v7426 = vsel %vm7423, 1, 0
    %v7427 = vcvt.s32.f32 %v7424
    %v7428 = vcvt.s32.f32 %v7425
    %v7429 = vcvt.s32.f32 %v7426
    %v7430 = vsel %vm4357, %v7427, 0.0
    %7431 = vadd.xlane.f32.xlu0 %v7430
    %v7432 = vpop.xlane.xlu0 %7431
    %v7433 = vsel %vm4357, %v7428, 0.0
    %7434 = vadd.xlane.f32.xlu0 %v7433
    %v7435 = vpop.xlane.xlu0 %7434
    %v7436 = vsel %vm4364, %v7429, 0.0
    %7437 = vadd.xlane.f32.xlu0 %v7436
    %v7438 = vpop.xlane.xlu0 %7437
    %v7439 = vadd.f32 %v7411, %v7432
    %v7440 = vadd.f32 %v7414, %v7435
    %v7441 = vadd.f32 %v7417, %v7438
    %vm7442 = vcmp.lt.f32.partialorder %v7439, 2.0
    %vm7443 = vcmp.lt.f32.partialorder %v7440, 2.0
    %vm7444 = vcmp.lt.f32.partialorder %v7441, 2.0
    %v7445 = vsel %vm7442, 1, 0
    %v7446 = vsel %vm7443, 1, 0
    %v7447 = vsel %vm7444, 1, 0
    %v7448 = vcvt.s32.f32 %v7445
    %v7449 = vcvt.s32.f32 %v7446
    %v7450 = vcvt.s32.f32 %v7447
    %v7451 = vmul.f32 %v7448, %v4406
    %v7452 = vmul.f32 %v7449, %v4406
    %v7453 = vmul.f32 %v7450, %v4406
    %v7454 = vadd.f32 %v7451, 0.0
    %v7455 = vadd.f32 %v7452, 0.0
    %v7456 = vadd.f32 %v7453, 0.0
    %7457 = vset.pattern.permute.xlu0 1
    %7458 = vperm.xlu0 %7457, %v7372
    %v7459 = vpop.permute.xlu0 %7458
    %7461 = vset.pattern.permute.xlu0 1
    %7462 = vperm.xlu0 %7461, %v7377
    %v7463 = vpop.permute.xlu0 %7462
    %7465 = vset.pattern.permute.xlu0 1
    %7466 = vperm.xlu0 %7465, %v7382
    %v7467 = vpop.permute.xlu0 %7466
    %vm7469 = vcmp.gt.f32.partialorder %v7372, %v7459
    %vm7470 = vcmp.gt.f32.partialorder %v7377, %v7463
    %vm7471 = vcmp.gt.f32.partialorder %v7382, %v7467
    %v7472 = vsel %vm7469, 1, 0
    %v7473 = vsel %vm7470, 1, 0
    %v7474 = vsel %vm7471, 1, 0
    %v7475 = vcvt.s32.f32 %v7472
    %v7476 = vcvt.s32.f32 %v7473
    %v7477 = vcvt.s32.f32 %v7474
    %v7478 = vsel %vm4357, %v7475, 0.0
    %7479 = vadd.xlane.f32.xlu0 %v7478
    %v7480 = vpop.xlane.xlu0 %7479
    %v7481 = vsel %vm4357, %v7476, 0.0
    %7482 = vadd.xlane.f32.xlu0 %v7481
    %v7483 = vpop.xlane.xlu0 %7482
    %v7484 = vsel %vm4364, %v7477, 0.0
    %7485 = vadd.xlane.f32.xlu0 %v7484
    %v7486 = vpop.xlane.xlu0 %7485
    %vm7487 = vcmp.eq.f32.partialorder %v7372, %v7459
    %vm7488 = vcmp.eq.f32.partialorder %v7377, %v7463
    %vm7489 = vcmp.eq.f32.partialorder %v7382, %v7467
    %vm7490 = vmand %vm7487, %vm4448
    %vm7491 = vmand %vm7488, %vm4448
    %vm7492 = vmand %vm7489, %vm4448
    %v7493 = vsel %vm7490, 1, 0
    %v7494 = vsel %vm7491, 1, 0
    %v7495 = vsel %vm7492, 1, 0
    %v7496 = vcvt.s32.f32 %v7493
    %v7497 = vcvt.s32.f32 %v7494
    %v7498 = vcvt.s32.f32 %v7495
    %v7499 = vsel %vm4357, %v7496, 0.0
    %7500 = vadd.xlane.f32.xlu0 %v7499
    %v7501 = vpop.xlane.xlu0 %7500
    %v7502 = vsel %vm4357, %v7497, 0.0
    %7503 = vadd.xlane.f32.xlu0 %v7502
    %v7504 = vpop.xlane.xlu0 %7503
    %v7505 = vsel %vm4364, %v7498, 0.0
    %7506 = vadd.xlane.f32.xlu0 %v7505
    %v7507 = vpop.xlane.xlu0 %7506
    %v7508 = vadd.f32 %v7480, %v7501
    %v7509 = vadd.f32 %v7483, %v7504
    %v7510 = vadd.f32 %v7486, %v7507
    %vm7511 = vcmp.lt.f32.partialorder %v7508, 2.0
    %vm7512 = vcmp.lt.f32.partialorder %v7509, 2.0
    %vm7513 = vcmp.lt.f32.partialorder %v7510, 2.0
    %v7514 = vsel %vm7511, 1, 0
    %v7515 = vsel %vm7512, 1, 0
    %v7516 = vsel %vm7513, 1, 0
    %v7517 = vcvt.s32.f32 %v7514
    %v7518 = vcvt.s32.f32 %v7515
    %v7519 = vcvt.s32.f32 %v7516
    %v7520 = vmul.f32 %v7517, %v4481
    %v7521 = vmul.f32 %v7518, %v4481
    %v7522 = vmul.f32 %v7519, %v4481
    %v7523 = vadd.f32 %v7454, %v7520
    %v7524 = vadd.f32 %v7455, %v7521
    %v7525 = vadd.f32 %v7456, %v7522
    %7526 = vset.pattern.permute.xlu0 2
    %7527 = vperm.xlu0 %7526, %v7372
    %v7528 = vpop.permute.xlu0 %7527
    %7530 = vset.pattern.permute.xlu0 2
    %7531 = vperm.xlu0 %7530, %v7377
    %v7532 = vpop.permute.xlu0 %7531
    %7534 = vset.pattern.permute.xlu0 2
    %7535 = vperm.xlu0 %7534, %v7382
    %v7536 = vpop.permute.xlu0 %7535
    %vm7538 = vcmp.gt.f32.partialorder %v7372, %v7528
    %vm7539 = vcmp.gt.f32.partialorder %v7377, %v7532
    %vm7540 = vcmp.gt.f32.partialorder %v7382, %v7536
    %v7541 = vsel %vm7538, 1, 0
    %v7542 = vsel %vm7539, 1, 0
    %v7543 = vsel %vm7540, 1, 0
    %v7544 = vcvt.s32.f32 %v7541
    %v7545 = vcvt.s32.f32 %v7542
    %v7546 = vcvt.s32.f32 %v7543
    %v7547 = vsel %vm4357, %v7544, 0.0
    %7548 = vadd.xlane.f32.xlu0 %v7547
    %v7549 = vpop.xlane.xlu0 %7548
    %v7550 = vsel %vm4357, %v7545, 0.0
    %7551 = vadd.xlane.f32.xlu0 %v7550
    %v7552 = vpop.xlane.xlu0 %7551
    %v7553 = vsel %vm4364, %v7546, 0.0
    %7554 = vadd.xlane.f32.xlu0 %v7553
    %v7555 = vpop.xlane.xlu0 %7554
    %vm7556 = vcmp.eq.f32.partialorder %v7372, %v7528
    %vm7557 = vcmp.eq.f32.partialorder %v7377, %v7532
    %vm7558 = vcmp.eq.f32.partialorder %v7382, %v7536
    %vm7559 = vmand %vm7556, %vm4523
    %vm7560 = vmand %vm7557, %vm4523
    %vm7561 = vmand %vm7558, %vm4523
    %v7562 = vsel %vm7559, 1, 0
    %v7563 = vsel %vm7560, 1, 0
    %v7564 = vsel %vm7561, 1, 0
    %v7565 = vcvt.s32.f32 %v7562
    %v7566 = vcvt.s32.f32 %v7563
    %v7567 = vcvt.s32.f32 %v7564
    %v7568 = vsel %vm4357, %v7565, 0.0
    %7569 = vadd.xlane.f32.xlu0 %v7568
    %v7570 = vpop.xlane.xlu0 %7569
    %v7571 = vsel %vm4357, %v7566, 0.0
    %7572 = vadd.xlane.f32.xlu0 %v7571
    %v7573 = vpop.xlane.xlu0 %7572
    %v7574 = vsel %vm4364, %v7567, 0.0
    %7575 = vadd.xlane.f32.xlu0 %v7574
    %v7576 = vpop.xlane.xlu0 %7575
    %v7577 = vadd.f32 %v7549, %v7570
    %v7578 = vadd.f32 %v7552, %v7573
    %v7579 = vadd.f32 %v7555, %v7576
    %vm7580 = vcmp.lt.f32.partialorder %v7577, 2.0
    %vm7581 = vcmp.lt.f32.partialorder %v7578, 2.0
    %vm7582 = vcmp.lt.f32.partialorder %v7579, 2.0
    %v7583 = vsel %vm7580, 1, 0
    %v7584 = vsel %vm7581, 1, 0
    %v7585 = vsel %vm7582, 1, 0
    %v7586 = vcvt.s32.f32 %v7583
    %v7587 = vcvt.s32.f32 %v7584
    %v7588 = vcvt.s32.f32 %v7585
    %v7589 = vmul.f32 %v7586, %v4556
    %v7590 = vmul.f32 %v7587, %v4556
    %v7591 = vmul.f32 %v7588, %v4556
    %v7592 = vadd.f32 %v7523, %v7589
    %v7593 = vadd.f32 %v7524, %v7590
    %v7594 = vadd.f32 %v7525, %v7591
    %7595 = vset.pattern.permute.xlu0 3
    %7596 = vperm.xlu0 %7595, %v7372
    %v7597 = vpop.permute.xlu0 %7596
    %7599 = vset.pattern.permute.xlu0 3
    %7600 = vperm.xlu0 %7599, %v7377
    %v7601 = vpop.permute.xlu0 %7600
    %7603 = vset.pattern.permute.xlu0 3
    %7604 = vperm.xlu0 %7603, %v7382
    %v7605 = vpop.permute.xlu0 %7604
    %vm7607 = vcmp.gt.f32.partialorder %v7372, %v7597
    %vm7608 = vcmp.gt.f32.partialorder %v7377, %v7601
    %vm7609 = vcmp.gt.f32.partialorder %v7382, %v7605
    %v7610 = vsel %vm7607, 1, 0
    %v7611 = vsel %vm7608, 1, 0
    %v7612 = vsel %vm7609, 1, 0
    %v7613 = vcvt.s32.f32 %v7610
    %v7614 = vcvt.s32.f32 %v7611
    %v7615 = vcvt.s32.f32 %v7612
    %v7616 = vsel %vm4357, %v7613, 0.0
    %7617 = vadd.xlane.f32.xlu0 %v7616
    %v7618 = vpop.xlane.xlu0 %7617
    %v7619 = vsel %vm4357, %v7614, 0.0
    %7620 = vadd.xlane.f32.xlu0 %v7619
    %v7621 = vpop.xlane.xlu0 %7620
    %v7622 = vsel %vm4364, %v7615, 0.0
    %7623 = vadd.xlane.f32.xlu0 %v7622
    %v7624 = vpop.xlane.xlu0 %7623
    %vm7625 = vcmp.eq.f32.partialorder %v7372, %v7597
    %vm7626 = vcmp.eq.f32.partialorder %v7377, %v7601
    %vm7627 = vcmp.eq.f32.partialorder %v7382, %v7605
    %vm7628 = vmand %vm7625, %vm4598
    %vm7629 = vmand %vm7626, %vm4598
    %vm7630 = vmand %vm7627, %vm4598
    %v7631 = vsel %vm7628, 1, 0
    %v7632 = vsel %vm7629, 1, 0
    %v7633 = vsel %vm7630, 1, 0
    %v7634 = vcvt.s32.f32 %v7631
    %v7635 = vcvt.s32.f32 %v7632
    %v7636 = vcvt.s32.f32 %v7633
    %v7637 = vsel %vm4357, %v7634, 0.0
    %7638 = vadd.xlane.f32.xlu0 %v7637
    %v7639 = vpop.xlane.xlu0 %7638
    %v7640 = vsel %vm4357, %v7635, 0.0
    %7641 = vadd.xlane.f32.xlu0 %v7640
    %v7642 = vpop.xlane.xlu0 %7641
    %v7643 = vsel %vm4364, %v7636, 0.0
    %7644 = vadd.xlane.f32.xlu0 %v7643
    %v7645 = vpop.xlane.xlu0 %7644
    %v7646 = vadd.f32 %v7618, %v7639
    %v7647 = vadd.f32 %v7621, %v7642
    %v7648 = vadd.f32 %v7624, %v7645
    %vm7649 = vcmp.lt.f32.partialorder %v7646, 2.0
    %vm7650 = vcmp.lt.f32.partialorder %v7647, 2.0
    %vm7651 = vcmp.lt.f32.partialorder %v7648, 2.0
    %v7652 = vsel %vm7649, 1, 0
    %v7653 = vsel %vm7650, 1, 0
    %v7654 = vsel %vm7651, 1, 0
    %v7655 = vcvt.s32.f32 %v7652
    %v7656 = vcvt.s32.f32 %v7653
    %v7657 = vcvt.s32.f32 %v7654
    %v7658 = vmul.f32 %v7655, %v4631
    %v7659 = vmul.f32 %v7656, %v4631
    %v7660 = vmul.f32 %v7657, %v4631
    %v7661 = vadd.f32 %v7592, %v7658
    %v7662 = vadd.f32 %v7593, %v7659
    %v7663 = vadd.f32 %v7594, %v7660
    %vm7664 = vcmp.gt.f32.partialorder %v7661, 0.5
    %vm7665 = vcmp.gt.f32.partialorder %v7662, 0.5
    %vm7666 = vcmp.gt.f32.partialorder %v7663, 0.5
    %v7667 = vsel %vm7664, %v7372, -1e+30
    %v7668 = vsel %vm7665, %v7377, -1e+30
    %v7669 = vsel %vm7666, %v7382, -1e+30
    %v7670 = vsel %vm4357, %v7667, -inf
    %7671 = vmax.xlane.f32.xlu0 %v7670
    %v7672 = vpop.xlane.xlu0 %7671
    %v7673 = vsel %vm4357, %v7668, -inf
    %7674 = vmax.xlane.f32.xlu0 %v7673
    %v7675 = vpop.xlane.xlu0 %7674
    %v7676 = vsel %vm4364, %v7669, -inf
    %7677 = vmax.xlane.f32.xlu0 %v7676
    %v7678 = vpop.xlane.xlu0 %7677
    %v7679 = vsub.f32 %v7667, %v7672
    %v7680 = vsub.f32 %v7668, %v7675
    %v7681 = vsub.f32 %v7669, %v7678
    %v7682 = vmul.f32 %v7679, 1.442695
    %v7683 = vpow.pop %v7682
    %v7684 = vmul.f32 %v7680, 1.442695
    %v7685 = vpow.pop %v7684
    %v7686 = vmul.f32 %v7681, 1.442695
    %v7687 = vpow.pop %v7686
    %v7688 = vsel %vm4357, %v7683, 0.0
    %7689 = vadd.xlane.f32.xlu0 %v7688
    %v7690 = vpop.xlane.xlu0 %7689
    %v7691 = vsel %vm4357, %v7685, 0.0
    %7692 = vadd.xlane.f32.xlu0 %v7691
    %v7693 = vpop.xlane.xlu0 %7692
    %v7694 = vsel %vm4364, %v7687, 0.0
    %7695 = vadd.xlane.f32.xlu0 %v7694
    %v7696 = vpop.xlane.xlu0 %7695
    %v7697 = vrcp.pop %v7690
    %v7698 = vrcp.pop %v7693
    %v7699 = vrcp.pop %v7696
    %v7700 = vmul.f32 %v7683, %v7697
    %v7701 = vmul.f32 %v7685, %v7698
    %v7702 = vmul.f32 %v7687, %v7699
    %v7703 = vpack.c.bf16 %v7278, %v7277
    %v7704 = vpack.c.bf16 %v7279, %v7279
    %s7705 = scalar_lea.vmem %s59, 256
    %v7706 = vld [vmem:[%s7705] sm:$0xff]
    %v7707 = vld [vmem:[%s7705 + $0x8] sm:$0xff]
    %v7708 = vld [vmem:[%s7705 + $0x10] sm:$0xff]
    %v7709 = vld [vmem:[%s7705 + $0x18] sm:$0xff]
    %v7710 = vld [vmem:[%s7705 + $0x20] sm:$0xff]
    %v7711 = vld [vmem:[%s7705 + $0x28] sm:$0xff]
    %v7712 = vld [vmem:[%s7705 + $0x30] sm:$0xff]
    %v7713 = vld [vmem:[%s7705 + $0x38] sm:$0xff]
    %v7714 = vld [vmem:[%s7705 + $0x40] sm:$0xff]
    %v7715 = vld [vmem:[%s7705 + $0x48] sm:$0xff]
    %v7716 = vld [vmem:[%s7705 + $0x50] sm:$0xff]
    %v7717 = vld [vmem:[%s7705 + $0x58] sm:$0xff]
    %v7718 = vld [vmem:[%s7705 + $0x60] sm:$0xff]
    %v7719 = vld [vmem:[%s7705 + $0x68] sm:$0xff]
    %v7720 = vld [vmem:[%s7705 + $0x70] sm:$0xff]
    %v7721 = vld [vmem:[%s7705 + $0x78] sm:$0xff]
    %v7722 = vld [vmem:[%s7705 + $0x80] sm:$0xff]
    %v7723 = vld [vmem:[%s7705 + $0x88] sm:$0xff]
    %v7724 = vld [vmem:[%s7705 + $0x90] sm:$0xff]
    %v7725 = vld [vmem:[%s7705 + $0x98] sm:$0xff]
    %v7726 = vld [vmem:[%s7705 + $0xa0] sm:$0xff]
    %v7727 = vld [vmem:[%s7705 + $0xa8] sm:$0xff]
    %v7728 = vld [vmem:[%s7705 + $0xb0] sm:$0xff]
    %v7729 = vld [vmem:[%s7705 + $0xb8] sm:$0xff]
    %v7730 = vld [vmem:[%s7705 + $0xc0] sm:$0xff]
    %v7731 = vld [vmem:[%s7705 + $0xc8] sm:$0xff]
    %v7732 = vld [vmem:[%s7705 + $0xd0] sm:$0xff]
    %v7733 = vld [vmem:[%s7705 + $0xd8] sm:$0xff]
    %v7734 = vld [vmem:[%s7705 + $0xe0] sm:$0xff]
    %v7735 = vld [vmem:[%s7705 + $0xe8] sm:$0xff]
    %v7736 = vld [vmem:[%s7705 + $0xf0] sm:$0xff]
    %v7737 = vld [vmem:[%s7705 + $0xf8] sm:$0xff]
    %s7738 = scalar_lea.vmem %s61, 4
    %v7739 = vld [vmem:[%s7738] sm:$0xf]
    %v7741 = vlaneseq
    %v7742 = vshrl.u32 %v7741, 7
    %v7743 = vsub.s32 0, %v7742
    %v7744 = vrot.slane %v7739, %v7743
    %v7745 = vlaneseq
    %v7746 = vshrl.u32 %v7745, 7
    %v7747 = vsub.s32 1, %v7746
    %v7748 = vrot.slane %v7739, %v7747
    %v7749 = vlaneseq
    %v7750 = vshrl.u32 %v7749, 7
    %v7751 = vsub.s32 2, %v7750
    %v7752 = vrot.slane %v7739, %v7751
    %v7753 = vlaneseq
    %v7754 = vshrl.u32 %v7753, 7
    %v7755 = vsub.s32 3, %v7754
    %v7756 = vrot.slane %v7739, %v7755
    %v7793 = vunpack.c.l.b16 %v7706
    %v7794 = vunpack.c.h.b16 %v7706
    %v7795 = vunpack.c.l.b16 %v7707
    %v7796 = vunpack.c.h.b16 %v7707
    %v7797 = vunpack.c.l.b16 %v7708
    %v7798 = vunpack.c.h.b16 %v7708
    %v7799 = vunpack.c.l.b16 %v7709
    %v7800 = vunpack.c.h.b16 %v7709
    %v7801 = vunpack.c.l.b16 %v7710
    %v7802 = vunpack.c.h.b16 %v7710
    %v7803 = vunpack.c.l.b16 %v7711
    %v7804 = vunpack.c.h.b16 %v7711
    %v7805 = vunpack.c.l.b16 %v7712
    %v7806 = vunpack.c.h.b16 %v7712
    %v7807 = vunpack.c.l.b16 %v7713
    %v7808 = vunpack.c.h.b16 %v7713
    %v7809 = vunpack.c.l.b16 %v7714
    %v7810 = vunpack.c.h.b16 %v7714
    %v7811 = vunpack.c.l.b16 %v7715
    %v7812 = vunpack.c.h.b16 %v7715
    %v7813 = vunpack.c.l.b16 %v7716
    %v7814 = vunpack.c.h.b16 %v7716
    %v7815 = vunpack.c.l.b16 %v7717
    %v7816 = vunpack.c.h.b16 %v7717
    %v7817 = vunpack.c.l.b16 %v7718
    %v7818 = vunpack.c.h.b16 %v7718
    %v7819 = vunpack.c.l.b16 %v7719
    %v7820 = vunpack.c.h.b16 %v7719
    %v7821 = vunpack.c.l.b16 %v7720
    %v7822 = vunpack.c.h.b16 %v7720
    %v7823 = vunpack.c.l.b16 %v7721
    %v7824 = vunpack.c.h.b16 %v7721
    %v7825 = vunpack.c.l.b16 %v7722
    %v7826 = vunpack.c.h.b16 %v7722
    %v7827 = vunpack.c.l.b16 %v7723
    %v7828 = vunpack.c.h.b16 %v7723
    %v7829 = vunpack.c.l.b16 %v7724
    %v7830 = vunpack.c.h.b16 %v7724
    %v7831 = vunpack.c.l.b16 %v7725
    %v7832 = vunpack.c.h.b16 %v7725
    %v7833 = vunpack.c.l.b16 %v7726
    %v7834 = vunpack.c.h.b16 %v7726
    %v7835 = vunpack.c.l.b16 %v7727
    %v7836 = vunpack.c.h.b16 %v7727
    %v7837 = vunpack.c.l.b16 %v7728
    %v7838 = vunpack.c.h.b16 %v7728
    %v7839 = vunpack.c.l.b16 %v7729
    %v7840 = vunpack.c.h.b16 %v7729
    %v7841 = vunpack.c.l.b16 %v7730
    %v7842 = vunpack.c.h.b16 %v7730
    %v7843 = vunpack.c.l.b16 %v7731
    %v7844 = vunpack.c.h.b16 %v7731
    %v7845 = vunpack.c.l.b16 %v7732
    %v7846 = vunpack.c.h.b16 %v7732
    %v7847 = vunpack.c.l.b16 %v7733
    %v7848 = vunpack.c.h.b16 %v7733
    %v7849 = vunpack.c.l.b16 %v7734
    %v7850 = vunpack.c.h.b16 %v7734
    %v7851 = vunpack.c.l.b16 %v7735
    %v7852 = vunpack.c.h.b16 %v7735
    %v7853 = vunpack.c.l.b16 %v7736
    %v7854 = vunpack.c.h.b16 %v7736
    %v7855 = vunpack.c.l.b16 %v7737
    %v7856 = vunpack.c.h.b16 %v7737
    %v7857 = vpack.c.b16 %v7797, %v7793
    %v7858 = vpack.c.b16 %v7798, %v7794
    %v7859 = vpack.c.b16 %v7799, %v7795
    %v7860 = vpack.c.b16 %v7800, %v7796
    %v7861 = vpack.c.b16 %v7805, %v7801
    %v7862 = vpack.c.b16 %v7806, %v7802
    %v7863 = vpack.c.b16 %v7807, %v7803
    %v7864 = vpack.c.b16 %v7808, %v7804
    %v7865 = vpack.c.b16 %v7813, %v7809
    %v7866 = vpack.c.b16 %v7814, %v7810
    %v7867 = vpack.c.b16 %v7815, %v7811
    %v7868 = vpack.c.b16 %v7816, %v7812
    %v7869 = vpack.c.b16 %v7821, %v7817
    %v7870 = vpack.c.b16 %v7822, %v7818
    %v7871 = vpack.c.b16 %v7823, %v7819
    %v7872 = vpack.c.b16 %v7824, %v7820
    %v7873 = vpack.c.b16 %v7829, %v7825
    %v7874 = vpack.c.b16 %v7830, %v7826
    %v7875 = vpack.c.b16 %v7831, %v7827
    %v7876 = vpack.c.b16 %v7832, %v7828
    %v7877 = vpack.c.b16 %v7837, %v7833
    %v7878 = vpack.c.b16 %v7838, %v7834
    %v7879 = vpack.c.b16 %v7839, %v7835
    %v7880 = vpack.c.b16 %v7840, %v7836
    %v7881 = vpack.c.b16 %v7845, %v7841
    %v7882 = vpack.c.b16 %v7846, %v7842
    %v7883 = vpack.c.b16 %v7847, %v7843
    %v7884 = vpack.c.b16 %v7848, %v7844
    %v7885 = vpack.c.b16 %v7853, %v7849
    %v7886 = vpack.c.b16 %v7854, %v7850
    %v7887 = vpack.c.b16 %v7855, %v7851
    %v7888 = vpack.c.b16 %v7856, %v7852
    %7921 = vmatprep.subr.bf16.mxu0 %v7858
    %7922 = vmatpush1.bf16.msra.mxu0 %v7857
    %7923 = vmatprep.subr.bf16.mxu0 %v7862
    %7924 = vmatpush1.bf16.msra.mxu0 %v7861
    %7925 = vmatprep.subr.bf16.mxu0 %v7866
    %7926 = vmatpush1.bf16.msra.mxu0 %v7865
    %7927 = vmatprep.subr.bf16.mxu0 %v7870
    %7928 = vmatpush1.bf16.msra.mxu0 %v7869
    %7929 = vmatprep.subr.bf16.mxu0 %v7874
    %7930 = vmatpush1.bf16.msra.mxu0 %v7873
    %7931 = vmatprep.subr.bf16.mxu0 %v7878
    %7932 = vmatpush1.bf16.msra.mxu0 %v7877
    %7933 = vmatprep.subr.bf16.mxu0 %v7882
    %7934 = vmatpush1.bf16.msra.mxu0 %v7881
    %7935 = vmatprep.subr.bf16.mxu0 %v7886
    %7936 = vmatpush1.bf16.msra.mxu0 %v7885
    %7937 = vmatprep.subr.bf16.mxu0 0
    %7938 = vmatpush1.bf16.msra.mxu0 0
    %7939 = vmatprep.subr.bf16.mxu0 0
    %7940 = vmatpush1.bf16.msra.mxu0 0
    %7941 = vmatprep.subr.bf16.mxu0 0
    %7942 = vmatpush1.bf16.msra.mxu0 0
    %7943 = vmatprep.subr.bf16.mxu0 0
    %7944 = vmatpush1.bf16.msra.mxu0 0
    %7945 = vmatprep.subr.bf16.mxu0 0
    %7946 = vmatpush1.bf16.msra.mxu0 0
    %7947 = vmatprep.subr.bf16.mxu0 0
    %7948 = vmatpush1.bf16.msra.mxu0 0
    %7949 = vmatprep.subr.bf16.mxu0 0
    %7950 = vmatpush1.bf16.msra.mxu0 0
    %7951 = vmatprep.subr.bf16.mxu0 0
    %7952 = vmatpush1.bf16.msra.mxu0 0
    %7953 = vmatprep.mubr.bf16.mxu0 0
    %7954 = vmatmul.mubr.bf16.gmra.mrb[0].mxu0 %v7703
    %v7955 = vpop.f32.mrb[0].mxu0
    %v7956 = vadd.f32 %v7744, %v7955
    %v7957 = vpop.f32.mrb[0].mxu0
    %v7958 = vadd.f32 %v7748, %v7957
    %v7959 = vpop.f32.mrb[0].mxu0
    %v7960 = vadd.f32 %v7744, %v7959
    %v7961 = vpop.f32.mrb[0].mxu0
    %v7962 = vadd.f32 %v7748, %v7961
    %7963 = vmatprep.mubr.bf16.mxu0 0
    %7964 = vmatmul.mubr.bf16.gmra.mrb[0].mxu0 %v7704
    %v7965 = vpop.f32.mrb[0].mxu0
    %v7966 = vadd.f32 %v7744, %v7965
    %v7967 = vpop.f32.mrb[0].mxu0
    %v7968 = vadd.f32 %v7748, %v7967
    %v7969 = vpop.f32.mrb[0].mxu0
    %v7970 = vpop.f32.mrb[0].mxu0
    %7971 = vdwg.mxu0
    %7972 = vmatprep.subr.bf16.mxu0 %v7860
    %7973 = vmatpush1.bf16.msra.mxu0 %v7859
    %7974 = vmatprep.subr.bf16.mxu0 %v7864
    %7975 = vmatpush1.bf16.msra.mxu0 %v7863
    %7976 = vmatprep.subr.bf16.mxu0 %v7868
    %7977 = vmatpush1.bf16.msra.mxu0 %v7867
    %7978 = vmatprep.subr.bf16.mxu0 %v7872
    %7979 = vmatpush1.bf16.msra.mxu0 %v7871
    %7980 = vmatprep.subr.bf16.mxu0 %v7876
    %7981 = vmatpush1.bf16.msra.mxu0 %v7875
    %7982 = vmatprep.subr.bf16.mxu0 %v7880
    %7983 = vmatpush1.bf16.msra.mxu0 %v7879
    %7984 = vmatprep.subr.bf16.mxu0 %v7884
    %7985 = vmatpush1.bf16.msra.mxu0 %v7883
    %7986 = vmatprep.subr.bf16.mxu0 %v7888
    %7987 = vmatpush1.bf16.msra.mxu0 %v7887
    %7988 = vmatprep.subr.bf16.mxu0 0
    %7989 = vmatpush1.bf16.msra.mxu0 0
    %7990 = vmatprep.subr.bf16.mxu0 0
    %7991 = vmatpush1.bf16.msra.mxu0 0
    %7992 = vmatprep.subr.bf16.mxu0 0
    %7993 = vmatpush1.bf16.msra.mxu0 0
    %7994 = vmatprep.subr.bf16.mxu0 0
    %7995 = vmatpush1.bf16.msra.mxu0 0
    %7996 = vmatprep.subr.bf16.mxu0 0
    %7997 = vmatpush1.bf16.msra.mxu0 0
    %7998 = vmatprep.subr.bf16.mxu0 0
    %7999 = vmatpush1.bf16.msra.mxu0 0
    %8000 = vmatprep.subr.bf16.mxu0 0
    %8001 = vmatpush1.bf16.msra.mxu0 0
    %8002 = vmatprep.subr.bf16.mxu0 0
    %8003 = vmatpush1.bf16.msra.mxu0 0
    %8004 = vmatprep.mubr.bf16.mxu0 0
    %8005 = vmatmul.mubr.bf16.gmra.mrb[0].mxu0 %v7703
    %v8006 = vpop.f32.mrb[0].mxu0
    %v8007 = vadd.f32 %v7752, %v8006
    %v8008 = vpop.f32.mrb[0].mxu0
    %v8009 = vadd.f32 %v7756, %v8008
    %v8010 = vpop.f32.mrb[0].mxu0
    %v8011 = vadd.f32 %v7752, %v8010
    %v8012 = vpop.f32.mrb[0].mxu0
    %v8013 = vadd.f32 %v7756, %v8012
    %8014 = vmatprep.mubr.bf16.mxu0 0
    %8015 = vmatmul.mubr.bf16.gmra.mrb[0].mxu0 %v7704
    %v8016 = vpop.f32.mrb[0].mxu0
    %v8017 = vadd.f32 %v7752, %v8016
    %v8018 = vpop.f32.mrb[0].mxu0
    %v8019 = vadd.f32 %v7756, %v8018
    %v8020 = vpop.f32.mrb[0].mxu0
    %v8021 = vpop.f32.mrb[0].mxu0
    %8022 = vdwg.mxu0
    %v8023 = vmul.f32 %v7956, %v7956
    %v8024 = vmul.f32 %v7958, %v7958
    %v8025 = vmul.f32 %v8007, %v8007
    %v8026 = vmul.f32 %v8009, %v8009
    %v8027 = vmul.f32 %v7960, %v7960
    %v8028 = vmul.f32 %v7962, %v7962
    %v8029 = vmul.f32 %v8011, %v8011
    %v8030 = vmul.f32 %v8013, %v8013
    %v8031 = vmul.f32 %v7966, %v7966
    %v8032 = vmul.f32 %v7968, %v7968
    %v8033 = vmul.f32 %v8017, %v8017
    %v8034 = vmul.f32 %v8019, %v8019
    %v8035 = vmul.f32 %v7956, %v8023
    %v8036 = vmul.f32 %v7958, %v8024
    %v8037 = vmul.f32 %v8007, %v8025
    %v8038 = vmul.f32 %v8009, %v8026
    %v8039 = vmul.f32 %v7960, %v8027
    %v8040 = vmul.f32 %v7962, %v8028
    %v8041 = vmul.f32 %v8011, %v8029
    %v8042 = vmul.f32 %v8013, %v8030
    %v8043 = vmul.f32 %v7966, %v8031
    %v8044 = vmul.f32 %v7968, %v8032
    %v8045 = vmul.f32 %v8017, %v8033
    %v8046 = vmul.f32 %v8019, %v8034
    %v8047 = vmul.f32 %v8035, 0.044715
    %v8048 = vmul.f32 %v8036, 0.044715
    %v8049 = vmul.f32 %v8037, 0.044715
    %v8050 = vmul.f32 %v8038, 0.044715
    %v8051 = vmul.f32 %v8039, 0.044715
    %v8052 = vmul.f32 %v8040, 0.044715
    %v8053 = vmul.f32 %v8041, 0.044715
    %v8054 = vmul.f32 %v8042, 0.044715
    %v8055 = vmul.f32 %v8043, 0.044715
    %v8056 = vmul.f32 %v8044, 0.044715
    %v8057 = vmul.f32 %v8045, 0.044715
    %v8058 = vmul.f32 %v8046, 0.044715
    %v8059 = vadd.f32 %v7956, %v8047
    %v8060 = vadd.f32 %v7958, %v8048
    %v8061 = vadd.f32 %v8007, %v8049
    %v8062 = vadd.f32 %v8009, %v8050
    %v8063 = vadd.f32 %v7960, %v8051
    %v8064 = vadd.f32 %v7962, %v8052
    %v8065 = vadd.f32 %v8011, %v8053
    %v8066 = vadd.f32 %v8013, %v8054
    %v8067 = vadd.f32 %v7966, %v8055
    %v8068 = vadd.f32 %v7968, %v8056
    %v8069 = vadd.f32 %v8017, %v8057
    %v8070 = vadd.f32 %v8019, %v8058
    %v8071 = vmul.f32 %v8059, 0.7978846
    %v8072 = vmul.f32 %v8060, 0.7978846
    %v8073 = vmul.f32 %v8061, 0.7978846
    %v8074 = vmul.f32 %v8062, 0.7978846
    %v8075 = vmul.f32 %v8063, 0.7978846
    %v8076 = vmul.f32 %v8064, 0.7978846
    %v8077 = vmul.f32 %v8065, 0.7978846
    %v8078 = vmul.f32 %v8066, 0.7978846
    %v8079 = vmul.f32 %v8067, 0.7978846
    %v8080 = vmul.f32 %v8068, 0.7978846
    %v8081 = vmul.f32 %v8069, 0.7978846
    %v8082 = vmul.f32 %v8070, 0.7978846
    %v8083 = vtanh.pop %v8071
    %v8084 = vtanh.pop %v8072
    %v8085 = vtanh.pop %v8073
    %v8086 = vtanh.pop %v8074
    %v8087 = vtanh.pop %v8075
    %v8088 = vtanh.pop %v8076
    %v8089 = vtanh.pop %v8077
    %v8090 = vtanh.pop %v8078
    %v8091 = vtanh.pop %v8079
    %v8092 = vtanh.pop %v8080
    %v8093 = vtanh.pop %v8081
    %v8094 = vtanh.pop %v8082
    %v8095 = vadd.f32 %v8083, 1.0
    %v8096 = vadd.f32 %v8084, 1.0
    %v8097 = vadd.f32 %v8085, 1.0
    %v8098 = vadd.f32 %v8086, 1.0
    %v8099 = vadd.f32 %v8087, 1.0
    %v8100 = vadd.f32 %v8088, 1.0
    %v8101 = vadd.f32 %v8089, 1.0
    %v8102 = vadd.f32 %v8090, 1.0
    %v8103 = vadd.f32 %v8091, 1.0
    %v8104 = vadd.f32 %v8092, 1.0
    %v8105 = vadd.f32 %v8093, 1.0
    %v8106 = vadd.f32 %v8094, 1.0
    %v8107 = vmul.f32 %v8095, 0.5
    %v8108 = vmul.f32 %v8096, 0.5
    %v8109 = vmul.f32 %v8097, 0.5
    %v8110 = vmul.f32 %v8098, 0.5
    %v8111 = vmul.f32 %v8099, 0.5
    %v8112 = vmul.f32 %v8100, 0.5
    %v8113 = vmul.f32 %v8101, 0.5
    %v8114 = vmul.f32 %v8102, 0.5
    %v8115 = vmul.f32 %v8103, 0.5
    %v8116 = vmul.f32 %v8104, 0.5
    %v8117 = vmul.f32 %v8105, 0.5
    %v8118 = vmul.f32 %v8106, 0.5
    %v8119 = vmul.f32 %v7956, %v8107
    %v8120 = vmul.f32 %v7958, %v8108
    %v8121 = vmul.f32 %v8007, %v8109
    %v8122 = vmul.f32 %v8009, %v8110
    %v8123 = vmul.f32 %v7960, %v8111
    %v8124 = vmul.f32 %v7962, %v8112
    %v8125 = vmul.f32 %v8011, %v8113
    %v8126 = vmul.f32 %v8013, %v8114
    %v8127 = vmul.f32 %v7966, %v8115
    %v8128 = vmul.f32 %v7968, %v8116
    %v8129 = vmul.f32 %v8017, %v8117
    %v8130 = vmul.f32 %v8019, %v8118
    %8132 = vset.pattern.permute.xlu0 0
    %8133 = vperm.xlu0 %8132, %v7700
    %v8134 = vpop.permute.xlu0 %8133
    %8137 = vset.pattern.permute.xlu0 0
    %8138 = vperm.xlu0 %8137, %v7701
    %v8139 = vpop.permute.xlu0 %8138
    %8142 = vset.pattern.permute.xlu0 0
    %8143 = vperm.xlu0 %8142, %v7702
    %v8144 = vpop.permute.xlu0 %8143
    %v8146 = vmul.f32 %v8119, %v8134
    %v8147 = vmul.f32 %v8123, %v8139
    %v8148 = vmul.f32 %v8127, %v8144
    %8149 = vset.pattern.permute.xlu0 1
    %8150 = vperm.xlu0 %8149, %v7700
    %v8151 = vpop.permute.xlu0 %8150
    %8153 = vset.pattern.permute.xlu0 1
    %8154 = vperm.xlu0 %8153, %v7701
    %v8155 = vpop.permute.xlu0 %8154
    %8157 = vset.pattern.permute.xlu0 1
    %8158 = vperm.xlu0 %8157, %v7702
    %v8159 = vpop.permute.xlu0 %8158
    %v8161 = vmul.f32 %v8120, %v8151
    %v8162 = vmul.f32 %v8124, %v8155
    %v8163 = vmul.f32 %v8128, %v8159
    %8164 = vset.pattern.permute.xlu0 2
    %8165 = vperm.xlu0 %8164, %v7700
    %v8166 = vpop.permute.xlu0 %8165
    %8168 = vset.pattern.permute.xlu0 2
    %8169 = vperm.xlu0 %8168, %v7701
    %v8170 = vpop.permute.xlu0 %8169
    %8172 = vset.pattern.permute.xlu0 2
    %8173 = vperm.xlu0 %8172, %v7702
    %v8174 = vpop.permute.xlu0 %8173
    %v8176 = vmul.f32 %v8121, %v8166
    %v8177 = vmul.f32 %v8125, %v8170
    %v8178 = vmul.f32 %v8129, %v8174
    %8179 = vset.pattern.permute.xlu0 3
    %8180 = vperm.xlu0 %8179, %v7700
    %v8181 = vpop.permute.xlu0 %8180
    %8183 = vset.pattern.permute.xlu0 3
    %8184 = vperm.xlu0 %8183, %v7701
    %v8185 = vpop.permute.xlu0 %8184
    %8187 = vset.pattern.permute.xlu0 3
    %8188 = vperm.xlu0 %8187, %v7702
    %v8189 = vpop.permute.xlu0 %8188
    %v8191 = vmul.f32 %v8122, %v8181
    %v8192 = vmul.f32 %v8126, %v8185
    %v8193 = vmul.f32 %v8130, %v8189
    %v8194 = vpack.c.bf16 %v8147, %v8146
    %v8195 = vpack.c.bf16 %v8162, %v8161
    %v8196 = vpack.c.bf16 %v8177, %v8176
    %v8197 = vpack.c.bf16 %v8192, %v8191
    %v8198 = vpack.c.bf16 %v8148, %v8148
    %v8199 = vpack.c.bf16 %v8163, %v8163
    %v8200 = vpack.c.bf16 %v8178, %v8178
    %v8201 = vpack.c.bf16 %v8193, %v8193
    %s8202 = scalar_lea.vmem %s63, 256
    %v8203 = vld [vmem:[%s8202] sm:$0xf]
    %v8204 = vld [vmem:[%s8202 + $0x4] sm:$0xf]
    %v8205 = vld [vmem:[%s8202 + $0x8] sm:$0xf]
    %v8206 = vld [vmem:[%s8202 + $0xc] sm:$0xf]
    %v8207 = vld [vmem:[%s8202 + $0x10] sm:$0xf]
    %v8208 = vld [vmem:[%s8202 + $0x14] sm:$0xf]
    %v8209 = vld [vmem:[%s8202 + $0x18] sm:$0xf]
    %v8210 = vld [vmem:[%s8202 + $0x1c] sm:$0xf]
    %v8211 = vld [vmem:[%s8202 + $0x20] sm:$0xf]
    %v8212 = vld [vmem:[%s8202 + $0x24] sm:$0xf]
    %v8213 = vld [vmem:[%s8202 + $0x28] sm:$0xf]
    %v8214 = vld [vmem:[%s8202 + $0x2c] sm:$0xf]
    %v8215 = vld [vmem:[%s8202 + $0x30] sm:$0xf]
    %v8216 = vld [vmem:[%s8202 + $0x34] sm:$0xf]
    %v8217 = vld [vmem:[%s8202 + $0x38] sm:$0xf]
    %v8218 = vld [vmem:[%s8202 + $0x3c] sm:$0xf]
    %v8219 = vld [vmem:[%s8202 + $0x40] sm:$0xf]
    %v8220 = vld [vmem:[%s8202 + $0x44] sm:$0xf]
    %v8221 = vld [vmem:[%s8202 + $0x48] sm:$0xf]
    %v8222 = vld [vmem:[%s8202 + $0x4c] sm:$0xf]
    %v8223 = vld [vmem:[%s8202 + $0x50] sm:$0xf]
    %v8224 = vld [vmem:[%s8202 + $0x54] sm:$0xf]
    %v8225 = vld [vmem:[%s8202 + $0x58] sm:$0xf]
    %v8226 = vld [vmem:[%s8202 + $0x5c] sm:$0xf]
    %v8227 = vld [vmem:[%s8202 + $0x60] sm:$0xf]
    %v8228 = vld [vmem:[%s8202 + $0x64] sm:$0xf]
    %v8229 = vld [vmem:[%s8202 + $0x68] sm:$0xf]
    %v8230 = vld [vmem:[%s8202 + $0x6c] sm:$0xf]
    %v8231 = vld [vmem:[%s8202 + $0x70] sm:$0xf]
    %v8232 = vld [vmem:[%s8202 + $0x74] sm:$0xf]
    %v8233 = vld [vmem:[%s8202 + $0x78] sm:$0xf]
    %v8234 = vld [vmem:[%s8202 + $0x7c] sm:$0xf]
    %v8235 = vld [vmem:[%s8202 + $0x80] sm:$0xf]
    %v8236 = vld [vmem:[%s8202 + $0x84] sm:$0xf]
    %v8237 = vld [vmem:[%s8202 + $0x88] sm:$0xf]
    %v8238 = vld [vmem:[%s8202 + $0x8c] sm:$0xf]
    %v8239 = vld [vmem:[%s8202 + $0x90] sm:$0xf]
    %v8240 = vld [vmem:[%s8202 + $0x94] sm:$0xf]
    %v8241 = vld [vmem:[%s8202 + $0x98] sm:$0xf]
    %v8242 = vld [vmem:[%s8202 + $0x9c] sm:$0xf]
    %v8243 = vld [vmem:[%s8202 + $0xa0] sm:$0xf]
    %v8244 = vld [vmem:[%s8202 + $0xa4] sm:$0xf]
    %v8245 = vld [vmem:[%s8202 + $0xa8] sm:$0xf]
    %v8246 = vld [vmem:[%s8202 + $0xac] sm:$0xf]
    %v8247 = vld [vmem:[%s8202 + $0xb0] sm:$0xf]
    %v8248 = vld [vmem:[%s8202 + $0xb4] sm:$0xf]
    %v8249 = vld [vmem:[%s8202 + $0xb8] sm:$0xf]
    %v8250 = vld [vmem:[%s8202 + $0xbc] sm:$0xf]
    %v8251 = vld [vmem:[%s8202 + $0xc0] sm:$0xf]
    %v8252 = vld [vmem:[%s8202 + $0xc4] sm:$0xf]
    %v8253 = vld [vmem:[%s8202 + $0xc8] sm:$0xf]
    %v8254 = vld [vmem:[%s8202 + $0xcc] sm:$0xf]
    %v8255 = vld [vmem:[%s8202 + $0xd0] sm:$0xf]
    %v8256 = vld [vmem:[%s8202 + $0xd4] sm:$0xf]
    %v8257 = vld [vmem:[%s8202 + $0xd8] sm:$0xf]
    %v8258 = vld [vmem:[%s8202 + $0xdc] sm:$0xf]
    %v8259 = vld [vmem:[%s8202 + $0xe0] sm:$0xf]
    %v8260 = vld [vmem:[%s8202 + $0xe4] sm:$0xf]
    %v8261 = vld [vmem:[%s8202 + $0xe8] sm:$0xf]
    %v8262 = vld [vmem:[%s8202 + $0xec] sm:$0xf]
    %v8263 = vld [vmem:[%s8202 + $0xf0] sm:$0xf]
    %v8264 = vld [vmem:[%s8202 + $0xf4] sm:$0xf]
    %v8265 = vld [vmem:[%s8202 + $0xf8] sm:$0xf]
    %v8266 = vld [vmem:[%s8202 + $0xfc] sm:$0xf]
    %s8267 = scalar_lea.vmem %s65, 4
    %v8268 = vld [vmem:[%s8267] sm:$0xf]
    %v8269 = vsel %vm4357, %v7700, 0
    %v8271 = vsel %vm4357, %v7701, 0
    %v8273 = vsel %vm4357, %v7702, 0
    %v8276 = vsel %vm5245, %v8268, 0
    %8278 = vmatprep.subr.mxu0 0.0
    %8279 = vmatpush1.msra.mxu0 %v8276
    %8280 = vmatprep.subr.mxu0 0.0
    %8281 = vmatpush1.msra.mxu0 0.0
    %8282 = vmatprep.subr.mxu0 0.0
    %8283 = vmatpush1.msra.mxu0 0.0
    %8284 = vmatprep.subr.mxu0 0.0
    %8285 = vmatpush1.msra.mxu0 0.0
    %8286 = vmatprep.subr.mxu0 0.0
    %8287 = vmatpush1.msra.mxu0 0.0
    %8288 = vmatprep.subr.mxu0 0.0
    %8289 = vmatpush1.msra.mxu0 0.0
    %8290 = vmatprep.subr.mxu0 0.0
    %8291 = vmatpush1.msra.mxu0 0.0
    %8292 = vmatprep.subr.mxu0 0.0
    %8293 = vmatpush1.msra.mxu0 0.0
    %8294 = vmatprep.subr.mxu0 0.0
    %8295 = vmatpush1.msra.mxu0 0.0
    %8296 = vmatprep.subr.mxu0 0.0
    %8297 = vmatpush1.msra.mxu0 0.0
    %8298 = vmatprep.subr.mxu0 0.0
    %8299 = vmatpush1.msra.mxu0 0.0
    %8300 = vmatprep.subr.mxu0 0.0
    %8301 = vmatpush1.msra.mxu0 0.0
    %8302 = vmatprep.subr.mxu0 0.0
    %8303 = vmatpush1.msra.mxu0 0.0
    %8304 = vmatprep.subr.mxu0 0.0
    %8305 = vmatpush1.msra.mxu0 0.0
    %8306 = vmatprep.subr.mxu0 0.0
    %8307 = vmatpush1.msra.mxu0 0.0
    %8308 = vmatprep.subr.mxu0 0.0
    %8309 = vmatpush1.msra.mxu0 0.0
    %8310 = vmatprep.subr.mxu0 0.0
    %8311 = vmatpush1.msra.mxu0 0.0
    %8312 = vmatprep.subr.mxu0 0.0
    %8313 = vmatpush1.msra.mxu0 0.0
    %8314 = vmatprep.subr.mxu0 0.0
    %8315 = vmatpush1.msra.mxu0 0.0
    %8316 = vmatprep.subr.mxu0 0.0
    %8317 = vmatpush1.msra.mxu0 0.0
    %8318 = vmatprep.subr.mxu0 0.0
    %8319 = vmatpush1.msra.mxu0 0.0
    %8320 = vmatprep.subr.mxu0 0.0
    %8321 = vmatpush1.msra.mxu0 0.0
    %8322 = vmatprep.subr.mxu0 0.0
    %8323 = vmatpush1.msra.mxu0 0.0
    %8324 = vmatprep.subr.mxu0 0.0
    %8325 = vmatpush1.msra.mxu0 0.0
    %8326 = vmatprep.subr.mxu0 0.0
    %8327 = vmatpush1.msra.mxu0 0.0
    %8328 = vmatprep.subr.mxu0 0.0
    %8329 = vmatpush1.msra.mxu0 0.0
    %8330 = vmatprep.subr.mxu0 0.0
    %8331 = vmatpush1.msra.mxu0 0.0
    %8332 = vmatprep.subr.mxu0 0.0
    %8333 = vmatpush1.msra.mxu0 0.0
    %8334 = vmatprep.subr.mxu0 0.0
    %8335 = vmatpush1.msra.mxu0 0.0
    %8336 = vmatprep.subr.mxu0 0.0
    %8337 = vmatpush1.msra.mxu0 0.0
    %8338 = vmatprep.subr.mxu0 0.0
    %8339 = vmatpush1.msra.mxu0 0.0
    %8340 = vmatprep.subr.mxu0 0.0
    %8341 = vmatpush1.msra.mxu0 0.0
    %8342 = vmatprep.mubr.f32.mxu0 0.0
    %8343 = vmatmul.mubr.f32.gmra.mrb[0].mxu0 %v8269
    %v8344 = vpop.f32.mrb[0].mxu0
    %v8345 = vadd.f32 0.0, %v8344
    %v8346 = vpop.f32.mrb[0].mxu0
    %8347 = vmatprep.mubr.f32.mxu0 0.0
    %8348 = vmatmul.mubr.f32.gmra.mrb[0].mxu0 %v8271
    %v8349 = vpop.f32.mrb[0].mxu0
    %v8350 = vadd.f32 0.0, %v8349
    %v8351 = vpop.f32.mrb[0].mxu0
    %8352 = vmatprep.mubr.f32.mxu0 0.0
    %8353 = vmatmul.mubr.f32.gmra.mrb[0].mxu0 %v8273
    %v8354 = vpop.f32.mrb[0].mxu0
    %v8355 = vadd.f32 0.0, %v8354
    %v8356 = vpop.f32.mrb[0].mxu0
    %8357 = vdwg.mxu0
    %v8422 = vunpack.c.l.b16 %v8203
    %v8423 = vunpack.c.l.b16 %v8204
    %v8424 = vunpack.c.l.b16 %v8205
    %v8425 = vunpack.c.l.b16 %v8206
    %v8426 = vunpack.c.l.b16 %v8207
    %v8427 = vunpack.c.l.b16 %v8208
    %v8428 = vunpack.c.l.b16 %v8209
    %v8429 = vunpack.c.l.b16 %v8210
    %v8430 = vunpack.c.l.b16 %v8211
    %v8431 = vunpack.c.l.b16 %v8212
    %v8432 = vunpack.c.l.b16 %v8213
    %v8433 = vunpack.c.l.b16 %v8214
    %v8434 = vunpack.c.l.b16 %v8215
    %v8435 = vunpack.c.l.b16 %v8216
    %v8436 = vunpack.c.l.b16 %v8217
    %v8437 = vunpack.c.l.b16 %v8218
    %v8438 = vunpack.c.l.b16 %v8219
    %v8439 = vunpack.c.l.b16 %v8220
    %v8440 = vunpack.c.l.b16 %v8221
    %v8441 = vunpack.c.l.b16 %v8222
    %v8442 = vunpack.c.l.b16 %v8223
    %v8443 = vunpack.c.l.b16 %v8224
    %v8444 = vunpack.c.l.b16 %v8225
    %v8445 = vunpack.c.l.b16 %v8226
    %v8446 = vunpack.c.l.b16 %v8227
    %v8447 = vunpack.c.l.b16 %v8228
    %v8448 = vunpack.c.l.b16 %v8229
    %v8449 = vunpack.c.l.b16 %v8230
    %v8450 = vunpack.c.l.b16 %v8231
    %v8451 = vunpack.c.l.b16 %v8232
    %v8452 = vunpack.c.l.b16 %v8233
    %v8453 = vunpack.c.l.b16 %v8234
    %v8454 = vunpack.c.l.b16 %v8235
    %v8455 = vunpack.c.l.b16 %v8236
    %v8456 = vunpack.c.l.b16 %v8237
    %v8457 = vunpack.c.l.b16 %v8238
    %v8458 = vunpack.c.l.b16 %v8239
    %v8459 = vunpack.c.l.b16 %v8240
    %v8460 = vunpack.c.l.b16 %v8241
    %v8461 = vunpack.c.l.b16 %v8242
    %v8462 = vunpack.c.l.b16 %v8243
    %v8463 = vunpack.c.l.b16 %v8244
    %v8464 = vunpack.c.l.b16 %v8245
    %v8465 = vunpack.c.l.b16 %v8246
    %v8466 = vunpack.c.l.b16 %v8247
    %v8467 = vunpack.c.l.b16 %v8248
    %v8468 = vunpack.c.l.b16 %v8249
    %v8469 = vunpack.c.l.b16 %v8250
    %v8470 = vunpack.c.l.b16 %v8251
    %v8471 = vunpack.c.l.b16 %v8252
    %v8472 = vunpack.c.l.b16 %v8253
    %v8473 = vunpack.c.l.b16 %v8254
    %v8474 = vunpack.c.l.b16 %v8255
    %v8475 = vunpack.c.l.b16 %v8256
    %v8476 = vunpack.c.l.b16 %v8257
    %v8477 = vunpack.c.l.b16 %v8258
    %v8478 = vunpack.c.l.b16 %v8259
    %v8479 = vunpack.c.l.b16 %v8260
    %v8480 = vunpack.c.l.b16 %v8261
    %v8481 = vunpack.c.l.b16 %v8262
    %v8482 = vunpack.c.l.b16 %v8263
    %v8483 = vunpack.c.l.b16 %v8264
    %v8484 = vunpack.c.l.b16 %v8265
    %v8485 = vunpack.c.l.b16 %v8266
    %v8486 = vpack.c.b16 %v8423, %v8422
    %v8487 = vpack.c.b16 %v8425, %v8424
    %v8488 = vpack.c.b16 %v8427, %v8426
    %v8489 = vpack.c.b16 %v8429, %v8428
    %v8490 = vpack.c.b16 %v8431, %v8430
    %v8491 = vpack.c.b16 %v8433, %v8432
    %v8492 = vpack.c.b16 %v8435, %v8434
    %v8493 = vpack.c.b16 %v8437, %v8436
    %v8494 = vpack.c.b16 %v8439, %v8438
    %v8495 = vpack.c.b16 %v8441, %v8440
    %v8496 = vpack.c.b16 %v8443, %v8442
    %v8497 = vpack.c.b16 %v8445, %v8444
    %v8498 = vpack.c.b16 %v8447, %v8446
    %v8499 = vpack.c.b16 %v8449, %v8448
    %v8500 = vpack.c.b16 %v8451, %v8450
    %v8501 = vpack.c.b16 %v8453, %v8452
    %v8502 = vpack.c.b16 %v8455, %v8454
    %v8503 = vpack.c.b16 %v8457, %v8456
    %v8504 = vpack.c.b16 %v8459, %v8458
    %v8505 = vpack.c.b16 %v8461, %v8460
    %v8506 = vpack.c.b16 %v8463, %v8462
    %v8507 = vpack.c.b16 %v8465, %v8464
    %v8508 = vpack.c.b16 %v8467, %v8466
    %v8509 = vpack.c.b16 %v8469, %v8468
    %v8510 = vpack.c.b16 %v8471, %v8470
    %v8511 = vpack.c.b16 %v8473, %v8472
    %v8512 = vpack.c.b16 %v8475, %v8474
    %v8513 = vpack.c.b16 %v8477, %v8476
    %v8514 = vpack.c.b16 %v8479, %v8478
    %v8515 = vpack.c.b16 %v8481, %v8480
    %v8516 = vpack.c.b16 %v8483, %v8482
    %v8517 = vpack.c.b16 %v8485, %v8484
    %8550 = vmatprep.subr.bf16.mxu0 0
    %8551 = vmatpush1.bf16.msra.mxu0 %v8486
    %8552 = vmatprep.subr.bf16.mxu0 0
    %8553 = vmatpush1.bf16.msra.mxu0 %v8487
    %8554 = vmatprep.subr.bf16.mxu0 0
    %8555 = vmatpush1.bf16.msra.mxu0 %v8488
    %8556 = vmatprep.subr.bf16.mxu0 0
    %8557 = vmatpush1.bf16.msra.mxu0 %v8489
    %8558 = vmatprep.subr.bf16.mxu0 0
    %8559 = vmatpush1.bf16.msra.mxu0 %v8490
    %8560 = vmatprep.subr.bf16.mxu0 0
    %8561 = vmatpush1.bf16.msra.mxu0 %v8491
    %8562 = vmatprep.subr.bf16.mxu0 0
    %8563 = vmatpush1.bf16.msra.mxu0 %v8492
    %8564 = vmatprep.subr.bf16.mxu0 0
    %8565 = vmatpush1.bf16.msra.mxu0 %v8493
    %8566 = vmatprep.subr.bf16.mxu0 0
    %8567 = vmatpush1.bf16.msra.mxu0 %v8494
    %8568 = vmatprep.subr.bf16.mxu0 0
    %8569 = vmatpush1.bf16.msra.mxu0 %v8495
    %8570 = vmatprep.subr.bf16.mxu0 0
    %8571 = vmatpush1.bf16.msra.mxu0 %v8496
    %8572 = vmatprep.subr.bf16.mxu0 0
    %8573 = vmatpush1.bf16.msra.mxu0 %v8497
    %8574 = vmatprep.subr.bf16.mxu0 0
    %8575 = vmatpush1.bf16.msra.mxu0 %v8498
    %8576 = vmatprep.subr.bf16.mxu0 0
    %8577 = vmatpush1.bf16.msra.mxu0 %v8499
    %8578 = vmatprep.subr.bf16.mxu0 0
    %8579 = vmatpush1.bf16.msra.mxu0 %v8500
    %8580 = vmatprep.subr.bf16.mxu0 0
    %8581 = vmatpush1.bf16.msra.mxu0 %v8501
    %8582 = vmatprep.mubr.bf16.mxu0 %v8195
    %8583 = vmatmul.mubr.bf16.gmra.mrb[0].mxu0 %v8194
    %v8584 = vpop.f32.mrb[0].mxu0
    %v8585 = vadd.f32 %v8345, %v8584
    %v8586 = vpop.f32.mrb[0].mxu0
    %v8587 = vpop.f32.mrb[0].mxu0
    %v8588 = vadd.f32 %v8350, %v8587
    %v8589 = vpop.f32.mrb[0].mxu0
    %8590 = vmatprep.mubr.bf16.mxu0 %v8199
    %8591 = vmatmul.mubr.bf16.gmra.mrb[0].mxu0 %v8198
    %v8592 = vpop.f32.mrb[0].mxu0
    %v8593 = vadd.f32 %v8355, %v8592
    %v8594 = vpop.f32.mrb[0].mxu0
    %v8595 = vpop.f32.mrb[0].mxu0
    %v8596 = vpop.f32.mrb[0].mxu0
    %8597 = vdwg.mxu0
    %8598 = vmatprep.subr.bf16.mxu0 0
    %8599 = vmatpush1.bf16.msra.mxu0 %v8502
    %8600 = vmatprep.subr.bf16.mxu0 0
    %8601 = vmatpush1.bf16.msra.mxu0 %v8503
    %8602 = vmatprep.subr.bf16.mxu0 0
    %8603 = vmatpush1.bf16.msra.mxu0 %v8504
    %8604 = vmatprep.subr.bf16.mxu0 0
    %8605 = vmatpush1.bf16.msra.mxu0 %v8505
    %8606 = vmatprep.subr.bf16.mxu0 0
    %8607 = vmatpush1.bf16.msra.mxu0 %v8506
    %8608 = vmatprep.subr.bf16.mxu0 0
    %8609 = vmatpush1.bf16.msra.mxu0 %v8507
    %8610 = vmatprep.subr.bf16.mxu0 0
    %8611 = vmatpush1.bf16.msra.mxu0 %v8508
    %8612 = vmatprep.subr.bf16.mxu0 0
    %8613 = vmatpush1.bf16.msra.mxu0 %v8509
    %8614 = vmatprep.subr.bf16.mxu0 0
    %8615 = vmatpush1.bf16.msra.mxu0 %v8510
    %8616 = vmatprep.subr.bf16.mxu0 0
    %8617 = vmatpush1.bf16.msra.mxu0 %v8511
    %8618 = vmatprep.subr.bf16.mxu0 0
    %8619 = vmatpush1.bf16.msra.mxu0 %v8512
    %8620 = vmatprep.subr.bf16.mxu0 0
    %8621 = vmatpush1.bf16.msra.mxu0 %v8513
    %8622 = vmatprep.subr.bf16.mxu0 0
    %8623 = vmatpush1.bf16.msra.mxu0 %v8514
    %8624 = vmatprep.subr.bf16.mxu0 0
    %8625 = vmatpush1.bf16.msra.mxu0 %v8515
    %8626 = vmatprep.subr.bf16.mxu0 0
    %8627 = vmatpush1.bf16.msra.mxu0 %v8516
    %8628 = vmatprep.subr.bf16.mxu0 0
    %8629 = vmatpush1.bf16.msra.mxu0 %v8517
    %8630 = vmatprep.mubr.bf16.mxu0 %v8197
    %8631 = vmatmul.mubr.bf16.gmra.mrb[0].mxu0 %v8196
    %v8632 = vpop.f32.mrb[0].mxu0
    %v8633 = vadd.f32 %v8585, %v8632
    %v8634 = vpop.f32.mrb[0].mxu0
    %v8635 = vpop.f32.mrb[0].mxu0
    %v8636 = vadd.f32 %v8588, %v8635
    %v8637 = vpop.f32.mrb[0].mxu0
    %8638 = vmatprep.mubr.bf16.mxu0 %v8201
    %8639 = vmatmul.mubr.bf16.gmra.mrb[0].mxu0 %v8200
    %v8640 = vpop.f32.mrb[0].mxu0
    %v8641 = vadd.f32 %v8593, %v8640
    %v8642 = vpop.f32.mrb[0].mxu0
    %v8643 = vpop.f32.mrb[0].mxu0
    %v8644 = vpop.f32.mrb[0].mxu0
    %8645 = vdwg.mxu0
    %v8646 = vadd.f32 %v7220, %v8633
    %v8647 = vadd.f32 %v7221, %v8636
    %v8648 = vadd.f32 %v7222, %v8641
    %v8649 = vld [vmem:[%s37] sm:$0x3]
    %v8651 = vsel %vm3027, %v8649, 0
    %v8654 = vsel %vm2578, %v8648, 0
    %8656 = vmatprep.subr.mxu0 0.0
    %8657 = vmatpush1.msra.mxu0 %v8646
    %8658 = vmatprep.subr.mxu0 0.0
    %8659 = vmatpush1.msra.mxu0 %v8647
    %8660 = vmatprep.subr.mxu0 0.0
    %8661 = vmatpush1.msra.mxu0 %v8654
    %8662 = vmatprep.subr.mxu0 0.0
    %8663 = vmatpush1.msra.mxu0 0.0
    %8664 = vmatprep.subr.mxu0 0.0
    %8665 = vmatpush1.msra.mxu0 0.0
    %8666 = vmatprep.subr.mxu0 0.0
    %8667 = vmatpush1.msra.mxu0 0.0
    %8668 = vmatprep.subr.mxu0 0.0
    %8669 = vmatpush1.msra.mxu0 0.0
    %8670 = vmatprep.subr.mxu0 0.0
    %8671 = vmatpush1.msra.mxu0 0.0
    %8672 = vmatprep.subr.mxu0 0.0
    %8673 = vmatpush1.msra.mxu0 0.0
    %8674 = vmatprep.subr.mxu0 0.0
    %8675 = vmatpush1.msra.mxu0 0.0
    %8676 = vmatprep.subr.mxu0 0.0
    %8677 = vmatpush1.msra.mxu0 0.0
    %8678 = vmatprep.subr.mxu0 0.0
    %8679 = vmatpush1.msra.mxu0 0.0
    %8680 = vmatprep.subr.mxu0 0.0
    %8681 = vmatpush1.msra.mxu0 0.0
    %8682 = vmatprep.subr.mxu0 0.0
    %8683 = vmatpush1.msra.mxu0 0.0
    %8684 = vmatprep.subr.mxu0 0.0
    %8685 = vmatpush1.msra.mxu0 0.0
    %8686 = vmatprep.subr.mxu0 0.0
    %8687 = vmatpush1.msra.mxu0 0.0
    %8688 = vmatprep.subr.mxu0 0.0
    %8689 = vmatpush1.msra.mxu0 0.0
    %8690 = vmatprep.subr.mxu0 0.0
    %8691 = vmatpush1.msra.mxu0 0.0
    %8692 = vmatprep.subr.mxu0 0.0
    %8693 = vmatpush1.msra.mxu0 0.0
    %8694 = vmatprep.subr.mxu0 0.0
    %8695 = vmatpush1.msra.mxu0 0.0
    %8696 = vmatprep.subr.mxu0 0.0
    %8697 = vmatpush1.msra.mxu0 0.0
    %8698 = vmatprep.subr.mxu0 0.0
    %8699 = vmatpush1.msra.mxu0 0.0
    %8700 = vmatprep.subr.mxu0 0.0
    %8701 = vmatpush1.msra.mxu0 0.0
    %8702 = vmatprep.subr.mxu0 0.0
    %8703 = vmatpush1.msra.mxu0 0.0
    %8704 = vmatprep.subr.mxu0 0.0
    %8705 = vmatpush1.msra.mxu0 0.0
    %8706 = vmatprep.subr.mxu0 0.0
    %8707 = vmatpush1.msra.mxu0 0.0
    %8708 = vmatprep.subr.mxu0 0.0
    %8709 = vmatpush1.msra.mxu0 0.0
    %8710 = vmatprep.subr.mxu0 0.0
    %8711 = vmatpush1.msra.mxu0 0.0
    %8712 = vmatprep.subr.mxu0 0.0
    %8713 = vmatpush1.msra.mxu0 0.0
    %8714 = vmatprep.subr.mxu0 0.0
    %8715 = vmatpush1.msra.mxu0 0.0
    %8716 = vmatprep.subr.mxu0 0.0
    %8717 = vmatpush1.msra.mxu0 0.0
    %8718 = vmatprep.subr.mxu0 0.0
    %8719 = vmatpush1.msra.mxu0 0.0
    %8720 = vmatprep.mubr.f32.mxu0 0.0
    %8721 = vmatmul.mubr.f32.gmra.mrb[0].mxu0 %v8651
    %v8722 = vpop.f32.mrb[0].mxu0
    %v8723 = vadd.f32 0.0, %v8722
    %v8724 = vpop.f32.mrb[0].mxu0
    %8725 = vdwg.mxu0
    %8726 = vst [vmem:[#allocation2] sm:$0x3] %v8723
    // Predicated region
    $region134: #{_lambda_.1} parent=1 // pred_check
      _
    $region135: #{_lambda_.1} parent=1 // pred_check_branch
      %8728 = sbr.rel (0) target = $region137
    $region136: #{_lambda_.1} parent=1 // pred_region
      %s8730 = ssub.s32 32, 32
      %8731 = vsyncadd [#allocation3], %s8730
      %s8733 = sshll.u32 [#allocation2], 4
      %s8734 = int_to_ptr.vmem [resolvable:$true] %s8733
      %8736 = dma.vmem_to_hbm [thread:$0]  %s8734, 32, %s67, [#allocation3]
    $region137: #{_lambda_.1} parent=1 // pred_fallthru
      _
    // Predicated region
    $region138: #{_lambda_.1} parent=1 // pred_check
      _
    $region139: #{_lambda_.1} parent=1 // pred_check_branch
      %8738 = sbr.rel (0) target = $region141
    $region140: #{_lambda_.1} parent=1 // pred_region
      %8739 = dma.done [#allocation3], 32
    $region141: #{_lambda_.1} parent=1 // pred_fallthru
      _
    %8740 = vsyncpa [#allocation3], 1

</llo_original>
